<compile_context>
chip_gen: v7x
topology: tpu7x:2x2x1
jax: 0.10.0
libtpu: 0.0.40
codegen_flags: <defaults>
</compile_context>

<pallas_src>
import functools

import jax
import jax.numpy as jnp
from jax.experimental import pallas as pl
from jax.experimental.pallas import tpu as pltpu  # noqa: F401  (TPU backend assumed)


# ---------------------------------------------------------------------------
# In-kernel math helpers (operate on values, not refs)
# ---------------------------------------------------------------------------
def _layernorm(x, g, b, eps=1e-5):
    mu = jnp.mean(x, axis=-1, keepdims=True)
    var = jnp.mean(jnp.square(x - mu), axis=-1, keepdims=True)
    return (x - mu) * jax.lax.rsqrt(var + eps) * g + b


def _erf(x):
    # Abramowitz & Stegun 7.1.26 (|err| <= 1.5e-7): reproduces torch's exact-erf
    # GELU at f32 precision using only exp/abs/where (no erf primitive needed).
    a1, a2, a3, a4, a5 = (0.254829592, -0.284496736, 1.421413741,
                          -1.453152027, 1.061405429)
    p = 0.3275911
    ax = jnp.abs(x)
    t = 1.0 / (1.0 + p * ax)
    poly = ((((a5 * t + a4) * t + a3) * t + a2) * t + a1) * t
    y = 1.0 - poly * jnp.exp(-ax * ax)
    return jnp.where(x < 0.0, -y, y)


def _gelu(x):
    return 0.5 * x * (1.0 + _erf(x * 0.7071067811865476))


# ---------------------------------------------------------------------------
# Pallas kernels
# ---------------------------------------------------------------------------
def _preblock_kernel(x_ref, p_ref, g_ref, b_ref, o_ref):
    """x: (2, B*C, S); p: (S, S) fused pooling matrix; g, b: (2, 1, S)."""
    P = p_ref[...]
    for ch in range(2):                          # HbO / HbR, static unroll
        y = jnp.dot(x_ref[ch], P, preferred_element_type=jnp.float32)
        o_ref[ch] = _layernorm(y, g_ref[ch], b_ref[ch])


def _branch_kernel(rows_ref, wc_ref, bc_ref, eg_ref, eb_ref, cls_ref, pos_ref,
                   l1g_ref, l1b_ref, wqkv_ref, wout_ref, bout_ref,
                   l2g_ref, l2b_ref, w1_ref, b1_ref, w2_ref, b2_ref,
                   out_ref, *, batch, n_tok, heads, dim_head, depth):
    """One full ViT branch: fused conv+embed+LN, cls/pos, `depth` transformer
    layers, CLS extraction.  All activations stay in VMEM/vregs."""
    scale = dim_head ** -0.5
    inner = heads * dim_head
    np_ = n_tok - 1                              # tokens before the CLS token

    # ---- fused (conv -> rearrange -> Linear) + LayerNorm(dim) -------------
    emb = jnp.dot(rows_ref[...], wc_ref[...],
                  preferred_element_type=jnp.float32) + bc_ref[...]
    emb = _layernorm(emb, eg_ref[...], eb_ref[...])          # (B*np, dim)

    # ---- build token sequence: [cls+pos0, emb+pos1..] per batch -----------
    pos = pos_ref[...]                                        # (n_tok, dim)
    cls_row = cls_ref[...] + pos[0:1, :]                      # (1, dim)
    pos_rest = pos[1:, :]                                     # (np, dim)
    parts = []
    for b in range(batch):
        parts.append(cls_row)
        parts.append(emb[b * np_:(b + 1) * np_, :] + pos_rest)
    x = jnp.concatenate(parts, axis=0)                        # (B*n_tok, dim)

    # ---- transformer layers (weights stacked on a leading depth axis) -----
    for l in range(depth):
        # Residual(PreNorm(Attention))
        xn = _layernorm(x, l1g_ref[l], l1b_ref[l])
        qkv = jnp.dot(xn, wqkv_ref[l], preferred_element_type=jnp.float32)
        b_outs = []
        for b in range(batch):
            qkv_b = qkv[b * n_tok:(b + 1) * n_tok, :]
            h_outs = []
            for h in range(heads):
                q = qkv_b[:, h * dim_head:(h + 1) * dim_head]
                k = qkv_b[:, inner + h * dim_head:inner + (h + 1) * dim_head]
                v = qkv_b[:, 2 * inner + h * dim_head:
                          2 * inner + (h + 1) * dim_head]
                s = jax.lax.dot_general(
                    q, k, (((1,), (1,)), ((), ())),
                    preferred_element_type=jnp.float32) * scale
                s = s - jnp.max(s, axis=-1, keepdims=True)
                p_ = jnp.exp(s)
                p_ = p_ * pl.reciprocal(
                    jnp.sum(p_, axis=-1, keepdims=True), approx=True)
                h_outs.append(jnp.dot(p_, v,
                                      preferred_element_type=jnp.float32))
            b_outs.append(jnp.concatenate(h_outs, axis=1))    # (n_tok, inner)
        attn = jnp.concatenate(b_outs, axis=0)                # (B*n_tok, inner)
        x = x + (jnp.dot(attn, wout_ref[l],
                         preferred_element_type=jnp.float32) + bout_ref[l])

        # Residual(PreNorm(FeedForward))
        xn = _layernorm(x, l2g_ref[l], l2b_ref[l])
        hmid = jnp.dot(xn, w1_ref[l],
                       preferred_element_type=jnp.float32) + b1_ref[l]
        hmid = _gelu(hmid)
        x = x + (jnp.dot(hmid, w2_ref[l],
                         preferred_element_type=jnp.float32) + b2_ref[l])

    # ---- CLS pooling -------------------------------------------------------
    out_ref[...] = jnp.concatenate(
        [x[b * n_tok:b * n_tok + 1, :] for b in range(batch)], axis=0)


def _head_kernel(xp_ref, xc_ref, g_ref, b_ref, w_ref, bias_ref, o_ref):
    x = jnp.concatenate([xp_ref[...], xc_ref[...]], axis=1)   # (B, 2*dim)
    x = _layernorm(x, g_ref[...], b_ref[...])
    o_ref[...] = jnp.dot(x, w_ref[...],
                         preferred_element_type=jnp.float32) + bias_ref[...]


# ---------------------------------------------------------------------------
# pallas_call wrappers
# ---------------------------------------------------------------------------
def _run_preblock(x, pp):
    two, rows, S = x.shape
    return pl.pallas_call(
        _preblock_kernel,
        out_shape=jax.ShapeDtypeStruct((two, rows, S), jnp.float32),
    )(x, pp["pool_mat"], pp["pre_ln_g"], pp["pre_ln_b"])


def _run_branch(rows, bp, *, batch, n_tok, dim, heads, dim_head, depth):
    L = bp["layers"]
    kern = functools.partial(_branch_kernel, batch=batch, n_tok=n_tok,
                             heads=heads, dim_head=dim_head, depth=depth)
    return pl.pallas_call(
        kern,
        out_shape=jax.ShapeDtypeStruct((batch, dim), jnp.float32),
    )(rows, bp["wc"], bp["bc"], bp["eln_g"], bp["eln_b"], bp["cls"], bp["pos"],
      L["ln1_g"], L["ln1_b"], L["w_qkv"], L["w_out"], L["b_out"],
      L["ln2_g"], L["ln2_b"], L["w1"], L["b1"], L["w2"], L["b2"])


def _run_head(cls_p, cls_c, pp, n_class):
    B = cls_p.shape[0]
    return pl.pallas_call(
        _head_kernel,
        out_shape=jax.ShapeDtypeStruct((B, n_class), jnp.float32),
    )(cls_p, cls_c, pp["head_ln_g"], pp["head_ln_b"], pp["head_w"], pp["head_b"])


# ---------------------------------------------------------------------------
# Forward (XLA glue is only cheap reshapes / small slices)
# ---------------------------------------------------------------------------
def fnirs_pret_forward(img, pp, cfg):
    B, _, C, S = img.shape
    dim, heads = cfg["dim"], cfg["heads"]
    dim_head, depth = cfg["dim_head"], cfg["depth"]

    # ---- PreBlock: smoothing + LayerNorm, both channels in one kernel -----
    x = jnp.transpose(img, (1, 0, 2, 3)).reshape(2, B * C, S)
    xs = _run_preblock(x, pp)
    x_pre = jnp.transpose(xs.reshape(2, B, C, S), (1, 0, 2, 3))   # (B,2,C,S)

    # ---- patch branch: rows are kh=5 channel windows over the full S axis --
    kh = 5
    Ho_p = C - kh + 1
    rows_p = jnp.stack([x_pre[:, :, h:h + kh, :] for h in range(Ho_p)], axis=1)
    rows_p = rows_p.reshape(B * Ho_p, 2 * kh * S)
    cls_p = _run_branch(rows_p, pp["patch"], batch=B, n_tok=Ho_p + 1,
                        dim=dim, heads=heads, dim_head=dim_head, depth=depth)

    # ---- channel branch: one row per fNIRS channel -------------------------
    # TODO(synk): PyTorch's img.squeeze() changes rank when B==1 or C==1; this
    # implementation models the B>1, C>1 case where squeeze() is a no-op.
    rows_c = jnp.transpose(x_pre, (0, 2, 1, 3)).reshape(B * C, 2 * S)
    cls_c = _run_branch(rows_c, pp["channel"], batch=B, n_tok=C + 1,
                        dim=dim, heads=heads, dim_head=dim_head, depth=depth)

    # ---- MLP head ----------------------------------------------------------
    return _run_head(cls_p, cls_c, pp, cfg["n_class"])


# ---------------------------------------------------------------------------
# Parameter construction (torch-layout raw params) and kernel-layout fusion
# ---------------------------------------------------------------------------
def avgpool_matrix(S, k):
    # AvgPool1d(kernel_size=k, stride=1, padding=k//2, count_include_pad=True)
    pad = k // 2
    idx = jnp.arange(S)
    return (jnp.abs(idx[:, None] - idx[None, :]) <= pad).astype(jnp.float32) / float(k)


def fuse_conv_embed(conv_w, conv_b, lin_w, lin_b, S, stride):
    """Fold Conv2d(OIHW) + Rearrange('b c h w -> b h (c w)') + Linear into one
    matmul over rows that are (Cin, kh, S)-flattened channel windows."""
    Cout, Cin, kh, kw = conv_w.shape
    Wo = (S - kw) // stride + 1
    dim = lin_w.shape[1]
    lin_w_r = lin_w.reshape(Cout, Wo, dim)
    Wc = jnp.zeros((Cin, kh, S, dim), jnp.float32)
    for w in range(Wo):
        contrib = jnp.einsum("oihk,od->ihkd", conv_w, lin_w_r[:, w, :])
        Wc = Wc.at[:, :, w * stride:w * stride + kw, :].add(contrib)
    b_fold = jnp.einsum("o,owd->d", conv_b, lin_w_r) + lin_b
    return Wc.reshape(Cin * kh * S, dim), b_fold.reshape(1, dim)


def _stack_layers(layers):
    g = lambda a, k: jnp.stack([l[a][k] for l in layers])
    return dict(
        ln1_g=g("attn", "ln_g")[:, None, :], ln1_b=g("attn", "ln_b")[:, None, :],
        w_qkv=g("attn", "w_qkv"), w_out=g("attn", "w_out"),
        b_out=g("attn", "b_out")[:, None, :],
        ln2_g=g("ff", "ln_g")[:, None, :], ln2_b=g("ff", "ln_b")[:, None, :],
        w1=g("ff", "w1"), b1=g("ff", "b1")[:, None, :],
        w2=g("ff", "w2"), b2=g("ff", "b2")[:, None, :],
    )


def prepare_params(p, *, sampling_point, n_channels, dim):
    S, C = sampling_point, n_channels
    P = avgpool_matrix(S, 5) @ avgpool_matrix(S, 13) @ avgpool_matrix(S, 7)
    n_tok_p = (C - 5 + 1) + 1
    n_tok_c = C + 1
    wc_p, bc_p = fuse_conv_embed(p["conv_p_w"], p["conv_p_b"],
                                 p["emb_p_w"], p["emb_p_b"], S, 4)
    wc_c, bc_c = fuse_conv_embed(p["conv_c_w"], p["conv_c_b"],
                                 p["emb_c_w"], p["emb_c_b"], S, 4)
    return {
        "pool_mat": P,
        "pre_ln_g": jnp.stack([p["pre_ln0_g"], p["pre_ln1_g"]])[:, None, :],
        "pre_ln_b": jnp.stack([p["pre_ln0_b"], p["pre_ln1_b"]])[:, None, :],
        "patch": dict(
            wc=wc_p, bc=bc_p,
            eln_g=p["emb_p_ln_g"].reshape(1, dim),
            eln_b=p["emb_p_ln_b"].reshape(1, dim),
            cls=p["cls_patch"].reshape(1, dim),
            pos=p["pos_patch"][0, :n_tok_p],
            layers=_stack_layers(p["tr_patch"]),
        ),
        "channel": dict(
            wc=wc_c, bc=bc_c,
            eln_g=p["emb_c_ln_g"].reshape(1, dim),
            eln_b=p["emb_c_ln_b"].reshape(1, dim),
            cls=p["cls_channel"].reshape(1, dim),
            pos=p["pos_channel"][0, :n_tok_c],
            layers=_stack_layers(p["tr_channel"]),
        ),
        "head_ln_g": p["head_ln_g"].reshape(1, -1),
        "head_ln_b": p["head_ln_b"].reshape(1, -1),
        "head_w": p["head_w"],
        "head_b": p["head_b"].reshape(1, -1),
    }


def init_params(key, *, sampling_point, dim, depth, heads, dim_head,
                mlp_dim, n_class):
    inner = heads * dim_head
    emb_in = ((sampling_point - 30) // 4 + 1) * 8
    keys = iter(jax.random.split(key, 512))

    def nrm(shape, std=0.02):
        return jax.random.normal(next(keys), shape, jnp.float32) * std

    params = {
        "pre_ln0_g": jnp.ones((sampling_point,), jnp.float32),
        "pre_ln0_b": jnp.zeros((sampling_point,), jnp.float32),
        "pre_ln1_g": jnp.ones((sampling_point,), jnp.float32),
        "pre_ln1_b": jnp.zeros((sampling_point,), jnp.float32),
        "conv_p_w": nrm((8, 2, 5, 30)), "conv_p_b": nrm((8,)),
        "conv_c_w": nrm((8, 2, 1, 30)), "conv_c_b": nrm((8,)),
        "emb_p_w": nrm((emb_in, dim)), "emb_p_b": nrm((dim,)),
        "emb_p_ln_g": jnp.ones((dim,), jnp.float32),
        "emb_p_ln_b": jnp.zeros((dim,), jnp.float32),
        "emb_c_w": nrm((emb_in, dim)), "emb_c_b": nrm((dim,)),
        "emb_c_ln_g": jnp.ones((dim,), jnp.float32),
        "emb_c_ln_b": jnp.zeros((dim,), jnp.float32),
        "cls_patch": nrm((1, 1, dim), std=1.0),
        "pos_patch": nrm((1, 101, dim), std=1.0),
        "cls_channel": nrm((1, 1, dim), std=1.0),
        "pos_channel": nrm((1, 101, dim), std=1.0),
        "head_ln_g": jnp.ones((2 * dim,), jnp.float32),
        "head_ln_b": jnp.zeros((2 * dim,), jnp.float32),
        "head_w": nrm((2 * dim, n_class)), "head_b": nrm((n_class,)),
    }

    def make_layer():
        return {
            "attn": {
                "ln_g": jnp.ones((dim,), jnp.float32),
                "ln_b": jnp.zeros((dim,), jnp.float32),
                "w_qkv": nrm((dim, 3 * inner)),          # to_qkv (no bias)
                "w_out": nrm((inner, dim)),
                "b_out": nrm((dim,)),
            },
            "ff": {
                "ln_g": jnp.ones((dim,), jnp.float32),
                "ln_b": jnp.zeros((dim,), jnp.float32),
                "w1": nrm((dim, mlp_dim)), "b1": nrm((mlp_dim,)),
                "w2": nrm((mlp_dim, dim)), "b2": nrm((dim,)),
            },
        }

    params["tr_patch"] = [make_layer() for _ in range(depth)]
    params["tr_channel"] = [make_layer() for _ in range(depth)]
    return params


# ---------------------------------------------------------------------------
if __name__ == "__main__":
    cfg = dict(n_class=3, sampling_point=64, n_channels=12, dim=32, depth=2,
               heads=2, dim_head=16, mlp_dim=64)

    key = jax.random.PRNGKey(0)
    pkey, xkey = jax.random.split(key)
    raw = init_params(pkey, sampling_point=cfg["sampling_point"], dim=cfg["dim"],
                      depth=cfg["depth"], heads=cfg["heads"],
                      dim_head=cfg["dim_head"], mlp_dim=cfg["mlp_dim"],
                      n_class=cfg["n_class"])
    pp = prepare_params(raw, sampling_point=cfg["sampling_point"],
                        n_channels=cfg["n_channels"], dim=cfg["dim"])

    # input: [B, 2, fNIRS channels, sampling points]
    img = jax.random.normal(
        xkey, (2, 2, cfg["n_channels"], cfg["sampling_point"]), jnp.float32)

    fwd = jax.jit(functools.partial(fnirs_pret_forward, cfg=cfg))
    out = fwd(img, pp)
    jax.block_until_ready(out)
    assert out.shape == (2, cfg["n_class"])
    assert bool(jnp.all(jnp.isfinite(out)))
    print("KERNEL_OK")
</pallas_src>

<mosaic_0001>
module attributes {stable_mosaic.version = 11 : i64} {
  func.func @_preblock_kernel(%arg0: memref<2x24x64xf32, #tpu.memory_space<vmem>>, %arg1: memref<64x64xf32, #tpu.memory_space<vmem>>, %arg2: memref<2x1x64xf32, #tpu.memory_space<vmem>>, %arg3: memref<2x1x64xf32, #tpu.memory_space<vmem>>, %arg4: memref<2x24x64xf32, #tpu.memory_space<vmem>>) attributes {dimension_semantics = [], scalar_prefetch = 0 : i64, scratch_operands = 0 : i64, tpu.core_type = #tpu.core_type<tc>} {
    %c0 = arith.constant 0 : index
    %c0_0 = arith.constant 0 : index
    %0 = vector.load %arg1[%c0, %c0_0] : memref<64x64xf32, #tpu.memory_space<vmem>>, vector<64x64xf32>
    %c0_1 = arith.constant 0 : index
    %c0_2 = arith.constant 0 : index
    %c0_3 = arith.constant 0 : index
    %1 = vector.load %arg0[%c0_1, %c0_2, %c0_3] : memref<2x24x64xf32, #tpu.memory_space<vmem>>, vector<1x24x64xf32>
    %2 = vector.shape_cast %1 : vector<1x24x64xf32> to vector<24x64xf32>
    %cst = arith.constant dense<0.000000e+00> : vector<24x64xf32>
    %3 = tpu.matmul %2, %0, %cst {dimension_numbers = #tpu.dot_dimension_numbers<[1], [0], [0], [1], [0, 0, 1, 1], [], []>} : vector<24x64xf32>, vector<64x64xf32>, vector<24x64xf32> -> vector<24x64xf32>
    %c0_4 = arith.constant 0 : index
    %c0_5 = arith.constant 0 : index
    %c0_6 = arith.constant 0 : index
    %4 = vector.load %arg2[%c0_4, %c0_5, %c0_6] : memref<2x1x64xf32, #tpu.memory_space<vmem>>, vector<1x1x64xf32>
    %5 = vector.shape_cast %4 : vector<1x1x64xf32> to vector<1x64xf32>
    %c0_7 = arith.constant 0 : index
    %c0_8 = arith.constant 0 : index
    %c0_9 = arith.constant 0 : index
    %6 = vector.load %arg3[%c0_7, %c0_8, %c0_9] : memref<2x1x64xf32, #tpu.memory_space<vmem>>, vector<1x1x64xf32>
    %7 = vector.shape_cast %6 : vector<1x1x64xf32> to vector<1x64xf32>
    %cst_10 = arith.constant dense<0.000000e+00> : vector<24xf32>
    %8 = vector.multi_reduction <add>, %3, %cst_10 [1] : vector<24x64xf32> to vector<24xf32>
    %9 = vector.shape_cast %8 : vector<24xf32> to vector<24x1xf32>
    %cst_11 = arith.constant 6.400000e+01 : f32
    %10 = vector.broadcast %cst_11 : f32 to vector<24x1xf32>
    %11 = arith.divf %9, %10 : vector<24x1xf32>
    %12 = vector.broadcast %11 : vector<24x1xf32> to vector<24x64xf32>
    %13 = arith.subf %3, %12 : vector<24x64xf32>
    %14 = arith.mulf %13, %13 : vector<24x64xf32>
    %cst_12 = arith.constant dense<0.000000e+00> : vector<24xf32>
    %15 = vector.multi_reduction <add>, %14, %cst_12 [1] : vector<24x64xf32> to vector<24xf32>
    %16 = vector.shape_cast %15 : vector<24xf32> to vector<24x1xf32>
    %cst_13 = arith.constant 6.400000e+01 : f32
    %17 = vector.broadcast %cst_13 : f32 to vector<24x1xf32>
    %18 = arith.divf %16, %17 : vector<24x1xf32>
    %19 = vector.broadcast %11 : vector<24x1xf32> to vector<24x64xf32>
    %20 = arith.subf %3, %19 : vector<24x64xf32>
    %cst_14 = arith.constant 9.99999974E-6 : f32
    %21 = vector.broadcast %cst_14 : f32 to vector<24x1xf32>
    %22 = arith.addf %18, %21 : vector<24x1xf32>
    %23 = math.rsqrt %22 : vector<24x1xf32>
    %24 = vector.broadcast %23 : vector<24x1xf32> to vector<24x64xf32>
    %25 = arith.mulf %20, %24 : vector<24x64xf32>
    %26 = vector.broadcast %5 : vector<1x64xf32> to vector<24x64xf32>
    %27 = arith.mulf %25, %26 : vector<24x64xf32>
    %28 = vector.broadcast %7 : vector<1x64xf32> to vector<24x64xf32>
    %29 = arith.addf %27, %28 : vector<24x64xf32>
    %c0_15 = arith.constant 0 : index
    %c0_16 = arith.constant 0 : index
    %c0_17 = arith.constant 0 : index
    %30 = vector.load %arg4[%c0_15, %c0_16, %c0_17] : memref<2x24x64xf32, #tpu.memory_space<vmem>>, vector<1x24x64xf32>
    %31 = vector.shape_cast %30 : vector<1x24x64xf32> to vector<24x64xf32>
    %32 = vector.shape_cast %29 : vector<24x64xf32> to vector<1x24x64xf32>
    tpu.vector_store %arg4[%c0_15, %c0_16, %c0_17], %32 {strides = array<i32>} : memref<2x24x64xf32, #tpu.memory_space<vmem>>, vector<1x24x64xf32>,
    %c1 = arith.constant 1 : index
    %c0_18 = arith.constant 0 : index
    %c0_19 = arith.constant 0 : index
    %33 = vector.load %arg0[%c1, %c0_18, %c0_19] : memref<2x24x64xf32, #tpu.memory_space<vmem>>, vector<1x24x64xf32>
    %34 = vector.shape_cast %33 : vector<1x24x64xf32> to vector<24x64xf32>
    %cst_20 = arith.constant dense<0.000000e+00> : vector<24x64xf32>
    %35 = tpu.matmul %34, %0, %cst_20 {dimension_numbers = #tpu.dot_dimension_numbers<[1], [0], [0], [1], [0, 0, 1, 1], [], []>} : vector<24x64xf32>, vector<64x64xf32>, vector<24x64xf32> -> vector<24x64xf32>
    %c1_21 = arith.constant 1 : index
    %c0_22 = arith.constant 0 : index
    %c0_23 = arith.constant 0 : index
    %36 = vector.load %arg2[%c1_21, %c0_22, %c0_23] : memref<2x1x64xf32, #tpu.memory_space<vmem>>, vector<1x1x64xf32>
    %37 = vector.shape_cast %36 : vector<1x1x64xf32> to vector<1x64xf32>
    %c1_24 = arith.constant 1 : index
    %c0_25 = arith.constant 0 : index
    %c0_26 = arith.constant 0 : index
    %38 = vector.load %arg3[%c1_24, %c0_25, %c0_26] : memref<2x1x64xf32, #tpu.memory_space<vmem>>, vector<1x1x64xf32>
    %39 = vector.shape_cast %38 : vector<1x1x64xf32> to vector<1x64xf32>
    %cst_27 = arith.constant dense<0.000000e+00> : vector<24xf32>
    %40 = vector.multi_reduction <add>, %35, %cst_27 [1] : vector<24x64xf32> to vector<24xf32>
    %41 = vector.shape_cast %40 : vector<24xf32> to vector<24x1xf32>
    %cst_28 = arith.constant 6.400000e+01 : f32
    %42 = vector.broadcast %cst_28 : f32 to vector<24x1xf32>
    %43 = arith.divf %41, %42 : vector<24x1xf32>
    %44 = vector.broadcast %43 : vector<24x1xf32> to vector<24x64xf32>
    %45 = arith.subf %35, %44 : vector<24x64xf32>
    %46 = arith.mulf %45, %45 : vector<24x64xf32>
    %cst_29 = arith.constant dense<0.000000e+00> : vector<24xf32>
    %47 = vector.multi_reduction <add>, %46, %cst_29 [1] : vector<24x64xf32> to vector<24xf32>
    %48 = vector.shape_cast %47 : vector<24xf32> to vector<24x1xf32>
    %cst_30 = arith.constant 6.400000e+01 : f32
    %49 = vector.broadcast %cst_30 : f32 to vector<24x1xf32>
    %50 = arith.divf %48, %49 : vector<24x1xf32>
    %51 = vector.broadcast %43 : vector<24x1xf32> to vector<24x64xf32>
    %52 = arith.subf %35, %51 : vector<24x64xf32>
    %cst_31 = arith.constant 9.99999974E-6 : f32
    %53 = vector.broadcast %cst_31 : f32 to vector<24x1xf32>
    %54 = arith.addf %50, %53 : vector<24x1xf32>
    %55 = math.rsqrt %54 : vector<24x1xf32>
    %56 = vector.broadcast %55 : vector<24x1xf32> to vector<24x64xf32>
    %57 = arith.mulf %52, %56 : vector<24x64xf32>
    %58 = vector.broadcast %37 : vector<1x64xf32> to vector<24x64xf32>
    %59 = arith.mulf %57, %58 : vector<24x64xf32>
    %60 = vector.broadcast %39 : vector<1x64xf32> to vector<24x64xf32>
    %61 = arith.addf %59, %60 : vector<24x64xf32>
    %c1_32 = arith.constant 1 : index
    %c0_33 = arith.constant 0 : index
    %c0_34 = arith.constant 0 : index
    %62 = vector.load %arg4[%c1_32, %c0_33, %c0_34] : memref<2x24x64xf32, #tpu.memory_space<vmem>>, vector<1x24x64xf32>
    %63 = vector.shape_cast %62 : vector<1x24x64xf32> to vector<24x64xf32>
    %64 = vector.shape_cast %61 : vector<24x64xf32> to vector<1x24x64xf32>
    tpu.vector_store %arg4[%c1_32, %c0_33, %c0_34], %64 {strides = array<i32>} : memref<2x24x64xf32, #tpu.memory_space<vmem>>, vector<1x24x64xf32>,
    return
  }
}

module attributes {stable_mosaic.version = 11 : i64} {
  func.func @_branch_kernel(%arg0: memref<16x640xf32, #tpu.memory_space<vmem>>, %arg1: memref<640x32xf32, #tpu.memory_space<vmem>>, %arg2: memref<1x32xf32, #tpu.memory_space<vmem>>, %arg3: memref<1x32xf32, #tpu.memory_space<vmem>>, %arg4: memref<1x32xf32, #tpu.memory_space<vmem>>, %arg5: memref<1x32xf32, #tpu.memory_space<vmem>>, %arg6: memref<9x32xf32, #tpu.memory_space<vmem>>, %arg7: memref<2x1x32xf32, #tpu.memory_space<vmem>>, %arg8: memref<2x1x32xf32, #tpu.memory_space<vmem>>, %arg9: memref<2x32x96xf32, #tpu.memory_space<vmem>>, %arg10: memref<2x32x32xf32, #tpu.memory_space<vmem>>, %arg11: memref<2x1x32xf32, #tpu.memory_space<vmem>>, %arg12: memref<2x1x32xf32, #tpu.memory_space<vmem>>, %arg13: memref<2x1x32xf32, #tpu.memory_space<vmem>>, %arg14: memref<2x32x64xf32, #tpu.memory_space<vmem>>, %arg15: memref<2x1x64xf32, #tpu.memory_space<vmem>>, %arg16: memref<2x64x32xf32, #tpu.memory_space<vmem>>, %arg17: memref<2x1x32xf32, #tpu.memory_space<vmem>>, %arg18: memref<2x32xf32, #tpu.memory_space<vmem>>) attributes {dimension_semantics = [], scalar_prefetch = 0 : i64, scratch_operands = 0 : i64, tpu.core_type = #tpu.core_type<tc>} {
    %c0 = arith.constant 0 : index
    %c0_0 = arith.constant 0 : index
    %0 = vector.load %arg0[%c0, %c0_0] : memref<16x640xf32, #tpu.memory_space<vmem>>, vector<16x640xf32>
    %c0_1 = arith.constant 0 : index
    %c0_2 = arith.constant 0 : index
    %1 = vector.load %arg1[%c0_1, %c0_2] : memref<640x32xf32, #tpu.memory_space<vmem>>, vector<640x32xf32>
    %cst = arith.constant dense<0.000000e+00> : vector<16x32xf32>
    %2 = tpu.matmul %0, %1, %cst {dimension_numbers = #tpu.dot_dimension_numbers<[1], [0], [0], [1], [0, 0, 1, 1], [], []>} : vector<16x640xf32>, vector<640x32xf32>, vector<16x32xf32> -> vector<16x32xf32>
    %c0_3 = arith.constant 0 : index
    %c0_4 = arith.constant 0 : index
    %3 = vector.load %arg2[%c0_3, %c0_4] : memref<1x32xf32, #tpu.memory_space<vmem>>, vector<1x32xf32>
    %4 = vector.broadcast %3 : vector<1x32xf32> to vector<16x32xf32>
    %5 = arith.addf %2, %4 : vector<16x32xf32>
    %c0_5 = arith.constant 0 : index
    %c0_6 = arith.constant 0 : index
    %6 = vector.load %arg3[%c0_5, %c0_6] : memref<1x32xf32, #tpu.memory_space<vmem>>, vector<1x32xf32>
    %c0_7 = arith.constant 0 : index
    %c0_8 = arith.constant 0 : index
    %7 = vector.load %arg4[%c0_7, %c0_8] : memref<1x32xf32, #tpu.memory_space<vmem>>, vector<1x32xf32>
    %cst_9 = arith.constant dense<0.000000e+00> : vector<16xf32>
    %8 = vector.multi_reduction <add>, %5, %cst_9 [1] : vector<16x32xf32> to vector<16xf32>
    %9 = vector.shape_cast %8 : vector<16xf32> to vector<16x1xf32>
    %cst_10 = arith.constant 3.200000e+01 : f32
    %10 = vector.broadcast %cst_10 : f32 to vector<16x1xf32>
    %11 = arith.divf %9, %10 : vector<16x1xf32>
    %12 = vector.broadcast %11 : vector<16x1xf32> to vector<16x32xf32>
    %13 = arith.subf %5, %12 : vector<16x32xf32>
    %14 = arith.mulf %13, %13 : vector<16x32xf32>
    %cst_11 = arith.constant dense<0.000000e+00> : vector<16xf32>
    %15 = vector.multi_reduction <add>, %14, %cst_11 [1] : vector<16x32xf32> to vector<16xf32>
    %16 = vector.shape_cast %15 : vector<16xf32> to vector<16x1xf32>
    %cst_12 = arith.constant 3.200000e+01 : f32
    %17 = vector.broadcast %cst_12 : f32 to vector<16x1xf32>
    %18 = arith.divf %16, %17 : vector<16x1xf32>
    %19 = vector.broadcast %11 : vector<16x1xf32> to vector<16x32xf32>
    %20 = arith.subf %5, %19 : vector<16x32xf32>
    %cst_13 = arith.constant 9.99999974E-6 : f32
    %21 = vector.broadcast %cst_13 : f32 to vector<16x1xf32>
    %22 = arith.addf %18, %21 : vector<16x1xf32>
    %23 = math.rsqrt %22 : vector<16x1xf32>
    %24 = vector.broadcast %23 : vector<16x1xf32> to vector<16x32xf32>
    %25 = arith.mulf %20, %24 : vector<16x32xf32>
    %26 = vector.broadcast %6 : vector<1x32xf32> to vector<16x32xf32>
    %27 = arith.mulf %25, %26 : vector<16x32xf32>
    %28 = vector.broadcast %7 : vector<1x32xf32> to vector<16x32xf32>
    %29 = arith.addf %27, %28 : vector<16x32xf32>
    %c0_14 = arith.constant 0 : index
    %c0_15 = arith.constant 0 : index
    %30 = vector.load %arg6[%c0_14, %c0_15] : memref<9x32xf32, #tpu.memory_space<vmem>>, vector<9x32xf32>
    %c0_16 = arith.constant 0 : index
    %c0_17 = arith.constant 0 : index
    %31 = vector.load %arg5[%c0_16, %c0_17] : memref<1x32xf32, #tpu.memory_space<vmem>>, vector<1x32xf32>
    %32 = vector.extract_strided_slice %30 {offsets = [0, 0], sizes = [1, 32], strides = [1, 1]} : vector<9x32xf32> to vector<1x32xf32>
    %33 = arith.addf %31, %32 : vector<1x32xf32>
    %34 = vector.extract_strided_slice %30 {offsets = [1, 0], sizes = [8, 32], strides = [1, 1]} : vector<9x32xf32> to vector<8x32xf32>
    %35 = vector.extract_strided_slice %29 {offsets = [0, 0], sizes = [8, 32], strides = [1, 1]} : vector<16x32xf32> to vector<8x32xf32>
    %36 = arith.addf %35, %34 : vector<8x32xf32>
    %37 = vector.extract_strided_slice %29 {offsets = [8, 0], sizes = [8, 32], strides = [1, 1]} : vector<16x32xf32> to vector<8x32xf32>
    %38 = arith.addf %37, %34 : vector<8x32xf32>
    %39 = tpu.concatenate %33, %36, %33, %38 in 0 : vector<1x32xf32>, vector<8x32xf32>, vector<1x32xf32>, vector<8x32xf32> -> vector<18x32xf32>
    %c0_18 = arith.constant 0 : index
    %c0_19 = arith.constant 0 : index
    %c0_20 = arith.constant 0 : index
    %40 = vector.load %arg7[%c0_18, %c0_19, %c0_20] : memref<2x1x32xf32, #tpu.memory_space<vmem>>, vector<1x1x32xf32>
    %41 = vector.shape_cast %40 : vector<1x1x32xf32> to vector<1x32xf32>
    %c0_21 = arith.constant 0 : index
    %c0_22 = arith.constant 0 : index
    %c0_23 = arith.constant 0 : index
    %42 = vector.load %arg8[%c0_21, %c0_22, %c0_23] : memref<2x1x32xf32, #tpu.memory_space<vmem>>, vector<1x1x32xf32>
    %43 = vector.shape_cast %42 : vector<1x1x32xf32> to vector<1x32xf32>
    %cst_24 = arith.constant dense<0.000000e+00> : vector<18xf32>
    %44 = vector.multi_reduction <add>, %39, %cst_24 [1] : vector<18x32xf32> to vector<18xf32>
    %45 = vector.shape_cast %44 : vector<18xf32> to vector<18x1xf32>
    %cst_25 = arith.constant 3.200000e+01 : f32
    %46 = vector.broadcast %cst_25 : f32 to vector<18x1xf32>
    %47 = arith.divf %45, %46 : vector<18x1xf32>
    %48 = vector.broadcast %47 : vector<18x1xf32> to vector<18x32xf32>
    %49 = arith.subf %39, %48 : vector<18x32xf32>
    %50 = arith.mulf %49, %49 : vector<18x32xf32>
    %cst_26 = arith.constant dense<0.000000e+00> : vector<18xf32>
    %51 = vector.multi_reduction <add>, %50, %cst_26 [1] : vector<18x32xf32> to vector<18xf32>
    %52 = vector.shape_cast %51 : vector<18xf32> to vector<18x1xf32>
    %cst_27 = arith.constant 3.200000e+01 : f32
    %53 = vector.broadcast %cst_27 : f32 to vector<18x1xf32>
    %54 = arith.divf %52, %53 : vector<18x1xf32>
    %55 = vector.broadcast %47 : vector<18x1xf32> to vector<18x32xf32>
    %56 = arith.subf %39, %55 : vector<18x32xf32>
    %cst_28 = arith.constant 9.99999974E-6 : f32
    %57 = vector.broadcast %cst_28 : f32 to vector<18x1xf32>
    %58 = arith.addf %54, %57 : vector<18x1xf32>
    %59 = math.rsqrt %58 : vector<18x1xf32>
    %60 = vector.broadcast %59 : vector<18x1xf32> to vector<18x32xf32>
    %61 = arith.mulf %56, %60 : vector<18x32xf32>
    %62 = vector.broadcast %41 : vector<1x32xf32> to vector<18x32xf32>
    %63 = arith.mulf %61, %62 : vector<18x32xf32>
    %64 = vector.broadcast %43 : vector<1x32xf32> to vector<18x32xf32>
    %65 = arith.addf %63, %64 : vector<18x32xf32>
    %c0_29 = arith.constant 0 : index
    %c0_30 = arith.constant 0 : index
    %c0_31 = arith.constant 0 : index
    %66 = vector.load %arg9[%c0_29, %c0_30, %c0_31] : memref<2x32x96xf32, #tpu.memory_space<vmem>>, vector<1x32x96xf32>
    %67 = vector.shape_cast %66 : vector<1x32x96xf32> to vector<32x96xf32>
    %cst_32 = arith.constant dense<0.000000e+00> : vector<18x96xf32>
    %68 = tpu.matmul %65, %67, %cst_32 {dimension_numbers = #tpu.dot_dimension_numbers<[1], [0], [0], [1], [0, 0, 1, 1], [], []>} : vector<18x32xf32>, vector<32x96xf32>, vector<18x96xf32> -> vector<18x96xf32>
    %69 = vector.extract_strided_slice %68 {offsets = [0, 0], sizes = [9, 96], strides = [1, 1]} : vector<18x96xf32> to vector<9x96xf32>
    %70 = vector.extract_strided_slice %69 {offsets = [0, 0], sizes = [9, 16], strides = [1, 1]} : vector<9x96xf32> to vector<9x16xf32>
    %71 = vector.extract_strided_slice %69 {offsets = [0, 32], sizes = [9, 16], strides = [1, 1]} : vector<9x96xf32> to vector<9x16xf32>
    %72 = vector.extract_strided_slice %69 {offsets = [0, 64], sizes = [9, 16], strides = [1, 1]} : vector<9x96xf32> to vector<9x16xf32>
    %cst_33 = arith.constant dense<0.000000e+00> : vector<9x9xf32>
    %73 = tpu.matmul %70, %71, %cst_33 {dimension_numbers = #tpu.dot_dimension_numbers<[1], [1], [0], [0], [0, 0, 1, 0], [], []>} : vector<9x16xf32>, vector<9x16xf32>, vector<9x9xf32> -> vector<9x9xf32>
    %cst_34 = arith.constant 2.500000e-01 : f32
    %74 = vector.broadcast %cst_34 : f32 to vector<9x9xf32>
    %75 = arith.mulf %73, %74 : vector<9x9xf32>
    %cst_35 = arith.constant dense<0xFF800000> : vector<9xf32>
    %76 = vector.multi_reduction <maximumf>, %75, %cst_35 [1] : vector<9x9xf32> to vector<9xf32>
    %77 = vector.shape_cast %76 : vector<9xf32> to vector<9x1xf32>
    %78 = vector.broadcast %77 : vector<9x1xf32> to vector<9x9xf32>
    %79 = arith.subf %75, %78 : vector<9x9xf32>
    %80 = math.exp %79 : vector<9x9xf32>
    %cst_36 = arith.constant dense<0.000000e+00> : vector<9xf32>
    %81 = vector.multi_reduction <add>, %80, %cst_36 [1] : vector<9x9xf32> to vector<9xf32>
    %82 = vector.shape_cast %81 : vector<9xf32> to vector<9x1xf32>
    %83 = tpu.reciprocal %82 {approx = true} : vector<9x1xf32> -> vector<9x1xf32>
    %84 = vector.broadcast %83 : vector<9x1xf32> to vector<9x9xf32>
    %85 = arith.mulf %80, %84 : vector<9x9xf32>
    %cst_37 = arith.constant dense<0.000000e+00> : vector<9x16xf32>
    %86 = tpu.matmul %85, %72, %cst_37 {dimension_numbers = #tpu.dot_dimension_numbers<[1], [0], [0], [1], [0, 0, 1, 1], [], []>} : vector<9x9xf32>, vector<9x16xf32>, vector<9x16xf32> -> vector<9x16xf32>
    %87 = vector.extract_strided_slice %69 {offsets = [0, 16], sizes = [9, 16], strides = [1, 1]} : vector<9x96xf32> to vector<9x16xf32>
    %88 = vector.extract_strided_slice %69 {offsets = [0, 48], sizes = [9, 16], strides = [1, 1]} : vector<9x96xf32> to vector<9x16xf32>
    %89 = vector.extract_strided_slice %69 {offsets = [0, 80], sizes = [9, 16], strides = [1, 1]} : vector<9x96xf32> to vector<9x16xf32>
    %cst_38 = arith.constant dense<0.000000e+00> : vector<9x9xf32>
    %90 = tpu.matmul %87, %88, %cst_38 {dimension_numbers = #tpu.dot_dimension_numbers<[1], [1], [0], [0], [0, 0, 1, 0], [], []>} : vector<9x16xf32>, vector<9x16xf32>, vector<9x9xf32> -> vector<9x9xf32>
    %cst_39 = arith.constant 2.500000e-01 : f32
    %91 = vector.broadcast %cst_39 : f32 to vector<9x9xf32>
    %92 = arith.mulf %90, %91 : vector<9x9xf32>
    %cst_40 = arith.constant dense<0xFF800000> : vector<9xf32>
    %93 = vector.multi_reduction <maximumf>, %92, %cst_40 [1] : vector<9x9xf32> to vector<9xf32>
    %94 = vector.shape_cast %93 : vector<9xf32> to vector<9x1xf32>
    %95 = vector.broadcast %94 : vector<9x1xf32> to vector<9x9xf32>
    %96 = arith.subf %92, %95 : vector<9x9xf32>
    %97 = math.exp %96 : vector<9x9xf32>
    %cst_41 = arith.constant dense<0.000000e+00> : vector<9xf32>
    %98 = vector.multi_reduction <add>, %97, %cst_41 [1] : vector<9x9xf32> to vector<9xf32>
    %99 = vector.shape_cast %98 : vector<9xf32> to vector<9x1xf32>
    %100 = tpu.reciprocal %99 {approx = true} : vector<9x1xf32> -> vector<9x1xf32>
    %101 = vector.broadcast %100 : vector<9x1xf32> to vector<9x9xf32>
    %102 = arith.mulf %97, %101 : vector<9x9xf32>
    %cst_42 = arith.constant dense<0.000000e+00> : vector<9x16xf32>
    %103 = tpu.matmul %102, %89, %cst_42 {dimension_numbers = #tpu.dot_dimension_numbers<[1], [0], [0], [1], [0, 0, 1, 1], [], []>} : vector<9x9xf32>, vector<9x16xf32>, vector<9x16xf32> -> vector<9x16xf32>
    %104 = tpu.concatenate %86, %103 in 1 : vector<9x16xf32>, vector<9x16xf32> -> vector<9x32xf32>
    %105 = vector.extract_strided_slice %68 {offsets = [9, 0], sizes = [9, 96], strides = [1, 1]} : vector<18x96xf32> to vector<9x96xf32>
    %106 = vector.extract_strided_slice %105 {offsets = [0, 0], sizes = [9, 16], strides = [1, 1]} : vector<9x96xf32> to vector<9x16xf32>
    %107 = vector.extract_strided_slice %105 {offsets = [0, 32], sizes = [9, 16], strides = [1, 1]} : vector<9x96xf32> to vector<9x16xf32>
    %108 = vector.extract_strided_slice %105 {offsets = [0, 64], sizes = [9, 16], strides = [1, 1]} : vector<9x96xf32> to vector<9x16xf32>
    %cst_43 = arith.constant dense<0.000000e+00> : vector<9x9xf32>
    %109 = tpu.matmul %106, %107, %cst_43 {dimension_numbers = #tpu.dot_dimension_numbers<[1], [1], [0], [0], [0, 0, 1, 0], [], []>} : vector<9x16xf32>, vector<9x16xf32>, vector<9x9xf32> -> vector<9x9xf32>
    %cst_44 = arith.constant 2.500000e-01 : f32
    %110 = vector.broadcast %cst_44 : f32 to vector<9x9xf32>
    %111 = arith.mulf %109, %110 : vector<9x9xf32>
    %cst_45 = arith.constant dense<0xFF800000> : vector<9xf32>
    %112 = vector.multi_reduction <maximumf>, %111, %cst_45 [1] : vector<9x9xf32> to vector<9xf32>
    %113 = vector.shape_cast %112 : vector<9xf32> to vector<9x1xf32>
    %114 = vector.broadcast %113 : vector<9x1xf32> to vector<9x9xf32>
    %115 = arith.subf %111, %114 : vector<9x9xf32>
    %116 = math.exp %115 : vector<9x9xf32>
    %cst_46 = arith.constant dense<0.000000e+00> : vector<9xf32>
    %117 = vector.multi_reduction <add>, %116, %cst_46 [1] : vector<9x9xf32> to vector<9xf32>
    %118 = vector.shape_cast %117 : vector<9xf32> to vector<9x1xf32>
    %119 = tpu.reciprocal %118 {approx = true} : vector<9x1xf32> -> vector<9x1xf32>
    %120 = vector.broadcast %119 : vector<9x1xf32> to vector<9x9xf32>
    %121 = arith.mulf %116, %120 : vector<9x9xf32>
    %cst_47 = arith.constant dense<0.000000e+00> : vector<9x16xf32>
    %122 = tpu.matmul %121, %108, %cst_47 {dimension_numbers = #tpu.dot_dimension_numbers<[1], [0], [0], [1], [0, 0, 1, 1], [], []>} : vector<9x9xf32>, vector<9x16xf32>, vector<9x16xf32> -> vector<9x16xf32>
    %123 = vector.extract_strided_slice %105 {offsets = [0, 16], sizes = [9, 16], strides = [1, 1]} : vector<9x96xf32> to vector<9x16xf32>
    %124 = vector.extract_strided_slice %105 {offsets = [0, 48], sizes = [9, 16], strides = [1, 1]} : vector<9x96xf32> to vector<9x16xf32>
    %125 = vector.extract_strided_slice %105 {offsets = [0, 80], sizes = [9, 16], strides = [1, 1]} : vector<9x96xf32> to vector<9x16xf32>
    %cst_48 = arith.constant dense<0.000000e+00> : vector<9x9xf32>
    %126 = tpu.matmul %123, %124, %cst_48 {dimension_numbers = #tpu.dot_dimension_numbers<[1], [1], [0], [0], [0, 0, 1, 0], [], []>} : vector<9x16xf32>, vector<9x16xf32>, vector<9x9xf32> -> vector<9x9xf32>
    %cst_49 = arith.constant 2.500000e-01 : f32
    %127 = vector.broadcast %cst_49 : f32 to vector<9x9xf32>
    %128 = arith.mulf %126, %127 : vector<9x9xf32>
    %cst_50 = arith.constant dense<0xFF800000> : vector<9xf32>
    %129 = vector.multi_reduction <maximumf>, %128, %cst_50 [1] : vector<9x9xf32> to vector<9xf32>
    %130 = vector.shape_cast %129 : vector<9xf32> to vector<9x1xf32>
    %131 = vector.broadcast %130 : vector<9x1xf32> to vector<9x9xf32>
    %132 = arith.subf %128, %131 : vector<9x9xf32>
    %133 = math.exp %132 : vector<9x9xf32>
    %cst_51 = arith.constant dense<0.000000e+00> : vector<9xf32>
    %134 = vector.multi_reduction <add>, %133, %cst_51 [1] : vector<9x9xf32> to vector<9xf32>
    %135 = vector.shape_cast %134 : vector<9xf32> to vector<9x1xf32>
    %136 = tpu.reciprocal %135 {approx = true} : vector<9x1xf32> -> vector<9x1xf32>
    %137 = vector.broadcast %136 : vector<9x1xf32> to vector<9x9xf32>
    %138 = arith.mulf %133, %137 : vector<9x9xf32>
    %cst_52 = arith.constant dense<0.000000e+00> : vector<9x16xf32>
    %139 = tpu.matmul %138, %125, %cst_52 {dimension_numbers = #tpu.dot_dimension_numbers<[1], [0], [0], [1], [0, 0, 1, 1], [], []>} : vector<9x9xf32>, vector<9x16xf32>, vector<9x16xf32> -> vector<9x16xf32>
    %140 = tpu.concatenate %122, %139 in 1 : vector<9x16xf32>, vector<9x16xf32> -> vector<9x32xf32>
    %141 = tpu.concatenate %104, %140 in 0 : vector<9x32xf32>, vector<9x32xf32> -> vector<18x32xf32>
    %c0_53 = arith.constant 0 : index
    %c0_54 = arith.constant 0 : index
    %c0_55 = arith.constant 0 : index
    %142 = vector.load %arg10[%c0_53, %c0_54, %c0_55] : memref<2x32x32xf32, #tpu.memory_space<vmem>>, vector<1x32x32xf32>
    %143 = vector.shape_cast %142 : vector<1x32x32xf32> to vector<32x32xf32>
    %cst_56 = arith.constant dense<0.000000e+00> : vector<18x32xf32>
    %144 = tpu.matmul %141, %143, %cst_56 {dimension_numbers = #tpu.dot_dimension_numbers<[1], [0], [0], [1], [0, 0, 1, 1], [], []>} : vector<18x32xf32>, vector<32x32xf32>, vector<18x32xf32> -> vector<18x32xf32>
    %c0_57 = arith.constant 0 : index
    %c0_58 = arith.constant 0 : index
    %c0_59 = arith.constant 0 : index
    %145 = vector.load %arg11[%c0_57, %c0_58, %c0_59] : memref<2x1x32xf32, #tpu.memory_space<vmem>>, vector<1x1x32xf32>
    %146 = vector.shape_cast %145 : vector<1x1x32xf32> to vector<1x32xf32>
    %147 = vector.broadcast %146 : vector<1x32xf32> to vector<18x32xf32>
    %148 = arith.addf %144, %147 : vector<18x32xf32>
    %149 = arith.addf %39, %148 : vector<18x32xf32>
    %c0_60 = arith.constant 0 : index
    %c0_61 = arith.constant 0 : index
    %c0_62 = arith.constant 0 : index
    %150 = vector.load %arg12[%c0_60, %c0_61, %c0_62] : memref<2x1x32xf32, #tpu.memory_space<vmem>>, vector<1x1x32xf32>
    %151 = vector.shape_cast %150 : vector<1x1x32xf32> to vector<1x32xf32>
    %c0_63 = arith.constant 0 : index
    %c0_64 = arith.constant 0 : index
    %c0_65 = arith.constant 0 : index
    %152 = vector.load %arg13[%c0_63, %c0_64, %c0_65] : memref<2x1x32xf32, #tpu.memory_space<vmem>>, vector<1x1x32xf32>
    %153 = vector.shape_cast %152 : vector<1x1x32xf32> to vector<1x32xf32>
    %cst_66 = arith.constant dense<0.000000e+00> : vector<18xf32>
    %154 = vector.multi_reduction <add>, %149, %cst_66 [1] : vector<18x32xf32> to vector<18xf32>
    %155 = vector.shape_cast %154 : vector<18xf32> to vector<18x1xf32>
    %cst_67 = arith.constant 3.200000e+01 : f32
    %156 = vector.broadcast %cst_67 : f32 to vector<18x1xf32>
    %157 = arith.divf %155, %156 : vector<18x1xf32>
    %158 = vector.broadcast %157 : vector<18x1xf32> to vector<18x32xf32>
    %159 = arith.subf %149, %158 : vector<18x32xf32>
    %160 = arith.mulf %159, %159 : vector<18x32xf32>
    %cst_68 = arith.constant dense<0.000000e+00> : vector<18xf32>
    %161 = vector.multi_reduction <add>, %160, %cst_68 [1] : vector<18x32xf32> to vector<18xf32>
    %162 = vector.shape_cast %161 : vector<18xf32> to vector<18x1xf32>
    %cst_69 = arith.constant 3.200000e+01 : f32
    %163 = vector.broadcast %cst_69 : f32 to vector<18x1xf32>
    %164 = arith.divf %162, %163 : vector<18x1xf32>
    %165 = vector.broadcast %157 : vector<18x1xf32> to vector<18x32xf32>
    %166 = arith.subf %149, %165 : vector<18x32xf32>
    %cst_70 = arith.constant 9.99999974E-6 : f32
    %167 = vector.broadcast %cst_70 : f32 to vector<18x1xf32>
    %168 = arith.addf %164, %167 : vector<18x1xf32>
    %169 = math.rsqrt %168 : vector<18x1xf32>
    %170 = vector.broadcast %169 : vector<18x1xf32> to vector<18x32xf32>
    %171 = arith.mulf %166, %170 : vector<18x32xf32>
    %172 = vector.broadcast %151 : vector<1x32xf32> to vector<18x32xf32>
    %173 = arith.mulf %171, %172 : vector<18x32xf32>
    %174 = vector.broadcast %153 : vector<1x32xf32> to vector<18x32xf32>
    %175 = arith.addf %173, %174 : vector<18x32xf32>
    %c0_71 = arith.constant 0 : index
    %c0_72 = arith.constant 0 : index
    %c0_73 = arith.constant 0 : index
    %176 = vector.load %arg14[%c0_71, %c0_72, %c0_73] : memref<2x32x64xf32, #tpu.memory_space<vmem>>, vector<1x32x64xf32>
    %177 = vector.shape_cast %176 : vector<1x32x64xf32> to vector<32x64xf32>
    %cst_74 = arith.constant dense<0.000000e+00> : vector<18x64xf32>
    %178 = tpu.matmul %175, %177, %cst_74 {dimension_numbers = #tpu.dot_dimension_numbers<[1], [0], [0], [1], [0, 0, 1, 1], [], []>} : vector<18x32xf32>, vector<32x64xf32>, vector<18x64xf32> -> vector<18x64xf32>
    %c0_75 = arith.constant 0 : index
    %c0_76 = arith.constant 0 : index
    %c0_77 = arith.constant 0 : index
    %179 = vector.load %arg15[%c0_75, %c0_76, %c0_77] : memref<2x1x64xf32, #tpu.memory_space<vmem>>, vector<1x1x64xf32>
    %180 = vector.shape_cast %179 : vector<1x1x64xf32> to vector<1x64xf32>
    %181 = vector.broadcast %180 : vector<1x64xf32> to vector<18x64xf32>
    %182 = arith.addf %178, %181 : vector<18x64xf32>
    %cst_78 = arith.constant 5.000000e-01 : f32
    %183 = vector.broadcast %cst_78 : f32 to vector<18x64xf32>
    %184 = arith.mulf %183, %182 : vector<18x64xf32>
    %cst_79 = arith.constant 0.707106769 : f32
    %185 = vector.broadcast %cst_79 : f32 to vector<18x64xf32>
    %186 = arith.mulf %182, %185 : vector<18x64xf32>
    %187 = math.absf %186 : vector<18x64xf32>
    %cst_80 = arith.constant 0.327591091 : f32
    %188 = vector.broadcast %cst_80 : f32 to vector<18x64xf32>
    %189 = arith.mulf %188, %187 : vector<18x64xf32>
    %cst_81 = arith.constant 1.000000e+00 : f32
    %190 = vector.broadcast %cst_81 : f32 to vector<18x64xf32>
    %191 = arith.addf %190, %189 : vector<18x64xf32>
    %cst_82 = arith.constant 1.000000e+00 : f32
    %192 = vector.broadcast %cst_82 : f32 to vector<18x64xf32>
    %193 = arith.divf %192, %191 : vector<18x64xf32>
    %cst_83 = arith.constant 1.06140542 : f32
    %194 = vector.broadcast %cst_83 : f32 to vector<18x64xf32>
    %195 = arith.mulf %194, %193 : vector<18x64xf32>
    %cst_84 = arith.constant -1.45315206 : f32
    %196 = vector.broadcast %cst_84 : f32 to vector<18x64xf32>
    %197 = arith.addf %195, %196 : vector<18x64xf32>
    %198 = arith.mulf %197, %193 : vector<18x64xf32>
    %cst_85 = arith.constant 1.42141378 : f32
    %199 = vector.broadcast %cst_85 : f32 to vector<18x64xf32>
    %200 = arith.addf %198, %199 : vector<18x64xf32>
    %201 = arith.mulf %200, %193 : vector<18x64xf32>
    %cst_86 = arith.constant -0.284496725 : f32
    %202 = vector.broadcast %cst_86 : f32 to vector<18x64xf32>
    %203 = arith.addf %201, %202 : vector<18x64xf32>
    %204 = arith.mulf %203, %193 : vector<18x64xf32>
    %cst_87 = arith.constant 0.254829586 : f32
    %205 = vector.broadcast %cst_87 : f32 to vector<18x64xf32>
    %206 = arith.addf %204, %205 : vector<18x64xf32>
    %207 = arith.mulf %206, %193 : vector<18x64xf32>
    %cst_88 = arith.constant 0.000000e+00 : f32
    %208 = vector.broadcast %cst_88 : f32 to vector<18x64xf32>
    %209 = arith.subf %208, %187 : vector<18x64xf32>
    %210 = arith.mulf %209, %187 : vector<18x64xf32>
    %211 = math.exp %210 : vector<18x64xf32>
    %212 = arith.mulf %207, %211 : vector<18x64xf32>
    %cst_89 = arith.constant 1.000000e+00 : f32
    %213 = vector.broadcast %cst_89 : f32 to vector<18x64xf32>
    %214 = arith.subf %213, %212 : vector<18x64xf32>
    %cst_90 = arith.constant 0.000000e+00 : f32
    %215 = vector.broadcast %cst_90 : f32 to vector<18x64xf32>
    %216 = arith.cmpf olt, %186, %215 : vector<18x64xf32>
    %cst_91 = arith.constant 0.000000e+00 : f32
    %217 = vector.broadcast %cst_91 : f32 to vector<18x64xf32>
    %218 = arith.subf %217, %214 : vector<18x64xf32>
    %219 = arith.select %216, %218, %214 : vector<18x64xi1>, vector<18x64xf32>
    %cst_92 = arith.constant 1.000000e+00 : f32
    %220 = vector.broadcast %cst_92 : f32 to vector<18x64xf32>
    %221 = arith.addf %220, %219 : vector<18x64xf32>
    %222 = arith.mulf %184, %221 : vector<18x64xf32>
    %c0_93 = arith.constant 0 : index
    %c0_94 = arith.constant 0 : index
    %c0_95 = arith.constant 0 : index
    %223 = vector.load %arg16[%c0_93, %c0_94, %c0_95] : memref<2x64x32xf32, #tpu.memory_space<vmem>>, vector<1x64x32xf32>
    %224 = vector.shape_cast %223 : vector<1x64x32xf32> to vector<64x32xf32>
    %cst_96 = arith.constant dense<0.000000e+00> : vector<18x32xf32>
    %225 = tpu.matmul %222, %224, %cst_96 {dimension_numbers = #tpu.dot_dimension_numbers<[1], [0], [0], [1], [0, 0, 1, 1], [], []>} : vector<18x64xf32>, vector<64x32xf32>, vector<18x32xf32> -> vector<18x32xf32>
    %c0_97 = arith.constant 0 : index
    %c0_98 = arith.constant 0 : index
    %c0_99 = arith.constant 0 : index
    %226 = vector.load %arg17[%c0_97, %c0_98, %c0_99] : memref<2x1x32xf32, #tpu.memory_space<vmem>>, vector<1x1x32xf32>
    %227 = vector.shape_cast %226 : vector<1x1x32xf32> to vector<1x32xf32>
    %228 = vector.broadcast %227 : vector<1x32xf32> to vector<18x32xf32>
    %229 = arith.addf %225, %228 : vector<18x32xf32>
    %230 = arith.addf %149, %229 : vector<18x32xf32>
    %c1 = arith.constant 1 : index
    %c0_100 = arith.constant 0 : index
    %c0_101 = arith.constant 0 : index
    %231 = vector.load %arg7[%c1, %c0_100, %c0_101] : memref<2x1x32xf32, #tpu.memory_space<vmem>>, vector<1x1x32xf32>
    %232 = vector.shape_cast %231 : vector<1x1x32xf32> to vector<1x32xf32>
    %c1_102 = arith.constant 1 : index
    %c0_103 = arith.constant 0 : index
    %c0_104 = arith.constant 0 : index
    %233 = vector.load %arg8[%c1_102, %c0_103, %c0_104] : memref<2x1x32xf32, #tpu.memory_space<vmem>>, vector<1x1x32xf32>
    %234 = vector.shape_cast %233 : vector<1x1x32xf32> to vector<1x32xf32>
    %cst_105 = arith.constant dense<0.000000e+00> : vector<18xf32>
    %235 = vector.multi_reduction <add>, %230, %cst_105 [1] : vector<18x32xf32> to vector<18xf32>
    %236 = vector.shape_cast %235 : vector<18xf32> to vector<18x1xf32>
    %cst_106 = arith.constant 3.200000e+01 : f32
    %237 = vector.broadcast %cst_106 : f32 to vector<18x1xf32>
    %238 = arith.divf %236, %237 : vector<18x1xf32>
    %239 = vector.broadcast %238 : vector<18x1xf32> to vector<18x32xf32>
    %240 = arith.subf %230, %239 : vector<18x32xf32>
    %241 = arith.mulf %240, %240 : vector<18x32xf32>
    %cst_107 = arith.constant dense<0.000000e+00> : vector<18xf32>
    %242 = vector.multi_reduction <add>, %241, %cst_107 [1] : vector<18x32xf32> to vector<18xf32>
    %243 = vector.shape_cast %242 : vector<18xf32> to vector<18x1xf32>
    %cst_108 = arith.constant 3.200000e+01 : f32
    %244 = vector.broadcast %cst_108 : f32 to vector<18x1xf32>
    %245 = arith.divf %243, %244 : vector<18x1xf32>
    %246 = vector.broadcast %238 : vector<18x1xf32> to vector<18x32xf32>
    %247 = arith.subf %230, %246 : vector<18x32xf32>
    %cst_109 = arith.constant 9.99999974E-6 : f32
    %248 = vector.broadcast %cst_109 : f32 to vector<18x1xf32>
    %249 = arith.addf %245, %248 : vector<18x1xf32>
    %250 = math.rsqrt %249 : vector<18x1xf32>
    %251 = vector.broadcast %250 : vector<18x1xf32> to vector<18x32xf32>
    %252 = arith.mulf %247, %251 : vector<18x32xf32>
    %253 = vector.broadcast %232 : vector<1x32xf32> to vector<18x32xf32>
    %254 = arith.mulf %252, %253 : vector<18x32xf32>
    %255 = vector.broadcast %234 : vector<1x32xf32> to vector<18x32xf32>
    %256 = arith.addf %254, %255 : vector<18x32xf32>
    %c1_110 = arith.constant 1 : index
    %c0_111 = arith.constant 0 : index
    %c0_112 = arith.constant 0 : index
    %257 = vector.load %arg9[%c1_110, %c0_111, %c0_112] : memref<2x32x96xf32, #tpu.memory_space<vmem>>, vector<1x32x96xf32>
    %258 = vector.shape_cast %257 : vector<1x32x96xf32> to vector<32x96xf32>
    %cst_113 = arith.constant dense<0.000000e+00> : vector<18x96xf32>
    %259 = tpu.matmul %256, %258, %cst_113 {dimension_numbers = #tpu.dot_dimension_numbers<[1], [0], [0], [1], [0, 0, 1, 1], [], []>} : vector<18x32xf32>, vector<32x96xf32>, vector<18x96xf32> -> vector<18x96xf32>
    %260 = vector.extract_strided_slice %259 {offsets = [0, 0], sizes = [9, 96], strides = [1, 1]} : vector<18x96xf32> to vector<9x96xf32>
    %261 = vector.extract_strided_slice %260 {offsets = [0, 0], sizes = [9, 16], strides = [1, 1]} : vector<9x96xf32> to vector<9x16xf32>
    %262 = vector.extract_strided_slice %260 {offsets = [0, 32], sizes = [9, 16], strides = [1, 1]} : vector<9x96xf32> to vector<9x16xf32>
    %263 = vector.extract_strided_slice %260 {offsets = [0, 64], sizes = [9, 16], strides = [1, 1]} : vector<9x96xf32> to vector<9x16xf32>
    %cst_114 = arith.constant dense<0.000000e+00> : vector<9x9xf32>
    %264 = tpu.matmul %261, %262, %cst_114 {dimension_numbers = #tpu.dot_dimension_numbers<[1], [1], [0], [0], [0, 0, 1, 0], [], []>} : vector<9x16xf32>, vector<9x16xf32>, vector<9x9xf32> -> vector<9x9xf32>
    %cst_115 = arith.constant 2.500000e-01 : f32
    %265 = vector.broadcast %cst_115 : f32 to vector<9x9xf32>
    %266 = arith.mulf %264, %265 : vector<9x9xf32>
    %cst_116 = arith.constant dense<0xFF800000> : vector<9xf32>
    %267 = vector.multi_reduction <maximumf>, %266, %cst_116 [1] : vector<9x9xf32> to vector<9xf32>
    %268 = vector.shape_cast %267 : vector<9xf32> to vector<9x1xf32>
    %269 = vector.broadcast %268 : vector<9x1xf32> to vector<9x9xf32>
    %270 = arith.subf %266, %269 : vector<9x9xf32>
    %271 = math.exp %270 : vector<9x9xf32>
    %cst_117 = arith.constant dense<0.000000e+00> : vector<9xf32>
    %272 = vector.multi_reduction <add>, %271, %cst_117 [1] : vector<9x9xf32> to vector<9xf32>
    %273 = vector.shape_cast %272 : vector<9xf32> to vector<9x1xf32>
    %274 = tpu.reciprocal %273 {approx = true} : vector<9x1xf32> -> vector<9x1xf32>
    %275 = vector.broadcast %274 : vector<9x1xf32> to vector<9x9xf32>
    %276 = arith.mulf %271, %275 : vector<9x9xf32>
    %cst_118 = arith.constant dense<0.000000e+00> : vector<9x16xf32>
    %277 = tpu.matmul %276, %263, %cst_118 {dimension_numbers = #tpu.dot_dimension_numbers<[1], [0], [0], [1], [0, 0, 1, 1], [], []>} : vector<9x9xf32>, vector<9x16xf32>, vector<9x16xf32> -> vector<9x16xf32>
    %278 = vector.extract_strided_slice %260 {offsets = [0, 16], sizes = [9, 16], strides = [1, 1]} : vector<9x96xf32> to vector<9x16xf32>
    %279 = vector.extract_strided_slice %260 {offsets = [0, 48], sizes = [9, 16], strides = [1, 1]} : vector<9x96xf32> to vector<9x16xf32>
    %280 = vector.extract_strided_slice %260 {offsets = [0, 80], sizes = [9, 16], strides = [1, 1]} : vector<9x96xf32> to vector<9x16xf32>
    %cst_119 = arith.constant dense<0.000000e+00> : vector<9x9xf32>
    %281 = tpu.matmul %278, %279, %cst_119 {dimension_numbers = #tpu.dot_dimension_numbers<[1], [1], [0], [0], [0, 0, 1, 0], [], []>} : vector<9x16xf32>, vector<9x16xf32>, vector<9x9xf32> -> vector<9x9xf32>
    %cst_120 = arith.constant 2.500000e-01 : f32
    %282 = vector.broadcast %cst_120 : f32 to vector<9x9xf32>
    %283 = arith.mulf %281, %282 : vector<9x9xf32>
    %cst_121 = arith.constant dense<0xFF800000> : vector<9xf32>
    %284 = vector.multi_reduction <maximumf>, %283, %cst_121 [1] : vector<9x9xf32> to vector<9xf32>
    %285 = vector.shape_cast %284 : vector<9xf32> to vector<9x1xf32>
    %286 = vector.broadcast %285 : vector<9x1xf32> to vector<9x9xf32>
    %287 = arith.subf %283, %286 : vector<9x9xf32>
    %288 = math.exp %287 : vector<9x9xf32>
    %cst_122 = arith.constant dense<0.000000e+00> : vector<9xf32>
    %289 = vector.multi_reduction <add>, %288, %cst_122 [1] : vector<9x9xf32> to vector<9xf32>
    %290 = vector.shape_cast %289 : vector<9xf32> to vector<9x1xf32>
    %291 = tpu.reciprocal %290 {approx = true} : vector<9x1xf32> -> vector<9x1xf32>
    %292 = vector.broadcast %291 : vector<9x1xf32> to vector<9x9xf32>
    %293 = arith.mulf %288, %292 : vector<9x9xf32>
    %cst_123 = arith.constant dense<0.000000e+00> : vector<9x16xf32>
    %294 = tpu.matmul %293, %280, %cst_123 {dimension_numbers = #tpu.dot_dimension_numbers<[1], [0], [0], [1], [0, 0, 1, 1], [], []>} : vector<9x9xf32>, vector<9x16xf32>, vector<9x16xf32> -> vector<9x16xf32>
    %295 = tpu.concatenate %277, %294 in 1 : vector<9x16xf32>, vector<9x16xf32> -> vector<9x32xf32>
    %296 = vector.extract_strided_slice %259 {offsets = [9, 0], sizes = [9, 96], strides = [1, 1]} : vector<18x96xf32> to vector<9x96xf32>
    %297 = vector.extract_strided_slice %296 {offsets = [0, 0], sizes = [9, 16], strides = [1, 1]} : vector<9x96xf32> to vector<9x16xf32>
    %298 = vector.extract_strided_slice %296 {offsets = [0, 32], sizes = [9, 16], strides = [1, 1]} : vector<9x96xf32> to vector<9x16xf32>
    %299 = vector.extract_strided_slice %296 {offsets = [0, 64], sizes = [9, 16], strides = [1, 1]} : vector<9x96xf32> to vector<9x16xf32>
    %cst_124 = arith.constant dense<0.000000e+00> : vector<9x9xf32>
    %300 = tpu.matmul %297, %298, %cst_124 {dimension_numbers = #tpu.dot_dimension_numbers<[1], [1], [0], [0], [0, 0, 1, 0], [], []>} : vector<9x16xf32>, vector<9x16xf32>, vector<9x9xf32> -> vector<9x9xf32>
    %cst_125 = arith.constant 2.500000e-01 : f32
    %301 = vector.broadcast %cst_125 : f32 to vector<9x9xf32>
    %302 = arith.mulf %300, %301 : vector<9x9xf32>
    %cst_126 = arith.constant dense<0xFF800000> : vector<9xf32>
    %303 = vector.multi_reduction <maximumf>, %302, %cst_126 [1] : vector<9x9xf32> to vector<9xf32>
    %304 = vector.shape_cast %303 : vector<9xf32> to vector<9x1xf32>
    %305 = vector.broadcast %304 : vector<9x1xf32> to vector<9x9xf32>
    %306 = arith.subf %302, %305 : vector<9x9xf32>
    %307 = math.exp %306 : vector<9x9xf32>
    %cst_127 = arith.constant dense<0.000000e+00> : vector<9xf32>
    %308 = vector.multi_reduction <add>, %307, %cst_127 [1] : vector<9x9xf32> to vector<9xf32>
    %309 = vector.shape_cast %308 : vector<9xf32> to vector<9x1xf32>
    %310 = tpu.reciprocal %309 {approx = true} : vector<9x1xf32> -> vector<9x1xf32>
    %311 = vector.broadcast %310 : vector<9x1xf32> to vector<9x9xf32>
    %312 = arith.mulf %307, %311 : vector<9x9xf32>
    %cst_128 = arith.constant dense<0.000000e+00> : vector<9x16xf32>
    %313 = tpu.matmul %312, %299, %cst_128 {dimension_numbers = #tpu.dot_dimension_numbers<[1], [0], [0], [1], [0, 0, 1, 1], [], []>} : vector<9x9xf32>, vector<9x16xf32>, vector<9x16xf32> -> vector<9x16xf32>
    %314 = vector.extract_strided_slice %296 {offsets = [0, 16], sizes = [9, 16], strides = [1, 1]} : vector<9x96xf32> to vector<9x16xf32>
    %315 = vector.extract_strided_slice %296 {offsets = [0, 48], sizes = [9, 16], strides = [1, 1]} : vector<9x96xf32> to vector<9x16xf32>
    %316 = vector.extract_strided_slice %296 {offsets = [0, 80], sizes = [9, 16], strides = [1, 1]} : vector<9x96xf32> to vector<9x16xf32>
    %cst_129 = arith.constant dense<0.000000e+00> : vector<9x9xf32>
    %317 = tpu.matmul %314, %315, %cst_129 {dimension_numbers = #tpu.dot_dimension_numbers<[1], [1], [0], [0], [0, 0, 1, 0], [], []>} : vector<9x16xf32>, vector<9x16xf32>, vector<9x9xf32> -> vector<9x9xf32>
    %cst_130 = arith.constant 2.500000e-01 : f32
    %318 = vector.broadcast %cst_130 : f32 to vector<9x9xf32>
    %319 = arith.mulf %317, %318 : vector<9x9xf32>
    %cst_131 = arith.constant dense<0xFF800000> : vector<9xf32>
    %320 = vector.multi_reduction <maximumf>, %319, %cst_131 [1] : vector<9x9xf32> to vector<9xf32>
    %321 = vector.shape_cast %320 : vector<9xf32> to vector<9x1xf32>
    %322 = vector.broadcast %321 : vector<9x1xf32> to vector<9x9xf32>
    %323 = arith.subf %319, %322 : vector<9x9xf32>
    %324 = math.exp %323 : vector<9x9xf32>
    %cst_132 = arith.constant dense<0.000000e+00> : vector<9xf32>
    %325 = vector.multi_reduction <add>, %324, %cst_132 [1] : vector<9x9xf32> to vector<9xf32>
    %326 = vector.shape_cast %325 : vector<9xf32> to vector<9x1xf32>
    %327 = tpu.reciprocal %326 {approx = true} : vector<9x1xf32> -> vector<9x1xf32>
    %328 = vector.broadcast %327 : vector<9x1xf32> to vector<9x9xf32>
    %329 = arith.mulf %324, %328 : vector<9x9xf32>
    %cst_133 = arith.constant dense<0.000000e+00> : vector<9x16xf32>
    %330 = tpu.matmul %329, %316, %cst_133 {dimension_numbers = #tpu.dot_dimension_numbers<[1], [0], [0], [1], [0, 0, 1, 1], [], []>} : vector<9x9xf32>, vector<9x16xf32>, vector<9x16xf32> -> vector<9x16xf32>
    %331 = tpu.concatenate %313, %330 in 1 : vector<9x16xf32>, vector<9x16xf32> -> vector<9x32xf32>
    %332 = tpu.concatenate %295, %331 in 0 : vector<9x32xf32>, vector<9x32xf32> -> vector<18x32xf32>
    %c1_134 = arith.constant 1 : index
    %c0_135 = arith.constant 0 : index
    %c0_136 = arith.constant 0 : index
    %333 = vector.load %arg10[%c1_134, %c0_135, %c0_136] : memref<2x32x32xf32, #tpu.memory_space<vmem>>, vector<1x32x32xf32>
    %334 = vector.shape_cast %333 : vector<1x32x32xf32> to vector<32x32xf32>
    %cst_137 = arith.constant dense<0.000000e+00> : vector<18x32xf32>
    %335 = tpu.matmul %332, %334, %cst_137 {dimension_numbers = #tpu.dot_dimension_numbers<[1], [0], [0], [1], [0, 0, 1, 1], [], []>} : vector<18x32xf32>, vector<32x32xf32>, vector<18x32xf32> -> vector<18x32xf32>
    %c1_138 = arith.constant 1 : index
    %c0_139 = arith.constant 0 : index
    %c0_140 = arith.constant 0 : index
    %336 = vector.load %arg11[%c1_138, %c0_139, %c0_140] : memref<2x1x32xf32, #tpu.memory_space<vmem>>, vector<1x1x32xf32>
    %337 = vector.shape_cast %336 : vector<1x1x32xf32> to vector<1x32xf32>
    %338 = vector.broadcast %337 : vector<1x32xf32> to vector<18x32xf32>
    %339 = arith.addf %335, %338 : vector<18x32xf32>
    %340 = arith.addf %230, %339 : vector<18x32xf32>
    %c1_141 = arith.constant 1 : index
    %c0_142 = arith.constant 0 : index
    %c0_143 = arith.constant 0 : index
    %341 = vector.load %arg12[%c1_141, %c0_142, %c0_143] : memref<2x1x32xf32, #tpu.memory_space<vmem>>, vector<1x1x32xf32>
    %342 = vector.shape_cast %341 : vector<1x1x32xf32> to vector<1x32xf32>
    %c1_144 = arith.constant 1 : index
    %c0_145 = arith.constant 0 : index
    %c0_146 = arith.constant 0 : index
    %343 = vector.load %arg13[%c1_144, %c0_145, %c0_146] : memref<2x1x32xf32, #tpu.memory_space<vmem>>, vector<1x1x32xf32>
    %344 = vector.shape_cast %343 : vector<1x1x32xf32> to vector<1x32xf32>
    %cst_147 = arith.constant dense<0.000000e+00> : vector<18xf32>
    %345 = vector.multi_reduction <add>, %340, %cst_147 [1] : vector<18x32xf32> to vector<18xf32>
    %346 = vector.shape_cast %345 : vector<18xf32> to vector<18x1xf32>
    %cst_148 = arith.constant 3.200000e+01 : f32
    %347 = vector.broadcast %cst_148 : f32 to vector<18x1xf32>
    %348 = arith.divf %346, %347 : vector<18x1xf32>
    %349 = vector.broadcast %348 : vector<18x1xf32> to vector<18x32xf32>
    %350 = arith.subf %340, %349 : vector<18x32xf32>
    %351 = arith.mulf %350, %350 : vector<18x32xf32>
    %cst_149 = arith.constant dense<0.000000e+00> : vector<18xf32>
    %352 = vector.multi_reduction <add>, %351, %cst_149 [1] : vector<18x32xf32> to vector<18xf32>
    %353 = vector.shape_cast %352 : vector<18xf32> to vector<18x1xf32>
    %cst_150 = arith.constant 3.200000e+01 : f32
    %354 = vector.broadcast %cst_150 : f32 to vector<18x1xf32>
    %355 = arith.divf %353, %354 : vector<18x1xf32>
    %356 = vector.broadcast %348 : vector<18x1xf32> to vector<18x32xf32>
    %357 = arith.subf %340, %356 : vector<18x32xf32>
    %cst_151 = arith.constant 9.99999974E-6 : f32
    %358 = vector.broadcast %cst_151 : f32 to vector<18x1xf32>
    %359 = arith.addf %355, %358 : vector<18x1xf32>
    %360 = math.rsqrt %359 : vector<18x1xf32>
    %361 = vector.broadcast %360 : vector<18x1xf32> to vector<18x32xf32>
    %362 = arith.mulf %357, %361 : vector<18x32xf32>
    %363 = vector.broadcast %342 : vector<1x32xf32> to vector<18x32xf32>
    %364 = arith.mulf %362, %363 : vector<18x32xf32>
    %365 = vector.broadcast %344 : vector<1x32xf32> to vector<18x32xf32>
    %366 = arith.addf %364, %365 : vector<18x32xf32>
    %c1_152 = arith.constant 1 : index
    %c0_153 = arith.constant 0 : index
    %c0_154 = arith.constant 0 : index
    %367 = vector.load %arg14[%c1_152, %c0_153, %c0_154] : memref<2x32x64xf32, #tpu.memory_space<vmem>>, vector<1x32x64xf32>
    %368 = vector.shape_cast %367 : vector<1x32x64xf32> to vector<32x64xf32>
    %cst_155 = arith.constant dense<0.000000e+00> : vector<18x64xf32>
    %369 = tpu.matmul %366, %368, %cst_155 {dimension_numbers = #tpu.dot_dimension_numbers<[1], [0], [0], [1], [0, 0, 1, 1], [], []>} : vector<18x32xf32>, vector<32x64xf32>, vector<18x64xf32> -> vector<18x64xf32>
    %c1_156 = arith.constant 1 : index
    %c0_157 = arith.constant 0 : index
    %c0_158 = arith.constant 0 : index
    %370 = vector.load %arg15[%c1_156, %c0_157, %c0_158] : memref<2x1x64xf32, #tpu.memory_space<vmem>>, vector<1x1x64xf32>
    %371 = vector.shape_cast %370 : vector<1x1x64xf32> to vector<1x64xf32>
    %372 = vector.broadcast %371 : vector<1x64xf32> to vector<18x64xf32>
    %373 = arith.addf %369, %372 : vector<18x64xf32>
    %cst_159 = arith.constant 5.000000e-01 : f32
    %374 = vector.broadcast %cst_159 : f32 to vector<18x64xf32>
    %375 = arith.mulf %374, %373 : vector<18x64xf32>
    %cst_160 = arith.constant 0.707106769 : f32
    %376 = vector.broadcast %cst_160 : f32 to vector<18x64xf32>
    %377 = arith.mulf %373, %376 : vector<18x64xf32>
    %378 = math.absf %377 : vector<18x64xf32>
    %cst_161 = arith.constant 0.327591091 : f32
    %379 = vector.broadcast %cst_161 : f32 to vector<18x64xf32>
    %380 = arith.mulf %379, %378 : vector<18x64xf32>
    %cst_162 = arith.constant 1.000000e+00 : f32
    %381 = vector.broadcast %cst_162 : f32 to vector<18x64xf32>
    %382 = arith.addf %381, %380 : vector<18x64xf32>
    %cst_163 = arith.constant 1.000000e+00 : f32
    %383 = vector.broadcast %cst_163 : f32 to vector<18x64xf32>
    %384 = arith.divf %383, %382 : vector<18x64xf32>
    %cst_164 = arith.constant 1.06140542 : f32
    %385 = vector.broadcast %cst_164 : f32 to vector<18x64xf32>
    %386 = arith.mulf %385, %384 : vector<18x64xf32>
    %cst_165 = arith.constant -1.45315206 : f32
    %387 = vector.broadcast %cst_165 : f32 to vector<18x64xf32>
    %388 = arith.addf %386, %387 : vector<18x64xf32>
    %389 = arith.mulf %388, %384 : vector<18x64xf32>
    %cst_166 = arith.constant 1.42141378 : f32
    %390 = vector.broadcast %cst_166 : f32 to vector<18x64xf32>
    %391 = arith.addf %389, %390 : vector<18x64xf32>
    %392 = arith.mulf %391, %384 : vector<18x64xf32>
    %cst_167 = arith.constant -0.284496725 : f32
    %393 = vector.broadcast %cst_167 : f32 to vector<18x64xf32>
    %394 = arith.addf %392, %393 : vector<18x64xf32>
    %395 = arith.mulf %394, %384 : vector<18x64xf32>
    %cst_168 = arith.constant 0.254829586 : f32
    %396 = vector.broadcast %cst_168 : f32 to vector<18x64xf32>
    %397 = arith.addf %395, %396 : vector<18x64xf32>
    %398 = arith.mulf %397, %384 : vector<18x64xf32>
    %cst_169 = arith.constant 0.000000e+00 : f32
    %399 = vector.broadcast %cst_169 : f32 to vector<18x64xf32>
    %400 = arith.subf %399, %378 : vector<18x64xf32>
    %401 = arith.mulf %400, %378 : vector<18x64xf32>
    %402 = math.exp %401 : vector<18x64xf32>
    %403 = arith.mulf %398, %402 : vector<18x64xf32>
    %cst_170 = arith.constant 1.000000e+00 : f32
    %404 = vector.broadcast %cst_170 : f32 to vector<18x64xf32>
    %405 = arith.subf %404, %403 : vector<18x64xf32>
    %cst_171 = arith.constant 0.000000e+00 : f32
    %406 = vector.broadcast %cst_171 : f32 to vector<18x64xf32>
    %407 = arith.cmpf olt, %377, %406 : vector<18x64xf32>
    %cst_172 = arith.constant 0.000000e+00 : f32
    %408 = vector.broadcast %cst_172 : f32 to vector<18x64xf32>
    %409 = arith.subf %408, %405 : vector<18x64xf32>
    %410 = arith.select %407, %409, %405 : vector<18x64xi1>, vector<18x64xf32>
    %cst_173 = arith.constant 1.000000e+00 : f32
    %411 = vector.broadcast %cst_173 : f32 to vector<18x64xf32>
    %412 = arith.addf %411, %410 : vector<18x64xf32>
    %413 = arith.mulf %375, %412 : vector<18x64xf32>
    %c1_174 = arith.constant 1 : index
    %c0_175 = arith.constant 0 : index
    %c0_176 = arith.constant 0 : index
    %414 = vector.load %arg16[%c1_174, %c0_175, %c0_176] : memref<2x64x32xf32, #tpu.memory_space<vmem>>, vector<1x64x32xf32>
    %415 = vector.shape_cast %414 : vector<1x64x32xf32> to vector<64x32xf32>
    %cst_177 = arith.constant dense<0.000000e+00> : vector<18x32xf32>
    %416 = tpu.matmul %413, %415, %cst_177 {dimension_numbers = #tpu.dot_dimension_numbers<[1], [0], [0], [1], [0, 0, 1, 1], [], []>} : vector<18x64xf32>, vector<64x32xf32>, vector<18x32xf32> -> vector<18x32xf32>
    %c1_178 = arith.constant 1 : index
    %c0_179 = arith.constant 0 : index
    %c0_180 = arith.constant 0 : index
    %417 = vector.load %arg17[%c1_178, %c0_179, %c0_180] : memref<2x1x32xf32, #tpu.memory_space<vmem>>, vector<1x1x32xf32>
    %418 = vector.shape_cast %417 : vector<1x1x32xf32> to vector<1x32xf32>
    %419 = vector.broadcast %418 : vector<1x32xf32> to vector<18x32xf32>
    %420 = arith.addf %416, %419 : vector<18x32xf32>
    %421 = arith.addf %340, %420 : vector<18x32xf32>
    %422 = vector.extract_strided_slice %421 {offsets = [0, 0], sizes = [1, 32], strides = [1, 1]} : vector<18x32xf32> to vector<1x32xf32>
    %423 = vector.extract_strided_slice %421 {offsets = [9, 0], sizes = [1, 32], strides = [1, 1]} : vector<18x32xf32> to vector<1x32xf32>
    %424 = tpu.concatenate %422, %423 in 0 : vector<1x32xf32>, vector<1x32xf32> -> vector<2x32xf32>
    %c0_181 = arith.constant 0 : index
    %c0_182 = arith.constant 0 : index
    %425 = vector.load %arg18[%c0_181, %c0_182] : memref<2x32xf32, #tpu.memory_space<vmem>>, vector<2x32xf32>
    tpu.vector_store %arg18[%c0_181, %c0_182], %424 {strides = array<i32>} : memref<2x32xf32, #tpu.memory_space<vmem>>, vector<2x32xf32>,
    return
  }
}

module attributes {stable_mosaic.version = 11 : i64} {
  func.func @_branch_kernel(%arg0: memref<24x128xf32, #tpu.memory_space<vmem>>, %arg1: memref<128x32xf32, #tpu.memory_space<vmem>>, %arg2: memref<1x32xf32, #tpu.memory_space<vmem>>, %arg3: memref<1x32xf32, #tpu.memory_space<vmem>>, %arg4: memref<1x32xf32, #tpu.memory_space<vmem>>, %arg5: memref<1x32xf32, #tpu.memory_space<vmem>>, %arg6: memref<13x32xf32, #tpu.memory_space<vmem>>, %arg7: memref<2x1x32xf32, #tpu.memory_space<vmem>>, %arg8: memref<2x1x32xf32, #tpu.memory_space<vmem>>, %arg9: memref<2x32x96xf32, #tpu.memory_space<vmem>>, %arg10: memref<2x32x32xf32, #tpu.memory_space<vmem>>, %arg11: memref<2x1x32xf32, #tpu.memory_space<vmem>>, %arg12: memref<2x1x32xf32, #tpu.memory_space<vmem>>, %arg13: memref<2x1x32xf32, #tpu.memory_space<vmem>>, %arg14: memref<2x32x64xf32, #tpu.memory_space<vmem>>, %arg15: memref<2x1x64xf32, #tpu.memory_space<vmem>>, %arg16: memref<2x64x32xf32, #tpu.memory_space<vmem>>, %arg17: memref<2x1x32xf32, #tpu.memory_space<vmem>>, %arg18: memref<2x32xf32, #tpu.memory_space<vmem>>) attributes {dimension_semantics = [], scalar_prefetch = 0 : i64, scratch_operands = 0 : i64, tpu.core_type = #tpu.core_type<tc>} {
    %c0 = arith.constant 0 : index
    %c0_0 = arith.constant 0 : index
    %0 = vector.load %arg0[%c0, %c0_0] : memref<24x128xf32, #tpu.memory_space<vmem>>, vector<24x128xf32>
    %c0_1 = arith.constant 0 : index
    %c0_2 = arith.constant 0 : index
    %1 = vector.load %arg1[%c0_1, %c0_2] : memref<128x32xf32, #tpu.memory_space<vmem>>, vector<128x32xf32>
    %cst = arith.constant dense<0.000000e+00> : vector<24x32xf32>
    %2 = tpu.matmul %0, %1, %cst {dimension_numbers = #tpu.dot_dimension_numbers<[1], [0], [0], [1], [0, 0, 1, 1], [], []>} : vector<24x128xf32>, vector<128x32xf32>, vector<24x32xf32> -> vector<24x32xf32>
    %c0_3 = arith.constant 0 : index
    %c0_4 = arith.constant 0 : index
    %3 = vector.load %arg2[%c0_3, %c0_4] : memref<1x32xf32, #tpu.memory_space<vmem>>, vector<1x32xf32>
    %4 = vector.broadcast %3 : vector<1x32xf32> to vector<24x32xf32>
    %5 = arith.addf %2, %4 : vector<24x32xf32>
    %c0_5 = arith.constant 0 : index
    %c0_6 = arith.constant 0 : index
    %6 = vector.load %arg3[%c0_5, %c0_6] : memref<1x32xf32, #tpu.memory_space<vmem>>, vector<1x32xf32>
    %c0_7 = arith.constant 0 : index
    %c0_8 = arith.constant 0 : index
    %7 = vector.load %arg4[%c0_7, %c0_8] : memref<1x32xf32, #tpu.memory_space<vmem>>, vector<1x32xf32>
    %cst_9 = arith.constant dense<0.000000e+00> : vector<24xf32>
    %8 = vector.multi_reduction <add>, %5, %cst_9 [1] : vector<24x32xf32> to vector<24xf32>
    %9 = vector.shape_cast %8 : vector<24xf32> to vector<24x1xf32>
    %cst_10 = arith.constant 3.200000e+01 : f32
    %10 = vector.broadcast %cst_10 : f32 to vector<24x1xf32>
    %11 = arith.divf %9, %10 : vector<24x1xf32>
    %12 = vector.broadcast %11 : vector<24x1xf32> to vector<24x32xf32>
    %13 = arith.subf %5, %12 : vector<24x32xf32>
    %14 = arith.mulf %13, %13 : vector<24x32xf32>
    %cst_11 = arith.constant dense<0.000000e+00> : vector<24xf32>
    %15 = vector.multi_reduction <add>, %14, %cst_11 [1] : vector<24x32xf32> to vector<24xf32>
    %16 = vector.shape_cast %15 : vector<24xf32> to vector<24x1xf32>
    %cst_12 = arith.constant 3.200000e+01 : f32
    %17 = vector.broadcast %cst_12 : f32 to vector<24x1xf32>
    %18 = arith.divf %16, %17 : vector<24x1xf32>
    %19 = vector.broadcast %11 : vector<24x1xf32> to vector<24x32xf32>
    %20 = arith.subf %5, %19 : vector<24x32xf32>
    %cst_13 = arith.constant 9.99999974E-6 : f32
    %21 = vector.broadcast %cst_13 : f32 to vector<24x1xf32>
    %22 = arith.addf %18, %21 : vector<24x1xf32>
    %23 = math.rsqrt %22 : vector<24x1xf32>
    %24 = vector.broadcast %23 : vector<24x1xf32> to vector<24x32xf32>
    %25 = arith.mulf %20, %24 : vector<24x32xf32>
    %26 = vector.broadcast %6 : vector<1x32xf32> to vector<24x32xf32>
    %27 = arith.mulf %25, %26 : vector<24x32xf32>
    %28 = vector.broadcast %7 : vector<1x32xf32> to vector<24x32xf32>
    %29 = arith.addf %27, %28 : vector<24x32xf32>
    %c0_14 = arith.constant 0 : index
    %c0_15 = arith.constant 0 : index
    %30 = vector.load %arg6[%c0_14, %c0_15] : memref<13x32xf32, #tpu.memory_space<vmem>>, vector<13x32xf32>
    %c0_16 = arith.constant 0 : index
    %c0_17 = arith.constant 0 : index
    %31 = vector.load %arg5[%c0_16, %c0_17] : memref<1x32xf32, #tpu.memory_space<vmem>>, vector<1x32xf32>
    %32 = vector.extract_strided_slice %30 {offsets = [0, 0], sizes = [1, 32], strides = [1, 1]} : vector<13x32xf32> to vector<1x32xf32>
    %33 = arith.addf %31, %32 : vector<1x32xf32>
    %34 = vector.extract_strided_slice %30 {offsets = [1, 0], sizes = [12, 32], strides = [1, 1]} : vector<13x32xf32> to vector<12x32xf32>
    %35 = vector.extract_strided_slice %29 {offsets = [0, 0], sizes = [12, 32], strides = [1, 1]} : vector<24x32xf32> to vector<12x32xf32>
    %36 = arith.addf %35, %34 : vector<12x32xf32>
    %37 = vector.extract_strided_slice %29 {offsets = [12, 0], sizes = [12, 32], strides = [1, 1]} : vector<24x32xf32> to vector<12x32xf32>
    %38 = arith.addf %37, %34 : vector<12x32xf32>
    %39 = tpu.concatenate %33, %36, %33, %38 in 0 : vector<1x32xf32>, vector<12x32xf32>, vector<1x32xf32>, vector<12x32xf32> -> vector<26x32xf32>
    %c0_18 = arith.constant 0 : index
    %c0_19 = arith.constant 0 : index
    %c0_20 = arith.constant 0 : index
    %40 = vector.load %arg7[%c0_18, %c0_19, %c0_20] : memref<2x1x32xf32, #tpu.memory_space<vmem>>, vector<1x1x32xf32>
    %41 = vector.shape_cast %40 : vector<1x1x32xf32> to vector<1x32xf32>
    %c0_21 = arith.constant 0 : index
    %c0_22 = arith.constant 0 : index
    %c0_23 = arith.constant 0 : index
    %42 = vector.load %arg8[%c0_21, %c0_22, %c0_23] : memref<2x1x32xf32, #tpu.memory_space<vmem>>, vector<1x1x32xf32>
    %43 = vector.shape_cast %42 : vector<1x1x32xf32> to vector<1x32xf32>
    %cst_24 = arith.constant dense<0.000000e+00> : vector<26xf32>
    %44 = vector.multi_reduction <add>, %39, %cst_24 [1] : vector<26x32xf32> to vector<26xf32>
    %45 = vector.shape_cast %44 : vector<26xf32> to vector<26x1xf32>
    %cst_25 = arith.constant 3.200000e+01 : f32
    %46 = vector.broadcast %cst_25 : f32 to vector<26x1xf32>
    %47 = arith.divf %45, %46 : vector<26x1xf32>
    %48 = vector.broadcast %47 : vector<26x1xf32> to vector<26x32xf32>
    %49 = arith.subf %39, %48 : vector<26x32xf32>
    %50 = arith.mulf %49, %49 : vector<26x32xf32>
    %cst_26 = arith.constant dense<0.000000e+00> : vector<26xf32>
    %51 = vector.multi_reduction <add>, %50, %cst_26 [1] : vector<26x32xf32> to vector<26xf32>
    %52 = vector.shape_cast %51 : vector<26xf32> to vector<26x1xf32>
    %cst_27 = arith.constant 3.200000e+01 : f32
    %53 = vector.broadcast %cst_27 : f32 to vector<26x1xf32>
    %54 = arith.divf %52, %53 : vector<26x1xf32>
    %55 = vector.broadcast %47 : vector<26x1xf32> to vector<26x32xf32>
    %56 = arith.subf %39, %55 : vector<26x32xf32>
    %cst_28 = arith.constant 9.99999974E-6 : f32
    %57 = vector.broadcast %cst_28 : f32 to vector<26x1xf32>
    %58 = arith.addf %54, %57 : vector<26x1xf32>
    %59 = math.rsqrt %58 : vector<26x1xf32>
    %60 = vector.broadcast %59 : vector<26x1xf32> to vector<26x32xf32>
    %61 = arith.mulf %56, %60 : vector<26x32xf32>
    %62 = vector.broadcast %41 : vector<1x32xf32> to vector<26x32xf32>
    %63 = arith.mulf %61, %62 : vector<26x32xf32>
    %64 = vector.broadcast %43 : vector<1x32xf32> to vector<26x32xf32>
    %65 = arith.addf %63, %64 : vector<26x32xf32>
    %c0_29 = arith.constant 0 : index
    %c0_30 = arith.constant 0 : index
    %c0_31 = arith.constant 0 : index
    %66 = vector.load %arg9[%c0_29, %c0_30, %c0_31] : memref<2x32x96xf32, #tpu.memory_space<vmem>>, vector<1x32x96xf32>
    %67 = vector.shape_cast %66 : vector<1x32x96xf32> to vector<32x96xf32>
    %cst_32 = arith.constant dense<0.000000e+00> : vector<26x96xf32>
    %68 = tpu.matmul %65, %67, %cst_32 {dimension_numbers = #tpu.dot_dimension_numbers<[1], [0], [0], [1], [0, 0, 1, 1], [], []>} : vector<26x32xf32>, vector<32x96xf32>, vector<26x96xf32> -> vector<26x96xf32>
    %69 = vector.extract_strided_slice %68 {offsets = [0, 0], sizes = [13, 96], strides = [1, 1]} : vector<26x96xf32> to vector<13x96xf32>
    %70 = vector.extract_strided_slice %69 {offsets = [0, 0], sizes = [13, 16], strides = [1, 1]} : vector<13x96xf32> to vector<13x16xf32>
    %71 = vector.extract_strided_slice %69 {offsets = [0, 32], sizes = [13, 16], strides = [1, 1]} : vector<13x96xf32> to vector<13x16xf32>
    %72 = vector.extract_strided_slice %69 {offsets = [0, 64], sizes = [13, 16], strides = [1, 1]} : vector<13x96xf32> to vector<13x16xf32>
    %cst_33 = arith.constant dense<0.000000e+00> : vector<13x13xf32>
    %73 = tpu.matmul %70, %71, %cst_33 {dimension_numbers = #tpu.dot_dimension_numbers<[1], [1], [0], [0], [0, 0, 1, 0], [], []>} : vector<13x16xf32>, vector<13x16xf32>, vector<13x13xf32> -> vector<13x13xf32>
    %cst_34 = arith.constant 2.500000e-01 : f32
    %74 = vector.broadcast %cst_34 : f32 to vector<13x13xf32>
    %75 = arith.mulf %73, %74 : vector<13x13xf32>
    %cst_35 = arith.constant dense<0xFF800000> : vector<13xf32>
    %76 = vector.multi_reduction <maximumf>, %75, %cst_35 [1] : vector<13x13xf32> to vector<13xf32>
    %77 = vector.shape_cast %76 : vector<13xf32> to vector<13x1xf32>
    %78 = vector.broadcast %77 : vector<13x1xf32> to vector<13x13xf32>
    %79 = arith.subf %75, %78 : vector<13x13xf32>
    %80 = math.exp %79 : vector<13x13xf32>
    %cst_36 = arith.constant dense<0.000000e+00> : vector<13xf32>
    %81 = vector.multi_reduction <add>, %80, %cst_36 [1] : vector<13x13xf32> to vector<13xf32>
    %82 = vector.shape_cast %81 : vector<13xf32> to vector<13x1xf32>
    %83 = tpu.reciprocal %82 {approx = true} : vector<13x1xf32> -> vector<13x1xf32>
    %84 = vector.broadcast %83 : vector<13x1xf32> to vector<13x13xf32>
    %85 = arith.mulf %80, %84 : vector<13x13xf32>
    %cst_37 = arith.constant dense<0.000000e+00> : vector<13x16xf32>
    %86 = tpu.matmul %85, %72, %cst_37 {dimension_numbers = #tpu.dot_dimension_numbers<[1], [0], [0], [1], [0, 0, 1, 1], [], []>} : vector<13x13xf32>, vector<13x16xf32>, vector<13x16xf32> -> vector<13x16xf32>
    %87 = vector.extract_strided_slice %69 {offsets = [0, 16], sizes = [13, 16], strides = [1, 1]} : vector<13x96xf32> to vector<13x16xf32>
    %88 = vector.extract_strided_slice %69 {offsets = [0, 48], sizes = [13, 16], strides = [1, 1]} : vector<13x96xf32> to vector<13x16xf32>
    %89 = vector.extract_strided_slice %69 {offsets = [0, 80], sizes = [13, 16], strides = [1, 1]} : vector<13x96xf32> to vector<13x16xf32>
    %cst_38 = arith.constant dense<0.000000e+00> : vector<13x13xf32>
    %90 = tpu.matmul %87, %88, %cst_38 {dimension_numbers = #tpu.dot_dimension_numbers<[1], [1], [0], [0], [0, 0, 1, 0], [], []>} : vector<13x16xf32>, vector<13x16xf32>, vector<13x13xf32> -> vector<13x13xf32>
    %cst_39 = arith.constant 2.500000e-01 : f32
    %91 = vector.broadcast %cst_39 : f32 to vector<13x13xf32>
    %92 = arith.mulf %90, %91 : vector<13x13xf32>
    %cst_40 = arith.constant dense<0xFF800000> : vector<13xf32>
    %93 = vector.multi_reduction <maximumf>, %92, %cst_40 [1] : vector<13x13xf32> to vector<13xf32>
    %94 = vector.shape_cast %93 : vector<13xf32> to vector<13x1xf32>
    %95 = vector.broadcast %94 : vector<13x1xf32> to vector<13x13xf32>
    %96 = arith.subf %92, %95 : vector<13x13xf32>
    %97 = math.exp %96 : vector<13x13xf32>
    %cst_41 = arith.constant dense<0.000000e+00> : vector<13xf32>
    %98 = vector.multi_reduction <add>, %97, %cst_41 [1] : vector<13x13xf32> to vector<13xf32>
    %99 = vector.shape_cast %98 : vector<13xf32> to vector<13x1xf32>
    %100 = tpu.reciprocal %99 {approx = true} : vector<13x1xf32> -> vector<13x1xf32>
    %101 = vector.broadcast %100 : vector<13x1xf32> to vector<13x13xf32>
    %102 = arith.mulf %97, %101 : vector<13x13xf32>
    %cst_42 = arith.constant dense<0.000000e+00> : vector<13x16xf32>
    %103 = tpu.matmul %102, %89, %cst_42 {dimension_numbers = #tpu.dot_dimension_numbers<[1], [0], [0], [1], [0, 0, 1, 1], [], []>} : vector<13x13xf32>, vector<13x16xf32>, vector<13x16xf32> -> vector<13x16xf32>
    %104 = tpu.concatenate %86, %103 in 1 : vector<13x16xf32>, vector<13x16xf32> -> vector<13x32xf32>
    %105 = vector.extract_strided_slice %68 {offsets = [13, 0], sizes = [13, 96], strides = [1, 1]} : vector<26x96xf32> to vector<13x96xf32>
    %106 = vector.extract_strided_slice %105 {offsets = [0, 0], sizes = [13, 16], strides = [1, 1]} : vector<13x96xf32> to vector<13x16xf32>
    %107 = vector.extract_strided_slice %105 {offsets = [0, 32], sizes = [13, 16], strides = [1, 1]} : vector<13x96xf32> to vector<13x16xf32>
    %108 = vector.extract_strided_slice %105 {offsets = [0, 64], sizes = [13, 16], strides = [1, 1]} : vector<13x96xf32> to vector<13x16xf32>
    %cst_43 = arith.constant dense<0.000000e+00> : vector<13x13xf32>
    %109 = tpu.matmul %106, %107, %cst_43 {dimension_numbers = #tpu.dot_dimension_numbers<[1], [1], [0], [0], [0, 0, 1, 0], [], []>} : vector<13x16xf32>, vector<13x16xf32>, vector<13x13xf32> -> vector<13x13xf32>
    %cst_44 = arith.constant 2.500000e-01 : f32
    %110 = vector.broadcast %cst_44 : f32 to vector<13x13xf32>
    %111 = arith.mulf %109, %110 : vector<13x13xf32>
    %cst_45 = arith.constant dense<0xFF800000> : vector<13xf32>
    %112 = vector.multi_reduction <maximumf>, %111, %cst_45 [1] : vector<13x13xf32> to vector<13xf32>
    %113 = vector.shape_cast %112 : vector<13xf32> to vector<13x1xf32>
    %114 = vector.broadcast %113 : vector<13x1xf32> to vector<13x13xf32>
    %115 = arith.subf %111, %114 : vector<13x13xf32>
    %116 = math.exp %115 : vector<13x13xf32>
    %cst_46 = arith.constant dense<0.000000e+00> : vector<13xf32>
    %117 = vector.multi_reduction <add>, %116, %cst_46 [1] : vector<13x13xf32> to vector<13xf32>
    %118 = vector.shape_cast %117 : vector<13xf32> to vector<13x1xf32>
    %119 = tpu.reciprocal %118 {approx = true} : vector<13x1xf32> -> vector<13x1xf32>
    %120 = vector.broadcast %119 : vector<13x1xf32> to vector<13x13xf32>
    %121 = arith.mulf %116, %120 : vector<13x13xf32>
    %cst_47 = arith.constant dense<0.000000e+00> : vector<13x16xf32>
    %122 = tpu.matmul %121, %108, %cst_47 {dimension_numbers = #tpu.dot_dimension_numbers<[1], [0], [0], [1], [0, 0, 1, 1], [], []>} : vector<13x13xf32>, vector<13x16xf32>, vector<13x16xf32> -> vector<13x16xf32>
    %123 = vector.extract_strided_slice %105 {offsets = [0, 16], sizes = [13, 16], strides = [1, 1]} : vector<13x96xf32> to vector<13x16xf32>
    %124 = vector.extract_strided_slice %105 {offsets = [0, 48], sizes = [13, 16], strides = [1, 1]} : vector<13x96xf32> to vector<13x16xf32>
    %125 = vector.extract_strided_slice %105 {offsets = [0, 80], sizes = [13, 16], strides = [1, 1]} : vector<13x96xf32> to vector<13x16xf32>
    %cst_48 = arith.constant dense<0.000000e+00> : vector<13x13xf32>
    %126 = tpu.matmul %123, %124, %cst_48 {dimension_numbers = #tpu.dot_dimension_numbers<[1], [1], [0], [0], [0, 0, 1, 0], [], []>} : vector<13x16xf32>, vector<13x16xf32>, vector<13x13xf32> -> vector<13x13xf32>
    %cst_49 = arith.constant 2.500000e-01 : f32
    %127 = vector.broadcast %cst_49 : f32 to vector<13x13xf32>
    %128 = arith.mulf %126, %127 : vector<13x13xf32>
    %cst_50 = arith.constant dense<0xFF800000> : vector<13xf32>
    %129 = vector.multi_reduction <maximumf>, %128, %cst_50 [1] : vector<13x13xf32> to vector<13xf32>
    %130 = vector.shape_cast %129 : vector<13xf32> to vector<13x1xf32>
    %131 = vector.broadcast %130 : vector<13x1xf32> to vector<13x13xf32>
    %132 = arith.subf %128, %131 : vector<13x13xf32>
    %133 = math.exp %132 : vector<13x13xf32>
    %cst_51 = arith.constant dense<0.000000e+00> : vector<13xf32>
    %134 = vector.multi_reduction <add>, %133, %cst_51 [1] : vector<13x13xf32> to vector<13xf32>
    %135 = vector.shape_cast %134 : vector<13xf32> to vector<13x1xf32>
    %136 = tpu.reciprocal %135 {approx = true} : vector<13x1xf32> -> vector<13x1xf32>
    %137 = vector.broadcast %136 : vector<13x1xf32> to vector<13x13xf32>
    %138 = arith.mulf %133, %137 : vector<13x13xf32>
    %cst_52 = arith.constant dense<0.000000e+00> : vector<13x16xf32>
    %139 = tpu.matmul %138, %125, %cst_52 {dimension_numbers = #tpu.dot_dimension_numbers<[1], [0], [0], [1], [0, 0, 1, 1], [], []>} : vector<13x13xf32>, vector<13x16xf32>, vector<13x16xf32> -> vector<13x16xf32>
    %140 = tpu.concatenate %122, %139 in 1 : vector<13x16xf32>, vector<13x16xf32> -> vector<13x32xf32>
    %141 = tpu.concatenate %104, %140 in 0 : vector<13x32xf32>, vector<13x32xf32> -> vector<26x32xf32>
    %c0_53 = arith.constant 0 : index
    %c0_54 = arith.constant 0 : index
    %c0_55 = arith.constant 0 : index
    %142 = vector.load %arg10[%c0_53, %c0_54, %c0_55] : memref<2x32x32xf32, #tpu.memory_space<vmem>>, vector<1x32x32xf32>
    %143 = vector.shape_cast %142 : vector<1x32x32xf32> to vector<32x32xf32>
    %cst_56 = arith.constant dense<0.000000e+00> : vector<26x32xf32>
    %144 = tpu.matmul %141, %143, %cst_56 {dimension_numbers = #tpu.dot_dimension_numbers<[1], [0], [0], [1], [0, 0, 1, 1], [], []>} : vector<26x32xf32>, vector<32x32xf32>, vector<26x32xf32> -> vector<26x32xf32>
    %c0_57 = arith.constant 0 : index
    %c0_58 = arith.constant 0 : index
    %c0_59 = arith.constant 0 : index
    %145 = vector.load %arg11[%c0_57, %c0_58, %c0_59] : memref<2x1x32xf32, #tpu.memory_space<vmem>>, vector<1x1x32xf32>
    %146 = vector.shape_cast %145 : vector<1x1x32xf32> to vector<1x32xf32>
    %147 = vector.broadcast %146 : vector<1x32xf32> to vector<26x32xf32>
    %148 = arith.addf %144, %147 : vector<26x32xf32>
    %149 = arith.addf %39, %148 : vector<26x32xf32>
    %c0_60 = arith.constant 0 : index
    %c0_61 = arith.constant 0 : index
    %c0_62 = arith.constant 0 : index
    %150 = vector.load %arg12[%c0_60, %c0_61, %c0_62] : memref<2x1x32xf32, #tpu.memory_space<vmem>>, vector<1x1x32xf32>
    %151 = vector.shape_cast %150 : vector<1x1x32xf32> to vector<1x32xf32>
    %c0_63 = arith.constant 0 : index
    %c0_64 = arith.constant 0 : index
    %c0_65 = arith.constant 0 : index
    %152 = vector.load %arg13[%c0_63, %c0_64, %c0_65] : memref<2x1x32xf32, #tpu.memory_space<vmem>>, vector<1x1x32xf32>
    %153 = vector.shape_cast %152 : vector<1x1x32xf32> to vector<1x32xf32>
    %cst_66 = arith.constant dense<0.000000e+00> : vector<26xf32>
    %154 = vector.multi_reduction <add>, %149, %cst_66 [1] : vector<26x32xf32> to vector<26xf32>
    %155 = vector.shape_cast %154 : vector<26xf32> to vector<26x1xf32>
    %cst_67 = arith.constant 3.200000e+01 : f32
    %156 = vector.broadcast %cst_67 : f32 to vector<26x1xf32>
    %157 = arith.divf %155, %156 : vector<26x1xf32>
    %158 = vector.broadcast %157 : vector<26x1xf32> to vector<26x32xf32>
    %159 = arith.subf %149, %158 : vector<26x32xf32>
    %160 = arith.mulf %159, %159 : vector<26x32xf32>
    %cst_68 = arith.constant dense<0.000000e+00> : vector<26xf32>
    %161 = vector.multi_reduction <add>, %160, %cst_68 [1] : vector<26x32xf32> to vector<26xf32>
    %162 = vector.shape_cast %161 : vector<26xf32> to vector<26x1xf32>
    %cst_69 = arith.constant 3.200000e+01 : f32
    %163 = vector.broadcast %cst_69 : f32 to vector<26x1xf32>
    %164 = arith.divf %162, %163 : vector<26x1xf32>
    %165 = vector.broadcast %157 : vector<26x1xf32> to vector<26x32xf32>
    %166 = arith.subf %149, %165 : vector<26x32xf32>
    %cst_70 = arith.constant 9.99999974E-6 : f32
    %167 = vector.broadcast %cst_70 : f32 to vector<26x1xf32>
    %168 = arith.addf %164, %167 : vector<26x1xf32>
    %169 = math.rsqrt %168 : vector<26x1xf32>
    %170 = vector.broadcast %169 : vector<26x1xf32> to vector<26x32xf32>
    %171 = arith.mulf %166, %170 : vector<26x32xf32>
    %172 = vector.broadcast %151 : vector<1x32xf32> to vector<26x32xf32>
    %173 = arith.mulf %171, %172 : vector<26x32xf32>
    %174 = vector.broadcast %153 : vector<1x32xf32> to vector<26x32xf32>
    %175 = arith.addf %173, %174 : vector<26x32xf32>
    %c0_71 = arith.constant 0 : index
    %c0_72 = arith.constant 0 : index
    %c0_73 = arith.constant 0 : index
    %176 = vector.load %arg14[%c0_71, %c0_72, %c0_73] : memref<2x32x64xf32, #tpu.memory_space<vmem>>, vector<1x32x64xf32>
    %177 = vector.shape_cast %176 : vector<1x32x64xf32> to vector<32x64xf32>
    %cst_74 = arith.constant dense<0.000000e+00> : vector<26x64xf32>
    %178 = tpu.matmul %175, %177, %cst_74 {dimension_numbers = #tpu.dot_dimension_numbers<[1], [0], [0], [1], [0, 0, 1, 1], [], []>} : vector<26x32xf32>, vector<32x64xf32>, vector<26x64xf32> -> vector<26x64xf32>
    %c0_75 = arith.constant 0 : index
    %c0_76 = arith.constant 0 : index
    %c0_77 = arith.constant 0 : index
    %179 = vector.load %arg15[%c0_75, %c0_76, %c0_77] : memref<2x1x64xf32, #tpu.memory_space<vmem>>, vector<1x1x64xf32>
    %180 = vector.shape_cast %179 : vector<1x1x64xf32> to vector<1x64xf32>
    %181 = vector.broadcast %180 : vector<1x64xf32> to vector<26x64xf32>
    %182 = arith.addf %178, %181 : vector<26x64xf32>
    %cst_78 = arith.constant 5.000000e-01 : f32
    %183 = vector.broadcast %cst_78 : f32 to vector<26x64xf32>
    %184 = arith.mulf %183, %182 : vector<26x64xf32>
    %cst_79 = arith.constant 0.707106769 : f32
    %185 = vector.broadcast %cst_79 : f32 to vector<26x64xf32>
    %186 = arith.mulf %182, %185 : vector<26x64xf32>
    %187 = math.absf %186 : vector<26x64xf32>
    %cst_80 = arith.constant 0.327591091 : f32
    %188 = vector.broadcast %cst_80 : f32 to vector<26x64xf32>
    %189 = arith.mulf %188, %187 : vector<26x64xf32>
    %cst_81 = arith.constant 1.000000e+00 : f32
    %190 = vector.broadcast %cst_81 : f32 to vector<26x64xf32>
    %191 = arith.addf %190, %189 : vector<26x64xf32>
    %cst_82 = arith.constant 1.000000e+00 : f32
    %192 = vector.broadcast %cst_82 : f32 to vector<26x64xf32>
    %193 = arith.divf %192, %191 : vector<26x64xf32>
    %cst_83 = arith.constant 1.06140542 : f32
    %194 = vector.broadcast %cst_83 : f32 to vector<26x64xf32>
    %195 = arith.mulf %194, %193 : vector<26x64xf32>
    %cst_84 = arith.constant -1.45315206 : f32
    %196 = vector.broadcast %cst_84 : f32 to vector<26x64xf32>
    %197 = arith.addf %195, %196 : vector<26x64xf32>
    %198 = arith.mulf %197, %193 : vector<26x64xf32>
    %cst_85 = arith.constant 1.42141378 : f32
    %199 = vector.broadcast %cst_85 : f32 to vector<26x64xf32>
    %200 = arith.addf %198, %199 : vector<26x64xf32>
    %201 = arith.mulf %200, %193 : vector<26x64xf32>
    %cst_86 = arith.constant -0.284496725 : f32
    %202 = vector.broadcast %cst_86 : f32 to vector<26x64xf32>
    %203 = arith.addf %201, %202 : vector<26x64xf32>
    %204 = arith.mulf %203, %193 : vector<26x64xf32>
    %cst_87 = arith.constant 0.254829586 : f32
    %205 = vector.broadcast %cst_87 : f32 to vector<26x64xf32>
    %206 = arith.addf %204, %205 : vector<26x64xf32>
    %207 = arith.mulf %206, %193 : vector<26x64xf32>
    %cst_88 = arith.constant 0.000000e+00 : f32
    %208 = vector.broadcast %cst_88 : f32 to vector<26x64xf32>
    %209 = arith.subf %208, %187 : vector<26x64xf32>
    %210 = arith.mulf %209, %187 : vector<26x64xf32>
    %211 = math.exp %210 : vector<26x64xf32>
    %212 = arith.mulf %207, %211 : vector<26x64xf32>
    %cst_89 = arith.constant 1.000000e+00 : f32
    %213 = vector.broadcast %cst_89 : f32 to vector<26x64xf32>
    %214 = arith.subf %213, %212 : vector<26x64xf32>
    %cst_90 = arith.constant 0.000000e+00 : f32
    %215 = vector.broadcast %cst_90 : f32 to vector<26x64xf32>
    %216 = arith.cmpf olt, %186, %215 : vector<26x64xf32>
    %cst_91 = arith.constant 0.000000e+00 : f32
    %217 = vector.broadcast %cst_91 : f32 to vector<26x64xf32>
    %218 = arith.subf %217, %214 : vector<26x64xf32>
    %219 = arith.select %216, %218, %214 : vector<26x64xi1>, vector<26x64xf32>
    %cst_92 = arith.constant 1.000000e+00 : f32
    %220 = vector.broadcast %cst_92 : f32 to vector<26x64xf32>
    %221 = arith.addf %220, %219 : vector<26x64xf32>
    %222 = arith.mulf %184, %221 : vector<26x64xf32>
    %c0_93 = arith.constant 0 : index
    %c0_94 = arith.constant 0 : index
    %c0_95 = arith.constant 0 : index
    %223 = vector.load %arg16[%c0_93, %c0_94, %c0_95] : memref<2x64x32xf32, #tpu.memory_space<vmem>>, vector<1x64x32xf32>
    %224 = vector.shape_cast %223 : vector<1x64x32xf32> to vector<64x32xf32>
    %cst_96 = arith.constant dense<0.000000e+00> : vector<26x32xf32>
    %225 = tpu.matmul %222, %224, %cst_96 {dimension_numbers = #tpu.dot_dimension_numbers<[1], [0], [0], [1], [0, 0, 1, 1], [], []>} : vector<26x64xf32>, vector<64x32xf32>, vector<26x32xf32> -> vector<26x32xf32>
    %c0_97 = arith.constant 0 : index
    %c0_98 = arith.constant 0 : index
    %c0_99 = arith.constant 0 : index
    %226 = vector.load %arg17[%c0_97, %c0_98, %c0_99] : memref<2x1x32xf32, #tpu.memory_space<vmem>>, vector<1x1x32xf32>
    %227 = vector.shape_cast %226 : vector<1x1x32xf32> to vector<1x32xf32>
    %228 = vector.broadcast %227 : vector<1x32xf32> to vector<26x32xf32>
    %229 = arith.addf %225, %228 : vector<26x32xf32>
    %230 = arith.addf %149, %229 : vector<26x32xf32>
    %c1 = arith.constant 1 : index
    %c0_100 = arith.constant 0 : index
    %c0_101 = arith.constant 0 : index
    %231 = vector.load %arg7[%c1, %c0_100, %c0_101] : memref<2x1x32xf32, #tpu.memory_space<vmem>>, vector<1x1x32xf32>
    %232 = vector.shape_cast %231 : vector<1x1x32xf32> to vector<1x32xf32>
    %c1_102 = arith.constant 1 : index
    %c0_103 = arith.constant 0 : index
    %c0_104 = arith.constant 0 : index
    %233 = vector.load %arg8[%c1_102, %c0_103, %c0_104] : memref<2x1x32xf32, #tpu.memory_space<vmem>>, vector<1x1x32xf32>
    %234 = vector.shape_cast %233 : vector<1x1x32xf32> to vector<1x32xf32>
    %cst_105 = arith.constant dense<0.000000e+00> : vector<26xf32>
    %235 = vector.multi_reduction <add>, %230, %cst_105 [1] : vector<26x32xf32> to vector<26xf32>
    %236 = vector.shape_cast %235 : vector<26xf32> to vector<26x1xf32>
    %cst_106 = arith.constant 3.200000e+01 : f32
    %237 = vector.broadcast %cst_106 : f32 to vector<26x1xf32>
    %238 = arith.divf %236, %237 : vector<26x1xf32>
    %239 = vector.broadcast %238 : vector<26x1xf32> to vector<26x32xf32>
    %240 = arith.subf %230, %239 : vector<26x32xf32>
    %241 = arith.mulf %240, %240 : vector<26x32xf32>
    %cst_107 = arith.constant dense<0.000000e+00> : vector<26xf32>
    %242 = vector.multi_reduction <add>, %241, %cst_107 [1] : vector<26x32xf32> to vector<26xf32>
    %243 = vector.shape_cast %242 : vector<26xf32> to vector<26x1xf32>
    %cst_108 = arith.constant 3.200000e+01 : f32
    %244 = vector.broadcast %cst_108 : f32 to vector<26x1xf32>
    %245 = arith.divf %243, %244 : vector<26x1xf32>
    %246 = vector.broadcast %238 : vector<26x1xf32> to vector<26x32xf32>
    %247 = arith.subf %230, %246 : vector<26x32xf32>
    %cst_109 = arith.constant 9.99999974E-6 : f32
    %248 = vector.broadcast %cst_109 : f32 to vector<26x1xf32>
    %249 = arith.addf %245, %248 : vector<26x1xf32>
    %250 = math.rsqrt %249 : vector<26x1xf32>
    %251 = vector.broadcast %250 : vector<26x1xf32> to vector<26x32xf32>
    %252 = arith.mulf %247, %251 : vector<26x32xf32>
    %253 = vector.broadcast %232 : vector<1x32xf32> to vector<26x32xf32>
    %254 = arith.mulf %252, %253 : vector<26x32xf32>
    %255 = vector.broadcast %234 : vector<1x32xf32> to vector<26x32xf32>
    %256 = arith.addf %254, %255 : vector<26x32xf32>
    %c1_110 = arith.constant 1 : index
    %c0_111 = arith.constant 0 : index
    %c0_112 = arith.constant 0 : index
    %257 = vector.load %arg9[%c1_110, %c0_111, %c0_112] : memref<2x32x96xf32, #tpu.memory_space<vmem>>, vector<1x32x96xf32>
    %258 = vector.shape_cast %257 : vector<1x32x96xf32> to vector<32x96xf32>
    %cst_113 = arith.constant dense<0.000000e+00> : vector<26x96xf32>
    %259 = tpu.matmul %256, %258, %cst_113 {dimension_numbers = #tpu.dot_dimension_numbers<[1], [0], [0], [1], [0, 0, 1, 1], [], []>} : vector<26x32xf32>, vector<32x96xf32>, vector<26x96xf32> -> vector<26x96xf32>
    %260 = vector.extract_strided_slice %259 {offsets = [0, 0], sizes = [13, 96], strides = [1, 1]} : vector<26x96xf32> to vector<13x96xf32>
    %261 = vector.extract_strided_slice %260 {offsets = [0, 0], sizes = [13, 16], strides = [1, 1]} : vector<13x96xf32> to vector<13x16xf32>
    %262 = vector.extract_strided_slice %260 {offsets = [0, 32], sizes = [13, 16], strides = [1, 1]} : vector<13x96xf32> to vector<13x16xf32>
    %263 = vector.extract_strided_slice %260 {offsets = [0, 64], sizes = [13, 16], strides = [1, 1]} : vector<13x96xf32> to vector<13x16xf32>
    %cst_114 = arith.constant dense<0.000000e+00> : vector<13x13xf32>
    %264 = tpu.matmul %261, %262, %cst_114 {dimension_numbers = #tpu.dot_dimension_numbers<[1], [1], [0], [0], [0, 0, 1, 0], [], []>} : vector<13x16xf32>, vector<13x16xf32>, vector<13x13xf32> -> vector<13x13xf32>
    %cst_115 = arith.constant 2.500000e-01 : f32
    %265 = vector.broadcast %cst_115 : f32 to vector<13x13xf32>
    %266 = arith.mulf %264, %265 : vector<13x13xf32>
    %cst_116 = arith.constant dense<0xFF800000> : vector<13xf32>
    %267 = vector.multi_reduction <maximumf>, %266, %cst_116 [1] : vector<13x13xf32> to vector<13xf32>
    %268 = vector.shape_cast %267 : vector<13xf32> to vector<13x1xf32>
    %269 = vector.broadcast %268 : vector<13x1xf32> to vector<13x13xf32>
    %270 = arith.subf %266, %269 : vector<13x13xf32>
    %271 = math.exp %270 : vector<13x13xf32>
    %cst_117 = arith.constant dense<0.000000e+00> : vector<13xf32>
    %272 = vector.multi_reduction <add>, %271, %cst_117 [1] : vector<13x13xf32> to vector<13xf32>
    %273 = vector.shape_cast %272 : vector<13xf32> to vector<13x1xf32>
    %274 = tpu.reciprocal %273 {approx = true} : vector<13x1xf32> -> vector<13x1xf32>
    %275 = vector.broadcast %274 : vector<13x1xf32> to vector<13x13xf32>
    %276 = arith.mulf %271, %275 : vector<13x13xf32>
    %cst_118 = arith.constant dense<0.000000e+00> : vector<13x16xf32>
    %277 = tpu.matmul %276, %263, %cst_118 {dimension_numbers = #tpu.dot_dimension_numbers<[1], [0], [0], [1], [0, 0, 1, 1], [], []>} : vector<13x13xf32>, vector<13x16xf32>, vector<13x16xf32> -> vector<13x16xf32>
    %278 = vector.extract_strided_slice %260 {offsets = [0, 16], sizes = [13, 16], strides = [1, 1]} : vector<13x96xf32> to vector<13x16xf32>
    %279 = vector.extract_strided_slice %260 {offsets = [0, 48], sizes = [13, 16], strides = [1, 1]} : vector<13x96xf32> to vector<13x16xf32>
    %280 = vector.extract_strided_slice %260 {offsets = [0, 80], sizes = [13, 16], strides = [1, 1]} : vector<13x96xf32> to vector<13x16xf32>
    %cst_119 = arith.constant dense<0.000000e+00> : vector<13x13xf32>
    %281 = tpu.matmul %278, %279, %cst_119 {dimension_numbers = #tpu.dot_dimension_numbers<[1], [1], [0], [0], [0, 0, 1, 0], [], []>} : vector<13x16xf32>, vector<13x16xf32>, vector<13x13xf32> -> vector<13x13xf32>
    %cst_120 = arith.constant 2.500000e-01 : f32
    %282 = vector.broadcast %cst_120 : f32 to vector<13x13xf32>
    %283 = arith.mulf %281, %282 : vector<13x13xf32>
    %cst_121 = arith.constant dense<0xFF800000> : vector<13xf32>
    %284 = vector.multi_reduction <maximumf>, %283, %cst_121 [1] : vector<13x13xf32> to vector<13xf32>
    %285 = vector.shape_cast %284 : vector<13xf32> to vector<13x1xf32>
    %286 = vector.broadcast %285 : vector<13x1xf32> to vector<13x13xf32>
    %287 = arith.subf %283, %286 : vector<13x13xf32>
    %288 = math.exp %287 : vector<13x13xf32>
    %cst_122 = arith.constant dense<0.000000e+00> : vector<13xf32>
    %289 = vector.multi_reduction <add>, %288, %cst_122 [1] : vector<13x13xf32> to vector<13xf32>
    %290 = vector.shape_cast %289 : vector<13xf32> to vector<13x1xf32>
    %291 = tpu.reciprocal %290 {approx = true} : vector<13x1xf32> -> vector<13x1xf32>
    %292 = vector.broadcast %291 : vector<13x1xf32> to vector<13x13xf32>
    %293 = arith.mulf %288, %292 : vector<13x13xf32>
    %cst_123 = arith.constant dense<0.000000e+00> : vector<13x16xf32>
    %294 = tpu.matmul %293, %280, %cst_123 {dimension_numbers = #tpu.dot_dimension_numbers<[1], [0], [0], [1], [0, 0, 1, 1], [], []>} : vector<13x13xf32>, vector<13x16xf32>, vector<13x16xf32> -> vector<13x16xf32>
    %295 = tpu.concatenate %277, %294 in 1 : vector<13x16xf32>, vector<13x16xf32> -> vector<13x32xf32>
    %296 = vector.extract_strided_slice %259 {offsets = [13, 0], sizes = [13, 96], strides = [1, 1]} : vector<26x96xf32> to vector<13x96xf32>
    %297 = vector.extract_strided_slice %296 {offsets = [0, 0], sizes = [13, 16], strides = [1, 1]} : vector<13x96xf32> to vector<13x16xf32>
    %298 = vector.extract_strided_slice %296 {offsets = [0, 32], sizes = [13, 16], strides = [1, 1]} : vector<13x96xf32> to vector<13x16xf32>
    %299 = vector.extract_strided_slice %296 {offsets = [0, 64], sizes = [13, 16], strides = [1, 1]} : vector<13x96xf32> to vector<13x16xf32>
    %cst_124 = arith.constant dense<0.000000e+00> : vector<13x13xf32>
    %300 = tpu.matmul %297, %298, %cst_124 {dimension_numbers = #tpu.dot_dimension_numbers<[1], [1], [0], [0], [0, 0, 1, 0], [], []>} : vector<13x16xf32>, vector<13x16xf32>, vector<13x13xf32> -> vector<13x13xf32>
    %cst_125 = arith.constant 2.500000e-01 : f32
    %301 = vector.broadcast %cst_125 : f32 to vector<13x13xf32>
    %302 = arith.mulf %300, %301 : vector<13x13xf32>
    %cst_126 = arith.constant dense<0xFF800000> : vector<13xf32>
    %303 = vector.multi_reduction <maximumf>, %302, %cst_126 [1] : vector<13x13xf32> to vector<13xf32>
    %304 = vector.shape_cast %303 : vector<13xf32> to vector<13x1xf32>
    %305 = vector.broadcast %304 : vector<13x1xf32> to vector<13x13xf32>
    %306 = arith.subf %302, %305 : vector<13x13xf32>
    %307 = math.exp %306 : vector<13x13xf32>
    %cst_127 = arith.constant dense<0.000000e+00> : vector<13xf32>
    %308 = vector.multi_reduction <add>, %307, %cst_127 [1] : vector<13x13xf32> to vector<13xf32>
    %309 = vector.shape_cast %308 : vector<13xf32> to vector<13x1xf32>
    %310 = tpu.reciprocal %309 {approx = true} : vector<13x1xf32> -> vector<13x1xf32>
    %311 = vector.broadcast %310 : vector<13x1xf32> to vector<13x13xf32>
    %312 = arith.mulf %307, %311 : vector<13x13xf32>
    %cst_128 = arith.constant dense<0.000000e+00> : vector<13x16xf32>
    %313 = tpu.matmul %312, %299, %cst_128 {dimension_numbers = #tpu.dot_dimension_numbers<[1], [0], [0], [1], [0, 0, 1, 1], [], []>} : vector<13x13xf32>, vector<13x16xf32>, vector<13x16xf32> -> vector<13x16xf32>
    %314 = vector.extract_strided_slice %296 {offsets = [0, 16], sizes = [13, 16], strides = [1, 1]} : vector<13x96xf32> to vector<13x16xf32>
    %315 = vector.extract_strided_slice %296 {offsets = [0, 48], sizes = [13, 16], strides = [1, 1]} : vector<13x96xf32> to vector<13x16xf32>
    %316 = vector.extract_strided_slice %296 {offsets = [0, 80], sizes = [13, 16], strides = [1, 1]} : vector<13x96xf32> to vector<13x16xf32>
    %cst_129 = arith.constant dense<0.000000e+00> : vector<13x13xf32>
    %317 = tpu.matmul %314, %315, %cst_129 {dimension_numbers = #tpu.dot_dimension_numbers<[1], [1], [0], [0], [0, 0, 1, 0], [], []>} : vector<13x16xf32>, vector<13x16xf32>, vector<13x13xf32> -> vector<13x13xf32>
    %cst_130 = arith.constant 2.500000e-01 : f32
    %318 = vector.broadcast %cst_130 : f32 to vector<13x13xf32>
    %319 = arith.mulf %317, %318 : vector<13x13xf32>
    %cst_131 = arith.constant dense<0xFF800000> : vector<13xf32>
    %320 = vector.multi_reduction <maximumf>, %319, %cst_131 [1] : vector<13x13xf32> to vector<13xf32>
    %321 = vector.shape_cast %320 : vector<13xf32> to vector<13x1xf32>
    %322 = vector.broadcast %321 : vector<13x1xf32> to vector<13x13xf32>
    %323 = arith.subf %319, %322 : vector<13x13xf32>
    %324 = math.exp %323 : vector<13x13xf32>
    %cst_132 = arith.constant dense<0.000000e+00> : vector<13xf32>
    %325 = vector.multi_reduction <add>, %324, %cst_132 [1] : vector<13x13xf32> to vector<13xf32>
    %326 = vector.shape_cast %325 : vector<13xf32> to vector<13x1xf32>
    %327 = tpu.reciprocal %326 {approx = true} : vector<13x1xf32> -> vector<13x1xf32>
    %328 = vector.broadcast %327 : vector<13x1xf32> to vector<13x13xf32>
    %329 = arith.mulf %324, %328 : vector<13x13xf32>
    %cst_133 = arith.constant dense<0.000000e+00> : vector<13x16xf32>
    %330 = tpu.matmul %329, %316, %cst_133 {dimension_numbers = #tpu.dot_dimension_numbers<[1], [0], [0], [1], [0, 0, 1, 1], [], []>} : vector<13x13xf32>, vector<13x16xf32>, vector<13x16xf32> -> vector<13x16xf32>
    %331 = tpu.concatenate %313, %330 in 1 : vector<13x16xf32>, vector<13x16xf32> -> vector<13x32xf32>
    %332 = tpu.concatenate %295, %331 in 0 : vector<13x32xf32>, vector<13x32xf32> -> vector<26x32xf32>
    %c1_134 = arith.constant 1 : index
    %c0_135 = arith.constant 0 : index
    %c0_136 = arith.constant 0 : index
    %333 = vector.load %arg10[%c1_134, %c0_135, %c0_136] : memref<2x32x32xf32, #tpu.memory_space<vmem>>, vector<1x32x32xf32>
    %334 = vector.shape_cast %333 : vector<1x32x32xf32> to vector<32x32xf32>
    %cst_137 = arith.constant dense<0.000000e+00> : vector<26x32xf32>
    %335 = tpu.matmul %332, %334, %cst_137 {dimension_numbers = #tpu.dot_dimension_numbers<[1], [0], [0], [1], [0, 0, 1, 1], [], []>} : vector<26x32xf32>, vector<32x32xf32>, vector<26x32xf32> -> vector<26x32xf32>
    %c1_138 = arith.constant 1 : index
    %c0_139 = arith.constant 0 : index
    %c0_140 = arith.constant 0 : index
    %336 = vector.load %arg11[%c1_138, %c0_139, %c0_140] : memref<2x1x32xf32, #tpu.memory_space<vmem>>, vector<1x1x32xf32>
    %337 = vector.shape_cast %336 : vector<1x1x32xf32> to vector<1x32xf32>
    %338 = vector.broadcast %337 : vector<1x32xf32> to vector<26x32xf32>
    %339 = arith.addf %335, %338 : vector<26x32xf32>
    %340 = arith.addf %230, %339 : vector<26x32xf32>
    %c1_141 = arith.constant 1 : index
    %c0_142 = arith.constant 0 : index
    %c0_143 = arith.constant 0 : index
    %341 = vector.load %arg12[%c1_141, %c0_142, %c0_143] : memref<2x1x32xf32, #tpu.memory_space<vmem>>, vector<1x1x32xf32>
    %342 = vector.shape_cast %341 : vector<1x1x32xf32> to vector<1x32xf32>
    %c1_144 = arith.constant 1 : index
    %c0_145 = arith.constant 0 : index
    %c0_146 = arith.constant 0 : index
    %343 = vector.load %arg13[%c1_144, %c0_145, %c0_146] : memref<2x1x32xf32, #tpu.memory_space<vmem>>, vector<1x1x32xf32>
    %344 = vector.shape_cast %343 : vector<1x1x32xf32> to vector<1x32xf32>
    %cst_147 = arith.constant dense<0.000000e+00> : vector<26xf32>
    %345 = vector.multi_reduction <add>, %340, %cst_147 [1] : vector<26x32xf32> to vector<26xf32>
    %346 = vector.shape_cast %345 : vector<26xf32> to vector<26x1xf32>
    %cst_148 = arith.constant 3.200000e+01 : f32
    %347 = vector.broadcast %cst_148 : f32 to vector<26x1xf32>
    %348 = arith.divf %346, %347 : vector<26x1xf32>
    %349 = vector.broadcast %348 : vector<26x1xf32> to vector<26x32xf32>
    %350 = arith.subf %340, %349 : vector<26x32xf32>
    %351 = arith.mulf %350, %350 : vector<26x32xf32>
    %cst_149 = arith.constant dense<0.000000e+00> : vector<26xf32>
    %352 = vector.multi_reduction <add>, %351, %cst_149 [1] : vector<26x32xf32> to vector<26xf32>
    %353 = vector.shape_cast %352 : vector<26xf32> to vector<26x1xf32>
    %cst_150 = arith.constant 3.200000e+01 : f32
    %354 = vector.broadcast %cst_150 : f32 to vector<26x1xf32>
    %355 = arith.divf %353, %354 : vector<26x1xf32>
    %356 = vector.broadcast %348 : vector<26x1xf32> to vector<26x32xf32>
    %357 = arith.subf %340, %356 : vector<26x32xf32>
    %cst_151 = arith.constant 9.99999974E-6 : f32
    %358 = vector.broadcast %cst_151 : f32 to vector<26x1xf32>
    %359 = arith.addf %355, %358 : vector<26x1xf32>
    %360 = math.rsqrt %359 : vector<26x1xf32>
    %361 = vector.broadcast %360 : vector<26x1xf32> to vector<26x32xf32>
    %362 = arith.mulf %357, %361 : vector<26x32xf32>
    %363 = vector.broadcast %342 : vector<1x32xf32> to vector<26x32xf32>
    %364 = arith.mulf %362, %363 : vector<26x32xf32>
    %365 = vector.broadcast %344 : vector<1x32xf32> to vector<26x32xf32>
    %366 = arith.addf %364, %365 : vector<26x32xf32>
    %c1_152 = arith.constant 1 : index
    %c0_153 = arith.constant 0 : index
    %c0_154 = arith.constant 0 : index
    %367 = vector.load %arg14[%c1_152, %c0_153, %c0_154] : memref<2x32x64xf32, #tpu.memory_space<vmem>>, vector<1x32x64xf32>
    %368 = vector.shape_cast %367 : vector<1x32x64xf32> to vector<32x64xf32>
    %cst_155 = arith.constant dense<0.000000e+00> : vector<26x64xf32>
    %369 = tpu.matmul %366, %368, %cst_155 {dimension_numbers = #tpu.dot_dimension_numbers<[1], [0], [0], [1], [0, 0, 1, 1], [], []>} : vector<26x32xf32>, vector<32x64xf32>, vector<26x64xf32> -> vector<26x64xf32>
    %c1_156 = arith.constant 1 : index
    %c0_157 = arith.constant 0 : index
    %c0_158 = arith.constant 0 : index
    %370 = vector.load %arg15[%c1_156, %c0_157, %c0_158] : memref<2x1x64xf32, #tpu.memory_space<vmem>>, vector<1x1x64xf32>
    %371 = vector.shape_cast %370 : vector<1x1x64xf32> to vector<1x64xf32>
    %372 = vector.broadcast %371 : vector<1x64xf32> to vector<26x64xf32>
    %373 = arith.addf %369, %372 : vector<26x64xf32>
    %cst_159 = arith.constant 5.000000e-01 : f32
    %374 = vector.broadcast %cst_159 : f32 to vector<26x64xf32>
    %375 = arith.mulf %374, %373 : vector<26x64xf32>
    %cst_160 = arith.constant 0.707106769 : f32
    %376 = vector.broadcast %cst_160 : f32 to vector<26x64xf32>
    %377 = arith.mulf %373, %376 : vector<26x64xf32>
    %378 = math.absf %377 : vector<26x64xf32>
    %cst_161 = arith.constant 0.327591091 : f32
    %379 = vector.broadcast %cst_161 : f32 to vector<26x64xf32>
    %380 = arith.mulf %379, %378 : vector<26x64xf32>
    %cst_162 = arith.constant 1.000000e+00 : f32
    %381 = vector.broadcast %cst_162 : f32 to vector<26x64xf32>
    %382 = arith.addf %381, %380 : vector<26x64xf32>
    %cst_163 = arith.constant 1.000000e+00 : f32
    %383 = vector.broadcast %cst_163 : f32 to vector<26x64xf32>
    %384 = arith.divf %383, %382 : vector<26x64xf32>
    %cst_164 = arith.constant 1.06140542 : f32
    %385 = vector.broadcast %cst_164 : f32 to vector<26x64xf32>
    %386 = arith.mulf %385, %384 : vector<26x64xf32>
    %cst_165 = arith.constant -1.45315206 : f32
    %387 = vector.broadcast %cst_165 : f32 to vector<26x64xf32>
    %388 = arith.addf %386, %387 : vector<26x64xf32>
    %389 = arith.mulf %388, %384 : vector<26x64xf32>
    %cst_166 = arith.constant 1.42141378 : f32
    %390 = vector.broadcast %cst_166 : f32 to vector<26x64xf32>
    %391 = arith.addf %389, %390 : vector<26x64xf32>
    %392 = arith.mulf %391, %384 : vector<26x64xf32>
    %cst_167 = arith.constant -0.284496725 : f32
    %393 = vector.broadcast %cst_167 : f32 to vector<26x64xf32>
    %394 = arith.addf %392, %393 : vector<26x64xf32>
    %395 = arith.mulf %394, %384 : vector<26x64xf32>
    %cst_168 = arith.constant 0.254829586 : f32
    %396 = vector.broadcast %cst_168 : f32 to vector<26x64xf32>
    %397 = arith.addf %395, %396 : vector<26x64xf32>
    %398 = arith.mulf %397, %384 : vector<26x64xf32>
    %cst_169 = arith.constant 0.000000e+00 : f32
    %399 = vector.broadcast %cst_169 : f32 to vector<26x64xf32>
    %400 = arith.subf %399, %378 : vector<26x64xf32>
    %401 = arith.mulf %400, %378 : vector<26x64xf32>
    %402 = math.exp %401 : vector<26x64xf32>
    %403 = arith.mulf %398, %402 : vector<26x64xf32>
    %cst_170 = arith.constant 1.000000e+00 : f32
    %404 = vector.broadcast %cst_170 : f32 to vector<26x64xf32>
    %405 = arith.subf %404, %403 : vector<26x64xf32>
    %cst_171 = arith.constant 0.000000e+00 : f32
    %406 = vector.broadcast %cst_171 : f32 to vector<26x64xf32>
    %407 = arith.cmpf olt, %377, %406 : vector<26x64xf32>
    %cst_172 = arith.constant 0.000000e+00 : f32
    %408 = vector.broadcast %cst_172 : f32 to vector<26x64xf32>
    %409 = arith.subf %408, %405 : vector<26x64xf32>
    %410 = arith.select %407, %409, %405 : vector<26x64xi1>, vector<26x64xf32>
    %cst_173 = arith.constant 1.000000e+00 : f32
    %411 = vector.broadcast %cst_173 : f32 to vector<26x64xf32>
    %412 = arith.addf %411, %410 : vector<26x64xf32>
    %413 = arith.mulf %375, %412 : vector<26x64xf32>
    %c1_174 = arith.constant 1 : index
    %c0_175 = arith.constant 0 : index
    %c0_176 = arith.constant 0 : index
    %414 = vector.load %arg16[%c1_174, %c0_175, %c0_176] : memref<2x64x32xf32, #tpu.memory_space<vmem>>, vector<1x64x32xf32>
    %415 = vector.shape_cast %414 : vector<1x64x32xf32> to vector<64x32xf32>
    %cst_177 = arith.constant dense<0.000000e+00> : vector<26x32xf32>
    %416 = tpu.matmul %413, %415, %cst_177 {dimension_numbers = #tpu.dot_dimension_numbers<[1], [0], [0], [1], [0, 0, 1, 1], [], []>} : vector<26x64xf32>, vector<64x32xf32>, vector<26x32xf32> -> vector<26x32xf32>
    %c1_178 = arith.constant 1 : index
    %c0_179 = arith.constant 0 : index
    %c0_180 = arith.constant 0 : index
    %417 = vector.load %arg17[%c1_178, %c0_179, %c0_180] : memref<2x1x32xf32, #tpu.memory_space<vmem>>, vector<1x1x32xf32>
    %418 = vector.shape_cast %417 : vector<1x1x32xf32> to vector<1x32xf32>
    %419 = vector.broadcast %418 : vector<1x32xf32> to vector<26x32xf32>
    %420 = arith.addf %416, %419 : vector<26x32xf32>
    %421 = arith.addf %340, %420 : vector<26x32xf32>
    %422 = vector.extract_strided_slice %421 {offsets = [0, 0], sizes = [1, 32], strides = [1, 1]} : vector<26x32xf32> to vector<1x32xf32>
    %423 = vector.extract_strided_slice %421 {offsets = [13, 0], sizes = [1, 32], strides = [1, 1]} : vector<26x32xf32> to vector<1x32xf32>
    %424 = tpu.concatenate %422, %423 in 0 : vector<1x32xf32>, vector<1x32xf32> -> vector<2x32xf32>
    %c0_181 = arith.constant 0 : index
    %c0_182 = arith.constant 0 : index
    %425 = vector.load %arg18[%c0_181, %c0_182] : memref<2x32xf32, #tpu.memory_space<vmem>>, vector<2x32xf32>
    tpu.vector_store %arg18[%c0_181, %c0_182], %424 {strides = array<i32>} : memref<2x32xf32, #tpu.memory_space<vmem>>, vector<2x32xf32>,
    return
  }
}

module attributes {stable_mosaic.version = 11 : i64} {
  func.func @_head_kernel(%arg0: memref<2x32xf32, #tpu.memory_space<vmem>>, %arg1: memref<2x32xf32, #tpu.memory_space<vmem>>, %arg2: memref<1x64xf32, #tpu.memory_space<vmem>>, %arg3: memref<1x64xf32, #tpu.memory_space<vmem>>, %arg4: memref<64x3xf32, #tpu.memory_space<vmem>>, %arg5: memref<1x3xf32, #tpu.memory_space<vmem>>, %arg6: memref<2x3xf32, #tpu.memory_space<vmem>>) attributes {dimension_semantics = [], scalar_prefetch = 0 : i64, scratch_operands = 0 : i64, tpu.core_type = #tpu.core_type<tc>} {
    %c0 = arith.constant 0 : index
    %c0_0 = arith.constant 0 : index
    %0 = vector.load %arg0[%c0, %c0_0] : memref<2x32xf32, #tpu.memory_space<vmem>>, vector<2x32xf32>
    %c0_1 = arith.constant 0 : index
    %c0_2 = arith.constant 0 : index
    %1 = vector.load %arg1[%c0_1, %c0_2] : memref<2x32xf32, #tpu.memory_space<vmem>>, vector<2x32xf32>
    %2 = tpu.concatenate %0, %1 in 1 : vector<2x32xf32>, vector<2x32xf32> -> vector<2x64xf32>
    %c0_3 = arith.constant 0 : index
    %c0_4 = arith.constant 0 : index
    %3 = vector.load %arg2[%c0_3, %c0_4] : memref<1x64xf32, #tpu.memory_space<vmem>>, vector<1x64xf32>
    %c0_5 = arith.constant 0 : index
    %c0_6 = arith.constant 0 : index
    %4 = vector.load %arg3[%c0_5, %c0_6] : memref<1x64xf32, #tpu.memory_space<vmem>>, vector<1x64xf32>
    %cst = arith.constant dense<0.000000e+00> : vector<2xf32>
    %5 = vector.multi_reduction <add>, %2, %cst [1] : vector<2x64xf32> to vector<2xf32>
    %6 = vector.shape_cast %5 : vector<2xf32> to vector<2x1xf32>
    %cst_7 = arith.constant 6.400000e+01 : f32
    %7 = vector.broadcast %cst_7 : f32 to vector<2x1xf32>
    %8 = arith.divf %6, %7 : vector<2x1xf32>
    %9 = vector.broadcast %8 : vector<2x1xf32> to vector<2x64xf32>
    %10 = arith.subf %2, %9 : vector<2x64xf32>
    %11 = arith.mulf %10, %10 : vector<2x64xf32>
    %cst_8 = arith.constant dense<0.000000e+00> : vector<2xf32>
    %12 = vector.multi_reduction <add>, %11, %cst_8 [1] : vector<2x64xf32> to vector<2xf32>
    %13 = vector.shape_cast %12 : vector<2xf32> to vector<2x1xf32>
    %cst_9 = arith.constant 6.400000e+01 : f32
    %14 = vector.broadcast %cst_9 : f32 to vector<2x1xf32>
    %15 = arith.divf %13, %14 : vector<2x1xf32>
    %16 = vector.broadcast %8 : vector<2x1xf32> to vector<2x64xf32>
    %17 = arith.subf %2, %16 : vector<2x64xf32>
    %cst_10 = arith.constant 9.99999974E-6 : f32
    %18 = vector.broadcast %cst_10 : f32 to vector<2x1xf32>
    %19 = arith.addf %15, %18 : vector<2x1xf32>
    %20 = math.rsqrt %19 : vector<2x1xf32>
    %21 = vector.broadcast %20 : vector<2x1xf32> to vector<2x64xf32>
    %22 = arith.mulf %17, %21 : vector<2x64xf32>
    %23 = vector.broadcast %3 : vector<1x64xf32> to vector<2x64xf32>
    %24 = arith.mulf %22, %23 : vector<2x64xf32>
    %25 = vector.broadcast %4 : vector<1x64xf32> to vector<2x64xf32>
    %26 = arith.addf %24, %25 : vector<2x64xf32>
    %c0_11 = arith.constant 0 : index
    %c0_12 = arith.constant 0 : index
    %27 = vector.load %arg4[%c0_11, %c0_12] : memref<64x3xf32, #tpu.memory_space<vmem>>, vector<64x3xf32>
    %cst_13 = arith.constant dense<0.000000e+00> : vector<2x3xf32>
    %28 = tpu.matmul %26, %27, %cst_13 {dimension_numbers = #tpu.dot_dimension_numbers<[1], [0], [0], [1], [0, 0, 1, 1], [], []>} : vector<2x64xf32>, vector<64x3xf32>, vector<2x3xf32> -> vector<2x3xf32>
    %c0_14 = arith.constant 0 : index
    %c0_15 = arith.constant 0 : index
    %29 = vector.load %arg5[%c0_14, %c0_15] : memref<1x3xf32, #tpu.memory_space<vmem>>, vector<1x3xf32>
    %30 = vector.broadcast %29 : vector<1x3xf32> to vector<2x3xf32>
    %31 = arith.addf %28, %30 : vector<2x3xf32>
    %c0_16 = arith.constant 0 : index
    %c0_17 = arith.constant 0 : index
    %32 = vector.load %arg6[%c0_16, %c0_17] : memref<2x3xf32, #tpu.memory_space<vmem>>, vector<2x3xf32>
    tpu.vector_store %arg6[%c0_16, %c0_17], %31 {strides = array<i32>} : memref<2x3xf32, #tpu.memory_space<vmem>>, vector<2x3xf32>,
    return
  }
}

</mosaic_0001>

<llo_original>
// kernel: fnirs_pret_forward.4
$region0: #{fnirs_pret_forward.4}
  #allocation0 [shape = 'u32[]', space=smem, size = 0x4, offset = 0x4, fixed_abs, tag = 'smem constant byte address 0x4 - core index']
  #allocation1 [shape = 'u32[144,128]{1,0:T(1,128)}', space=vmem, size = 0x12000, scoped, tag = 'internal scratch']
  %s0 = inlined_call_operand.vmem [shape: f32[2,24,64], index: 0, kind: input, shape index: {}]
  %s1 = inlined_call_operand.vmem [shape: f32[64,64], index: 1, kind: input, shape index: {}]
  %s2 = inlined_call_operand.vmem [shape: f32[2,1,64], index: 2, kind: input, shape index: {}]
  %s3 = inlined_call_operand.vmem [shape: f32[2,1,64], index: 3, kind: input, shape index: {}]
  %s4 = inlined_call_operand.vmem [shape: f32[2,24,64], index: 4, kind: output, shape index: {}]
  %s5 = sld [smem:[#allocation0]]
  $region26: #{fnirs_pret_forward.4} parent=0
    _
  %s7 = ssub.s32 1, %s5
  %s8 = scalar_select 0, %s7, %s5
  // Predicated region
  $region2: #{fnirs_pret_forward.4} parent=0 // pred_check
    _
  $region3: #{fnirs_pret_forward.4} parent=0 // pred_check_branch
    %10 = sbr.rel (0) target = $region5
  $region4: #{fnirs_pret_forward.4} parent=0 // pred_region
    _
  $region5: #{fnirs_pret_forward.4} parent=0 // pred_fallthru
    _
  // Predicated region
  $region6: #{fnirs_pret_forward.4} parent=0 // pred_check
    _
  $region7: #{fnirs_pret_forward.4} parent=0 // pred_check_branch
    %12 = sbr.rel (0) target = $region9
  $region8: #{fnirs_pret_forward.4} parent=0 // pred_region
    _
  $region9: #{fnirs_pret_forward.4} parent=0 // pred_fallthru
    _
  // Predicated region
  $region10: #{fnirs_pret_forward.4} parent=0 // pred_check
    _
  $region11: #{fnirs_pret_forward.4} parent=0 // pred_check_branch
    %14 = sbr.rel (0) target = $region13
  $region12: #{fnirs_pret_forward.4} parent=0 // pred_region
    _
  $region13: #{fnirs_pret_forward.4} parent=0 // pred_fallthru
    _
  // Predicated region
  $region14: #{fnirs_pret_forward.4} parent=0 // pred_check
    _
  $region15: #{fnirs_pret_forward.4} parent=0 // pred_check_branch
    %16 = sbr.rel (0) target = $region17
  $region16: #{fnirs_pret_forward.4} parent=0 // pred_region
    _
  $region17: #{fnirs_pret_forward.4} parent=0 // pred_fallthru
    _
  %v17 = vld [vmem:[%s1] sm:$0xff]
  %v18 = vld [vmem:[%s1 + $0x8] sm:$0xff]
  %v19 = vld [vmem:[%s1 + $0x10] sm:$0xff]
  %v20 = vld [vmem:[%s1 + $0x18] sm:$0xff]
  %v21 = vld [vmem:[%s1 + $0x20] sm:$0xff]
  %v22 = vld [vmem:[%s1 + $0x28] sm:$0xff]
  %v23 = vld [vmem:[%s1 + $0x30] sm:$0xff]
  %v24 = vld [vmem:[%s1 + $0x38] sm:$0xff]
  %v25 = vld [vmem:[%s0] sm:$0xff]
  %v26 = vld [vmem:[%s0 + $0x8] sm:$0xff]
  %v27 = vld [vmem:[%s0 + $0x10] sm:$0xff]
  %vm28 = vcmask 523264
  %v30 = vsel %vm28, %v25, 0
  %v33 = vsel %vm28, %v26, 0
  %v36 = vsel %vm28, %v27, 0
  %38 = vmatprep.subr.mxu0 0.0
  %39 = vmatpush1.msra.mxu0 %v17
  %40 = vmatprep.subr.mxu0 0.0
  %41 = vmatpush1.msra.mxu0 %v18
  %42 = vmatprep.subr.mxu0 0.0
  %43 = vmatpush1.msra.mxu0 %v19
  %44 = vmatprep.subr.mxu0 0.0
  %45 = vmatpush1.msra.mxu0 %v20
  %46 = vmatprep.subr.mxu0 0.0
  %47 = vmatpush1.msra.mxu0 %v21
  %48 = vmatprep.subr.mxu0 0.0
  %49 = vmatpush1.msra.mxu0 %v22
  %50 = vmatprep.subr.mxu0 0.0
  %51 = vmatpush1.msra.mxu0 %v23
  %52 = vmatprep.subr.mxu0 0.0
  %53 = vmatpush1.msra.mxu0 %v24
  %54 = vmatprep.subr.mxu0 0.0
  %55 = vmatpush1.msra.mxu0 0.0
  %56 = vmatprep.subr.mxu0 0.0
  %57 = vmatpush1.msra.mxu0 0.0
  %58 = vmatprep.subr.mxu0 0.0
  %59 = vmatpush1.msra.mxu0 0.0
  %60 = vmatprep.subr.mxu0 0.0
  %61 = vmatpush1.msra.mxu0 0.0
  %62 = vmatprep.subr.mxu0 0.0
  %63 = vmatpush1.msra.mxu0 0.0
  %64 = vmatprep.subr.mxu0 0.0
  %65 = vmatpush1.msra.mxu0 0.0
  %66 = vmatprep.subr.mxu0 0.0
  %67 = vmatpush1.msra.mxu0 0.0
  %68 = vmatprep.subr.mxu0 0.0
  %69 = vmatpush1.msra.mxu0 0.0
  %70 = vmatprep.subr.mxu0 0.0
  %71 = vmatpush1.msra.mxu0 0.0
  %72 = vmatprep.subr.mxu0 0.0
  %73 = vmatpush1.msra.mxu0 0.0
  %74 = vmatprep.subr.mxu0 0.0
  %75 = vmatpush1.msra.mxu0 0.0
  %76 = vmatprep.subr.mxu0 0.0
  %77 = vmatpush1.msra.mxu0 0.0
  %78 = vmatprep.subr.mxu0 0.0
  %79 = vmatpush1.msra.mxu0 0.0
  %80 = vmatprep.subr.mxu0 0.0
  %81 = vmatpush1.msra.mxu0 0.0
  %82 = vmatprep.subr.mxu0 0.0
  %83 = vmatpush1.msra.mxu0 0.0
  %84 = vmatprep.subr.mxu0 0.0
  %85 = vmatpush1.msra.mxu0 0.0
  %86 = vmatprep.subr.mxu0 0.0
  %87 = vmatpush1.msra.mxu0 0.0
  %88 = vmatprep.subr.mxu0 0.0
  %89 = vmatpush1.msra.mxu0 0.0
  %90 = vmatprep.subr.mxu0 0.0
  %91 = vmatpush1.msra.mxu0 0.0
  %92 = vmatprep.subr.mxu0 0.0
  %93 = vmatpush1.msra.mxu0 0.0
  %94 = vmatprep.subr.mxu0 0.0
  %95 = vmatpush1.msra.mxu0 0.0
  %96 = vmatprep.subr.mxu0 0.0
  %97 = vmatpush1.msra.mxu0 0.0
  %98 = vmatprep.subr.mxu0 0.0
  %99 = vmatpush1.msra.mxu0 0.0
  %100 = vmatprep.subr.mxu0 0.0
  %101 = vmatpush1.msra.mxu0 0.0
  %102 = vmatprep.mubr.f32.mxu0 0.0
  %103 = vmatmul.mubr.f32.gmra.mrb[0].mxu0 %v30
  %v104 = vpop.f32.mrb[0].mxu0
  %v105 = vadd.f32 0.0, %v104
  %v106 = vpop.f32.mrb[0].mxu0
  %107 = vmatprep.mubr.f32.mxu0 0.0
  %108 = vmatmul.mubr.f32.gmra.mrb[0].mxu0 %v33
  %v109 = vpop.f32.mrb[0].mxu0
  %v110 = vadd.f32 0.0, %v109
  %v111 = vpop.f32.mrb[0].mxu0
  %112 = vmatprep.mubr.f32.mxu0 0.0
  %113 = vmatmul.mubr.f32.gmra.mrb[0].mxu0 %v36
  %v114 = vpop.f32.mrb[0].mxu0
  %v115 = vadd.f32 0.0, %v114
  %v116 = vpop.f32.mrb[0].mxu0
  %117 = vdwg.mxu0
  %v118 = vld [vmem:[%s2] sm:$0x1]
  %v119 = vld [vmem:[%s3] sm:$0x1]
  %v120 = vsel %vm28, %v105, 0.0
  %121 = vadd.xlane.f32.xlu0 %v120
  %v122 = vpop.xlane.xlu0 %121
  %v123 = vsel %vm28, %v110, 0.0
  %124 = vadd.xlane.f32.xlu0 %v123
  %v125 = vpop.xlane.xlu0 %124
  %v126 = vsel %vm28, %v115, 0.0
  %127 = vadd.xlane.f32.xlu0 %v126
  %v128 = vpop.xlane.xlu0 %127
  %v129 = vrcp.pop 64.0
  %v130 = vmul.f32 %v122, %v129
  %v131 = vmul.f32 %v125, %v129
  %v132 = vmul.f32 %v128, %v129
  %v133 = vsub.f32 %v105, %v130
  %v134 = vsub.f32 %v110, %v131
  %v135 = vsub.f32 %v115, %v132
  %v136 = vmul.f32 %v133, %v133
  %v137 = vmul.f32 %v134, %v134
  %v138 = vmul.f32 %v135, %v135
  %v139 = vsel %vm28, %v136, 0.0
  %140 = vadd.xlane.f32.xlu0 %v139
  %v141 = vpop.xlane.xlu0 %140
  %v142 = vsel %vm28, %v137, 0.0
  %143 = vadd.xlane.f32.xlu0 %v142
  %v144 = vpop.xlane.xlu0 %143
  %v145 = vsel %vm28, %v138, 0.0
  %146 = vadd.xlane.f32.xlu0 %v145
  %v147 = vpop.xlane.xlu0 %146
  %v148 = vmul.f32 %v141, %v129
  %v149 = vmul.f32 %v144, %v129
  %v150 = vmul.f32 %v147, %v129
  %v151 = vadd.f32 %v148, 1e-05
  %v152 = vadd.f32 %v149, 1e-05
  %v153 = vadd.f32 %v150, 1e-05
  %v154 = vrsqrt.pop %v151
  %v155 = vrsqrt.pop %v152
  %v156 = vrsqrt.pop %v153
  %v157 = vmul.f32 %v133, %v154
  %v158 = vmul.f32 %v134, %v155
  %v159 = vmul.f32 %v135, %v156
  %v161 = vlaneseq
  %v162 = vshrl.u32 %v161, 7
  %v163 = vsub.s32 0, %v162
  %v164 = vrot.slane %v118, %v163
  %v166 = vmul.f32 %v157, %v164
  %v167 = vmul.f32 %v158, %v164
  %v168 = vmul.f32 %v159, %v164
  %v170 = vlaneseq
  %v171 = vshrl.u32 %v170, 7
  %v172 = vsub.s32 0, %v171
  %v173 = vrot.slane %v119, %v172
  %v175 = vadd.f32 %v166, %v173
  %v176 = vadd.f32 %v167, %v173
  %v177 = vadd.f32 %v168, %v173
  %178 = vst.msk [vmem:[%s4] sm:$0xff] %vm28, %v175
  %179 = vst.msk [vmem:[%s4 + $0x8] sm:$0xff] %vm28, %v176
  %180 = vst.msk [vmem:[%s4 + $0x10] sm:$0xff] %vm28, %v177
  %s181 = scalar_lea.vmem %s0, 24
  %v182 = vld [vmem:[%s181] sm:$0xff]
  %v183 = vld [vmem:[%s181 + $0x8] sm:$0xff]
  %v184 = vld [vmem:[%s181 + $0x10] sm:$0xff]
  %v186 = vsel %vm28, %v182, 0
  %v189 = vsel %vm28, %v183, 0
  %v192 = vsel %vm28, %v184, 0
  %194 = vmatprep.subr.mxu0 0.0
  %195 = vmatpush1.msra.mxu0 %v17
  %196 = vmatprep.subr.mxu0 0.0
  %197 = vmatpush1.msra.mxu0 %v18
  %198 = vmatprep.subr.mxu0 0.0
  %199 = vmatpush1.msra.mxu0 %v19
  %200 = vmatprep.subr.mxu0 0.0
  %201 = vmatpush1.msra.mxu0 %v20
  %202 = vmatprep.subr.mxu0 0.0
  %203 = vmatpush1.msra.mxu0 %v21
  %204 = vmatprep.subr.mxu0 0.0
  %205 = vmatpush1.msra.mxu0 %v22
  %206 = vmatprep.subr.mxu0 0.0
  %207 = vmatpush1.msra.mxu0 %v23
  %208 = vmatprep.subr.mxu0 0.0
  %209 = vmatpush1.msra.mxu0 %v24
  %210 = vmatprep.subr.mxu0 0.0
  %211 = vmatpush1.msra.mxu0 0.0
  %212 = vmatprep.subr.mxu0 0.0
  %213 = vmatpush1.msra.mxu0 0.0
  %214 = vmatprep.subr.mxu0 0.0
  %215 = vmatpush1.msra.mxu0 0.0
  %216 = vmatprep.subr.mxu0 0.0
  %217 = vmatpush1.msra.mxu0 0.0
  %218 = vmatprep.subr.mxu0 0.0
  %219 = vmatpush1.msra.mxu0 0.0
  %220 = vmatprep.subr.mxu0 0.0
  %221 = vmatpush1.msra.mxu0 0.0
  %222 = vmatprep.subr.mxu0 0.0
  %223 = vmatpush1.msra.mxu0 0.0
  %224 = vmatprep.subr.mxu0 0.0
  %225 = vmatpush1.msra.mxu0 0.0
  %226 = vmatprep.subr.mxu0 0.0
  %227 = vmatpush1.msra.mxu0 0.0
  %228 = vmatprep.subr.mxu0 0.0
  %229 = vmatpush1.msra.mxu0 0.0
  %230 = vmatprep.subr.mxu0 0.0
  %231 = vmatpush1.msra.mxu0 0.0
  %232 = vmatprep.subr.mxu0 0.0
  %233 = vmatpush1.msra.mxu0 0.0
  %234 = vmatprep.subr.mxu0 0.0
  %235 = vmatpush1.msra.mxu0 0.0
  %236 = vmatprep.subr.mxu0 0.0
  %237 = vmatpush1.msra.mxu0 0.0
  %238 = vmatprep.subr.mxu0 0.0
  %239 = vmatpush1.msra.mxu0 0.0
  %240 = vmatprep.subr.mxu0 0.0
  %241 = vmatpush1.msra.mxu0 0.0
  %242 = vmatprep.subr.mxu0 0.0
  %243 = vmatpush1.msra.mxu0 0.0
  %244 = vmatprep.subr.mxu0 0.0
  %245 = vmatpush1.msra.mxu0 0.0
  %246 = vmatprep.subr.mxu0 0.0
  %247 = vmatpush1.msra.mxu0 0.0
  %248 = vmatprep.subr.mxu0 0.0
  %249 = vmatpush1.msra.mxu0 0.0
  %250 = vmatprep.subr.mxu0 0.0
  %251 = vmatpush1.msra.mxu0 0.0
  %252 = vmatprep.subr.mxu0 0.0
  %253 = vmatpush1.msra.mxu0 0.0
  %254 = vmatprep.subr.mxu0 0.0
  %255 = vmatpush1.msra.mxu0 0.0
  %256 = vmatprep.subr.mxu0 0.0
  %257 = vmatpush1.msra.mxu0 0.0
  %258 = vmatprep.mubr.f32.mxu0 0.0
  %259 = vmatmul.mubr.f32.gmra.mrb[0].mxu0 %v186
  %v260 = vpop.f32.mrb[0].mxu0
  %v261 = vadd.f32 0.0, %v260
  %v262 = vpop.f32.mrb[0].mxu0
  %263 = vmatprep.mubr.f32.mxu0 0.0
  %264 = vmatmul.mubr.f32.gmra.mrb[0].mxu0 %v189
  %v265 = vpop.f32.mrb[0].mxu0
  %v266 = vadd.f32 0.0, %v265
  %v267 = vpop.f32.mrb[0].mxu0
  %268 = vmatprep.mubr.f32.mxu0 0.0
  %269 = vmatmul.mubr.f32.gmra.mrb[0].mxu0 %v192
  %v270 = vpop.f32.mrb[0].mxu0
  %v271 = vadd.f32 0.0, %v270
  %v272 = vpop.f32.mrb[0].mxu0
  %273 = vdwg.mxu0
  %s274 = scalar_lea.vmem %s2, 1
  %v275 = vld [vmem:[%s274] sm:$0x1]
  %s276 = scalar_lea.vmem %s3, 1
  %v277 = vld [vmem:[%s276] sm:$0x1]
  %v278 = vsel %vm28, %v261, 0.0
  %279 = vadd.xlane.f32.xlu0 %v278
  %v280 = vpop.xlane.xlu0 %279
  %v281 = vsel %vm28, %v266, 0.0
  %282 = vadd.xlane.f32.xlu0 %v281
  %v283 = vpop.xlane.xlu0 %282
  %v284 = vsel %vm28, %v271, 0.0
  %285 = vadd.xlane.f32.xlu0 %v284
  %v286 = vpop.xlane.xlu0 %285
  %v287 = vmul.f32 %v280, %v129
  %v288 = vmul.f32 %v283, %v129
  %v289 = vmul.f32 %v286, %v129
  %v290 = vsub.f32 %v261, %v287
  %v291 = vsub.f32 %v266, %v288
  %v292 = vsub.f32 %v271, %v289
  %v293 = vmul.f32 %v290, %v290
  %v294 = vmul.f32 %v291, %v291
  %v295 = vmul.f32 %v292, %v292
  %v296 = vsel %vm28, %v293, 0.0
  %297 = vadd.xlane.f32.xlu0 %v296
  %v298 = vpop.xlane.xlu0 %297
  %v299 = vsel %vm28, %v294, 0.0
  %300 = vadd.xlane.f32.xlu0 %v299
  %v301 = vpop.xlane.xlu0 %300
  %v302 = vsel %vm28, %v295, 0.0
  %303 = vadd.xlane.f32.xlu0 %v302
  %v304 = vpop.xlane.xlu0 %303
  %v305 = vmul.f32 %v298, %v129
  %v306 = vmul.f32 %v301, %v129
  %v307 = vmul.f32 %v304, %v129
  %v308 = vadd.f32 %v305, 1e-05
  %v309 = vadd.f32 %v306, 1e-05
  %v310 = vadd.f32 %v307, 1e-05
  %v311 = vrsqrt.pop %v308
  %v312 = vrsqrt.pop %v309
  %v313 = vrsqrt.pop %v310
  %v314 = vmul.f32 %v290, %v311
  %v315 = vmul.f32 %v291, %v312
  %v316 = vmul.f32 %v292, %v313
  %v318 = vlaneseq
  %v319 = vshrl.u32 %v318, 7
  %v320 = vsub.s32 0, %v319
  %v321 = vrot.slane %v275, %v320
  %v323 = vmul.f32 %v314, %v321
  %v324 = vmul.f32 %v315, %v321
  %v325 = vmul.f32 %v316, %v321
  %v327 = vlaneseq
  %v328 = vshrl.u32 %v327, 7
  %v329 = vsub.s32 0, %v328
  %v330 = vrot.slane %v277, %v329
  %v332 = vadd.f32 %v323, %v330
  %v333 = vadd.f32 %v324, %v330
  %v334 = vadd.f32 %v325, %v330
  %s335 = scalar_lea.vmem %s4, 24
  %336 = vst.msk [vmem:[%s335] sm:$0xff] %vm28, %v332
  %337 = vst.msk [vmem:[%s335 + $0x8] sm:$0xff] %vm28, %v333
  %338 = vst.msk [vmem:[%s335 + $0x10] sm:$0xff] %vm28, %v334
  // Predicated region
  $region18: #{fnirs_pret_forward.4} parent=0 // pred_check
    _
  $region19: #{fnirs_pret_forward.4} parent=0 // pred_check_branch
    %340 = sbr.rel (0) target = $region21
  $region20: #{fnirs_pret_forward.4} parent=0 // pred_region
    _
  $region21: #{fnirs_pret_forward.4} parent=0 // pred_fallthru
    _
  // Predicated region
  $region22: #{fnirs_pret_forward.4} parent=0 // pred_check
    _
  $region23: #{fnirs_pret_forward.4} parent=0 // pred_check_branch
    %342 = sbr.rel (0) target = $region25
  $region24: #{fnirs_pret_forward.4} parent=0 // pred_region
    _
  $region25: #{fnirs_pret_forward.4} parent=0 // pred_fallthru
    _

// kernel: fnirs_pret_forward.7
$region0: #{fnirs_pret_forward.7}
  #allocation0 [shape = 'u32[]', space=smem, size = 0x4, offset = 0x4, fixed_abs, tag = 'smem constant byte address 0x4 - core index']
  #allocation1 [shape = 'u32[144,128]{1,0:T(1,128)}', space=vmem, size = 0x12000, scoped, tag = 'internal scratch']
  %s0 = inlined_call_operand.vmem [shape: f32[2,32], index: 0, kind: input, shape index: {}]
  %s1 = inlined_call_operand.vmem [shape: f32[2,32], index: 1, kind: input, shape index: {}]
  %s2 = inlined_call_operand.vmem [shape: f32[1,64], index: 2, kind: input, shape index: {}]
  %s3 = inlined_call_operand.vmem [shape: f32[1,64], index: 3, kind: input, shape index: {}]
  %s4 = inlined_call_operand.vmem [shape: f32[64,3], index: 4, kind: input, shape index: {}]
  %s5 = inlined_call_operand.vmem [shape: f32[1,3], index: 5, kind: input, shape index: {}]
  %s6 = inlined_call_operand.hbm [shape: f32[2,3], index: 6, kind: output, shape index: {}]
  %s7 = sld [smem:[#allocation0]]
  $region34: #{fnirs_pret_forward.7} parent=0
    _
  %s9 = ssub.s32 1, %s7
  %s10 = scalar_select 0, %s9, %s7
  $region1: #{fnirs_pret_forward.7} parent=0
    #allocation2 [shape = 'u8[1024]{0}', space=vmem, size = 0x400, scoped, tag = 'output window, operand 0, single buffered']
    #allocation3 [shape = 's32[1]{0}', space=sflag, size = 0x4, scoped, tag = 'scoped memory for fnirs_pret_forward.7']
    %11 = vsyncpa [#allocation3], 0
    // Predicated region
    $region2: #{fnirs_pret_forward.7} parent=1 // pred_check
      _
    $region3: #{fnirs_pret_forward.7} parent=1 // pred_check_branch
      %13 = sbr.rel (0) target = $region5
    $region4: #{fnirs_pret_forward.7} parent=1 // pred_region
      _
    $region5: #{fnirs_pret_forward.7} parent=1 // pred_fallthru
      _
    // Predicated region
    $region6: #{fnirs_pret_forward.7} parent=1 // pred_check
      _
    $region7: #{fnirs_pret_forward.7} parent=1 // pred_check_branch
      %15 = sbr.rel (0) target = $region9
    $region8: #{fnirs_pret_forward.7} parent=1 // pred_region
      _
    $region9: #{fnirs_pret_forward.7} parent=1 // pred_fallthru
      _
    // Predicated region
    $region10: #{fnirs_pret_forward.7} parent=1 // pred_check
      _
    $region11: #{fnirs_pret_forward.7} parent=1 // pred_check_branch
      %17 = sbr.rel (0) target = $region13
    $region12: #{fnirs_pret_forward.7} parent=1 // pred_region
      _
    $region13: #{fnirs_pret_forward.7} parent=1 // pred_fallthru
      _
    // Predicated region
    $region14: #{fnirs_pret_forward.7} parent=1 // pred_check
      _
    $region15: #{fnirs_pret_forward.7} parent=1 // pred_check_branch
      %19 = sbr.rel (0) target = $region17
    $region16: #{fnirs_pret_forward.7} parent=1 // pred_region
      _
    $region17: #{fnirs_pret_forward.7} parent=1 // pred_fallthru
      _
    // Predicated region
    $region18: #{fnirs_pret_forward.7} parent=1 // pred_check
      _
    $region19: #{fnirs_pret_forward.7} parent=1 // pred_check_branch
      %21 = sbr.rel (0) target = $region21
    $region20: #{fnirs_pret_forward.7} parent=1 // pred_region
      _
    $region21: #{fnirs_pret_forward.7} parent=1 // pred_fallthru
      _
    // Predicated region
    $region22: #{fnirs_pret_forward.7} parent=1 // pred_check
      _
    $region23: #{fnirs_pret_forward.7} parent=1 // pred_check_branch
      %23 = sbr.rel (0) target = $region25
    $region24: #{fnirs_pret_forward.7} parent=1 // pred_region
      _
    $region25: #{fnirs_pret_forward.7} parent=1 // pred_fallthru
      _
    %v24 = vld [vmem:[%s0] sm:$0x3]
    %v25 = vld [vmem:[%s1] sm:$0x3]
    %27 = vrot.lane.b32.xlu0 %v25, 32
    %v28 = vpop.permute.xlu0 %27
    %vm30 = vcmask 261120
    %v31 = vsel %vm30, %v24, %v28
    %v32 = vld [vmem:[%s2] sm:$0x1]
    %v33 = vld [vmem:[%s3] sm:$0x1]
    %vm34 = vcmask 517120
    %v35 = vsel %vm34, %v31, 0.0
    %36 = vadd.xlane.f32.xlu0 %v35
    %v37 = vpop.xlane.xlu0 %36
    %v38 = vrcp.pop 64.0
    %v39 = vmul.f32 %v37, %v38
    %v40 = vsub.f32 %v31, %v39
    %v41 = vmul.f32 %v40, %v40
    %v42 = vsel %vm34, %v41, 0.0
    %43 = vadd.xlane.f32.xlu0 %v42
    %v44 = vpop.xlane.xlu0 %43
    %v45 = vmul.f32 %v44, %v38
    %v46 = vadd.f32 %v45, 1e-05
    %v47 = vrsqrt.pop %v46
    %v48 = vmul.f32 %v40, %v47
    %v50 = vlaneseq
    %v51 = vshrl.u32 %v50, 7
    %v52 = vsub.s32 0, %v51
    %v53 = vrot.slane %v32, %v52
    %v55 = vmul.f32 %v48, %v53
    %v57 = vlaneseq
    %v58 = vshrl.u32 %v57, 7
    %v59 = vsub.s32 0, %v58
    %v60 = vrot.slane %v33, %v59
    %v62 = vadd.f32 %v55, %v60
    %v63 = vld [vmem:[%s4] sm:$0xff]
    %v64 = vld [vmem:[%s4 + $0x8] sm:$0xff]
    %v65 = vld [vmem:[%s4 + $0x10] sm:$0xff]
    %v66 = vld [vmem:[%s4 + $0x18] sm:$0xff]
    %v67 = vld [vmem:[%s4 + $0x20] sm:$0xff]
    %v68 = vld [vmem:[%s4 + $0x28] sm:$0xff]
    %v69 = vld [vmem:[%s4 + $0x30] sm:$0xff]
    %v70 = vld [vmem:[%s4 + $0x38] sm:$0xff]
    %v71 = vld [vmem:[%s5] sm:$0x1]
    %v73 = vlaneseq
    %v74 = vshrl.u32 %v73, 7
    %v75 = vsub.s32 0, %v74
    %v76 = vrot.slane %v71, %v75
    %vm78 = vcmask 523264
    %v80 = vsel %vm78, %v62, 0
    %82 = vmatprep.subr.mxu0 0.0
    %83 = vmatpush1.msra.mxu0 %v63
    %84 = vmatprep.subr.mxu0 0.0
    %85 = vmatpush1.msra.mxu0 %v64
    %86 = vmatprep.subr.mxu0 0.0
    %87 = vmatpush1.msra.mxu0 %v65
    %88 = vmatprep.subr.mxu0 0.0
    %89 = vmatpush1.msra.mxu0 %v66
    %90 = vmatprep.subr.mxu0 0.0
    %91 = vmatpush1.msra.mxu0 %v67
    %92 = vmatprep.subr.mxu0 0.0
    %93 = vmatpush1.msra.mxu0 %v68
    %94 = vmatprep.subr.mxu0 0.0
    %95 = vmatpush1.msra.mxu0 %v69
    %96 = vmatprep.subr.mxu0 0.0
    %97 = vmatpush1.msra.mxu0 %v70
    %98 = vmatprep.subr.mxu0 0.0
    %99 = vmatpush1.msra.mxu0 0.0
    %100 = vmatprep.subr.mxu0 0.0
    %101 = vmatpush1.msra.mxu0 0.0
    %102 = vmatprep.subr.mxu0 0.0
    %103 = vmatpush1.msra.mxu0 0.0
    %104 = vmatprep.subr.mxu0 0.0
    %105 = vmatpush1.msra.mxu0 0.0
    %106 = vmatprep.subr.mxu0 0.0
    %107 = vmatpush1.msra.mxu0 0.0
    %108 = vmatprep.subr.mxu0 0.0
    %109 = vmatpush1.msra.mxu0 0.0
    %110 = vmatprep.subr.mxu0 0.0
    %111 = vmatpush1.msra.mxu0 0.0
    %112 = vmatprep.subr.mxu0 0.0
    %113 = vmatpush1.msra.mxu0 0.0
    %114 = vmatprep.subr.mxu0 0.0
    %115 = vmatpush1.msra.mxu0 0.0
    %116 = vmatprep.subr.mxu0 0.0
    %117 = vmatpush1.msra.mxu0 0.0
    %118 = vmatprep.subr.mxu0 0.0
    %119 = vmatpush1.msra.mxu0 0.0
    %120 = vmatprep.subr.mxu0 0.0
    %121 = vmatpush1.msra.mxu0 0.0
    %122 = vmatprep.subr.mxu0 0.0
    %123 = vmatpush1.msra.mxu0 0.0
    %124 = vmatprep.subr.mxu0 0.0
    %125 = vmatpush1.msra.mxu0 0.0
    %126 = vmatprep.subr.mxu0 0.0
    %127 = vmatpush1.msra.mxu0 0.0
    %128 = vmatprep.subr.mxu0 0.0
    %129 = vmatpush1.msra.mxu0 0.0
    %130 = vmatprep.subr.mxu0 0.0
    %131 = vmatpush1.msra.mxu0 0.0
    %132 = vmatprep.subr.mxu0 0.0
    %133 = vmatpush1.msra.mxu0 0.0
    %134 = vmatprep.subr.mxu0 0.0
    %135 = vmatpush1.msra.mxu0 0.0
    %136 = vmatprep.subr.mxu0 0.0
    %137 = vmatpush1.msra.mxu0 0.0
    %138 = vmatprep.subr.mxu0 0.0
    %139 = vmatpush1.msra.mxu0 0.0
    %140 = vmatprep.subr.mxu0 0.0
    %141 = vmatpush1.msra.mxu0 0.0
    %142 = vmatprep.subr.mxu0 0.0
    %143 = vmatpush1.msra.mxu0 0.0
    %144 = vmatprep.subr.mxu0 0.0
    %145 = vmatpush1.msra.mxu0 0.0
    %146 = vmatprep.mubr.f32.mxu0 0.0
    %147 = vmatmul.mubr.f32.gmra.mrb[0].mxu0 %v80
    %v148 = vpop.f32.mrb[0].mxu0
    %v149 = vadd.f32 %v76, %v148
    %v150 = vpop.f32.mrb[0].mxu0
    %151 = vdwg.mxu0
    %vm152 = vcmask 17408
    %153 = vst.msk [vmem:[#allocation2] sm:$0x3] %vm152, %v149
    // Predicated region
    $region26: #{fnirs_pret_forward.7} parent=1 // pred_check
      _
    $region27: #{fnirs_pret_forward.7} parent=1 // pred_check_branch
      %155 = sbr.rel (0) target = $region29
    $region28: #{fnirs_pret_forward.7} parent=1 // pred_region
      %s157 = ssub.s32 32, 32
      %158 = vsyncadd [#allocation3], %s157
      %s160 = sshll.u32 [#allocation2], 4
      %s161 = int_to_ptr.vmem [resolvable:$true] %s160
      %163 = dma.vmem_to_hbm [thread:$0]  %s161, 32, %s6, [#allocation3]
    $region29: #{fnirs_pret_forward.7} parent=1 // pred_fallthru
      _
    // Predicated region
    $region30: #{fnirs_pret_forward.7} parent=1 // pred_check
      _
    $region31: #{fnirs_pret_forward.7} parent=1 // pred_check_branch
      %165 = sbr.rel (0) target = $region33
    $region32: #{fnirs_pret_forward.7} parent=1 // pred_region
      %166 = dma.done [#allocation3], 32
    $region33: #{fnirs_pret_forward.7} parent=1 // pred_fallthru
      _
    %167 = vsyncpa [#allocation3], 1

// kernel: fnirs_pret_forward.6
$region0: #{fnirs_pret_forward.6}
  #allocation0 [shape = 'u32[]', space=smem, size = 0x4, offset = 0x4, fixed_abs, tag = 'smem constant byte address 0x4 - core index']
  #allocation1 [shape = 'u32[144,128]{1,0:T(1,128)}', space=vmem, size = 0x12000, scoped, tag = 'internal scratch']
  %s0 = inlined_call_operand.vmem [shape: f32[24,128], index: 0, kind: input, shape index: {}]
  %s1 = inlined_call_operand.vmem [shape: f32[128,32], index: 1, kind: input, shape index: {}]
  %s2 = inlined_call_operand.vmem [shape: f32[1,32], index: 2, kind: input, shape index: {}]
  %s3 = inlined_call_operand.vmem [shape: f32[1,32], index: 3, kind: input, shape index: {}]
  %s4 = inlined_call_operand.vmem [shape: f32[1,32], index: 4, kind: input, shape index: {}]
  %s5 = inlined_call_operand.vmem [shape: f32[1,32], index: 5, kind: input, shape index: {}]
  %s6 = inlined_call_operand.vmem [shape: f32[13,32], index: 6, kind: input, shape index: {}]
  %s7 = inlined_call_operand.vmem [shape: f32[2,1,32], index: 7, kind: input, shape index: {}]
  %s8 = inlined_call_operand.vmem [shape: f32[2,1,32], index: 8, kind: input, shape index: {}]
  %s9 = inlined_call_operand.vmem [shape: f32[2,32,96], index: 9, kind: input, shape index: {}]
  %s10 = inlined_call_operand.vmem [shape: f32[2,32,32], index: 10, kind: input, shape index: {}]
  %s11 = inlined_call_operand.vmem [shape: f32[2,1,32], index: 11, kind: input, shape index: {}]
  %s12 = inlined_call_operand.vmem [shape: f32[2,1,32], index: 12, kind: input, shape index: {}]
  %s13 = inlined_call_operand.vmem [shape: f32[2,1,32], index: 13, kind: input, shape index: {}]
  %s14 = inlined_call_operand.vmem [shape: f32[2,32,64], index: 14, kind: input, shape index: {}]
  %s15 = inlined_call_operand.vmem [shape: f32[2,1,64], index: 15, kind: input, shape index: {}]
  %s16 = inlined_call_operand.vmem [shape: f32[2,64,32], index: 16, kind: input, shape index: {}]
  %s17 = inlined_call_operand.vmem [shape: f32[2,1,32], index: 17, kind: input, shape index: {}]
  %s18 = inlined_call_operand.vmem [shape: f32[2,32], index: 18, kind: output, shape index: {}]
  %s19 = sld [smem:[#allocation0]]
  $region82: #{fnirs_pret_forward.6} parent=0
    _
  %s21 = ssub.s32 1, %s19
  %s22 = scalar_select 0, %s21, %s19
  // Predicated region
  $region2: #{fnirs_pret_forward.6} parent=0 // pred_check
    _
  $region3: #{fnirs_pret_forward.6} parent=0 // pred_check_branch
    %24 = sbr.rel (0) target = $region5
  $region4: #{fnirs_pret_forward.6} parent=0 // pred_region
    _
  $region5: #{fnirs_pret_forward.6} parent=0 // pred_fallthru
    _
  // Predicated region
  $region6: #{fnirs_pret_forward.6} parent=0 // pred_check
    _
  $region7: #{fnirs_pret_forward.6} parent=0 // pred_check_branch
    %26 = sbr.rel (0) target = $region9
  $region8: #{fnirs_pret_forward.6} parent=0 // pred_region
    _
  $region9: #{fnirs_pret_forward.6} parent=0 // pred_fallthru
    _
  // Predicated region
  $region10: #{fnirs_pret_forward.6} parent=0 // pred_check
    _
  $region11: #{fnirs_pret_forward.6} parent=0 // pred_check_branch
    %28 = sbr.rel (0) target = $region13
  $region12: #{fnirs_pret_forward.6} parent=0 // pred_region
    _
  $region13: #{fnirs_pret_forward.6} parent=0 // pred_fallthru
    _
  // Predicated region
  $region14: #{fnirs_pret_forward.6} parent=0 // pred_check
    _
  $region15: #{fnirs_pret_forward.6} parent=0 // pred_check_branch
    %30 = sbr.rel (0) target = $region17
  $region16: #{fnirs_pret_forward.6} parent=0 // pred_region
    _
  $region17: #{fnirs_pret_forward.6} parent=0 // pred_fallthru
    _
  // Predicated region
  $region18: #{fnirs_pret_forward.6} parent=0 // pred_check
    _
  $region19: #{fnirs_pret_forward.6} parent=0 // pred_check_branch
    %32 = sbr.rel (0) target = $region21
  $region20: #{fnirs_pret_forward.6} parent=0 // pred_region
    _
  $region21: #{fnirs_pret_forward.6} parent=0 // pred_fallthru
    _
  // Predicated region
  $region22: #{fnirs_pret_forward.6} parent=0 // pred_check
    _
  $region23: #{fnirs_pret_forward.6} parent=0 // pred_check_branch
    %34 = sbr.rel (0) target = $region25
  $region24: #{fnirs_pret_forward.6} parent=0 // pred_region
    _
  $region25: #{fnirs_pret_forward.6} parent=0 // pred_fallthru
    _
  // Predicated region
  $region26: #{fnirs_pret_forward.6} parent=0 // pred_check
    _
  $region27: #{fnirs_pret_forward.6} parent=0 // pred_check_branch
    %36 = sbr.rel (0) target = $region29
  $region28: #{fnirs_pret_forward.6} parent=0 // pred_region
    _
  $region29: #{fnirs_pret_forward.6} parent=0 // pred_fallthru
    _
  // Predicated region
  $region30: #{fnirs_pret_forward.6} parent=0 // pred_check
    _
  $region31: #{fnirs_pret_forward.6} parent=0 // pred_check_branch
    %38 = sbr.rel (0) target = $region33
  $region32: #{fnirs_pret_forward.6} parent=0 // pred_region
    _
  $region33: #{fnirs_pret_forward.6} parent=0 // pred_fallthru
    _
  // Predicated region
  $region34: #{fnirs_pret_forward.6} parent=0 // pred_check
    _
  $region35: #{fnirs_pret_forward.6} parent=0 // pred_check_branch
    %40 = sbr.rel (0) target = $region37
  $region36: #{fnirs_pret_forward.6} parent=0 // pred_region
    _
  $region37: #{fnirs_pret_forward.6} parent=0 // pred_fallthru
    _
  // Predicated region
  $region38: #{fnirs_pret_forward.6} parent=0 // pred_check
    _
  $region39: #{fnirs_pret_forward.6} parent=0 // pred_check_branch
    %42 = sbr.rel (0) target = $region41
  $region40: #{fnirs_pret_forward.6} parent=0 // pred_region
    _
  $region41: #{fnirs_pret_forward.6} parent=0 // pred_fallthru
    _
  // Predicated region
  $region42: #{fnirs_pret_forward.6} parent=0 // pred_check
    _
  $region43: #{fnirs_pret_forward.6} parent=0 // pred_check_branch
    %44 = sbr.rel (0) target = $region45
  $region44: #{fnirs_pret_forward.6} parent=0 // pred_region
    _
  $region45: #{fnirs_pret_forward.6} parent=0 // pred_fallthru
    _
  // Predicated region
  $region46: #{fnirs_pret_forward.6} parent=0 // pred_check
    _
  $region47: #{fnirs_pret_forward.6} parent=0 // pred_check_branch
    %46 = sbr.rel (0) target = $region49
  $region48: #{fnirs_pret_forward.6} parent=0 // pred_region
    _
  $region49: #{fnirs_pret_forward.6} parent=0 // pred_fallthru
    _
  // Predicated region
  $region50: #{fnirs_pret_forward.6} parent=0 // pred_check
    _
  $region51: #{fnirs_pret_forward.6} parent=0 // pred_check_branch
    %48 = sbr.rel (0) target = $region53
  $region52: #{fnirs_pret_forward.6} parent=0 // pred_region
    _
  $region53: #{fnirs_pret_forward.6} parent=0 // pred_fallthru
    _
  // Predicated region
  $region54: #{fnirs_pret_forward.6} parent=0 // pred_check
    _
  $region55: #{fnirs_pret_forward.6} parent=0 // pred_check_branch
    %50 = sbr.rel (0) target = $region57
  $region56: #{fnirs_pret_forward.6} parent=0 // pred_region
    _
  $region57: #{fnirs_pret_forward.6} parent=0 // pred_fallthru
    _
  // Predicated region
  $region58: #{fnirs_pret_forward.6} parent=0 // pred_check
    _
  $region59: #{fnirs_pret_forward.6} parent=0 // pred_check_branch
    %52 = sbr.rel (0) target = $region61
  $region60: #{fnirs_pret_forward.6} parent=0 // pred_region
    _
  $region61: #{fnirs_pret_forward.6} parent=0 // pred_fallthru
    _
  // Predicated region
  $region62: #{fnirs_pret_forward.6} parent=0 // pred_check
    _
  $region63: #{fnirs_pret_forward.6} parent=0 // pred_check_branch
    %54 = sbr.rel (0) target = $region65
  $region64: #{fnirs_pret_forward.6} parent=0 // pred_region
    _
  $region65: #{fnirs_pret_forward.6} parent=0 // pred_fallthru
    _
  // Predicated region
  $region66: #{fnirs_pret_forward.6} parent=0 // pred_check
    _
  $region67: #{fnirs_pret_forward.6} parent=0 // pred_check_branch
    %56 = sbr.rel (0) target = $region69
  $region68: #{fnirs_pret_forward.6} parent=0 // pred_region
    _
  $region69: #{fnirs_pret_forward.6} parent=0 // pred_fallthru
    _
  // Predicated region
  $region70: #{fnirs_pret_forward.6} parent=0 // pred_check
    _
  $region71: #{fnirs_pret_forward.6} parent=0 // pred_check_branch
    %58 = sbr.rel (0) target = $region73
  $region72: #{fnirs_pret_forward.6} parent=0 // pred_region
    _
  $region73: #{fnirs_pret_forward.6} parent=0 // pred_fallthru
    _
  %v59 = vld [vmem:[%s0] sm:$0xff]
  %v60 = vld [vmem:[%s0 + $0x8] sm:$0xff]
  %v61 = vld [vmem:[%s0 + $0x10] sm:$0xff]
  %v62 = vld [vmem:[%s1] sm:$0xff]
  %v63 = vld [vmem:[%s1 + $0x8] sm:$0xff]
  %v64 = vld [vmem:[%s1 + $0x10] sm:$0xff]
  %v65 = vld [vmem:[%s1 + $0x18] sm:$0xff]
  %v66 = vld [vmem:[%s1 + $0x20] sm:$0xff]
  %v67 = vld [vmem:[%s1 + $0x28] sm:$0xff]
  %v68 = vld [vmem:[%s1 + $0x30] sm:$0xff]
  %v69 = vld [vmem:[%s1 + $0x38] sm:$0xff]
  %v70 = vld [vmem:[%s1 + $0x40] sm:$0xff]
  %v71 = vld [vmem:[%s1 + $0x48] sm:$0xff]
  %v72 = vld [vmem:[%s1 + $0x50] sm:$0xff]
  %v73 = vld [vmem:[%s1 + $0x58] sm:$0xff]
  %v74 = vld [vmem:[%s1 + $0x60] sm:$0xff]
  %v75 = vld [vmem:[%s1 + $0x68] sm:$0xff]
  %v76 = vld [vmem:[%s1 + $0x70] sm:$0xff]
  %v77 = vld [vmem:[%s1 + $0x78] sm:$0xff]
  %v78 = vld [vmem:[%s2] sm:$0x1]
  %v80 = vlaneseq
  %v81 = vshrl.u32 %v80, 7
  %v82 = vsub.s32 0, %v81
  %v83 = vrot.slane %v78, %v82
  %85 = vmatprep.subr.mxu0 0.0
  %86 = vmatpush1.msra.mxu0 %v62
  %87 = vmatprep.subr.mxu0 0.0
  %88 = vmatpush1.msra.mxu0 %v63
  %89 = vmatprep.subr.mxu0 0.0
  %90 = vmatpush1.msra.mxu0 %v64
  %91 = vmatprep.subr.mxu0 0.0
  %92 = vmatpush1.msra.mxu0 %v65
  %93 = vmatprep.subr.mxu0 0.0
  %94 = vmatpush1.msra.mxu0 %v66
  %95 = vmatprep.subr.mxu0 0.0
  %96 = vmatpush1.msra.mxu0 %v67
  %97 = vmatprep.subr.mxu0 0.0
  %98 = vmatpush1.msra.mxu0 %v68
  %99 = vmatprep.subr.mxu0 0.0
  %100 = vmatpush1.msra.mxu0 %v69
  %101 = vmatprep.subr.mxu0 0.0
  %102 = vmatpush1.msra.mxu0 %v70
  %103 = vmatprep.subr.mxu0 0.0
  %104 = vmatpush1.msra.mxu0 %v71
  %105 = vmatprep.subr.mxu0 0.0
  %106 = vmatpush1.msra.mxu0 %v72
  %107 = vmatprep.subr.mxu0 0.0
  %108 = vmatpush1.msra.mxu0 %v73
  %109 = vmatprep.subr.mxu0 0.0
  %110 = vmatpush1.msra.mxu0 %v74
  %111 = vmatprep.subr.mxu0 0.0
  %112 = vmatpush1.msra.mxu0 %v75
  %113 = vmatprep.subr.mxu0 0.0
  %114 = vmatpush1.msra.mxu0 %v76
  %115 = vmatprep.subr.mxu0 0.0
  %116 = vmatpush1.msra.mxu0 %v77
  %117 = vmatprep.subr.mxu0 0.0
  %118 = vmatpush1.msra.mxu0 0.0
  %119 = vmatprep.subr.mxu0 0.0
  %120 = vmatpush1.msra.mxu0 0.0
  %121 = vmatprep.subr.mxu0 0.0
  %122 = vmatpush1.msra.mxu0 0.0
  %123 = vmatprep.subr.mxu0 0.0
  %124 = vmatpush1.msra.mxu0 0.0
  %125 = vmatprep.subr.mxu0 0.0
  %126 = vmatpush1.msra.mxu0 0.0
  %127 = vmatprep.subr.mxu0 0.0
  %128 = vmatpush1.msra.mxu0 0.0
  %129 = vmatprep.subr.mxu0 0.0
  %130 = vmatpush1.msra.mxu0 0.0
  %131 = vmatprep.subr.mxu0 0.0
  %132 = vmatpush1.msra.mxu0 0.0
  %133 = vmatprep.subr.mxu0 0.0
  %134 = vmatpush1.msra.mxu0 0.0
  %135 = vmatprep.subr.mxu0 0.0
  %136 = vmatpush1.msra.mxu0 0.0
  %137 = vmatprep.subr.mxu0 0.0
  %138 = vmatpush1.msra.mxu0 0.0
  %139 = vmatprep.subr.mxu0 0.0
  %140 = vmatpush1.msra.mxu0 0.0
  %141 = vmatprep.subr.mxu0 0.0
  %142 = vmatpush1.msra.mxu0 0.0
  %143 = vmatprep.subr.mxu0 0.0
  %144 = vmatpush1.msra.mxu0 0.0
  %145 = vmatprep.subr.mxu0 0.0
  %146 = vmatpush1.msra.mxu0 0.0
  %147 = vmatprep.subr.mxu0 0.0
  %148 = vmatpush1.msra.mxu0 0.0
  %149 = vmatprep.mubr.f32.mxu0 0.0
  %150 = vmatmul.mubr.f32.gmra.mrb[0].mxu0 %v59
  %v151 = vpop.f32.mrb[0].mxu0
  %v152 = vadd.f32 %v83, %v151
  %v153 = vpop.f32.mrb[0].mxu0
  %154 = vmatprep.mubr.f32.mxu0 0.0
  %155 = vmatmul.mubr.f32.gmra.mrb[0].mxu0 %v60
  %v156 = vpop.f32.mrb[0].mxu0
  %v157 = vadd.f32 %v83, %v156
  %v158 = vpop.f32.mrb[0].mxu0
  %159 = vmatprep.mubr.f32.mxu0 0.0
  %160 = vmatmul.mubr.f32.gmra.mrb[0].mxu0 %v61
  %v161 = vpop.f32.mrb[0].mxu0
  %v162 = vadd.f32 %v83, %v161
  %v163 = vpop.f32.mrb[0].mxu0
  %164 = vdwg.mxu0
  %v165 = vld [vmem:[%s3] sm:$0x1]
  %v166 = vld [vmem:[%s4] sm:$0x1]
  %vm167 = vcmask 261120
  %v168 = vsel %vm167, %v152, 0.0
  %169 = vadd.xlane.f32.xlu0 %v168
  %v170 = vpop.xlane.xlu0 %169
  %v171 = vsel %vm167, %v157, 0.0
  %172 = vadd.xlane.f32.xlu0 %v171
  %v173 = vpop.xlane.xlu0 %172
  %v174 = vsel %vm167, %v162, 0.0
  %175 = vadd.xlane.f32.xlu0 %v174
  %v176 = vpop.xlane.xlu0 %175
  %v177 = vrcp.pop 32.0
  %v178 = vmul.f32 %v170, %v177
  %v179 = vmul.f32 %v173, %v177
  %v180 = vmul.f32 %v176, %v177
  %v181 = vsub.f32 %v152, %v178
  %v182 = vsub.f32 %v157, %v179
  %v183 = vsub.f32 %v162, %v180
  %v184 = vmul.f32 %v181, %v181
  %v185 = vmul.f32 %v182, %v182
  %v186 = vmul.f32 %v183, %v183
  %v187 = vsel %vm167, %v184, 0.0
  %188 = vadd.xlane.f32.xlu0 %v187
  %v189 = vpop.xlane.xlu0 %188
  %v190 = vsel %vm167, %v185, 0.0
  %191 = vadd.xlane.f32.xlu0 %v190
  %v192 = vpop.xlane.xlu0 %191
  %v193 = vsel %vm167, %v186, 0.0
  %194 = vadd.xlane.f32.xlu0 %v193
  %v195 = vpop.xlane.xlu0 %194
  %v196 = vmul.f32 %v189, %v177
  %v197 = vmul.f32 %v192, %v177
  %v198 = vmul.f32 %v195, %v177
  %v199 = vadd.f32 %v196, 1e-05
  %v200 = vadd.f32 %v197, 1e-05
  %v201 = vadd.f32 %v198, 1e-05
  %v202 = vrsqrt.pop %v199
  %v203 = vrsqrt.pop %v200
  %v204 = vrsqrt.pop %v201
  %v205 = vmul.f32 %v181, %v202
  %v206 = vmul.f32 %v182, %v203
  %v207 = vmul.f32 %v183, %v204
  %v209 = vlaneseq
  %v210 = vshrl.u32 %v209, 7
  %v211 = vsub.s32 0, %v210
  %v212 = vrot.slane %v165, %v211
  %v214 = vmul.f32 %v205, %v212
  %v215 = vmul.f32 %v206, %v212
  %v216 = vmul.f32 %v207, %v212
  %v218 = vlaneseq
  %v219 = vshrl.u32 %v218, 7
  %v220 = vsub.s32 0, %v219
  %v221 = vrot.slane %v166, %v220
  %v223 = vadd.f32 %v214, %v221
  %v224 = vadd.f32 %v215, %v221
  %v225 = vadd.f32 %v216, %v221
  %v226 = vld [vmem:[%s6] sm:$0xff]
  %v227 = vld [vmem:[%s6 + $0x8] sm:$0x1f]
  %v228 = vld [vmem:[%s5] sm:$0x1]
  %v229 = vadd.f32 %v228, %v226
  %vm232 = vcmask 1046528
  %v233 = vrot.slane %v226, 1
  %v234 = vrot.slane %v227, 1
  %v235 = vsel %vm232, %v233, %v234
  %v238 = vadd.f32 %v223, %v235
  %v239 = vadd.f32 %v224, %v234
  %vm240 = vcmask 1042432
  %v241 = vrot.slane %v226, 5
  %v242 = vrot.slane %v227, 5
  %v243 = vsel %vm240, %v241, %v242
  %v246 = vadd.f32 %v224, %v241
  %v247 = vadd.f32 %v225, %v243
  %vm250 = vcmask 1040384
  %v251 = vrot.slane %v238, 7
  %v252 = vrot.slane %v239, 7
  %v253 = vsel %vm250, %v251, %v252
  %v257 = vlaneseq
  %v258 = vshrl.u32 %v257, 7
  %v259 = vsub.s32 0, %v258
  %v260 = vrot.slane %v229, %v259
  %vm264 = vcmask 1041408
  %v265 = vrot.slane %v246, 6
  %v266 = vrot.slane %v247, 6
  %v267 = vsel %vm264, %v265, %v266
  %v271 = vsel %vm250, %v229, %v251
  %vm272 = vcmask 1044480
  %v273 = vsel %vm272, %v253, %v260
  %vm274 = vcmask 1045504
  %v275 = vsel %vm274, %v273, %v265
  %v276 = vld [vmem:[%s7] sm:$0x1]
  %v277 = vld [vmem:[%s8] sm:$0x1]
  %v278 = vsel %vm167, %v271, 0.0
  %279 = vadd.xlane.f32.xlu0 %v278
  %v280 = vpop.xlane.xlu0 %279
  %v281 = vsel %vm167, %v275, 0.0
  %282 = vadd.xlane.f32.xlu0 %v281
  %v283 = vpop.xlane.xlu0 %282
  %v284 = vsel %vm167, %v267, 0.0
  %285 = vadd.xlane.f32.xlu0 %v284
  %v286 = vpop.xlane.xlu0 %285
  %vm287 = vcmask 254976
  %v288 = vsel %vm287, %v266, 0.0
  %289 = vadd.xlane.f32.xlu0 %v288
  %v290 = vpop.xlane.xlu0 %289
  %v291 = vmul.f32 %v280, %v177
  %v292 = vmul.f32 %v283, %v177
  %v293 = vmul.f32 %v286, %v177
  %v294 = vmul.f32 %v290, %v177
  %v295 = vsub.f32 %v271, %v291
  %v296 = vsub.f32 %v275, %v292
  %v297 = vsub.f32 %v267, %v293
  %v298 = vsub.f32 %v266, %v294
  %v299 = vmul.f32 %v295, %v295
  %v300 = vmul.f32 %v296, %v296
  %v301 = vmul.f32 %v297, %v297
  %v302 = vmul.f32 %v298, %v298
  %v303 = vsel %vm167, %v299, 0.0
  %304 = vadd.xlane.f32.xlu0 %v303
  %v305 = vpop.xlane.xlu0 %304
  %v306 = vsel %vm167, %v300, 0.0
  %307 = vadd.xlane.f32.xlu0 %v306
  %v308 = vpop.xlane.xlu0 %307
  %v309 = vsel %vm167, %v301, 0.0
  %310 = vadd.xlane.f32.xlu0 %v309
  %v311 = vpop.xlane.xlu0 %310
  %v312 = vsel %vm287, %v302, 0.0
  %313 = vadd.xlane.f32.xlu0 %v312
  %v314 = vpop.xlane.xlu0 %313
  %v315 = vmul.f32 %v305, %v177
  %v316 = vmul.f32 %v308, %v177
  %v317 = vmul.f32 %v311, %v177
  %v318 = vmul.f32 %v314, %v177
  %v319 = vadd.f32 %v315, 1e-05
  %v320 = vadd.f32 %v316, 1e-05
  %v321 = vadd.f32 %v317, 1e-05
  %v322 = vadd.f32 %v318, 1e-05
  %v323 = vrsqrt.pop %v319
  %v324 = vrsqrt.pop %v320
  %v325 = vrsqrt.pop %v321
  %v326 = vrsqrt.pop %v322
  %v327 = vmul.f32 %v295, %v323
  %v328 = vmul.f32 %v296, %v324
  %v329 = vmul.f32 %v297, %v325
  %v330 = vmul.f32 %v298, %v326
  %v332 = vlaneseq
  %v333 = vshrl.u32 %v332, 7
  %v334 = vsub.s32 0, %v333
  %v335 = vrot.slane %v276, %v334
  %v337 = vmul.f32 %v327, %v335
  %v338 = vmul.f32 %v328, %v335
  %v339 = vmul.f32 %v329, %v335
  %v340 = vmul.f32 %v330, %v335
  %v342 = vlaneseq
  %v343 = vshrl.u32 %v342, 7
  %v344 = vsub.s32 0, %v343
  %v345 = vrot.slane %v277, %v344
  %v347 = vadd.f32 %v337, %v345
  %v348 = vadd.f32 %v338, %v345
  %v349 = vadd.f32 %v339, %v345
  %v350 = vadd.f32 %v340, %v345
  %v351 = vld [vmem:[%s9] sm:$0xff]
  %v352 = vld [vmem:[%s9 + $0x8] sm:$0xff]
  %v353 = vld [vmem:[%s9 + $0x10] sm:$0xff]
  %v354 = vld [vmem:[%s9 + $0x18] sm:$0xff]
  %v356 = vsel %vm167, %v347, 0
  %v359 = vsel %vm167, %v348, 0
  %v362 = vsel %vm167, %v349, 0
  %v365 = vsel %vm167, %v350, 0
  %367 = vmatprep.subr.mxu0 0.0
  %368 = vmatpush1.msra.mxu0 %v351
  %369 = vmatprep.subr.mxu0 0.0
  %370 = vmatpush1.msra.mxu0 %v352
  %371 = vmatprep.subr.mxu0 0.0
  %372 = vmatpush1.msra.mxu0 %v353
  %373 = vmatprep.subr.mxu0 0.0
  %374 = vmatpush1.msra.mxu0 %v354
  %375 = vmatprep.subr.mxu0 0.0
  %376 = vmatpush1.msra.mxu0 0.0
  %377 = vmatprep.subr.mxu0 0.0
  %378 = vmatpush1.msra.mxu0 0.0
  %379 = vmatprep.subr.mxu0 0.0
  %380 = vmatpush1.msra.mxu0 0.0
  %381 = vmatprep.subr.mxu0 0.0
  %382 = vmatpush1.msra.mxu0 0.0
  %383 = vmatprep.subr.mxu0 0.0
  %384 = vmatpush1.msra.mxu0 0.0
  %385 = vmatprep.subr.mxu0 0.0
  %386 = vmatpush1.msra.mxu0 0.0
  %387 = vmatprep.subr.mxu0 0.0
  %388 = vmatpush1.msra.mxu0 0.0
  %389 = vmatprep.subr.mxu0 0.0
  %390 = vmatpush1.msra.mxu0 0.0
  %391 = vmatprep.subr.mxu0 0.0
  %392 = vmatpush1.msra.mxu0 0.0
  %393 = vmatprep.subr.mxu0 0.0
  %394 = vmatpush1.msra.mxu0 0.0
  %395 = vmatprep.subr.mxu0 0.0
  %396 = vmatpush1.msra.mxu0 0.0
  %397 = vmatprep.subr.mxu0 0.0
  %398 = vmatpush1.msra.mxu0 0.0
  %399 = vmatprep.subr.mxu0 0.0
  %400 = vmatpush1.msra.mxu0 0.0
  %401 = vmatprep.subr.mxu0 0.0
  %402 = vmatpush1.msra.mxu0 0.0
  %403 = vmatprep.subr.mxu0 0.0
  %404 = vmatpush1.msra.mxu0 0.0
  %405 = vmatprep.subr.mxu0 0.0
  %406 = vmatpush1.msra.mxu0 0.0
  %407 = vmatprep.subr.mxu0 0.0
  %408 = vmatpush1.msra.mxu0 0.0
  %409 = vmatprep.subr.mxu0 0.0
  %410 = vmatpush1.msra.mxu0 0.0
  %411 = vmatprep.subr.mxu0 0.0
  %412 = vmatpush1.msra.mxu0 0.0
  %413 = vmatprep.subr.mxu0 0.0
  %414 = vmatpush1.msra.mxu0 0.0
  %415 = vmatprep.subr.mxu0 0.0
  %416 = vmatpush1.msra.mxu0 0.0
  %417 = vmatprep.subr.mxu0 0.0
  %418 = vmatpush1.msra.mxu0 0.0
  %419 = vmatprep.subr.mxu0 0.0
  %420 = vmatpush1.msra.mxu0 0.0
  %421 = vmatprep.subr.mxu0 0.0
  %422 = vmatpush1.msra.mxu0 0.0
  %423 = vmatprep.subr.mxu0 0.0
  %424 = vmatpush1.msra.mxu0 0.0
  %425 = vmatprep.subr.mxu0 0.0
  %426 = vmatpush1.msra.mxu0 0.0
  %427 = vmatprep.subr.mxu0 0.0
  %428 = vmatpush1.msra.mxu0 0.0
  %429 = vmatprep.subr.mxu0 0.0
  %430 = vmatpush1.msra.mxu0 0.0
  %431 = vmatprep.mubr.f32.mxu0 0.0
  %432 = vmatmul.mubr.f32.gmra.mrb[0].mxu0 %v356
  %v433 = vpop.f32.mrb[0].mxu0
  %v434 = vadd.f32 0.0, %v433
  %v435 = vpop.f32.mrb[0].mxu0
  %436 = vmatprep.mubr.f32.mxu0 0.0
  %437 = vmatmul.mubr.f32.gmra.mrb[0].mxu0 %v359
  %v438 = vpop.f32.mrb[0].mxu0
  %v439 = vadd.f32 0.0, %v438
  %v440 = vpop.f32.mrb[0].mxu0
  %441 = vmatprep.mubr.f32.mxu0 0.0
  %442 = vmatmul.mubr.f32.gmra.mrb[0].mxu0 %v362
  %v443 = vpop.f32.mrb[0].mxu0
  %v444 = vadd.f32 0.0, %v443
  %v445 = vpop.f32.mrb[0].mxu0
  %446 = vmatprep.mubr.f32.mxu0 0.0
  %447 = vmatmul.mubr.f32.gmra.mrb[0].mxu0 %v365
  %v448 = vpop.f32.mrb[0].mxu0
  %v449 = vadd.f32 0.0, %v448
  %v450 = vpop.f32.mrb[0].mxu0
  %451 = vdwg.mxu0
  %454 = vrot.lane.b32.xlu0 %v434, 96
  %v455 = vpop.permute.xlu0 %454
  %456 = vrot.lane.b32.xlu0 %v439, 96
  %v457 = vpop.permute.xlu0 %456
  %vm458 = vcmask 130048
  %v459 = vsel %vm458, %v434, 0
  %v461 = vsel %vm458, %v439, 0
  %v463 = vsel %vm458, %v455, 0
  %v465 = vsel %vm458, %v457, 0
  %467 = vmatprep.subr.mxu0 0.0
  %468 = vmatpush1.xpose.msra.mxu0 %v463
  %469 = vmatprep.subr.mxu0 0.0
  %470 = vmatpush1.xpose.msra.mxu0 %v465
  %471 = vmatprep.subr.mxu0 0.0
  %472 = vmatpush1.xpose.msra.mxu0 0.0
  %473 = vmatprep.subr.mxu0 0.0
  %474 = vmatpush1.xpose.msra.mxu0 0.0
  %475 = vmatprep.subr.mxu0 0.0
  %476 = vmatpush1.xpose.msra.mxu0 0.0
  %477 = vmatprep.subr.mxu0 0.0
  %478 = vmatpush1.xpose.msra.mxu0 0.0
  %479 = vmatprep.subr.mxu0 0.0
  %480 = vmatpush1.xpose.msra.mxu0 0.0
  %481 = vmatprep.subr.mxu0 0.0
  %482 = vmatpush1.xpose.msra.mxu0 0.0
  %483 = vmatprep.subr.mxu0 0.0
  %484 = vmatpush1.xpose.msra.mxu0 0.0
  %485 = vmatprep.subr.mxu0 0.0
  %486 = vmatpush1.xpose.msra.mxu0 0.0
  %487 = vmatprep.subr.mxu0 0.0
  %488 = vmatpush1.xpose.msra.mxu0 0.0
  %489 = vmatprep.subr.mxu0 0.0
  %490 = vmatpush1.xpose.msra.mxu0 0.0
  %491 = vmatprep.subr.mxu0 0.0
  %492 = vmatpush1.xpose.msra.mxu0 0.0
  %493 = vmatprep.subr.mxu0 0.0
  %494 = vmatpush1.xpose.msra.mxu0 0.0
  %495 = vmatprep.subr.mxu0 0.0
  %496 = vmatpush1.xpose.msra.mxu0 0.0
  %497 = vmatprep.subr.mxu0 0.0
  %498 = vmatpush1.xpose.msra.mxu0 0.0
  %499 = vmatprep.subr.mxu0 0.0
  %500 = vmatpush1.xpose.msra.mxu0 0.0
  %501 = vmatprep.subr.mxu0 0.0
  %502 = vmatpush1.xpose.msra.mxu0 0.0
  %503 = vmatprep.subr.mxu0 0.0
  %504 = vmatpush1.xpose.msra.mxu0 0.0
  %505 = vmatprep.subr.mxu0 0.0
  %506 = vmatpush1.xpose.msra.mxu0 0.0
  %507 = vmatprep.subr.mxu0 0.0
  %508 = vmatpush1.xpose.msra.mxu0 0.0
  %509 = vmatprep.subr.mxu0 0.0
  %510 = vmatpush1.xpose.msra.mxu0 0.0
  %511 = vmatprep.subr.mxu0 0.0
  %512 = vmatpush1.xpose.msra.mxu0 0.0
  %513 = vmatprep.subr.mxu0 0.0
  %514 = vmatpush1.xpose.msra.mxu0 0.0
  %515 = vmatprep.subr.mxu0 0.0
  %516 = vmatpush1.xpose.msra.mxu0 0.0
  %517 = vmatprep.subr.mxu0 0.0
  %518 = vmatpush1.xpose.msra.mxu0 0.0
  %519 = vmatprep.subr.mxu0 0.0
  %520 = vmatpush1.xpose.msra.mxu0 0.0
  %521 = vmatprep.subr.mxu0 0.0
  %522 = vmatpush1.xpose.msra.mxu0 0.0
  %523 = vmatprep.subr.mxu0 0.0
  %524 = vmatpush1.xpose.msra.mxu0 0.0
  %525 = vmatprep.subr.mxu0 0.0
  %526 = vmatpush1.xpose.msra.mxu0 0.0
  %527 = vmatprep.subr.mxu0 0.0
  %528 = vmatpush1.xpose.msra.mxu0 0.0
  %529 = vmatprep.subr.mxu0 0.0
  %530 = vmatpush1.xpose.msra.mxu0 0.0
  %531 = vmatprep.mubr.f32.mxu0 0.0
  %532 = vmatmul.mubr.f32.gmra.mrb[0].mxu0 %v459
  %v533 = vpop.f32.mrb[0].mxu0
  %v534 = vadd.f32 0.0, %v533
  %v535 = vpop.f32.mrb[0].mxu0
  %536 = vmatprep.mubr.f32.mxu0 0.0
  %537 = vmatmul.mubr.f32.gmra.mrb[0].mxu0 %v461
  %v538 = vpop.f32.mrb[0].mxu0
  %v539 = vadd.f32 0.0, %v538
  %v540 = vpop.f32.mrb[0].mxu0
  %541 = vdwg.mxu0
  %v542 = vmul.f32 %v534, 0.25
  %v543 = vmul.f32 %v539, 0.25
  %vm544 = vcmask 105472
  %v545 = vsel %vm544, %v542, -inf
  %546 = vmax.xlane.f32.xlu0 %v545
  %v547 = vpop.xlane.xlu0 %546
  %vm548 = vcmask 102400
  %v549 = vsel %vm548, %v543, -inf
  %550 = vmax.xlane.f32.xlu0 %v549
  %v551 = vpop.xlane.xlu0 %550
  %v552 = vsub.f32 %v542, %v547
  %v553 = vsub.f32 %v543, %v551
  %v554 = vmul.f32 %v552, 1.442695
  %v555 = vpow.pop %v554
  %v556 = vmul.f32 %v553, 1.442695
  %v557 = vpow.pop %v556
  %v558 = vsel %vm544, %v555, 0.0
  %559 = vadd.xlane.f32.xlu0 %v558
  %v560 = vpop.xlane.xlu0 %559
  %v561 = vsel %vm548, %v557, 0.0
  %562 = vadd.xlane.f32.xlu0 %v561
  %v563 = vpop.xlane.xlu0 %562
  %v564 = vrcp.pop %v560
  %v565 = vrcp.pop %v563
  %v566 = vmul.f32 %v555, %v564
  %v567 = vmul.f32 %v557, %v565
  %568 = vrot.lane.b32.xlu0 %v434, 64
  %v569 = vpop.permute.xlu0 %568
  %570 = vrot.lane.b32.xlu0 %v439, 64
  %v571 = vpop.permute.xlu0 %570
  %v574 = vsel %vm544, %v566, 0
  %v577 = vsel %vm544, %v567, 0
  %v579 = vsel %vm272, %v571, 0
  %581 = vmatprep.subr.mxu0 0.0
  %582 = vmatpush1.msra.mxu0 %v569
  %583 = vmatprep.subr.mxu0 0.0
  %584 = vmatpush1.msra.mxu0 %v579
  %585 = vmatprep.subr.mxu0 0.0
  %586 = vmatpush1.msra.mxu0 0.0
  %587 = vmatprep.subr.mxu0 0.0
  %588 = vmatpush1.msra.mxu0 0.0
  %589 = vmatprep.subr.mxu0 0.0
  %590 = vmatpush1.msra.mxu0 0.0
  %591 = vmatprep.subr.mxu0 0.0
  %592 = vmatpush1.msra.mxu0 0.0
  %593 = vmatprep.subr.mxu0 0.0
  %594 = vmatpush1.msra.mxu0 0.0
  %595 = vmatprep.subr.mxu0 0.0
  %596 = vmatpush1.msra.mxu0 0.0
  %597 = vmatprep.subr.mxu0 0.0
  %598 = vmatpush1.msra.mxu0 0.0
  %599 = vmatprep.subr.mxu0 0.0
  %600 = vmatpush1.msra.mxu0 0.0
  %601 = vmatprep.subr.mxu0 0.0
  %602 = vmatpush1.msra.mxu0 0.0
  %603 = vmatprep.subr.mxu0 0.0
  %604 = vmatpush1.msra.mxu0 0.0
  %605 = vmatprep.subr.mxu0 0.0
  %606 = vmatpush1.msra.mxu0 0.0
  %607 = vmatprep.subr.mxu0 0.0
  %608 = vmatpush1.msra.mxu0 0.0
  %609 = vmatprep.subr.mxu0 0.0
  %610 = vmatpush1.msra.mxu0 0.0
  %611 = vmatprep.subr.mxu0 0.0
  %612 = vmatpush1.msra.mxu0 0.0
  %613 = vmatprep.subr.mxu0 0.0
  %614 = vmatpush1.msra.mxu0 0.0
  %615 = vmatprep.subr.mxu0 0.0
  %616 = vmatpush1.msra.mxu0 0.0
  %617 = vmatprep.subr.mxu0 0.0
  %618 = vmatpush1.msra.mxu0 0.0
  %619 = vmatprep.subr.mxu0 0.0
  %620 = vmatpush1.msra.mxu0 0.0
  %621 = vmatprep.subr.mxu0 0.0
  %622 = vmatpush1.msra.mxu0 0.0
  %623 = vmatprep.subr.mxu0 0.0
  %624 = vmatpush1.msra.mxu0 0.0
  %625 = vmatprep.subr.mxu0 0.0
  %626 = vmatpush1.msra.mxu0 0.0
  %627 = vmatprep.subr.mxu0 0.0
  %628 = vmatpush1.msra.mxu0 0.0
  %629 = vmatprep.subr.mxu0 0.0
  %630 = vmatpush1.msra.mxu0 0.0
  %631 = vmatprep.subr.mxu0 0.0
  %632 = vmatpush1.msra.mxu0 0.0
  %633 = vmatprep.subr.mxu0 0.0
  %634 = vmatpush1.msra.mxu0 0.0
  %635 = vmatprep.subr.mxu0 0.0
  %636 = vmatpush1.msra.mxu0 0.0
  %637 = vmatprep.subr.mxu0 0.0
  %638 = vmatpush1.msra.mxu0 0.0
  %639 = vmatprep.subr.mxu0 0.0
  %640 = vmatpush1.msra.mxu0 0.0
  %641 = vmatprep.subr.mxu0 0.0
  %642 = vmatpush1.msra.mxu0 0.0
  %643 = vmatprep.subr.mxu0 0.0
  %644 = vmatpush1.msra.mxu0 0.0
  %645 = vmatprep.mubr.f32.mxu0 0.0
  %646 = vmatmul.mubr.f32.gmra.mrb[0].mxu0 %v574
  %v647 = vpop.f32.mrb[0].mxu0
  %v648 = vadd.f32 0.0, %v647
  %v649 = vpop.f32.mrb[0].mxu0
  %650 = vmatprep.mubr.f32.mxu0 0.0
  %651 = vmatmul.mubr.f32.gmra.mrb[0].mxu0 %v577
  %v652 = vpop.f32.mrb[0].mxu0
  %v653 = vadd.f32 0.0, %v652
  %v654 = vpop.f32.mrb[0].mxu0
  %655 = vdwg.mxu0
  %656 = vrot.lane.b32.xlu0 %v434, 112
  %v657 = vpop.permute.xlu0 %656
  %658 = vrot.lane.b32.xlu0 %v439, 112
  %v659 = vpop.permute.xlu0 %658
  %660 = vrot.lane.b32.xlu0 %v434, 80
  %v661 = vpop.permute.xlu0 %660
  %662 = vrot.lane.b32.xlu0 %v439, 80
  %v663 = vpop.permute.xlu0 %662
  %v664 = vsel %vm458, %v657, 0
  %v666 = vsel %vm458, %v659, 0
  %v668 = vsel %vm458, %v661, 0
  %v670 = vsel %vm458, %v663, 0
  %672 = vmatprep.subr.mxu0 0.0
  %673 = vmatpush1.xpose.msra.mxu0 %v668
  %674 = vmatprep.subr.mxu0 0.0
  %675 = vmatpush1.xpose.msra.mxu0 %v670
  %676 = vmatprep.subr.mxu0 0.0
  %677 = vmatpush1.xpose.msra.mxu0 0.0
  %678 = vmatprep.subr.mxu0 0.0
  %679 = vmatpush1.xpose.msra.mxu0 0.0
  %680 = vmatprep.subr.mxu0 0.0
  %681 = vmatpush1.xpose.msra.mxu0 0.0
  %682 = vmatprep.subr.mxu0 0.0
  %683 = vmatpush1.xpose.msra.mxu0 0.0
  %684 = vmatprep.subr.mxu0 0.0
  %685 = vmatpush1.xpose.msra.mxu0 0.0
  %686 = vmatprep.subr.mxu0 0.0
  %687 = vmatpush1.xpose.msra.mxu0 0.0
  %688 = vmatprep.subr.mxu0 0.0
  %689 = vmatpush1.xpose.msra.mxu0 0.0
  %690 = vmatprep.subr.mxu0 0.0
  %691 = vmatpush1.xpose.msra.mxu0 0.0
  %692 = vmatprep.subr.mxu0 0.0
  %693 = vmatpush1.xpose.msra.mxu0 0.0
  %694 = vmatprep.subr.mxu0 0.0
  %695 = vmatpush1.xpose.msra.mxu0 0.0
  %696 = vmatprep.subr.mxu0 0.0
  %697 = vmatpush1.xpose.msra.mxu0 0.0
  %698 = vmatprep.subr.mxu0 0.0
  %699 = vmatpush1.xpose.msra.mxu0 0.0
  %700 = vmatprep.subr.mxu0 0.0
  %701 = vmatpush1.xpose.msra.mxu0 0.0
  %702 = vmatprep.subr.mxu0 0.0
  %703 = vmatpush1.xpose.msra.mxu0 0.0
  %704 = vmatprep.subr.mxu0 0.0
  %705 = vmatpush1.xpose.msra.mxu0 0.0
  %706 = vmatprep.subr.mxu0 0.0
  %707 = vmatpush1.xpose.msra.mxu0 0.0
  %708 = vmatprep.subr.mxu0 0.0
  %709 = vmatpush1.xpose.msra.mxu0 0.0
  %710 = vmatprep.subr.mxu0 0.0
  %711 = vmatpush1.xpose.msra.mxu0 0.0
  %712 = vmatprep.subr.mxu0 0.0
  %713 = vmatpush1.xpose.msra.mxu0 0.0
  %714 = vmatprep.subr.mxu0 0.0
  %715 = vmatpush1.xpose.msra.mxu0 0.0
  %716 = vmatprep.subr.mxu0 0.0
  %717 = vmatpush1.xpose.msra.mxu0 0.0
  %718 = vmatprep.subr.mxu0 0.0
  %719 = vmatpush1.xpose.msra.mxu0 0.0
  %720 = vmatprep.subr.mxu0 0.0
  %721 = vmatpush1.xpose.msra.mxu0 0.0
  %722 = vmatprep.subr.mxu0 0.0
  %723 = vmatpush1.xpose.msra.mxu0 0.0
  %724 = vmatprep.subr.mxu0 0.0
  %725 = vmatpush1.xpose.msra.mxu0 0.0
  %726 = vmatprep.subr.mxu0 0.0
  %727 = vmatpush1.xpose.msra.mxu0 0.0
  %728 = vmatprep.subr.mxu0 0.0
  %729 = vmatpush1.xpose.msra.mxu0 0.0
  %730 = vmatprep.subr.mxu0 0.0
  %731 = vmatpush1.xpose.msra.mxu0 0.0
  %732 = vmatprep.subr.mxu0 0.0
  %733 = vmatpush1.xpose.msra.mxu0 0.0
  %734 = vmatprep.subr.mxu0 0.0
  %735 = vmatpush1.xpose.msra.mxu0 0.0
  %736 = vmatprep.mubr.f32.mxu0 0.0
  %737 = vmatmul.mubr.f32.gmra.mrb[0].mxu0 %v664
  %v738 = vpop.f32.mrb[0].mxu0
  %v739 = vadd.f32 0.0, %v738
  %v740 = vpop.f32.mrb[0].mxu0
  %741 = vmatprep.mubr.f32.mxu0 0.0
  %742 = vmatmul.mubr.f32.gmra.mrb[0].mxu0 %v666
  %v743 = vpop.f32.mrb[0].mxu0
  %v744 = vadd.f32 0.0, %v743
  %v745 = vpop.f32.mrb[0].mxu0
  %746 = vdwg.mxu0
  %v747 = vmul.f32 %v739, 0.25
  %v748 = vmul.f32 %v744, 0.25
  %v749 = vsel %vm544, %v747, -inf
  %750 = vmax.xlane.f32.xlu0 %v749
  %v751 = vpop.xlane.xlu0 %750
  %v752 = vsel %vm548, %v748, -inf
  %753 = vmax.xlane.f32.xlu0 %v752
  %v754 = vpop.xlane.xlu0 %753
  %v755 = vsub.f32 %v747, %v751
  %v756 = vsub.f32 %v748, %v754
  %v757 = vmul.f32 %v755, 1.442695
  %v758 = vpow.pop %v757
  %v759 = vmul.f32 %v756, 1.442695
  %v760 = vpow.pop %v759
  %v761 = vsel %vm544, %v758, 0.0
  %762 = vadd.xlane.f32.xlu0 %v761
  %v763 = vpop.xlane.xlu0 %762
  %v764 = vsel %vm548, %v760, 0.0
  %765 = vadd.xlane.f32.xlu0 %v764
  %v766 = vpop.xlane.xlu0 %765
  %v767 = vrcp.pop %v763
  %v768 = vrcp.pop %v766
  %v769 = vmul.f32 %v758, %v767
  %v770 = vmul.f32 %v760, %v768
  %771 = vrot.lane.b32.xlu0 %v434, 48
  %v772 = vpop.permute.xlu0 %771
  %773 = vrot.lane.b32.xlu0 %v439, 48
  %v774 = vpop.permute.xlu0 %773
  %v777 = vsel %vm544, %v769, 0
  %v780 = vsel %vm544, %v770, 0
  %v782 = vsel %vm272, %v774, 0
  %784 = vmatprep.subr.mxu0 0.0
  %785 = vmatpush1.msra.mxu0 %v772
  %786 = vmatprep.subr.mxu0 0.0
  %787 = vmatpush1.msra.mxu0 %v782
  %788 = vmatprep.subr.mxu0 0.0
  %789 = vmatpush1.msra.mxu0 0.0
  %790 = vmatprep.subr.mxu0 0.0
  %791 = vmatpush1.msra.mxu0 0.0
  %792 = vmatprep.subr.mxu0 0.0
  %793 = vmatpush1.msra.mxu0 0.0
  %794 = vmatprep.subr.mxu0 0.0
  %795 = vmatpush1.msra.mxu0 0.0
  %796 = vmatprep.subr.mxu0 0.0
  %797 = vmatpush1.msra.mxu0 0.0
  %798 = vmatprep.subr.mxu0 0.0
  %799 = vmatpush1.msra.mxu0 0.0
  %800 = vmatprep.subr.mxu0 0.0
  %801 = vmatpush1.msra.mxu0 0.0
  %802 = vmatprep.subr.mxu0 0.0
  %803 = vmatpush1.msra.mxu0 0.0
  %804 = vmatprep.subr.mxu0 0.0
  %805 = vmatpush1.msra.mxu0 0.0
  %806 = vmatprep.subr.mxu0 0.0
  %807 = vmatpush1.msra.mxu0 0.0
  %808 = vmatprep.subr.mxu0 0.0
  %809 = vmatpush1.msra.mxu0 0.0
  %810 = vmatprep.subr.mxu0 0.0
  %811 = vmatpush1.msra.mxu0 0.0
  %812 = vmatprep.subr.mxu0 0.0
  %813 = vmatpush1.msra.mxu0 0.0
  %814 = vmatprep.subr.mxu0 0.0
  %815 = vmatpush1.msra.mxu0 0.0
  %816 = vmatprep.subr.mxu0 0.0
  %817 = vmatpush1.msra.mxu0 0.0
  %818 = vmatprep.subr.mxu0 0.0
  %819 = vmatpush1.msra.mxu0 0.0
  %820 = vmatprep.subr.mxu0 0.0
  %821 = vmatpush1.msra.mxu0 0.0
  %822 = vmatprep.subr.mxu0 0.0
  %823 = vmatpush1.msra.mxu0 0.0
  %824 = vmatprep.subr.mxu0 0.0
  %825 = vmatpush1.msra.mxu0 0.0
  %826 = vmatprep.subr.mxu0 0.0
  %827 = vmatpush1.msra.mxu0 0.0
  %828 = vmatprep.subr.mxu0 0.0
  %829 = vmatpush1.msra.mxu0 0.0
  %830 = vmatprep.subr.mxu0 0.0
  %831 = vmatpush1.msra.mxu0 0.0
  %832 = vmatprep.subr.mxu0 0.0
  %833 = vmatpush1.msra.mxu0 0.0
  %834 = vmatprep.subr.mxu0 0.0
  %835 = vmatpush1.msra.mxu0 0.0
  %836 = vmatprep.subr.mxu0 0.0
  %837 = vmatpush1.msra.mxu0 0.0
  %838 = vmatprep.subr.mxu0 0.0
  %839 = vmatpush1.msra.mxu0 0.0
  %840 = vmatprep.subr.mxu0 0.0
  %841 = vmatpush1.msra.mxu0 0.0
  %842 = vmatprep.subr.mxu0 0.0
  %843 = vmatpush1.msra.mxu0 0.0
  %844 = vmatprep.subr.mxu0 0.0
  %845 = vmatpush1.msra.mxu0 0.0
  %846 = vmatprep.subr.mxu0 0.0
  %847 = vmatpush1.msra.mxu0 0.0
  %848 = vmatprep.mubr.f32.mxu0 0.0
  %849 = vmatmul.mubr.f32.gmra.mrb[0].mxu0 %v777
  %v850 = vpop.f32.mrb[0].mxu0
  %v851 = vadd.f32 0.0, %v850
  %v852 = vpop.f32.mrb[0].mxu0
  %853 = vmatprep.mubr.f32.mxu0 0.0
  %854 = vmatmul.mubr.f32.gmra.mrb[0].mxu0 %v780
  %v855 = vpop.f32.mrb[0].mxu0
  %v856 = vadd.f32 0.0, %v855
  %v857 = vpop.f32.mrb[0].mxu0
  %858 = vdwg.mxu0
  %861 = vrot.lane.b32.xlu0 %v851, 16
  %v862 = vpop.permute.xlu0 %861
  %863 = vrot.lane.b32.xlu0 %v856, 16
  %v864 = vpop.permute.xlu0 %863
  %v867 = vsel %vm458, %v648, %v862
  %v868 = vsel %vm458, %v653, %v864
  %v871 = vrot.slane %v439, 5
  %v872 = vrot.slane %v444, 5
  %v873 = vsel %vm240, %v871, %v872
  %v874 = vrot.slane %v449, 5
  %v875 = vsel %vm240, %v872, %v874
  %876 = vrot.lane.b32.xlu0 %v873, 96
  %v877 = vpop.permute.xlu0 %876
  %878 = vrot.lane.b32.xlu0 %v875, 96
  %v879 = vpop.permute.xlu0 %878
  %v880 = vsel %vm458, %v873, 0
  %v882 = vsel %vm458, %v875, 0
  %v884 = vsel %vm458, %v877, 0
  %v886 = vsel %vm458, %v879, 0
  %888 = vmatprep.subr.mxu0 0.0
  %889 = vmatpush1.xpose.msra.mxu0 %v884
  %890 = vmatprep.subr.mxu0 0.0
  %891 = vmatpush1.xpose.msra.mxu0 %v886
  %892 = vmatprep.subr.mxu0 0.0
  %893 = vmatpush1.xpose.msra.mxu0 0.0
  %894 = vmatprep.subr.mxu0 0.0
  %895 = vmatpush1.xpose.msra.mxu0 0.0
  %896 = vmatprep.subr.mxu0 0.0
  %897 = vmatpush1.xpose.msra.mxu0 0.0
  %898 = vmatprep.subr.mxu0 0.0
  %899 = vmatpush1.xpose.msra.mxu0 0.0
  %900 = vmatprep.subr.mxu0 0.0
  %901 = vmatpush1.xpose.msra.mxu0 0.0
  %902 = vmatprep.subr.mxu0 0.0
  %903 = vmatpush1.xpose.msra.mxu0 0.0
  %904 = vmatprep.subr.mxu0 0.0
  %905 = vmatpush1.xpose.msra.mxu0 0.0
  %906 = vmatprep.subr.mxu0 0.0
  %907 = vmatpush1.xpose.msra.mxu0 0.0
  %908 = vmatprep.subr.mxu0 0.0
  %909 = vmatpush1.xpose.msra.mxu0 0.0
  %910 = vmatprep.subr.mxu0 0.0
  %911 = vmatpush1.xpose.msra.mxu0 0.0
  %912 = vmatprep.subr.mxu0 0.0
  %913 = vmatpush1.xpose.msra.mxu0 0.0
  %914 = vmatprep.subr.mxu0 0.0
  %915 = vmatpush1.xpose.msra.mxu0 0.0
  %916 = vmatprep.subr.mxu0 0.0
  %917 = vmatpush1.xpose.msra.mxu0 0.0
  %918 = vmatprep.subr.mxu0 0.0
  %919 = vmatpush1.xpose.msra.mxu0 0.0
  %920 = vmatprep.subr.mxu0 0.0
  %921 = vmatpush1.xpose.msra.mxu0 0.0
  %922 = vmatprep.subr.mxu0 0.0
  %923 = vmatpush1.xpose.msra.mxu0 0.0
  %924 = vmatprep.subr.mxu0 0.0
  %925 = vmatpush1.xpose.msra.mxu0 0.0
  %926 = vmatprep.subr.mxu0 0.0
  %927 = vmatpush1.xpose.msra.mxu0 0.0
  %928 = vmatprep.subr.mxu0 0.0
  %929 = vmatpush1.xpose.msra.mxu0 0.0
  %930 = vmatprep.subr.mxu0 0.0
  %931 = vmatpush1.xpose.msra.mxu0 0.0
  %932 = vmatprep.subr.mxu0 0.0
  %933 = vmatpush1.xpose.msra.mxu0 0.0
  %934 = vmatprep.subr.mxu0 0.0
  %935 = vmatpush1.xpose.msra.mxu0 0.0
  %936 = vmatprep.subr.mxu0 0.0
  %937 = vmatpush1.xpose.msra.mxu0 0.0
  %938 = vmatprep.subr.mxu0 0.0
  %939 = vmatpush1.xpose.msra.mxu0 0.0
  %940 = vmatprep.subr.mxu0 0.0
  %941 = vmatpush1.xpose.msra.mxu0 0.0
  %942 = vmatprep.subr.mxu0 0.0
  %943 = vmatpush1.xpose.msra.mxu0 0.0
  %944 = vmatprep.subr.mxu0 0.0
  %945 = vmatpush1.xpose.msra.mxu0 0.0
  %946 = vmatprep.subr.mxu0 0.0
  %947 = vmatpush1.xpose.msra.mxu0 0.0
  %948 = vmatprep.subr.mxu0 0.0
  %949 = vmatpush1.xpose.msra.mxu0 0.0
  %950 = vmatprep.subr.mxu0 0.0
  %951 = vmatpush1.xpose.msra.mxu0 0.0
  %952 = vmatprep.mubr.f32.mxu0 0.0
  %953 = vmatmul.mubr.f32.gmra.mrb[0].mxu0 %v880
  %v954 = vpop.f32.mrb[0].mxu0
  %v955 = vadd.f32 0.0, %v954
  %v956 = vpop.f32.mrb[0].mxu0
  %957 = vmatprep.mubr.f32.mxu0 0.0
  %958 = vmatmul.mubr.f32.gmra.mrb[0].mxu0 %v882
  %v959 = vpop.f32.mrb[0].mxu0
  %v960 = vadd.f32 0.0, %v959
  %v961 = vpop.f32.mrb[0].mxu0
  %962 = vdwg.mxu0
  %v963 = vmul.f32 %v955, 0.25
  %v964 = vmul.f32 %v960, 0.25
  %v965 = vsel %vm544, %v963, -inf
  %966 = vmax.xlane.f32.xlu0 %v965
  %v967 = vpop.xlane.xlu0 %966
  %v968 = vsel %vm548, %v964, -inf
  %969 = vmax.xlane.f32.xlu0 %v968
  %v970 = vpop.xlane.xlu0 %969
  %v971 = vsub.f32 %v963, %v967
  %v972 = vsub.f32 %v964, %v970
  %v973 = vmul.f32 %v971, 1.442695
  %v974 = vpow.pop %v973
  %v975 = vmul.f32 %v972, 1.442695
  %v976 = vpow.pop %v975
  %v977 = vsel %vm544, %v974, 0.0
  %978 = vadd.xlane.f32.xlu0 %v977
  %v979 = vpop.xlane.xlu0 %978
  %v980 = vsel %vm548, %v976, 0.0
  %981 = vadd.xlane.f32.xlu0 %v980
  %v982 = vpop.xlane.xlu0 %981
  %v983 = vrcp.pop %v979
  %v984 = vrcp.pop %v982
  %v985 = vmul.f32 %v974, %v983
  %v986 = vmul.f32 %v976, %v984
  %987 = vrot.lane.b32.xlu0 %v873, 64
  %v988 = vpop.permute.xlu0 %987
  %989 = vrot.lane.b32.xlu0 %v875, 64
  %v990 = vpop.permute.xlu0 %989
  %v993 = vsel %vm544, %v985, 0
  %v996 = vsel %vm544, %v986, 0
  %v998 = vsel %vm272, %v990, 0
  %1000 = vmatprep.subr.mxu0 0.0
  %1001 = vmatpush1.msra.mxu0 %v988
  %1002 = vmatprep.subr.mxu0 0.0
  %1003 = vmatpush1.msra.mxu0 %v998
  %1004 = vmatprep.subr.mxu0 0.0
  %1005 = vmatpush1.msra.mxu0 0.0
  %1006 = vmatprep.subr.mxu0 0.0
  %1007 = vmatpush1.msra.mxu0 0.0
  %1008 = vmatprep.subr.mxu0 0.0
  %1009 = vmatpush1.msra.mxu0 0.0
  %1010 = vmatprep.subr.mxu0 0.0
  %1011 = vmatpush1.msra.mxu0 0.0
  %1012 = vmatprep.subr.mxu0 0.0
  %1013 = vmatpush1.msra.mxu0 0.0
  %1014 = vmatprep.subr.mxu0 0.0
  %1015 = vmatpush1.msra.mxu0 0.0
  %1016 = vmatprep.subr.mxu0 0.0
  %1017 = vmatpush1.msra.mxu0 0.0
  %1018 = vmatprep.subr.mxu0 0.0
  %1019 = vmatpush1.msra.mxu0 0.0
  %1020 = vmatprep.subr.mxu0 0.0
  %1021 = vmatpush1.msra.mxu0 0.0
  %1022 = vmatprep.subr.mxu0 0.0
  %1023 = vmatpush1.msra.mxu0 0.0
  %1024 = vmatprep.subr.mxu0 0.0
  %1025 = vmatpush1.msra.mxu0 0.0
  %1026 = vmatprep.subr.mxu0 0.0
  %1027 = vmatpush1.msra.mxu0 0.0
  %1028 = vmatprep.subr.mxu0 0.0
  %1029 = vmatpush1.msra.mxu0 0.0
  %1030 = vmatprep.subr.mxu0 0.0
  %1031 = vmatpush1.msra.mxu0 0.0
  %1032 = vmatprep.subr.mxu0 0.0
  %1033 = vmatpush1.msra.mxu0 0.0
  %1034 = vmatprep.subr.mxu0 0.0
  %1035 = vmatpush1.msra.mxu0 0.0
  %1036 = vmatprep.subr.mxu0 0.0
  %1037 = vmatpush1.msra.mxu0 0.0
  %1038 = vmatprep.subr.mxu0 0.0
  %1039 = vmatpush1.msra.mxu0 0.0
  %1040 = vmatprep.subr.mxu0 0.0
  %1041 = vmatpush1.msra.mxu0 0.0
  %1042 = vmatprep.subr.mxu0 0.0
  %1043 = vmatpush1.msra.mxu0 0.0
  %1044 = vmatprep.subr.mxu0 0.0
  %1045 = vmatpush1.msra.mxu0 0.0
  %1046 = vmatprep.subr.mxu0 0.0
  %1047 = vmatpush1.msra.mxu0 0.0
  %1048 = vmatprep.subr.mxu0 0.0
  %1049 = vmatpush1.msra.mxu0 0.0
  %1050 = vmatprep.subr.mxu0 0.0
  %1051 = vmatpush1.msra.mxu0 0.0
  %1052 = vmatprep.subr.mxu0 0.0
  %1053 = vmatpush1.msra.mxu0 0.0
  %1054 = vmatprep.subr.mxu0 0.0
  %1055 = vmatpush1.msra.mxu0 0.0
  %1056 = vmatprep.subr.mxu0 0.0
  %1057 = vmatpush1.msra.mxu0 0.0
  %1058 = vmatprep.subr.mxu0 0.0
  %1059 = vmatpush1.msra.mxu0 0.0
  %1060 = vmatprep.subr.mxu0 0.0
  %1061 = vmatpush1.msra.mxu0 0.0
  %1062 = vmatprep.subr.mxu0 0.0
  %1063 = vmatpush1.msra.mxu0 0.0
  %1064 = vmatprep.mubr.f32.mxu0 0.0
  %1065 = vmatmul.mubr.f32.gmra.mrb[0].mxu0 %v993
  %v1066 = vpop.f32.mrb[0].mxu0
  %v1067 = vadd.f32 0.0, %v1066
  %v1068 = vpop.f32.mrb[0].mxu0
  %1069 = vmatprep.mubr.f32.mxu0 0.0
  %1070 = vmatmul.mubr.f32.gmra.mrb[0].mxu0 %v996
  %v1071 = vpop.f32.mrb[0].mxu0
  %v1072 = vadd.f32 0.0, %v1071
  %v1073 = vpop.f32.mrb[0].mxu0
  %1074 = vdwg.mxu0
  %1075 = vrot.lane.b32.xlu0 %v873, 112
  %v1076 = vpop.permute.xlu0 %1075
  %1077 = vrot.lane.b32.xlu0 %v875, 112
  %v1078 = vpop.permute.xlu0 %1077
  %1079 = vrot.lane.b32.xlu0 %v873, 80
  %v1080 = vpop.permute.xlu0 %1079
  %1081 = vrot.lane.b32.xlu0 %v875, 80
  %v1082 = vpop.permute.xlu0 %1081
  %v1083 = vsel %vm458, %v1076, 0
  %v1085 = vsel %vm458, %v1078, 0
  %v1087 = vsel %vm458, %v1080, 0
  %v1089 = vsel %vm458, %v1082, 0
  %1091 = vmatprep.subr.mxu0 0.0
  %1092 = vmatpush1.xpose.msra.mxu0 %v1087
  %1093 = vmatprep.subr.mxu0 0.0
  %1094 = vmatpush1.xpose.msra.mxu0 %v1089
  %1095 = vmatprep.subr.mxu0 0.0
  %1096 = vmatpush1.xpose.msra.mxu0 0.0
  %1097 = vmatprep.subr.mxu0 0.0
  %1098 = vmatpush1.xpose.msra.mxu0 0.0
  %1099 = vmatprep.subr.mxu0 0.0
  %1100 = vmatpush1.xpose.msra.mxu0 0.0
  %1101 = vmatprep.subr.mxu0 0.0
  %1102 = vmatpush1.xpose.msra.mxu0 0.0
  %1103 = vmatprep.subr.mxu0 0.0
  %1104 = vmatpush1.xpose.msra.mxu0 0.0
  %1105 = vmatprep.subr.mxu0 0.0
  %1106 = vmatpush1.xpose.msra.mxu0 0.0
  %1107 = vmatprep.subr.mxu0 0.0
  %1108 = vmatpush1.xpose.msra.mxu0 0.0
  %1109 = vmatprep.subr.mxu0 0.0
  %1110 = vmatpush1.xpose.msra.mxu0 0.0
  %1111 = vmatprep.subr.mxu0 0.0
  %1112 = vmatpush1.xpose.msra.mxu0 0.0
  %1113 = vmatprep.subr.mxu0 0.0
  %1114 = vmatpush1.xpose.msra.mxu0 0.0
  %1115 = vmatprep.subr.mxu0 0.0
  %1116 = vmatpush1.xpose.msra.mxu0 0.0
  %1117 = vmatprep.subr.mxu0 0.0
  %1118 = vmatpush1.xpose.msra.mxu0 0.0
  %1119 = vmatprep.subr.mxu0 0.0
  %1120 = vmatpush1.xpose.msra.mxu0 0.0
  %1121 = vmatprep.subr.mxu0 0.0
  %1122 = vmatpush1.xpose.msra.mxu0 0.0
  %1123 = vmatprep.subr.mxu0 0.0
  %1124 = vmatpush1.xpose.msra.mxu0 0.0
  %1125 = vmatprep.subr.mxu0 0.0
  %1126 = vmatpush1.xpose.msra.mxu0 0.0
  %1127 = vmatprep.subr.mxu0 0.0
  %1128 = vmatpush1.xpose.msra.mxu0 0.0
  %1129 = vmatprep.subr.mxu0 0.0
  %1130 = vmatpush1.xpose.msra.mxu0 0.0
  %1131 = vmatprep.subr.mxu0 0.0
  %1132 = vmatpush1.xpose.msra.mxu0 0.0
  %1133 = vmatprep.subr.mxu0 0.0
  %1134 = vmatpush1.xpose.msra.mxu0 0.0
  %1135 = vmatprep.subr.mxu0 0.0
  %1136 = vmatpush1.xpose.msra.mxu0 0.0
  %1137 = vmatprep.subr.mxu0 0.0
  %1138 = vmatpush1.xpose.msra.mxu0 0.0
  %1139 = vmatprep.subr.mxu0 0.0
  %1140 = vmatpush1.xpose.msra.mxu0 0.0
  %1141 = vmatprep.subr.mxu0 0.0
  %1142 = vmatpush1.xpose.msra.mxu0 0.0
  %1143 = vmatprep.subr.mxu0 0.0
  %1144 = vmatpush1.xpose.msra.mxu0 0.0
  %1145 = vmatprep.subr.mxu0 0.0
  %1146 = vmatpush1.xpose.msra.mxu0 0.0
  %1147 = vmatprep.subr.mxu0 0.0
  %1148 = vmatpush1.xpose.msra.mxu0 0.0
  %1149 = vmatprep.subr.mxu0 0.0
  %1150 = vmatpush1.xpose.msra.mxu0 0.0
  %1151 = vmatprep.subr.mxu0 0.0
  %1152 = vmatpush1.xpose.msra.mxu0 0.0
  %1153 = vmatprep.subr.mxu0 0.0
  %1154 = vmatpush1.xpose.msra.mxu0 0.0
  %1155 = vmatprep.mubr.f32.mxu0 0.0
  %1156 = vmatmul.mubr.f32.gmra.mrb[0].mxu0 %v1083
  %v1157 = vpop.f32.mrb[0].mxu0
  %v1158 = vadd.f32 0.0, %v1157
  %v1159 = vpop.f32.mrb[0].mxu0
  %1160 = vmatprep.mubr.f32.mxu0 0.0
  %1161 = vmatmul.mubr.f32.gmra.mrb[0].mxu0 %v1085
  %v1162 = vpop.f32.mrb[0].mxu0
  %v1163 = vadd.f32 0.0, %v1162
  %v1164 = vpop.f32.mrb[0].mxu0
  %1165 = vdwg.mxu0
  %v1166 = vmul.f32 %v1158, 0.25
  %v1167 = vmul.f32 %v1163, 0.25
  %v1168 = vsel %vm544, %v1166, -inf
  %1169 = vmax.xlane.f32.xlu0 %v1168
  %v1170 = vpop.xlane.xlu0 %1169
  %v1171 = vsel %vm548, %v1167, -inf
  %1172 = vmax.xlane.f32.xlu0 %v1171
  %v1173 = vpop.xlane.xlu0 %1172
  %v1174 = vsub.f32 %v1166, %v1170
  %v1175 = vsub.f32 %v1167, %v1173
  %v1176 = vmul.f32 %v1174, 1.442695
  %v1177 = vpow.pop %v1176
  %v1178 = vmul.f32 %v1175, 1.442695
  %v1179 = vpow.pop %v1178
  %v1180 = vsel %vm544, %v1177, 0.0
  %1181 = vadd.xlane.f32.xlu0 %v1180
  %v1182 = vpop.xlane.xlu0 %1181
  %v1183 = vsel %vm548, %v1179, 0.0
  %1184 = vadd.xlane.f32.xlu0 %v1183
  %v1185 = vpop.xlane.xlu0 %1184
  %v1186 = vrcp.pop %v1182
  %v1187 = vrcp.pop %v1185
  %v1188 = vmul.f32 %v1177, %v1186
  %v1189 = vmul.f32 %v1179, %v1187
  %1190 = vrot.lane.b32.xlu0 %v873, 48
  %v1191 = vpop.permute.xlu0 %1190
  %1192 = vrot.lane.b32.xlu0 %v875, 48
  %v1193 = vpop.permute.xlu0 %1192
  %v1196 = vsel %vm544, %v1188, 0
  %v1199 = vsel %vm544, %v1189, 0
  %v1201 = vsel %vm272, %v1193, 0
  %1203 = vmatprep.subr.mxu0 0.0
  %1204 = vmatpush1.msra.mxu0 %v1191
  %1205 = vmatprep.subr.mxu0 0.0
  %1206 = vmatpush1.msra.mxu0 %v1201
  %1207 = vmatprep.subr.mxu0 0.0
  %1208 = vmatpush1.msra.mxu0 0.0
  %1209 = vmatprep.subr.mxu0 0.0
  %1210 = vmatpush1.msra.mxu0 0.0
  %1211 = vmatprep.subr.mxu0 0.0
  %1212 = vmatpush1.msra.mxu0 0.0
  %1213 = vmatprep.subr.mxu0 0.0
  %1214 = vmatpush1.msra.mxu0 0.0
  %1215 = vmatprep.subr.mxu0 0.0
  %1216 = vmatpush1.msra.mxu0 0.0
  %1217 = vmatprep.subr.mxu0 0.0
  %1218 = vmatpush1.msra.mxu0 0.0
  %1219 = vmatprep.subr.mxu0 0.0
  %1220 = vmatpush1.msra.mxu0 0.0
  %1221 = vmatprep.subr.mxu0 0.0
  %1222 = vmatpush1.msra.mxu0 0.0
  %1223 = vmatprep.subr.mxu0 0.0
  %1224 = vmatpush1.msra.mxu0 0.0
  %1225 = vmatprep.subr.mxu0 0.0
  %1226 = vmatpush1.msra.mxu0 0.0
  %1227 = vmatprep.subr.mxu0 0.0
  %1228 = vmatpush1.msra.mxu0 0.0
  %1229 = vmatprep.subr.mxu0 0.0
  %1230 = vmatpush1.msra.mxu0 0.0
  %1231 = vmatprep.subr.mxu0 0.0
  %1232 = vmatpush1.msra.mxu0 0.0
  %1233 = vmatprep.subr.mxu0 0.0
  %1234 = vmatpush1.msra.mxu0 0.0
  %1235 = vmatprep.subr.mxu0 0.0
  %1236 = vmatpush1.msra.mxu0 0.0
  %1237 = vmatprep.subr.mxu0 0.0
  %1238 = vmatpush1.msra.mxu0 0.0
  %1239 = vmatprep.subr.mxu0 0.0
  %1240 = vmatpush1.msra.mxu0 0.0
  %1241 = vmatprep.subr.mxu0 0.0
  %1242 = vmatpush1.msra.mxu0 0.0
  %1243 = vmatprep.subr.mxu0 0.0
  %1244 = vmatpush1.msra.mxu0 0.0
  %1245 = vmatprep.subr.mxu0 0.0
  %1246 = vmatpush1.msra.mxu0 0.0
  %1247 = vmatprep.subr.mxu0 0.0
  %1248 = vmatpush1.msra.mxu0 0.0
  %1249 = vmatprep.subr.mxu0 0.0
  %1250 = vmatpush1.msra.mxu0 0.0
  %1251 = vmatprep.subr.mxu0 0.0
  %1252 = vmatpush1.msra.mxu0 0.0
  %1253 = vmatprep.subr.mxu0 0.0
  %1254 = vmatpush1.msra.mxu0 0.0
  %1255 = vmatprep.subr.mxu0 0.0
  %1256 = vmatpush1.msra.mxu0 0.0
  %1257 = vmatprep.subr.mxu0 0.0
  %1258 = vmatpush1.msra.mxu0 0.0
  %1259 = vmatprep.subr.mxu0 0.0
  %1260 = vmatpush1.msra.mxu0 0.0
  %1261 = vmatprep.subr.mxu0 0.0
  %1262 = vmatpush1.msra.mxu0 0.0
  %1263 = vmatprep.subr.mxu0 0.0
  %1264 = vmatpush1.msra.mxu0 0.0
  %1265 = vmatprep.subr.mxu0 0.0
  %1266 = vmatpush1.msra.mxu0 0.0
  %1267 = vmatprep.mubr.f32.mxu0 0.0
  %1268 = vmatmul.mubr.f32.gmra.mrb[0].mxu0 %v1196
  %v1269 = vpop.f32.mrb[0].mxu0
  %v1270 = vadd.f32 0.0, %v1269
  %v1271 = vpop.f32.mrb[0].mxu0
  %1272 = vmatprep.mubr.f32.mxu0 0.0
  %1273 = vmatmul.mubr.f32.gmra.mrb[0].mxu0 %v1199
  %v1274 = vpop.f32.mrb[0].mxu0
  %v1275 = vadd.f32 0.0, %v1274
  %v1276 = vpop.f32.mrb[0].mxu0
  %1277 = vdwg.mxu0
  %1280 = vrot.lane.b32.xlu0 %v1270, 16
  %v1281 = vpop.permute.xlu0 %1280
  %1282 = vrot.lane.b32.xlu0 %v1275, 16
  %v1283 = vpop.permute.xlu0 %1282
  %v1286 = vsel %vm458, %v1067, %v1281
  %v1287 = vsel %vm458, %v1072, %v1283
  %v1290 = vrot.slane %v1286, 3
  %v1291 = vrot.slane %v1287, 3
  %v1292 = vsel %vm272, %v1290, %v1291
  %v1294 = vsel %vm272, %v868, %v1290
  %v1295 = vld [vmem:[%s10] sm:$0xff]
  %v1296 = vld [vmem:[%s10 + $0x8] sm:$0xff]
  %v1297 = vld [vmem:[%s10 + $0x10] sm:$0xff]
  %v1298 = vld [vmem:[%s10 + $0x18] sm:$0xff]
  %v1299 = vld [vmem:[%s11] sm:$0x1]
  %v1301 = vlaneseq
  %v1302 = vshrl.u32 %v1301, 7
  %v1303 = vsub.s32 0, %v1302
  %v1304 = vrot.slane %v1299, %v1303
  %v1307 = vsel %vm167, %v867, 0
  %v1310 = vsel %vm167, %v1294, 0
  %v1312 = vsel %vm167, %v1292, 0
  %v1314 = vsel %vm167, %v1291, 0
  %1316 = vmatprep.subr.mxu0 0.0
  %1317 = vmatpush1.msra.mxu0 %v1295
  %1318 = vmatprep.subr.mxu0 0.0
  %1319 = vmatpush1.msra.mxu0 %v1296
  %1320 = vmatprep.subr.mxu0 0.0
  %1321 = vmatpush1.msra.mxu0 %v1297
  %1322 = vmatprep.subr.mxu0 0.0
  %1323 = vmatpush1.msra.mxu0 %v1298
  %1324 = vmatprep.subr.mxu0 0.0
  %1325 = vmatpush1.msra.mxu0 0.0
  %1326 = vmatprep.subr.mxu0 0.0
  %1327 = vmatpush1.msra.mxu0 0.0
  %1328 = vmatprep.subr.mxu0 0.0
  %1329 = vmatpush1.msra.mxu0 0.0
  %1330 = vmatprep.subr.mxu0 0.0
  %1331 = vmatpush1.msra.mxu0 0.0
  %1332 = vmatprep.subr.mxu0 0.0
  %1333 = vmatpush1.msra.mxu0 0.0
  %1334 = vmatprep.subr.mxu0 0.0
  %1335 = vmatpush1.msra.mxu0 0.0
  %1336 = vmatprep.subr.mxu0 0.0
  %1337 = vmatpush1.msra.mxu0 0.0
  %1338 = vmatprep.subr.mxu0 0.0
  %1339 = vmatpush1.msra.mxu0 0.0
  %1340 = vmatprep.subr.mxu0 0.0
  %1341 = vmatpush1.msra.mxu0 0.0
  %1342 = vmatprep.subr.mxu0 0.0
  %1343 = vmatpush1.msra.mxu0 0.0
  %1344 = vmatprep.subr.mxu0 0.0
  %1345 = vmatpush1.msra.mxu0 0.0
  %1346 = vmatprep.subr.mxu0 0.0
  %1347 = vmatpush1.msra.mxu0 0.0
  %1348 = vmatprep.subr.mxu0 0.0
  %1349 = vmatpush1.msra.mxu0 0.0
  %1350 = vmatprep.subr.mxu0 0.0
  %1351 = vmatpush1.msra.mxu0 0.0
  %1352 = vmatprep.subr.mxu0 0.0
  %1353 = vmatpush1.msra.mxu0 0.0
  %1354 = vmatprep.subr.mxu0 0.0
  %1355 = vmatpush1.msra.mxu0 0.0
  %1356 = vmatprep.subr.mxu0 0.0
  %1357 = vmatpush1.msra.mxu0 0.0
  %1358 = vmatprep.subr.mxu0 0.0
  %1359 = vmatpush1.msra.mxu0 0.0
  %1360 = vmatprep.subr.mxu0 0.0
  %1361 = vmatpush1.msra.mxu0 0.0
  %1362 = vmatprep.subr.mxu0 0.0
  %1363 = vmatpush1.msra.mxu0 0.0
  %1364 = vmatprep.subr.mxu0 0.0
  %1365 = vmatpush1.msra.mxu0 0.0
  %1366 = vmatprep.subr.mxu0 0.0
  %1367 = vmatpush1.msra.mxu0 0.0
  %1368 = vmatprep.subr.mxu0 0.0
  %1369 = vmatpush1.msra.mxu0 0.0
  %1370 = vmatprep.subr.mxu0 0.0
  %1371 = vmatpush1.msra.mxu0 0.0
  %1372 = vmatprep.subr.mxu0 0.0
  %1373 = vmatpush1.msra.mxu0 0.0
  %1374 = vmatprep.subr.mxu0 0.0
  %1375 = vmatpush1.msra.mxu0 0.0
  %1376 = vmatprep.subr.mxu0 0.0
  %1377 = vmatpush1.msra.mxu0 0.0
  %1378 = vmatprep.subr.mxu0 0.0
  %1379 = vmatpush1.msra.mxu0 0.0
  %1380 = vmatprep.mubr.f32.mxu0 0.0
  %1381 = vmatmul.mubr.f32.gmra.mrb[0].mxu0 %v1307
  %v1382 = vpop.f32.mrb[0].mxu0
  %v1383 = vadd.f32 %v1304, %v1382
  %v1384 = vpop.f32.mrb[0].mxu0
  %1385 = vmatprep.mubr.f32.mxu0 0.0
  %1386 = vmatmul.mubr.f32.gmra.mrb[0].mxu0 %v1310
  %v1387 = vpop.f32.mrb[0].mxu0
  %v1388 = vadd.f32 %v1304, %v1387
  %v1389 = vpop.f32.mrb[0].mxu0
  %1390 = vmatprep.mubr.f32.mxu0 0.0
  %1391 = vmatmul.mubr.f32.gmra.mrb[0].mxu0 %v1312
  %v1392 = vpop.f32.mrb[0].mxu0
  %v1393 = vadd.f32 %v1304, %v1392
  %v1394 = vpop.f32.mrb[0].mxu0
  %1395 = vmatprep.mubr.f32.mxu0 0.0
  %1396 = vmatmul.mubr.f32.gmra.mrb[0].mxu0 %v1314
  %v1397 = vpop.f32.mrb[0].mxu0
  %v1398 = vadd.f32 %v1304, %v1397
  %v1399 = vpop.f32.mrb[0].mxu0
  %1400 = vdwg.mxu0
  %v1401 = vadd.f32 %v271, %v1383
  %v1402 = vadd.f32 %v275, %v1388
  %v1403 = vadd.f32 %v267, %v1393
  %v1404 = vadd.f32 %v266, %v1398
  %v1405 = vld [vmem:[%s12] sm:$0x1]
  %v1406 = vld [vmem:[%s13] sm:$0x1]
  %v1407 = vsel %vm167, %v1401, 0.0
  %1408 = vadd.xlane.f32.xlu0 %v1407
  %v1409 = vpop.xlane.xlu0 %1408
  %v1410 = vsel %vm167, %v1402, 0.0
  %1411 = vadd.xlane.f32.xlu0 %v1410
  %v1412 = vpop.xlane.xlu0 %1411
  %v1413 = vsel %vm167, %v1403, 0.0
  %1414 = vadd.xlane.f32.xlu0 %v1413
  %v1415 = vpop.xlane.xlu0 %1414
  %v1416 = vsel %vm287, %v1404, 0.0
  %1417 = vadd.xlane.f32.xlu0 %v1416
  %v1418 = vpop.xlane.xlu0 %1417
  %v1419 = vmul.f32 %v1409, %v177
  %v1420 = vmul.f32 %v1412, %v177
  %v1421 = vmul.f32 %v1415, %v177
  %v1422 = vmul.f32 %v1418, %v177
  %v1423 = vsub.f32 %v1401, %v1419
  %v1424 = vsub.f32 %v1402, %v1420
  %v1425 = vsub.f32 %v1403, %v1421
  %v1426 = vsub.f32 %v1404, %v1422
  %v1427 = vmul.f32 %v1423, %v1423
  %v1428 = vmul.f32 %v1424, %v1424
  %v1429 = vmul.f32 %v1425, %v1425
  %v1430 = vmul.f32 %v1426, %v1426
  %v1431 = vsel %vm167, %v1427, 0.0
  %1432 = vadd.xlane.f32.xlu0 %v1431
  %v1433 = vpop.xlane.xlu0 %1432
  %v1434 = vsel %vm167, %v1428, 0.0
  %1435 = vadd.xlane.f32.xlu0 %v1434
  %v1436 = vpop.xlane.xlu0 %1435
  %v1437 = vsel %vm167, %v1429, 0.0
  %1438 = vadd.xlane.f32.xlu0 %v1437
  %v1439 = vpop.xlane.xlu0 %1438
  %v1440 = vsel %vm287, %v1430, 0.0
  %1441 = vadd.xlane.f32.xlu0 %v1440
  %v1442 = vpop.xlane.xlu0 %1441
  %v1443 = vmul.f32 %v1433, %v177
  %v1444 = vmul.f32 %v1436, %v177
  %v1445 = vmul.f32 %v1439, %v177
  %v1446 = vmul.f32 %v1442, %v177
  %v1447 = vadd.f32 %v1443, 1e-05
  %v1448 = vadd.f32 %v1444, 1e-05
  %v1449 = vadd.f32 %v1445, 1e-05
  %v1450 = vadd.f32 %v1446, 1e-05
  %v1451 = vrsqrt.pop %v1447
  %v1452 = vrsqrt.pop %v1448
  %v1453 = vrsqrt.pop %v1449
  %v1454 = vrsqrt.pop %v1450
  %v1455 = vmul.f32 %v1423, %v1451
  %v1456 = vmul.f32 %v1424, %v1452
  %v1457 = vmul.f32 %v1425, %v1453
  %v1458 = vmul.f32 %v1426, %v1454
  %v1460 = vlaneseq
  %v1461 = vshrl.u32 %v1460, 7
  %v1462 = vsub.s32 0, %v1461
  %v1463 = vrot.slane %v1405, %v1462
  %v1465 = vmul.f32 %v1455, %v1463
  %v1466 = vmul.f32 %v1456, %v1463
  %v1467 = vmul.f32 %v1457, %v1463
  %v1468 = vmul.f32 %v1458, %v1463
  %v1470 = vlaneseq
  %v1471 = vshrl.u32 %v1470, 7
  %v1472 = vsub.s32 0, %v1471
  %v1473 = vrot.slane %v1406, %v1472
  %v1475 = vadd.f32 %v1465, %v1473
  %v1476 = vadd.f32 %v1466, %v1473
  %v1477 = vadd.f32 %v1467, %v1473
  %v1478 = vadd.f32 %v1468, %v1473
  %v1479 = vld [vmem:[%s14] sm:$0xff]
  %v1480 = vld [vmem:[%s14 + $0x8] sm:$0xff]
  %v1481 = vld [vmem:[%s14 + $0x10] sm:$0xff]
  %v1482 = vld [vmem:[%s14 + $0x18] sm:$0xff]
  %v1483 = vld [vmem:[%s15] sm:$0x1]
  %v1485 = vlaneseq
  %v1486 = vshrl.u32 %v1485, 7
  %v1487 = vsub.s32 0, %v1486
  %v1488 = vrot.slane %v1483, %v1487
  %v1491 = vsel %vm167, %v1475, 0
  %v1494 = vsel %vm167, %v1476, 0
  %v1497 = vsel %vm167, %v1477, 0
  %v1500 = vsel %vm167, %v1478, 0
  %1502 = vmatprep.subr.mxu0 0.0
  %1503 = vmatpush1.msra.mxu0 %v1479
  %1504 = vmatprep.subr.mxu0 0.0
  %1505 = vmatpush1.msra.mxu0 %v1480
  %1506 = vmatprep.subr.mxu0 0.0
  %1507 = vmatpush1.msra.mxu0 %v1481
  %1508 = vmatprep.subr.mxu0 0.0
  %1509 = vmatpush1.msra.mxu0 %v1482
  %1510 = vmatprep.subr.mxu0 0.0
  %1511 = vmatpush1.msra.mxu0 0.0
  %1512 = vmatprep.subr.mxu0 0.0
  %1513 = vmatpush1.msra.mxu0 0.0
  %1514 = vmatprep.subr.mxu0 0.0
  %1515 = vmatpush1.msra.mxu0 0.0
  %1516 = vmatprep.subr.mxu0 0.0
  %1517 = vmatpush1.msra.mxu0 0.0
  %1518 = vmatprep.subr.mxu0 0.0
  %1519 = vmatpush1.msra.mxu0 0.0
  %1520 = vmatprep.subr.mxu0 0.0
  %1521 = vmatpush1.msra.mxu0 0.0
  %1522 = vmatprep.subr.mxu0 0.0
  %1523 = vmatpush1.msra.mxu0 0.0
  %1524 = vmatprep.subr.mxu0 0.0
  %1525 = vmatpush1.msra.mxu0 0.0
  %1526 = vmatprep.subr.mxu0 0.0
  %1527 = vmatpush1.msra.mxu0 0.0
  %1528 = vmatprep.subr.mxu0 0.0
  %1529 = vmatpush1.msra.mxu0 0.0
  %1530 = vmatprep.subr.mxu0 0.0
  %1531 = vmatpush1.msra.mxu0 0.0
  %1532 = vmatprep.subr.mxu0 0.0
  %1533 = vmatpush1.msra.mxu0 0.0
  %1534 = vmatprep.subr.mxu0 0.0
  %1535 = vmatpush1.msra.mxu0 0.0
  %1536 = vmatprep.subr.mxu0 0.0
  %1537 = vmatpush1.msra.mxu0 0.0
  %1538 = vmatprep.subr.mxu0 0.0
  %1539 = vmatpush1.msra.mxu0 0.0
  %1540 = vmatprep.subr.mxu0 0.0
  %1541 = vmatpush1.msra.mxu0 0.0
  %1542 = vmatprep.subr.mxu0 0.0
  %1543 = vmatpush1.msra.mxu0 0.0
  %1544 = vmatprep.subr.mxu0 0.0
  %1545 = vmatpush1.msra.mxu0 0.0
  %1546 = vmatprep.subr.mxu0 0.0
  %1547 = vmatpush1.msra.mxu0 0.0
  %1548 = vmatprep.subr.mxu0 0.0
  %1549 = vmatpush1.msra.mxu0 0.0
  %1550 = vmatprep.subr.mxu0 0.0
  %1551 = vmatpush1.msra.mxu0 0.0
  %1552 = vmatprep.subr.mxu0 0.0
  %1553 = vmatpush1.msra.mxu0 0.0
  %1554 = vmatprep.subr.mxu0 0.0
  %1555 = vmatpush1.msra.mxu0 0.0
  %1556 = vmatprep.subr.mxu0 0.0
  %1557 = vmatpush1.msra.mxu0 0.0
  %1558 = vmatprep.subr.mxu0 0.0
  %1559 = vmatpush1.msra.mxu0 0.0
  %1560 = vmatprep.subr.mxu0 0.0
  %1561 = vmatpush1.msra.mxu0 0.0
  %1562 = vmatprep.subr.mxu0 0.0
  %1563 = vmatpush1.msra.mxu0 0.0
  %1564 = vmatprep.subr.mxu0 0.0
  %1565 = vmatpush1.msra.mxu0 0.0
  %1566 = vmatprep.mubr.f32.mxu0 0.0
  %1567 = vmatmul.mubr.f32.gmra.mrb[0].mxu0 %v1491
  %v1568 = vpop.f32.mrb[0].mxu0
  %v1569 = vadd.f32 %v1488, %v1568
  %v1570 = vpop.f32.mrb[0].mxu0
  %1571 = vmatprep.mubr.f32.mxu0 0.0
  %1572 = vmatmul.mubr.f32.gmra.mrb[0].mxu0 %v1494
  %v1573 = vpop.f32.mrb[0].mxu0
  %v1574 = vadd.f32 %v1488, %v1573
  %v1575 = vpop.f32.mrb[0].mxu0
  %1576 = vmatprep.mubr.f32.mxu0 0.0
  %1577 = vmatmul.mubr.f32.gmra.mrb[0].mxu0 %v1497
  %v1578 = vpop.f32.mrb[0].mxu0
  %v1579 = vadd.f32 %v1488, %v1578
  %v1580 = vpop.f32.mrb[0].mxu0
  %1581 = vmatprep.mubr.f32.mxu0 0.0
  %1582 = vmatmul.mubr.f32.gmra.mrb[0].mxu0 %v1500
  %v1583 = vpop.f32.mrb[0].mxu0
  %v1584 = vadd.f32 %v1488, %v1583
  %v1585 = vpop.f32.mrb[0].mxu0
  %1586 = vdwg.mxu0
  %v1587 = vmul.f32 %v1569, 0.5
  %v1588 = vmul.f32 %v1574, 0.5
  %v1589 = vmul.f32 %v1579, 0.5
  %v1590 = vmul.f32 %v1584, 0.5
  %v1591 = vmul.f32 %v1569, 0.70710677
  %v1592 = vmul.f32 %v1574, 0.70710677
  %v1593 = vmul.f32 %v1579, 0.70710677
  %v1594 = vmul.f32 %v1584, 0.70710677
  %v1595 = vand.u32 2147483647, %v1591
  %v1596 = vand.u32 2147483647, %v1592
  %v1597 = vand.u32 2147483647, %v1593
  %v1598 = vand.u32 2147483647, %v1594
  %v1599 = vmul.f32 %v1595, 0.3275911
  %v1600 = vmul.f32 %v1596, 0.3275911
  %v1601 = vmul.f32 %v1597, 0.3275911
  %v1602 = vmul.f32 %v1598, 0.3275911
  %v1603 = vadd.f32 %v1599, 1.0
  %v1604 = vadd.f32 %v1600, 1.0
  %v1605 = vadd.f32 %v1601, 1.0
  %v1606 = vadd.f32 %v1602, 1.0
  %v1607 = vrcp.pop %v1603
  %v1608 = vmul.f32 1.0, %v1607
  %v1609 = vrcp.pop %v1604
  %v1610 = vmul.f32 1.0, %v1609
  %v1611 = vrcp.pop %v1605
  %v1612 = vmul.f32 1.0, %v1611
  %v1613 = vrcp.pop %v1606
  %v1614 = vmul.f32 1.0, %v1613
  %v1615 = vmul.f32 %v1608, 1.0614054
  %v1616 = vmul.f32 %v1610, 1.0614054
  %v1617 = vmul.f32 %v1612, 1.0614054
  %v1618 = vmul.f32 %v1614, 1.0614054
  %v1619 = vadd.f32 %v1615, -1.4531521
  %v1620 = vadd.f32 %v1616, -1.4531521
  %v1621 = vadd.f32 %v1617, -1.4531521
  %v1622 = vadd.f32 %v1618, -1.4531521
  %v1623 = vmul.f32 %v1619, %v1608
  %v1624 = vmul.f32 %v1620, %v1610
  %v1625 = vmul.f32 %v1621, %v1612
  %v1626 = vmul.f32 %v1622, %v1614
  %v1627 = vadd.f32 %v1623, 1.4214138
  %v1628 = vadd.f32 %v1624, 1.4214138
  %v1629 = vadd.f32 %v1625, 1.4214138
  %v1630 = vadd.f32 %v1626, 1.4214138
  %v1631 = vmul.f32 %v1627, %v1608
  %v1632 = vmul.f32 %v1628, %v1610
  %v1633 = vmul.f32 %v1629, %v1612
  %v1634 = vmul.f32 %v1630, %v1614
  %v1635 = vadd.f32 %v1631, -0.28449672
  %v1636 = vadd.f32 %v1632, -0.28449672
  %v1637 = vadd.f32 %v1633, -0.28449672
  %v1638 = vadd.f32 %v1634, -0.28449672
  %v1639 = vmul.f32 %v1635, %v1608
  %v1640 = vmul.f32 %v1636, %v1610
  %v1641 = vmul.f32 %v1637, %v1612
  %v1642 = vmul.f32 %v1638, %v1614
  %v1643 = vadd.f32 %v1639, 0.2548296
  %v1644 = vadd.f32 %v1640, 0.2548296
  %v1645 = vadd.f32 %v1641, 0.2548296
  %v1646 = vadd.f32 %v1642, 0.2548296
  %v1647 = vmul.f32 %v1643, %v1608
  %v1648 = vmul.f32 %v1644, %v1610
  %v1649 = vmul.f32 %v1645, %v1612
  %v1650 = vmul.f32 %v1646, %v1614
  %v1651 = vsub.f32 0.0, %v1595
  %v1652 = vsub.f32 0.0, %v1596
  %v1653 = vsub.f32 0.0, %v1597
  %v1654 = vsub.f32 0.0, %v1598
  %v1655 = vmul.f32 %v1651, %v1595
  %v1656 = vmul.f32 %v1652, %v1596
  %v1657 = vmul.f32 %v1653, %v1597
  %v1658 = vmul.f32 %v1654, %v1598
  %v1659 = vmul.f32 %v1655, 1.442695
  %v1660 = vpow.pop %v1659
  %v1661 = vmul.f32 %v1656, 1.442695
  %v1662 = vpow.pop %v1661
  %v1663 = vmul.f32 %v1657, 1.442695
  %v1664 = vpow.pop %v1663
  %v1665 = vmul.f32 %v1658, 1.442695
  %v1666 = vpow.pop %v1665
  %v1667 = vmul.f32 %v1647, %v1660
  %v1668 = vmul.f32 %v1648, %v1662
  %v1669 = vmul.f32 %v1649, %v1664
  %v1670 = vmul.f32 %v1650, %v1666
  %v1671 = vsub.f32 1.0, %v1667
  %v1672 = vsub.f32 1.0, %v1668
  %v1673 = vsub.f32 1.0, %v1669
  %v1674 = vsub.f32 1.0, %v1670
  %vm1675 = vcmp.lt.f32.partialorder %v1591, 0.0
  %vm1676 = vcmp.lt.f32.partialorder %v1592, 0.0
  %vm1677 = vcmp.lt.f32.partialorder %v1593, 0.0
  %vm1678 = vcmp.lt.f32.partialorder %v1594, 0.0
  %v1679 = vsub.f32 0.0, %v1671
  %v1680 = vsub.f32 0.0, %v1672
  %v1681 = vsub.f32 0.0, %v1673
  %v1682 = vsub.f32 0.0, %v1674
  %v1683 = vsel %vm1675, %v1679, %v1671
  %v1684 = vsel %vm1676, %v1680, %v1672
  %v1685 = vsel %vm1677, %v1681, %v1673
  %v1686 = vsel %vm1678, %v1682, %v1674
  %v1687 = vadd.f32 %v1683, 1.0
  %v1688 = vadd.f32 %v1684, 1.0
  %v1689 = vadd.f32 %v1685, 1.0
  %v1690 = vadd.f32 %v1686, 1.0
  %v1691 = vmul.f32 %v1587, %v1687
  %v1692 = vmul.f32 %v1588, %v1688
  %v1693 = vmul.f32 %v1589, %v1689
  %v1694 = vmul.f32 %v1590, %v1690
  %v1695 = vld [vmem:[%s16] sm:$0xff]
  %v1696 = vld [vmem:[%s16 + $0x8] sm:$0xff]
  %v1697 = vld [vmem:[%s16 + $0x10] sm:$0xff]
  %v1698 = vld [vmem:[%s16 + $0x18] sm:$0xff]
  %v1699 = vld [vmem:[%s16 + $0x20] sm:$0xff]
  %v1700 = vld [vmem:[%s16 + $0x28] sm:$0xff]
  %v1701 = vld [vmem:[%s16 + $0x30] sm:$0xff]
  %v1702 = vld [vmem:[%s16 + $0x38] sm:$0xff]
  %v1703 = vld [vmem:[%s17] sm:$0x1]
  %v1705 = vlaneseq
  %v1706 = vshrl.u32 %v1705, 7
  %v1707 = vsub.s32 0, %v1706
  %v1708 = vrot.slane %v1703, %v1707
  %vm1710 = vcmask 523264
  %v1712 = vsel %vm1710, %v1691, 0
  %v1715 = vsel %vm1710, %v1692, 0
  %v1718 = vsel %vm1710, %v1693, 0
  %v1721 = vsel %vm1710, %v1694, 0
  %1723 = vmatprep.subr.mxu0 0.0
  %1724 = vmatpush1.msra.mxu0 %v1695
  %1725 = vmatprep.subr.mxu0 0.0
  %1726 = vmatpush1.msra.mxu0 %v1696
  %1727 = vmatprep.subr.mxu0 0.0
  %1728 = vmatpush1.msra.mxu0 %v1697
  %1729 = vmatprep.subr.mxu0 0.0
  %1730 = vmatpush1.msra.mxu0 %v1698
  %1731 = vmatprep.subr.mxu0 0.0
  %1732 = vmatpush1.msra.mxu0 %v1699
  %1733 = vmatprep.subr.mxu0 0.0
  %1734 = vmatpush1.msra.mxu0 %v1700
  %1735 = vmatprep.subr.mxu0 0.0
  %1736 = vmatpush1.msra.mxu0 %v1701
  %1737 = vmatprep.subr.mxu0 0.0
  %1738 = vmatpush1.msra.mxu0 %v1702
  %1739 = vmatprep.subr.mxu0 0.0
  %1740 = vmatpush1.msra.mxu0 0.0
  %1741 = vmatprep.subr.mxu0 0.0
  %1742 = vmatpush1.msra.mxu0 0.0
  %1743 = vmatprep.subr.mxu0 0.0
  %1744 = vmatpush1.msra.mxu0 0.0
  %1745 = vmatprep.subr.mxu0 0.0
  %1746 = vmatpush1.msra.mxu0 0.0
  %1747 = vmatprep.subr.mxu0 0.0
  %1748 = vmatpush1.msra.mxu0 0.0
  %1749 = vmatprep.subr.mxu0 0.0
  %1750 = vmatpush1.msra.mxu0 0.0
  %1751 = vmatprep.subr.mxu0 0.0
  %1752 = vmatpush1.msra.mxu0 0.0
  %1753 = vmatprep.subr.mxu0 0.0
  %1754 = vmatpush1.msra.mxu0 0.0
  %1755 = vmatprep.subr.mxu0 0.0
  %1756 = vmatpush1.msra.mxu0 0.0
  %1757 = vmatprep.subr.mxu0 0.0
  %1758 = vmatpush1.msra.mxu0 0.0
  %1759 = vmatprep.subr.mxu0 0.0
  %1760 = vmatpush1.msra.mxu0 0.0
  %1761 = vmatprep.subr.mxu0 0.0
  %1762 = vmatpush1.msra.mxu0 0.0
  %1763 = vmatprep.subr.mxu0 0.0
  %1764 = vmatpush1.msra.mxu0 0.0
  %1765 = vmatprep.subr.mxu0 0.0
  %1766 = vmatpush1.msra.mxu0 0.0
  %1767 = vmatprep.subr.mxu0 0.0
  %1768 = vmatpush1.msra.mxu0 0.0
  %1769 = vmatprep.subr.mxu0 0.0
  %1770 = vmatpush1.msra.mxu0 0.0
  %1771 = vmatprep.subr.mxu0 0.0
  %1772 = vmatpush1.msra.mxu0 0.0
  %1773 = vmatprep.subr.mxu0 0.0
  %1774 = vmatpush1.msra.mxu0 0.0
  %1775 = vmatprep.subr.mxu0 0.0
  %1776 = vmatpush1.msra.mxu0 0.0
  %1777 = vmatprep.subr.mxu0 0.0
  %1778 = vmatpush1.msra.mxu0 0.0
  %1779 = vmatprep.subr.mxu0 0.0
  %1780 = vmatpush1.msra.mxu0 0.0
  %1781 = vmatprep.subr.mxu0 0.0
  %1782 = vmatpush1.msra.mxu0 0.0
  %1783 = vmatprep.subr.mxu0 0.0
  %1784 = vmatpush1.msra.mxu0 0.0
  %1785 = vmatprep.subr.mxu0 0.0
  %1786 = vmatpush1.msra.mxu0 0.0
  %1787 = vmatprep.mubr.f32.mxu0 0.0
  %1788 = vmatmul.mubr.f32.gmra.mrb[0].mxu0 %v1712
  %v1789 = vpop.f32.mrb[0].mxu0
  %v1790 = vadd.f32 %v1708, %v1789
  %v1791 = vpop.f32.mrb[0].mxu0
  %1792 = vmatprep.mubr.f32.mxu0 0.0
  %1793 = vmatmul.mubr.f32.gmra.mrb[0].mxu0 %v1715
  %v1794 = vpop.f32.mrb[0].mxu0
  %v1795 = vadd.f32 %v1708, %v1794
  %v1796 = vpop.f32.mrb[0].mxu0
  %1797 = vmatprep.mubr.f32.mxu0 0.0
  %1798 = vmatmul.mubr.f32.gmra.mrb[0].mxu0 %v1718
  %v1799 = vpop.f32.mrb[0].mxu0
  %v1800 = vadd.f32 %v1708, %v1799
  %v1801 = vpop.f32.mrb[0].mxu0
  %1802 = vmatprep.mubr.f32.mxu0 0.0
  %1803 = vmatmul.mubr.f32.gmra.mrb[0].mxu0 %v1721
  %v1804 = vpop.f32.mrb[0].mxu0
  %v1805 = vadd.f32 %v1708, %v1804
  %v1806 = vpop.f32.mrb[0].mxu0
  %1807 = vdwg.mxu0
  %v1808 = vadd.f32 %v1401, %v1790
  %v1809 = vadd.f32 %v1402, %v1795
  %v1810 = vadd.f32 %v1403, %v1800
  %v1811 = vadd.f32 %v1404, %v1805
  %s1812 = scalar_lea.vmem %s7, 1
  %v1813 = vld [vmem:[%s1812] sm:$0x1]
  %s1814 = scalar_lea.vmem %s8, 1
  %v1815 = vld [vmem:[%s1814] sm:$0x1]
  %v1816 = vsel %vm167, %v1808, 0.0
  %1817 = vadd.xlane.f32.xlu0 %v1816
  %v1818 = vpop.xlane.xlu0 %1817
  %v1819 = vsel %vm167, %v1809, 0.0
  %1820 = vadd.xlane.f32.xlu0 %v1819
  %v1821 = vpop.xlane.xlu0 %1820
  %v1822 = vsel %vm167, %v1810, 0.0
  %1823 = vadd.xlane.f32.xlu0 %v1822
  %v1824 = vpop.xlane.xlu0 %1823
  %v1825 = vsel %vm287, %v1811, 0.0
  %1826 = vadd.xlane.f32.xlu0 %v1825
  %v1827 = vpop.xlane.xlu0 %1826
  %v1828 = vmul.f32 %v1818, %v177
  %v1829 = vmul.f32 %v1821, %v177
  %v1830 = vmul.f32 %v1824, %v177
  %v1831 = vmul.f32 %v1827, %v177
  %v1832 = vsub.f32 %v1808, %v1828
  %v1833 = vsub.f32 %v1809, %v1829
  %v1834 = vsub.f32 %v1810, %v1830
  %v1835 = vsub.f32 %v1811, %v1831
  %v1836 = vmul.f32 %v1832, %v1832
  %v1837 = vmul.f32 %v1833, %v1833
  %v1838 = vmul.f32 %v1834, %v1834
  %v1839 = vmul.f32 %v1835, %v1835
  %v1840 = vsel %vm167, %v1836, 0.0
  %1841 = vadd.xlane.f32.xlu0 %v1840
  %v1842 = vpop.xlane.xlu0 %1841
  %v1843 = vsel %vm167, %v1837, 0.0
  %1844 = vadd.xlane.f32.xlu0 %v1843
  %v1845 = vpop.xlane.xlu0 %1844
  %v1846 = vsel %vm167, %v1838, 0.0
  %1847 = vadd.xlane.f32.xlu0 %v1846
  %v1848 = vpop.xlane.xlu0 %1847
  %v1849 = vsel %vm287, %v1839, 0.0
  %1850 = vadd.xlane.f32.xlu0 %v1849
  %v1851 = vpop.xlane.xlu0 %1850
  %v1852 = vmul.f32 %v1842, %v177
  %v1853 = vmul.f32 %v1845, %v177
  %v1854 = vmul.f32 %v1848, %v177
  %v1855 = vmul.f32 %v1851, %v177
  %v1856 = vadd.f32 %v1852, 1e-05
  %v1857 = vadd.f32 %v1853, 1e-05
  %v1858 = vadd.f32 %v1854, 1e-05
  %v1859 = vadd.f32 %v1855, 1e-05
  %v1860 = vrsqrt.pop %v1856
  %v1861 = vrsqrt.pop %v1857
  %v1862 = vrsqrt.pop %v1858
  %v1863 = vrsqrt.pop %v1859
  %v1864 = vmul.f32 %v1832, %v1860
  %v1865 = vmul.f32 %v1833, %v1861
  %v1866 = vmul.f32 %v1834, %v1862
  %v1867 = vmul.f32 %v1835, %v1863
  %v1869 = vlaneseq
  %v1870 = vshrl.u32 %v1869, 7
  %v1871 = vsub.s32 0, %v1870
  %v1872 = vrot.slane %v1813, %v1871
  %v1874 = vmul.f32 %v1864, %v1872
  %v1875 = vmul.f32 %v1865, %v1872
  %v1876 = vmul.f32 %v1866, %v1872
  %v1877 = vmul.f32 %v1867, %v1872
  %v1879 = vlaneseq
  %v1880 = vshrl.u32 %v1879, 7
  %v1881 = vsub.s32 0, %v1880
  %v1882 = vrot.slane %v1815, %v1881
  %v1884 = vadd.f32 %v1874, %v1882
  %v1885 = vadd.f32 %v1875, %v1882
  %v1886 = vadd.f32 %v1876, %v1882
  %v1887 = vadd.f32 %v1877, %v1882
  %s1888 = scalar_lea.vmem %s9, 32
  %v1889 = vld [vmem:[%s1888] sm:$0xff]
  %v1890 = vld [vmem:[%s1888 + $0x8] sm:$0xff]
  %v1891 = vld [vmem:[%s1888 + $0x10] sm:$0xff]
  %v1892 = vld [vmem:[%s1888 + $0x18] sm:$0xff]
  %v1894 = vsel %vm167, %v1884, 0
  %v1897 = vsel %vm167, %v1885, 0
  %v1900 = vsel %vm167, %v1886, 0
  %v1903 = vsel %vm167, %v1887, 0
  %1905 = vmatprep.subr.mxu0 0.0
  %1906 = vmatpush1.msra.mxu0 %v1889
  %1907 = vmatprep.subr.mxu0 0.0
  %1908 = vmatpush1.msra.mxu0 %v1890
  %1909 = vmatprep.subr.mxu0 0.0
  %1910 = vmatpush1.msra.mxu0 %v1891
  %1911 = vmatprep.subr.mxu0 0.0
  %1912 = vmatpush1.msra.mxu0 %v1892
  %1913 = vmatprep.subr.mxu0 0.0
  %1914 = vmatpush1.msra.mxu0 0.0
  %1915 = vmatprep.subr.mxu0 0.0
  %1916 = vmatpush1.msra.mxu0 0.0
  %1917 = vmatprep.subr.mxu0 0.0
  %1918 = vmatpush1.msra.mxu0 0.0
  %1919 = vmatprep.subr.mxu0 0.0
  %1920 = vmatpush1.msra.mxu0 0.0
  %1921 = vmatprep.subr.mxu0 0.0
  %1922 = vmatpush1.msra.mxu0 0.0
  %1923 = vmatprep.subr.mxu0 0.0
  %1924 = vmatpush1.msra.mxu0 0.0
  %1925 = vmatprep.subr.mxu0 0.0
  %1926 = vmatpush1.msra.mxu0 0.0
  %1927 = vmatprep.subr.mxu0 0.0
  %1928 = vmatpush1.msra.mxu0 0.0
  %1929 = vmatprep.subr.mxu0 0.0
  %1930 = vmatpush1.msra.mxu0 0.0
  %1931 = vmatprep.subr.mxu0 0.0
  %1932 = vmatpush1.msra.mxu0 0.0
  %1933 = vmatprep.subr.mxu0 0.0
  %1934 = vmatpush1.msra.mxu0 0.0
  %1935 = vmatprep.subr.mxu0 0.0
  %1936 = vmatpush1.msra.mxu0 0.0
  %1937 = vmatprep.subr.mxu0 0.0
  %1938 = vmatpush1.msra.mxu0 0.0
  %1939 = vmatprep.subr.mxu0 0.0
  %1940 = vmatpush1.msra.mxu0 0.0
  %1941 = vmatprep.subr.mxu0 0.0
  %1942 = vmatpush1.msra.mxu0 0.0
  %1943 = vmatprep.subr.mxu0 0.0
  %1944 = vmatpush1.msra.mxu0 0.0
  %1945 = vmatprep.subr.mxu0 0.0
  %1946 = vmatpush1.msra.mxu0 0.0
  %1947 = vmatprep.subr.mxu0 0.0
  %1948 = vmatpush1.msra.mxu0 0.0
  %1949 = vmatprep.subr.mxu0 0.0
  %1950 = vmatpush1.msra.mxu0 0.0
  %1951 = vmatprep.subr.mxu0 0.0
  %1952 = vmatpush1.msra.mxu0 0.0
  %1953 = vmatprep.subr.mxu0 0.0
  %1954 = vmatpush1.msra.mxu0 0.0
  %1955 = vmatprep.subr.mxu0 0.0
  %1956 = vmatpush1.msra.mxu0 0.0
  %1957 = vmatprep.subr.mxu0 0.0
  %1958 = vmatpush1.msra.mxu0 0.0
  %1959 = vmatprep.subr.mxu0 0.0
  %1960 = vmatpush1.msra.mxu0 0.0
  %1961 = vmatprep.subr.mxu0 0.0
  %1962 = vmatpush1.msra.mxu0 0.0
  %1963 = vmatprep.subr.mxu0 0.0
  %1964 = vmatpush1.msra.mxu0 0.0
  %1965 = vmatprep.subr.mxu0 0.0
  %1966 = vmatpush1.msra.mxu0 0.0
  %1967 = vmatprep.subr.mxu0 0.0
  %1968 = vmatpush1.msra.mxu0 0.0
  %1969 = vmatprep.mubr.f32.mxu0 0.0
  %1970 = vmatmul.mubr.f32.gmra.mrb[0].mxu0 %v1894
  %v1971 = vpop.f32.mrb[0].mxu0
  %v1972 = vadd.f32 0.0, %v1971
  %v1973 = vpop.f32.mrb[0].mxu0
  %1974 = vmatprep.mubr.f32.mxu0 0.0
  %1975 = vmatmul.mubr.f32.gmra.mrb[0].mxu0 %v1897
  %v1976 = vpop.f32.mrb[0].mxu0
  %v1977 = vadd.f32 0.0, %v1976
  %v1978 = vpop.f32.mrb[0].mxu0
  %1979 = vmatprep.mubr.f32.mxu0 0.0
  %1980 = vmatmul.mubr.f32.gmra.mrb[0].mxu0 %v1900
  %v1981 = vpop.f32.mrb[0].mxu0
  %v1982 = vadd.f32 0.0, %v1981
  %v1983 = vpop.f32.mrb[0].mxu0
  %1984 = vmatprep.mubr.f32.mxu0 0.0
  %1985 = vmatmul.mubr.f32.gmra.mrb[0].mxu0 %v1903
  %v1986 = vpop.f32.mrb[0].mxu0
  %v1987 = vadd.f32 0.0, %v1986
  %v1988 = vpop.f32.mrb[0].mxu0
  %1989 = vdwg.mxu0
  %1992 = vrot.lane.b32.xlu0 %v1972, 96
  %v1993 = vpop.permute.xlu0 %1992
  %1994 = vrot.lane.b32.xlu0 %v1977, 96
  %v1995 = vpop.permute.xlu0 %1994
  %v1996 = vsel %vm458, %v1972, 0
  %v1998 = vsel %vm458, %v1977, 0
  %v2000 = vsel %vm458, %v1993, 0
  %v2002 = vsel %vm458, %v1995, 0
  %2004 = vmatprep.subr.mxu0 0.0
  %2005 = vmatpush1.xpose.msra.mxu0 %v2000
  %2006 = vmatprep.subr.mxu0 0.0
  %2007 = vmatpush1.xpose.msra.mxu0 %v2002
  %2008 = vmatprep.subr.mxu0 0.0
  %2009 = vmatpush1.xpose.msra.mxu0 0.0
  %2010 = vmatprep.subr.mxu0 0.0
  %2011 = vmatpush1.xpose.msra.mxu0 0.0
  %2012 = vmatprep.subr.mxu0 0.0
  %2013 = vmatpush1.xpose.msra.mxu0 0.0
  %2014 = vmatprep.subr.mxu0 0.0
  %2015 = vmatpush1.xpose.msra.mxu0 0.0
  %2016 = vmatprep.subr.mxu0 0.0
  %2017 = vmatpush1.xpose.msra.mxu0 0.0
  %2018 = vmatprep.subr.mxu0 0.0
  %2019 = vmatpush1.xpose.msra.mxu0 0.0
  %2020 = vmatprep.subr.mxu0 0.0
  %2021 = vmatpush1.xpose.msra.mxu0 0.0
  %2022 = vmatprep.subr.mxu0 0.0
  %2023 = vmatpush1.xpose.msra.mxu0 0.0
  %2024 = vmatprep.subr.mxu0 0.0
  %2025 = vmatpush1.xpose.msra.mxu0 0.0
  %2026 = vmatprep.subr.mxu0 0.0
  %2027 = vmatpush1.xpose.msra.mxu0 0.0
  %2028 = vmatprep.subr.mxu0 0.0
  %2029 = vmatpush1.xpose.msra.mxu0 0.0
  %2030 = vmatprep.subr.mxu0 0.0
  %2031 = vmatpush1.xpose.msra.mxu0 0.0
  %2032 = vmatprep.subr.mxu0 0.0
  %2033 = vmatpush1.xpose.msra.mxu0 0.0
  %2034 = vmatprep.subr.mxu0 0.0
  %2035 = vmatpush1.xpose.msra.mxu0 0.0
  %2036 = vmatprep.subr.mxu0 0.0
  %2037 = vmatpush1.xpose.msra.mxu0 0.0
  %2038 = vmatprep.subr.mxu0 0.0
  %2039 = vmatpush1.xpose.msra.mxu0 0.0
  %2040 = vmatprep.subr.mxu0 0.0
  %2041 = vmatpush1.xpose.msra.mxu0 0.0
  %2042 = vmatprep.subr.mxu0 0.0
  %2043 = vmatpush1.xpose.msra.mxu0 0.0
  %2044 = vmatprep.subr.mxu0 0.0
  %2045 = vmatpush1.xpose.msra.mxu0 0.0
  %2046 = vmatprep.subr.mxu0 0.0
  %2047 = vmatpush1.xpose.msra.mxu0 0.0
  %2048 = vmatprep.subr.mxu0 0.0
  %2049 = vmatpush1.xpose.msra.mxu0 0.0
  %2050 = vmatprep.subr.mxu0 0.0
  %2051 = vmatpush1.xpose.msra.mxu0 0.0
  %2052 = vmatprep.subr.mxu0 0.0
  %2053 = vmatpush1.xpose.msra.mxu0 0.0
  %2054 = vmatprep.subr.mxu0 0.0
  %2055 = vmatpush1.xpose.msra.mxu0 0.0
  %2056 = vmatprep.subr.mxu0 0.0
  %2057 = vmatpush1.xpose.msra.mxu0 0.0
  %2058 = vmatprep.subr.mxu0 0.0
  %2059 = vmatpush1.xpose.msra.mxu0 0.0
  %2060 = vmatprep.subr.mxu0 0.0
  %2061 = vmatpush1.xpose.msra.mxu0 0.0
  %2062 = vmatprep.subr.mxu0 0.0
  %2063 = vmatpush1.xpose.msra.mxu0 0.0
  %2064 = vmatprep.subr.mxu0 0.0
  %2065 = vmatpush1.xpose.msra.mxu0 0.0
  %2066 = vmatprep.subr.mxu0 0.0
  %2067 = vmatpush1.xpose.msra.mxu0 0.0
  %2068 = vmatprep.mubr.f32.mxu0 0.0
  %2069 = vmatmul.mubr.f32.gmra.mrb[0].mxu0 %v1996
  %v2070 = vpop.f32.mrb[0].mxu0
  %v2071 = vadd.f32 0.0, %v2070
  %v2072 = vpop.f32.mrb[0].mxu0
  %2073 = vmatprep.mubr.f32.mxu0 0.0
  %2074 = vmatmul.mubr.f32.gmra.mrb[0].mxu0 %v1998
  %v2075 = vpop.f32.mrb[0].mxu0
  %v2076 = vadd.f32 0.0, %v2075
  %v2077 = vpop.f32.mrb[0].mxu0
  %2078 = vdwg.mxu0
  %v2079 = vmul.f32 %v2071, 0.25
  %v2080 = vmul.f32 %v2076, 0.25
  %v2081 = vsel %vm544, %v2079, -inf
  %2082 = vmax.xlane.f32.xlu0 %v2081
  %v2083 = vpop.xlane.xlu0 %2082
  %v2084 = vsel %vm548, %v2080, -inf
  %2085 = vmax.xlane.f32.xlu0 %v2084
  %v2086 = vpop.xlane.xlu0 %2085
  %v2087 = vsub.f32 %v2079, %v2083
  %v2088 = vsub.f32 %v2080, %v2086
  %v2089 = vmul.f32 %v2087, 1.442695
  %v2090 = vpow.pop %v2089
  %v2091 = vmul.f32 %v2088, 1.442695
  %v2092 = vpow.pop %v2091
  %v2093 = vsel %vm544, %v2090, 0.0
  %2094 = vadd.xlane.f32.xlu0 %v2093
  %v2095 = vpop.xlane.xlu0 %2094
  %v2096 = vsel %vm548, %v2092, 0.0
  %2097 = vadd.xlane.f32.xlu0 %v2096
  %v2098 = vpop.xlane.xlu0 %2097
  %v2099 = vrcp.pop %v2095
  %v2100 = vrcp.pop %v2098
  %v2101 = vmul.f32 %v2090, %v2099
  %v2102 = vmul.f32 %v2092, %v2100
  %2103 = vrot.lane.b32.xlu0 %v1972, 64
  %v2104 = vpop.permute.xlu0 %2103
  %2105 = vrot.lane.b32.xlu0 %v1977, 64
  %v2106 = vpop.permute.xlu0 %2105
  %v2109 = vsel %vm544, %v2101, 0
  %v2112 = vsel %vm544, %v2102, 0
  %v2114 = vsel %vm272, %v2106, 0
  %2116 = vmatprep.subr.mxu0 0.0
  %2117 = vmatpush1.msra.mxu0 %v2104
  %2118 = vmatprep.subr.mxu0 0.0
  %2119 = vmatpush1.msra.mxu0 %v2114
  %2120 = vmatprep.subr.mxu0 0.0
  %2121 = vmatpush1.msra.mxu0 0.0
  %2122 = vmatprep.subr.mxu0 0.0
  %2123 = vmatpush1.msra.mxu0 0.0
  %2124 = vmatprep.subr.mxu0 0.0
  %2125 = vmatpush1.msra.mxu0 0.0
  %2126 = vmatprep.subr.mxu0 0.0
  %2127 = vmatpush1.msra.mxu0 0.0
  %2128 = vmatprep.subr.mxu0 0.0
  %2129 = vmatpush1.msra.mxu0 0.0
  %2130 = vmatprep.subr.mxu0 0.0
  %2131 = vmatpush1.msra.mxu0 0.0
  %2132 = vmatprep.subr.mxu0 0.0
  %2133 = vmatpush1.msra.mxu0 0.0
  %2134 = vmatprep.subr.mxu0 0.0
  %2135 = vmatpush1.msra.mxu0 0.0
  %2136 = vmatprep.subr.mxu0 0.0
  %2137 = vmatpush1.msra.mxu0 0.0
  %2138 = vmatprep.subr.mxu0 0.0
  %2139 = vmatpush1.msra.mxu0 0.0
  %2140 = vmatprep.subr.mxu0 0.0
  %2141 = vmatpush1.msra.mxu0 0.0
  %2142 = vmatprep.subr.mxu0 0.0
  %2143 = vmatpush1.msra.mxu0 0.0
  %2144 = vmatprep.subr.mxu0 0.0
  %2145 = vmatpush1.msra.mxu0 0.0
  %2146 = vmatprep.subr.mxu0 0.0
  %2147 = vmatpush1.msra.mxu0 0.0
  %2148 = vmatprep.subr.mxu0 0.0
  %2149 = vmatpush1.msra.mxu0 0.0
  %2150 = vmatprep.subr.mxu0 0.0
  %2151 = vmatpush1.msra.mxu0 0.0
  %2152 = vmatprep.subr.mxu0 0.0
  %2153 = vmatpush1.msra.mxu0 0.0
  %2154 = vmatprep.subr.mxu0 0.0
  %2155 = vmatpush1.msra.mxu0 0.0
  %2156 = vmatprep.subr.mxu0 0.0
  %2157 = vmatpush1.msra.mxu0 0.0
  %2158 = vmatprep.subr.mxu0 0.0
  %2159 = vmatpush1.msra.mxu0 0.0
  %2160 = vmatprep.subr.mxu0 0.0
  %2161 = vmatpush1.msra.mxu0 0.0
  %2162 = vmatprep.subr.mxu0 0.0
  %2163 = vmatpush1.msra.mxu0 0.0
  %2164 = vmatprep.subr.mxu0 0.0
  %2165 = vmatpush1.msra.mxu0 0.0
  %2166 = vmatprep.subr.mxu0 0.0
  %2167 = vmatpush1.msra.mxu0 0.0
  %2168 = vmatprep.subr.mxu0 0.0
  %2169 = vmatpush1.msra.mxu0 0.0
  %2170 = vmatprep.subr.mxu0 0.0
  %2171 = vmatpush1.msra.mxu0 0.0
  %2172 = vmatprep.subr.mxu0 0.0
  %2173 = vmatpush1.msra.mxu0 0.0
  %2174 = vmatprep.subr.mxu0 0.0
  %2175 = vmatpush1.msra.mxu0 0.0
  %2176 = vmatprep.subr.mxu0 0.0
  %2177 = vmatpush1.msra.mxu0 0.0
  %2178 = vmatprep.subr.mxu0 0.0
  %2179 = vmatpush1.msra.mxu0 0.0
  %2180 = vmatprep.mubr.f32.mxu0 0.0
  %2181 = vmatmul.mubr.f32.gmra.mrb[0].mxu0 %v2109
  %v2182 = vpop.f32.mrb[0].mxu0
  %v2183 = vadd.f32 0.0, %v2182
  %v2184 = vpop.f32.mrb[0].mxu0
  %2185 = vmatprep.mubr.f32.mxu0 0.0
  %2186 = vmatmul.mubr.f32.gmra.mrb[0].mxu0 %v2112
  %v2187 = vpop.f32.mrb[0].mxu0
  %v2188 = vadd.f32 0.0, %v2187
  %v2189 = vpop.f32.mrb[0].mxu0
  %2190 = vdwg.mxu0
  %2191 = vrot.lane.b32.xlu0 %v1972, 112
  %v2192 = vpop.permute.xlu0 %2191
  %2193 = vrot.lane.b32.xlu0 %v1977, 112
  %v2194 = vpop.permute.xlu0 %2193
  %2195 = vrot.lane.b32.xlu0 %v1972, 80
  %v2196 = vpop.permute.xlu0 %2195
  %2197 = vrot.lane.b32.xlu0 %v1977, 80
  %v2198 = vpop.permute.xlu0 %2197
  %v2199 = vsel %vm458, %v2192, 0
  %v2201 = vsel %vm458, %v2194, 0
  %v2203 = vsel %vm458, %v2196, 0
  %v2205 = vsel %vm458, %v2198, 0
  %2207 = vmatprep.subr.mxu0 0.0
  %2208 = vmatpush1.xpose.msra.mxu0 %v2203
  %2209 = vmatprep.subr.mxu0 0.0
  %2210 = vmatpush1.xpose.msra.mxu0 %v2205
  %2211 = vmatprep.subr.mxu0 0.0
  %2212 = vmatpush1.xpose.msra.mxu0 0.0
  %2213 = vmatprep.subr.mxu0 0.0
  %2214 = vmatpush1.xpose.msra.mxu0 0.0
  %2215 = vmatprep.subr.mxu0 0.0
  %2216 = vmatpush1.xpose.msra.mxu0 0.0
  %2217 = vmatprep.subr.mxu0 0.0
  %2218 = vmatpush1.xpose.msra.mxu0 0.0
  %2219 = vmatprep.subr.mxu0 0.0
  %2220 = vmatpush1.xpose.msra.mxu0 0.0
  %2221 = vmatprep.subr.mxu0 0.0
  %2222 = vmatpush1.xpose.msra.mxu0 0.0
  %2223 = vmatprep.subr.mxu0 0.0
  %2224 = vmatpush1.xpose.msra.mxu0 0.0
  %2225 = vmatprep.subr.mxu0 0.0
  %2226 = vmatpush1.xpose.msra.mxu0 0.0
  %2227 = vmatprep.subr.mxu0 0.0
  %2228 = vmatpush1.xpose.msra.mxu0 0.0
  %2229 = vmatprep.subr.mxu0 0.0
  %2230 = vmatpush1.xpose.msra.mxu0 0.0
  %2231 = vmatprep.subr.mxu0 0.0
  %2232 = vmatpush1.xpose.msra.mxu0 0.0
  %2233 = vmatprep.subr.mxu0 0.0
  %2234 = vmatpush1.xpose.msra.mxu0 0.0
  %2235 = vmatprep.subr.mxu0 0.0
  %2236 = vmatpush1.xpose.msra.mxu0 0.0
  %2237 = vmatprep.subr.mxu0 0.0
  %2238 = vmatpush1.xpose.msra.mxu0 0.0
  %2239 = vmatprep.subr.mxu0 0.0
  %2240 = vmatpush1.xpose.msra.mxu0 0.0
  %2241 = vmatprep.subr.mxu0 0.0
  %2242 = vmatpush1.xpose.msra.mxu0 0.0
  %2243 = vmatprep.subr.mxu0 0.0
  %2244 = vmatpush1.xpose.msra.mxu0 0.0
  %2245 = vmatprep.subr.mxu0 0.0
  %2246 = vmatpush1.xpose.msra.mxu0 0.0
  %2247 = vmatprep.subr.mxu0 0.0
  %2248 = vmatpush1.xpose.msra.mxu0 0.0
  %2249 = vmatprep.subr.mxu0 0.0
  %2250 = vmatpush1.xpose.msra.mxu0 0.0
  %2251 = vmatprep.subr.mxu0 0.0
  %2252 = vmatpush1.xpose.msra.mxu0 0.0
  %2253 = vmatprep.subr.mxu0 0.0
  %2254 = vmatpush1.xpose.msra.mxu0 0.0
  %2255 = vmatprep.subr.mxu0 0.0
  %2256 = vmatpush1.xpose.msra.mxu0 0.0
  %2257 = vmatprep.subr.mxu0 0.0
  %2258 = vmatpush1.xpose.msra.mxu0 0.0
  %2259 = vmatprep.subr.mxu0 0.0
  %2260 = vmatpush1.xpose.msra.mxu0 0.0
  %2261 = vmatprep.subr.mxu0 0.0
  %2262 = vmatpush1.xpose.msra.mxu0 0.0
  %2263 = vmatprep.subr.mxu0 0.0
  %2264 = vmatpush1.xpose.msra.mxu0 0.0
  %2265 = vmatprep.subr.mxu0 0.0
  %2266 = vmatpush1.xpose.msra.mxu0 0.0
  %2267 = vmatprep.subr.mxu0 0.0
  %2268 = vmatpush1.xpose.msra.mxu0 0.0
  %2269 = vmatprep.subr.mxu0 0.0
  %2270 = vmatpush1.xpose.msra.mxu0 0.0
  %2271 = vmatprep.mubr.f32.mxu0 0.0
  %2272 = vmatmul.mubr.f32.gmra.mrb[0].mxu0 %v2199
  %v2273 = vpop.f32.mrb[0].mxu0
  %v2274 = vadd.f32 0.0, %v2273
  %v2275 = vpop.f32.mrb[0].mxu0
  %2276 = vmatprep.mubr.f32.mxu0 0.0
  %2277 = vmatmul.mubr.f32.gmra.mrb[0].mxu0 %v2201
  %v2278 = vpop.f32.mrb[0].mxu0
  %v2279 = vadd.f32 0.0, %v2278
  %v2280 = vpop.f32.mrb[0].mxu0
  %2281 = vdwg.mxu0
  %v2282 = vmul.f32 %v2274, 0.25
  %v2283 = vmul.f32 %v2279, 0.25
  %v2284 = vsel %vm544, %v2282, -inf
  %2285 = vmax.xlane.f32.xlu0 %v2284
  %v2286 = vpop.xlane.xlu0 %2285
  %v2287 = vsel %vm548, %v2283, -inf
  %2288 = vmax.xlane.f32.xlu0 %v2287
  %v2289 = vpop.xlane.xlu0 %2288
  %v2290 = vsub.f32 %v2282, %v2286
  %v2291 = vsub.f32 %v2283, %v2289
  %v2292 = vmul.f32 %v2290, 1.442695
  %v2293 = vpow.pop %v2292
  %v2294 = vmul.f32 %v2291, 1.442695
  %v2295 = vpow.pop %v2294
  %v2296 = vsel %vm544, %v2293, 0.0
  %2297 = vadd.xlane.f32.xlu0 %v2296
  %v2298 = vpop.xlane.xlu0 %2297
  %v2299 = vsel %vm548, %v2295, 0.0
  %2300 = vadd.xlane.f32.xlu0 %v2299
  %v2301 = vpop.xlane.xlu0 %2300
  %v2302 = vrcp.pop %v2298
  %v2303 = vrcp.pop %v2301
  %v2304 = vmul.f32 %v2293, %v2302
  %v2305 = vmul.f32 %v2295, %v2303
  %2306 = vrot.lane.b32.xlu0 %v1972, 48
  %v2307 = vpop.permute.xlu0 %2306
  %2308 = vrot.lane.b32.xlu0 %v1977, 48
  %v2309 = vpop.permute.xlu0 %2308
  %v2312 = vsel %vm544, %v2304, 0
  %v2315 = vsel %vm544, %v2305, 0
  %v2317 = vsel %vm272, %v2309, 0
  %2319 = vmatprep.subr.mxu0 0.0
  %2320 = vmatpush1.msra.mxu0 %v2307
  %2321 = vmatprep.subr.mxu0 0.0
  %2322 = vmatpush1.msra.mxu0 %v2317
  %2323 = vmatprep.subr.mxu0 0.0
  %2324 = vmatpush1.msra.mxu0 0.0
  %2325 = vmatprep.subr.mxu0 0.0
  %2326 = vmatpush1.msra.mxu0 0.0
  %2327 = vmatprep.subr.mxu0 0.0
  %2328 = vmatpush1.msra.mxu0 0.0
  %2329 = vmatprep.subr.mxu0 0.0
  %2330 = vmatpush1.msra.mxu0 0.0
  %2331 = vmatprep.subr.mxu0 0.0
  %2332 = vmatpush1.msra.mxu0 0.0
  %2333 = vmatprep.subr.mxu0 0.0
  %2334 = vmatpush1.msra.mxu0 0.0
  %2335 = vmatprep.subr.mxu0 0.0
  %2336 = vmatpush1.msra.mxu0 0.0
  %2337 = vmatprep.subr.mxu0 0.0
  %2338 = vmatpush1.msra.mxu0 0.0
  %2339 = vmatprep.subr.mxu0 0.0
  %2340 = vmatpush1.msra.mxu0 0.0
  %2341 = vmatprep.subr.mxu0 0.0
  %2342 = vmatpush1.msra.mxu0 0.0
  %2343 = vmatprep.subr.mxu0 0.0
  %2344 = vmatpush1.msra.mxu0 0.0
  %2345 = vmatprep.subr.mxu0 0.0
  %2346 = vmatpush1.msra.mxu0 0.0
  %2347 = vmatprep.subr.mxu0 0.0
  %2348 = vmatpush1.msra.mxu0 0.0
  %2349 = vmatprep.subr.mxu0 0.0
  %2350 = vmatpush1.msra.mxu0 0.0
  %2351 = vmatprep.subr.mxu0 0.0
  %2352 = vmatpush1.msra.mxu0 0.0
  %2353 = vmatprep.subr.mxu0 0.0
  %2354 = vmatpush1.msra.mxu0 0.0
  %2355 = vmatprep.subr.mxu0 0.0
  %2356 = vmatpush1.msra.mxu0 0.0
  %2357 = vmatprep.subr.mxu0 0.0
  %2358 = vmatpush1.msra.mxu0 0.0
  %2359 = vmatprep.subr.mxu0 0.0
  %2360 = vmatpush1.msra.mxu0 0.0
  %2361 = vmatprep.subr.mxu0 0.0
  %2362 = vmatpush1.msra.mxu0 0.0
  %2363 = vmatprep.subr.mxu0 0.0
  %2364 = vmatpush1.msra.mxu0 0.0
  %2365 = vmatprep.subr.mxu0 0.0
  %2366 = vmatpush1.msra.mxu0 0.0
  %2367 = vmatprep.subr.mxu0 0.0
  %2368 = vmatpush1.msra.mxu0 0.0
  %2369 = vmatprep.subr.mxu0 0.0
  %2370 = vmatpush1.msra.mxu0 0.0
  %2371 = vmatprep.subr.mxu0 0.0
  %2372 = vmatpush1.msra.mxu0 0.0
  %2373 = vmatprep.subr.mxu0 0.0
  %2374 = vmatpush1.msra.mxu0 0.0
  %2375 = vmatprep.subr.mxu0 0.0
  %2376 = vmatpush1.msra.mxu0 0.0
  %2377 = vmatprep.subr.mxu0 0.0
  %2378 = vmatpush1.msra.mxu0 0.0
  %2379 = vmatprep.subr.mxu0 0.0
  %2380 = vmatpush1.msra.mxu0 0.0
  %2381 = vmatprep.subr.mxu0 0.0
  %2382 = vmatpush1.msra.mxu0 0.0
  %2383 = vmatprep.mubr.f32.mxu0 0.0
  %2384 = vmatmul.mubr.f32.gmra.mrb[0].mxu0 %v2312
  %v2385 = vpop.f32.mrb[0].mxu0
  %v2386 = vadd.f32 0.0, %v2385
  %v2387 = vpop.f32.mrb[0].mxu0
  %2388 = vmatprep.mubr.f32.mxu0 0.0
  %2389 = vmatmul.mubr.f32.gmra.mrb[0].mxu0 %v2315
  %v2390 = vpop.f32.mrb[0].mxu0
  %v2391 = vadd.f32 0.0, %v2390
  %v2392 = vpop.f32.mrb[0].mxu0
  %2393 = vdwg.mxu0
  %2396 = vrot.lane.b32.xlu0 %v2386, 16
  %v2397 = vpop.permute.xlu0 %2396
  %2398 = vrot.lane.b32.xlu0 %v2391, 16
  %v2399 = vpop.permute.xlu0 %2398
  %v2402 = vsel %vm458, %v2183, %v2397
  %v2403 = vsel %vm458, %v2188, %v2399
  %v2406 = vrot.slane %v1977, 5
  %v2407 = vrot.slane %v1982, 5
  %v2408 = vsel %vm240, %v2406, %v2407
  %v2409 = vrot.slane %v1987, 5
  %v2410 = vsel %vm240, %v2407, %v2409
  %2411 = vrot.lane.b32.xlu0 %v2408, 96
  %v2412 = vpop.permute.xlu0 %2411
  %2413 = vrot.lane.b32.xlu0 %v2410, 96
  %v2414 = vpop.permute.xlu0 %2413
  %v2415 = vsel %vm458, %v2408, 0
  %v2417 = vsel %vm458, %v2410, 0
  %v2419 = vsel %vm458, %v2412, 0
  %v2421 = vsel %vm458, %v2414, 0
  %2423 = vmatprep.subr.mxu0 0.0
  %2424 = vmatpush1.xpose.msra.mxu0 %v2419
  %2425 = vmatprep.subr.mxu0 0.0
  %2426 = vmatpush1.xpose.msra.mxu0 %v2421
  %2427 = vmatprep.subr.mxu0 0.0
  %2428 = vmatpush1.xpose.msra.mxu0 0.0
  %2429 = vmatprep.subr.mxu0 0.0
  %2430 = vmatpush1.xpose.msra.mxu0 0.0
  %2431 = vmatprep.subr.mxu0 0.0
  %2432 = vmatpush1.xpose.msra.mxu0 0.0
  %2433 = vmatprep.subr.mxu0 0.0
  %2434 = vmatpush1.xpose.msra.mxu0 0.0
  %2435 = vmatprep.subr.mxu0 0.0
  %2436 = vmatpush1.xpose.msra.mxu0 0.0
  %2437 = vmatprep.subr.mxu0 0.0
  %2438 = vmatpush1.xpose.msra.mxu0 0.0
  %2439 = vmatprep.subr.mxu0 0.0
  %2440 = vmatpush1.xpose.msra.mxu0 0.0
  %2441 = vmatprep.subr.mxu0 0.0
  %2442 = vmatpush1.xpose.msra.mxu0 0.0
  %2443 = vmatprep.subr.mxu0 0.0
  %2444 = vmatpush1.xpose.msra.mxu0 0.0
  %2445 = vmatprep.subr.mxu0 0.0
  %2446 = vmatpush1.xpose.msra.mxu0 0.0
  %2447 = vmatprep.subr.mxu0 0.0
  %2448 = vmatpush1.xpose.msra.mxu0 0.0
  %2449 = vmatprep.subr.mxu0 0.0
  %2450 = vmatpush1.xpose.msra.mxu0 0.0
  %2451 = vmatprep.subr.mxu0 0.0
  %2452 = vmatpush1.xpose.msra.mxu0 0.0
  %2453 = vmatprep.subr.mxu0 0.0
  %2454 = vmatpush1.xpose.msra.mxu0 0.0
  %2455 = vmatprep.subr.mxu0 0.0
  %2456 = vmatpush1.xpose.msra.mxu0 0.0
  %2457 = vmatprep.subr.mxu0 0.0
  %2458 = vmatpush1.xpose.msra.mxu0 0.0
  %2459 = vmatprep.subr.mxu0 0.0
  %2460 = vmatpush1.xpose.msra.mxu0 0.0
  %2461 = vmatprep.subr.mxu0 0.0
  %2462 = vmatpush1.xpose.msra.mxu0 0.0
  %2463 = vmatprep.subr.mxu0 0.0
  %2464 = vmatpush1.xpose.msra.mxu0 0.0
  %2465 = vmatprep.subr.mxu0 0.0
  %2466 = vmatpush1.xpose.msra.mxu0 0.0
  %2467 = vmatprep.subr.mxu0 0.0
  %2468 = vmatpush1.xpose.msra.mxu0 0.0
  %2469 = vmatprep.subr.mxu0 0.0
  %2470 = vmatpush1.xpose.msra.mxu0 0.0
  %2471 = vmatprep.subr.mxu0 0.0
  %2472 = vmatpush1.xpose.msra.mxu0 0.0
  %2473 = vmatprep.subr.mxu0 0.0
  %2474 = vmatpush1.xpose.msra.mxu0 0.0
  %2475 = vmatprep.subr.mxu0 0.0
  %2476 = vmatpush1.xpose.msra.mxu0 0.0
  %2477 = vmatprep.subr.mxu0 0.0
  %2478 = vmatpush1.xpose.msra.mxu0 0.0
  %2479 = vmatprep.subr.mxu0 0.0
  %2480 = vmatpush1.xpose.msra.mxu0 0.0
  %2481 = vmatprep.subr.mxu0 0.0
  %2482 = vmatpush1.xpose.msra.mxu0 0.0
  %2483 = vmatprep.subr.mxu0 0.0
  %2484 = vmatpush1.xpose.msra.mxu0 0.0
  %2485 = vmatprep.subr.mxu0 0.0
  %2486 = vmatpush1.xpose.msra.mxu0 0.0
  %2487 = vmatprep.mubr.f32.mxu0 0.0
  %2488 = vmatmul.mubr.f32.gmra.mrb[0].mxu0 %v2415
  %v2489 = vpop.f32.mrb[0].mxu0
  %v2490 = vadd.f32 0.0, %v2489
  %v2491 = vpop.f32.mrb[0].mxu0
  %2492 = vmatprep.mubr.f32.mxu0 0.0
  %2493 = vmatmul.mubr.f32.gmra.mrb[0].mxu0 %v2417
  %v2494 = vpop.f32.mrb[0].mxu0
  %v2495 = vadd.f32 0.0, %v2494
  %v2496 = vpop.f32.mrb[0].mxu0
  %2497 = vdwg.mxu0
  %v2498 = vmul.f32 %v2490, 0.25
  %v2499 = vmul.f32 %v2495, 0.25
  %v2500 = vsel %vm544, %v2498, -inf
  %2501 = vmax.xlane.f32.xlu0 %v2500
  %v2502 = vpop.xlane.xlu0 %2501
  %v2503 = vsel %vm548, %v2499, -inf
  %2504 = vmax.xlane.f32.xlu0 %v2503
  %v2505 = vpop.xlane.xlu0 %2504
  %v2506 = vsub.f32 %v2498, %v2502
  %v2507 = vsub.f32 %v2499, %v2505
  %v2508 = vmul.f32 %v2506, 1.442695
  %v2509 = vpow.pop %v2508
  %v2510 = vmul.f32 %v2507, 1.442695
  %v2511 = vpow.pop %v2510
  %v2512 = vsel %vm544, %v2509, 0.0
  %2513 = vadd.xlane.f32.xlu0 %v2512
  %v2514 = vpop.xlane.xlu0 %2513
  %v2515 = vsel %vm548, %v2511, 0.0
  %2516 = vadd.xlane.f32.xlu0 %v2515
  %v2517 = vpop.xlane.xlu0 %2516
  %v2518 = vrcp.pop %v2514
  %v2519 = vrcp.pop %v2517
  %v2520 = vmul.f32 %v2509, %v2518
  %v2521 = vmul.f32 %v2511, %v2519
  %2522 = vrot.lane.b32.xlu0 %v2408, 64
  %v2523 = vpop.permute.xlu0 %2522
  %2524 = vrot.lane.b32.xlu0 %v2410, 64
  %v2525 = vpop.permute.xlu0 %2524
  %v2528 = vsel %vm544, %v2520, 0
  %v2531 = vsel %vm544, %v2521, 0
  %v2533 = vsel %vm272, %v2525, 0
  %2535 = vmatprep.subr.mxu0 0.0
  %2536 = vmatpush1.msra.mxu0 %v2523
  %2537 = vmatprep.subr.mxu0 0.0
  %2538 = vmatpush1.msra.mxu0 %v2533
  %2539 = vmatprep.subr.mxu0 0.0
  %2540 = vmatpush1.msra.mxu0 0.0
  %2541 = vmatprep.subr.mxu0 0.0
  %2542 = vmatpush1.msra.mxu0 0.0
  %2543 = vmatprep.subr.mxu0 0.0
  %2544 = vmatpush1.msra.mxu0 0.0
  %2545 = vmatprep.subr.mxu0 0.0
  %2546 = vmatpush1.msra.mxu0 0.0
  %2547 = vmatprep.subr.mxu0 0.0
  %2548 = vmatpush1.msra.mxu0 0.0
  %2549 = vmatprep.subr.mxu0 0.0
  %2550 = vmatpush1.msra.mxu0 0.0
  %2551 = vmatprep.subr.mxu0 0.0
  %2552 = vmatpush1.msra.mxu0 0.0
  %2553 = vmatprep.subr.mxu0 0.0
  %2554 = vmatpush1.msra.mxu0 0.0
  %2555 = vmatprep.subr.mxu0 0.0
  %2556 = vmatpush1.msra.mxu0 0.0
  %2557 = vmatprep.subr.mxu0 0.0
  %2558 = vmatpush1.msra.mxu0 0.0
  %2559 = vmatprep.subr.mxu0 0.0
  %2560 = vmatpush1.msra.mxu0 0.0
  %2561 = vmatprep.subr.mxu0 0.0
  %2562 = vmatpush1.msra.mxu0 0.0
  %2563 = vmatprep.subr.mxu0 0.0
  %2564 = vmatpush1.msra.mxu0 0.0
  %2565 = vmatprep.subr.mxu0 0.0
  %2566 = vmatpush1.msra.mxu0 0.0
  %2567 = vmatprep.subr.mxu0 0.0
  %2568 = vmatpush1.msra.mxu0 0.0
  %2569 = vmatprep.subr.mxu0 0.0
  %2570 = vmatpush1.msra.mxu0 0.0
  %2571 = vmatprep.subr.mxu0 0.0
  %2572 = vmatpush1.msra.mxu0 0.0
  %2573 = vmatprep.subr.mxu0 0.0
  %2574 = vmatpush1.msra.mxu0 0.0
  %2575 = vmatprep.subr.mxu0 0.0
  %2576 = vmatpush1.msra.mxu0 0.0
  %2577 = vmatprep.subr.mxu0 0.0
  %2578 = vmatpush1.msra.mxu0 0.0
  %2579 = vmatprep.subr.mxu0 0.0
  %2580 = vmatpush1.msra.mxu0 0.0
  %2581 = vmatprep.subr.mxu0 0.0
  %2582 = vmatpush1.msra.mxu0 0.0
  %2583 = vmatprep.subr.mxu0 0.0
  %2584 = vmatpush1.msra.mxu0 0.0
  %2585 = vmatprep.subr.mxu0 0.0
  %2586 = vmatpush1.msra.mxu0 0.0
  %2587 = vmatprep.subr.mxu0 0.0
  %2588 = vmatpush1.msra.mxu0 0.0
  %2589 = vmatprep.subr.mxu0 0.0
  %2590 = vmatpush1.msra.mxu0 0.0
  %2591 = vmatprep.subr.mxu0 0.0
  %2592 = vmatpush1.msra.mxu0 0.0
  %2593 = vmatprep.subr.mxu0 0.0
  %2594 = vmatpush1.msra.mxu0 0.0
  %2595 = vmatprep.subr.mxu0 0.0
  %2596 = vmatpush1.msra.mxu0 0.0
  %2597 = vmatprep.subr.mxu0 0.0
  %2598 = vmatpush1.msra.mxu0 0.0
  %2599 = vmatprep.mubr.f32.mxu0 0.0
  %2600 = vmatmul.mubr.f32.gmra.mrb[0].mxu0 %v2528
  %v2601 = vpop.f32.mrb[0].mxu0
  %v2602 = vadd.f32 0.0, %v2601
  %v2603 = vpop.f32.mrb[0].mxu0
  %2604 = vmatprep.mubr.f32.mxu0 0.0
  %2605 = vmatmul.mubr.f32.gmra.mrb[0].mxu0 %v2531
  %v2606 = vpop.f32.mrb[0].mxu0
  %v2607 = vadd.f32 0.0, %v2606
  %v2608 = vpop.f32.mrb[0].mxu0
  %2609 = vdwg.mxu0
  %2610 = vrot.lane.b32.xlu0 %v2408, 112
  %v2611 = vpop.permute.xlu0 %2610
  %2612 = vrot.lane.b32.xlu0 %v2410, 112
  %v2613 = vpop.permute.xlu0 %2612
  %2614 = vrot.lane.b32.xlu0 %v2408, 80
  %v2615 = vpop.permute.xlu0 %2614
  %2616 = vrot.lane.b32.xlu0 %v2410, 80
  %v2617 = vpop.permute.xlu0 %2616
  %v2618 = vsel %vm458, %v2611, 0
  %v2620 = vsel %vm458, %v2613, 0
  %v2622 = vsel %vm458, %v2615, 0
  %v2624 = vsel %vm458, %v2617, 0
  %2626 = vmatprep.subr.mxu0 0.0
  %2627 = vmatpush1.xpose.msra.mxu0 %v2622
  %2628 = vmatprep.subr.mxu0 0.0
  %2629 = vmatpush1.xpose.msra.mxu0 %v2624
  %2630 = vmatprep.subr.mxu0 0.0
  %2631 = vmatpush1.xpose.msra.mxu0 0.0
  %2632 = vmatprep.subr.mxu0 0.0
  %2633 = vmatpush1.xpose.msra.mxu0 0.0
  %2634 = vmatprep.subr.mxu0 0.0
  %2635 = vmatpush1.xpose.msra.mxu0 0.0
  %2636 = vmatprep.subr.mxu0 0.0
  %2637 = vmatpush1.xpose.msra.mxu0 0.0
  %2638 = vmatprep.subr.mxu0 0.0
  %2639 = vmatpush1.xpose.msra.mxu0 0.0
  %2640 = vmatprep.subr.mxu0 0.0
  %2641 = vmatpush1.xpose.msra.mxu0 0.0
  %2642 = vmatprep.subr.mxu0 0.0
  %2643 = vmatpush1.xpose.msra.mxu0 0.0
  %2644 = vmatprep.subr.mxu0 0.0
  %2645 = vmatpush1.xpose.msra.mxu0 0.0
  %2646 = vmatprep.subr.mxu0 0.0
  %2647 = vmatpush1.xpose.msra.mxu0 0.0
  %2648 = vmatprep.subr.mxu0 0.0
  %2649 = vmatpush1.xpose.msra.mxu0 0.0
  %2650 = vmatprep.subr.mxu0 0.0
  %2651 = vmatpush1.xpose.msra.mxu0 0.0
  %2652 = vmatprep.subr.mxu0 0.0
  %2653 = vmatpush1.xpose.msra.mxu0 0.0
  %2654 = vmatprep.subr.mxu0 0.0
  %2655 = vmatpush1.xpose.msra.mxu0 0.0
  %2656 = vmatprep.subr.mxu0 0.0
  %2657 = vmatpush1.xpose.msra.mxu0 0.0
  %2658 = vmatprep.subr.mxu0 0.0
  %2659 = vmatpush1.xpose.msra.mxu0 0.0
  %2660 = vmatprep.subr.mxu0 0.0
  %2661 = vmatpush1.xpose.msra.mxu0 0.0
  %2662 = vmatprep.subr.mxu0 0.0
  %2663 = vmatpush1.xpose.msra.mxu0 0.0
  %2664 = vmatprep.subr.mxu0 0.0
  %2665 = vmatpush1.xpose.msra.mxu0 0.0
  %2666 = vmatprep.subr.mxu0 0.0
  %2667 = vmatpush1.xpose.msra.mxu0 0.0
  %2668 = vmatprep.subr.mxu0 0.0
  %2669 = vmatpush1.xpose.msra.mxu0 0.0
  %2670 = vmatprep.subr.mxu0 0.0
  %2671 = vmatpush1.xpose.msra.mxu0 0.0
  %2672 = vmatprep.subr.mxu0 0.0
  %2673 = vmatpush1.xpose.msra.mxu0 0.0
  %2674 = vmatprep.subr.mxu0 0.0
  %2675 = vmatpush1.xpose.msra.mxu0 0.0
  %2676 = vmatprep.subr.mxu0 0.0
  %2677 = vmatpush1.xpose.msra.mxu0 0.0
  %2678 = vmatprep.subr.mxu0 0.0
  %2679 = vmatpush1.xpose.msra.mxu0 0.0
  %2680 = vmatprep.subr.mxu0 0.0
  %2681 = vmatpush1.xpose.msra.mxu0 0.0
  %2682 = vmatprep.subr.mxu0 0.0
  %2683 = vmatpush1.xpose.msra.mxu0 0.0
  %2684 = vmatprep.subr.mxu0 0.0
  %2685 = vmatpush1.xpose.msra.mxu0 0.0
  %2686 = vmatprep.subr.mxu0 0.0
  %2687 = vmatpush1.xpose.msra.mxu0 0.0
  %2688 = vmatprep.subr.mxu0 0.0
  %2689 = vmatpush1.xpose.msra.mxu0 0.0
  %2690 = vmatprep.mubr.f32.mxu0 0.0
  %2691 = vmatmul.mubr.f32.gmra.mrb[0].mxu0 %v2618
  %v2692 = vpop.f32.mrb[0].mxu0
  %v2693 = vadd.f32 0.0, %v2692
  %v2694 = vpop.f32.mrb[0].mxu0
  %2695 = vmatprep.mubr.f32.mxu0 0.0
  %2696 = vmatmul.mubr.f32.gmra.mrb[0].mxu0 %v2620
  %v2697 = vpop.f32.mrb[0].mxu0
  %v2698 = vadd.f32 0.0, %v2697
  %v2699 = vpop.f32.mrb[0].mxu0
  %2700 = vdwg.mxu0
  %v2701 = vmul.f32 %v2693, 0.25
  %v2702 = vmul.f32 %v2698, 0.25
  %v2703 = vsel %vm544, %v2701, -inf
  %2704 = vmax.xlane.f32.xlu0 %v2703
  %v2705 = vpop.xlane.xlu0 %2704
  %v2706 = vsel %vm548, %v2702, -inf
  %2707 = vmax.xlane.f32.xlu0 %v2706
  %v2708 = vpop.xlane.xlu0 %2707
  %v2709 = vsub.f32 %v2701, %v2705
  %v2710 = vsub.f32 %v2702, %v2708
  %v2711 = vmul.f32 %v2709, 1.442695
  %v2712 = vpow.pop %v2711
  %v2713 = vmul.f32 %v2710, 1.442695
  %v2714 = vpow.pop %v2713
  %v2715 = vsel %vm544, %v2712, 0.0
  %2716 = vadd.xlane.f32.xlu0 %v2715
  %v2717 = vpop.xlane.xlu0 %2716
  %v2718 = vsel %vm548, %v2714, 0.0
  %2719 = vadd.xlane.f32.xlu0 %v2718
  %v2720 = vpop.xlane.xlu0 %2719
  %v2721 = vrcp.pop %v2717
  %v2722 = vrcp.pop %v2720
  %v2723 = vmul.f32 %v2712, %v2721
  %v2724 = vmul.f32 %v2714, %v2722
  %2725 = vrot.lane.b32.xlu0 %v2408, 48
  %v2726 = vpop.permute.xlu0 %2725
  %2727 = vrot.lane.b32.xlu0 %v2410, 48
  %v2728 = vpop.permute.xlu0 %2727
  %v2731 = vsel %vm544, %v2723, 0
  %v2734 = vsel %vm544, %v2724, 0
  %v2736 = vsel %vm272, %v2728, 0
  %2738 = vmatprep.subr.mxu0 0.0
  %2739 = vmatpush1.msra.mxu0 %v2726
  %2740 = vmatprep.subr.mxu0 0.0
  %2741 = vmatpush1.msra.mxu0 %v2736
  %2742 = vmatprep.subr.mxu0 0.0
  %2743 = vmatpush1.msra.mxu0 0.0
  %2744 = vmatprep.subr.mxu0 0.0
  %2745 = vmatpush1.msra.mxu0 0.0
  %2746 = vmatprep.subr.mxu0 0.0
  %2747 = vmatpush1.msra.mxu0 0.0
  %2748 = vmatprep.subr.mxu0 0.0
  %2749 = vmatpush1.msra.mxu0 0.0
  %2750 = vmatprep.subr.mxu0 0.0
  %2751 = vmatpush1.msra.mxu0 0.0
  %2752 = vmatprep.subr.mxu0 0.0
  %2753 = vmatpush1.msra.mxu0 0.0
  %2754 = vmatprep.subr.mxu0 0.0
  %2755 = vmatpush1.msra.mxu0 0.0
  %2756 = vmatprep.subr.mxu0 0.0
  %2757 = vmatpush1.msra.mxu0 0.0
  %2758 = vmatprep.subr.mxu0 0.0
  %2759 = vmatpush1.msra.mxu0 0.0
  %2760 = vmatprep.subr.mxu0 0.0
  %2761 = vmatpush1.msra.mxu0 0.0
  %2762 = vmatprep.subr.mxu0 0.0
  %2763 = vmatpush1.msra.mxu0 0.0
  %2764 = vmatprep.subr.mxu0 0.0
  %2765 = vmatpush1.msra.mxu0 0.0
  %2766 = vmatprep.subr.mxu0 0.0
  %2767 = vmatpush1.msra.mxu0 0.0
  %2768 = vmatprep.subr.mxu0 0.0
  %2769 = vmatpush1.msra.mxu0 0.0
  %2770 = vmatprep.subr.mxu0 0.0
  %2771 = vmatpush1.msra.mxu0 0.0
  %2772 = vmatprep.subr.mxu0 0.0
  %2773 = vmatpush1.msra.mxu0 0.0
  %2774 = vmatprep.subr.mxu0 0.0
  %2775 = vmatpush1.msra.mxu0 0.0
  %2776 = vmatprep.subr.mxu0 0.0
  %2777 = vmatpush1.msra.mxu0 0.0
  %2778 = vmatprep.subr.mxu0 0.0
  %2779 = vmatpush1.msra.mxu0 0.0
  %2780 = vmatprep.subr.mxu0 0.0
  %2781 = vmatpush1.msra.mxu0 0.0
  %2782 = vmatprep.subr.mxu0 0.0
  %2783 = vmatpush1.msra.mxu0 0.0
  %2784 = vmatprep.subr.mxu0 0.0
  %2785 = vmatpush1.msra.mxu0 0.0
  %2786 = vmatprep.subr.mxu0 0.0
  %2787 = vmatpush1.msra.mxu0 0.0
  %2788 = vmatprep.subr.mxu0 0.0
  %2789 = vmatpush1.msra.mxu0 0.0
  %2790 = vmatprep.subr.mxu0 0.0
  %2791 = vmatpush1.msra.mxu0 0.0
  %2792 = vmatprep.subr.mxu0 0.0
  %2793 = vmatpush1.msra.mxu0 0.0
  %2794 = vmatprep.subr.mxu0 0.0
  %2795 = vmatpush1.msra.mxu0 0.0
  %2796 = vmatprep.subr.mxu0 0.0
  %2797 = vmatpush1.msra.mxu0 0.0
  %2798 = vmatprep.subr.mxu0 0.0
  %2799 = vmatpush1.msra.mxu0 0.0
  %2800 = vmatprep.subr.mxu0 0.0
  %2801 = vmatpush1.msra.mxu0 0.0
  %2802 = vmatprep.mubr.f32.mxu0 0.0
  %2803 = vmatmul.mubr.f32.gmra.mrb[0].mxu0 %v2731
  %v2804 = vpop.f32.mrb[0].mxu0
  %v2805 = vadd.f32 0.0, %v2804
  %v2806 = vpop.f32.mrb[0].mxu0
  %2807 = vmatprep.mubr.f32.mxu0 0.0
  %2808 = vmatmul.mubr.f32.gmra.mrb[0].mxu0 %v2734
  %v2809 = vpop.f32.mrb[0].mxu0
  %v2810 = vadd.f32 0.0, %v2809
  %v2811 = vpop.f32.mrb[0].mxu0
  %2812 = vdwg.mxu0
  %2815 = vrot.lane.b32.xlu0 %v2805, 16
  %v2816 = vpop.permute.xlu0 %2815
  %2817 = vrot.lane.b32.xlu0 %v2810, 16
  %v2818 = vpop.permute.xlu0 %2817
  %v2821 = vsel %vm458, %v2602, %v2816
  %v2822 = vsel %vm458, %v2607, %v2818
  %v2825 = vrot.slane %v2821, 3
  %v2826 = vrot.slane %v2822, 3
  %v2827 = vsel %vm272, %v2825, %v2826
  %v2829 = vsel %vm272, %v2403, %v2825
  %s2830 = scalar_lea.vmem %s10, 32
  %v2831 = vld [vmem:[%s2830] sm:$0xff]
  %v2832 = vld [vmem:[%s2830 + $0x8] sm:$0xff]
  %v2833 = vld [vmem:[%s2830 + $0x10] sm:$0xff]
  %v2834 = vld [vmem:[%s2830 + $0x18] sm:$0xff]
  %s2835 = scalar_lea.vmem %s11, 1
  %v2836 = vld [vmem:[%s2835] sm:$0x1]
  %v2838 = vlaneseq
  %v2839 = vshrl.u32 %v2838, 7
  %v2840 = vsub.s32 0, %v2839
  %v2841 = vrot.slane %v2836, %v2840
  %v2844 = vsel %vm167, %v2402, 0
  %v2847 = vsel %vm167, %v2829, 0
  %v2849 = vsel %vm167, %v2827, 0
  %v2851 = vsel %vm167, %v2826, 0
  %2853 = vmatprep.subr.mxu0 0.0
  %2854 = vmatpush1.msra.mxu0 %v2831
  %2855 = vmatprep.subr.mxu0 0.0
  %2856 = vmatpush1.msra.mxu0 %v2832
  %2857 = vmatprep.subr.mxu0 0.0
  %2858 = vmatpush1.msra.mxu0 %v2833
  %2859 = vmatprep.subr.mxu0 0.0
  %2860 = vmatpush1.msra.mxu0 %v2834
  %2861 = vmatprep.subr.mxu0 0.0
  %2862 = vmatpush1.msra.mxu0 0.0
  %2863 = vmatprep.subr.mxu0 0.0
  %2864 = vmatpush1.msra.mxu0 0.0
  %2865 = vmatprep.subr.mxu0 0.0
  %2866 = vmatpush1.msra.mxu0 0.0
  %2867 = vmatprep.subr.mxu0 0.0
  %2868 = vmatpush1.msra.mxu0 0.0
  %2869 = vmatprep.subr.mxu0 0.0
  %2870 = vmatpush1.msra.mxu0 0.0
  %2871 = vmatprep.subr.mxu0 0.0
  %2872 = vmatpush1.msra.mxu0 0.0
  %2873 = vmatprep.subr.mxu0 0.0
  %2874 = vmatpush1.msra.mxu0 0.0
  %2875 = vmatprep.subr.mxu0 0.0
  %2876 = vmatpush1.msra.mxu0 0.0
  %2877 = vmatprep.subr.mxu0 0.0
  %2878 = vmatpush1.msra.mxu0 0.0
  %2879 = vmatprep.subr.mxu0 0.0
  %2880 = vmatpush1.msra.mxu0 0.0
  %2881 = vmatprep.subr.mxu0 0.0
  %2882 = vmatpush1.msra.mxu0 0.0
  %2883 = vmatprep.subr.mxu0 0.0
  %2884 = vmatpush1.msra.mxu0 0.0
  %2885 = vmatprep.subr.mxu0 0.0
  %2886 = vmatpush1.msra.mxu0 0.0
  %2887 = vmatprep.subr.mxu0 0.0
  %2888 = vmatpush1.msra.mxu0 0.0
  %2889 = vmatprep.subr.mxu0 0.0
  %2890 = vmatpush1.msra.mxu0 0.0
  %2891 = vmatprep.subr.mxu0 0.0
  %2892 = vmatpush1.msra.mxu0 0.0
  %2893 = vmatprep.subr.mxu0 0.0
  %2894 = vmatpush1.msra.mxu0 0.0
  %2895 = vmatprep.subr.mxu0 0.0
  %2896 = vmatpush1.msra.mxu0 0.0
  %2897 = vmatprep.subr.mxu0 0.0
  %2898 = vmatpush1.msra.mxu0 0.0
  %2899 = vmatprep.subr.mxu0 0.0
  %2900 = vmatpush1.msra.mxu0 0.0
  %2901 = vmatprep.subr.mxu0 0.0
  %2902 = vmatpush1.msra.mxu0 0.0
  %2903 = vmatprep.subr.mxu0 0.0
  %2904 = vmatpush1.msra.mxu0 0.0
  %2905 = vmatprep.subr.mxu0 0.0
  %2906 = vmatpush1.msra.mxu0 0.0
  %2907 = vmatprep.subr.mxu0 0.0
  %2908 = vmatpush1.msra.mxu0 0.0
  %2909 = vmatprep.subr.mxu0 0.0
  %2910 = vmatpush1.msra.mxu0 0.0
  %2911 = vmatprep.subr.mxu0 0.0
  %2912 = vmatpush1.msra.mxu0 0.0
  %2913 = vmatprep.subr.mxu0 0.0
  %2914 = vmatpush1.msra.mxu0 0.0
  %2915 = vmatprep.subr.mxu0 0.0
  %2916 = vmatpush1.msra.mxu0 0.0
  %2917 = vmatprep.mubr.f32.mxu0 0.0
  %2918 = vmatmul.mubr.f32.gmra.mrb[0].mxu0 %v2844
  %v2919 = vpop.f32.mrb[0].mxu0
  %v2920 = vadd.f32 %v2841, %v2919
  %v2921 = vpop.f32.mrb[0].mxu0
  %2922 = vmatprep.mubr.f32.mxu0 0.0
  %2923 = vmatmul.mubr.f32.gmra.mrb[0].mxu0 %v2847
  %v2924 = vpop.f32.mrb[0].mxu0
  %v2925 = vadd.f32 %v2841, %v2924
  %v2926 = vpop.f32.mrb[0].mxu0
  %2927 = vmatprep.mubr.f32.mxu0 0.0
  %2928 = vmatmul.mubr.f32.gmra.mrb[0].mxu0 %v2849
  %v2929 = vpop.f32.mrb[0].mxu0
  %v2930 = vadd.f32 %v2841, %v2929
  %v2931 = vpop.f32.mrb[0].mxu0
  %2932 = vmatprep.mubr.f32.mxu0 0.0
  %2933 = vmatmul.mubr.f32.gmra.mrb[0].mxu0 %v2851
  %v2934 = vpop.f32.mrb[0].mxu0
  %v2935 = vadd.f32 %v2841, %v2934
  %v2936 = vpop.f32.mrb[0].mxu0
  %2937 = vdwg.mxu0
  %v2938 = vadd.f32 %v1808, %v2920
  %v2939 = vadd.f32 %v1809, %v2925
  %v2940 = vadd.f32 %v1810, %v2930
  %v2941 = vadd.f32 %v1811, %v2935
  %s2942 = scalar_lea.vmem %s12, 1
  %v2943 = vld [vmem:[%s2942] sm:$0x1]
  %s2944 = scalar_lea.vmem %s13, 1
  %v2945 = vld [vmem:[%s2944] sm:$0x1]
  %v2946 = vsel %vm167, %v2938, 0.0
  %2947 = vadd.xlane.f32.xlu0 %v2946
  %v2948 = vpop.xlane.xlu0 %2947
  %v2949 = vsel %vm167, %v2939, 0.0
  %2950 = vadd.xlane.f32.xlu0 %v2949
  %v2951 = vpop.xlane.xlu0 %2950
  %v2952 = vsel %vm167, %v2940, 0.0
  %2953 = vadd.xlane.f32.xlu0 %v2952
  %v2954 = vpop.xlane.xlu0 %2953
  %v2955 = vsel %vm287, %v2941, 0.0
  %2956 = vadd.xlane.f32.xlu0 %v2955
  %v2957 = vpop.xlane.xlu0 %2956
  %v2958 = vmul.f32 %v2948, %v177
  %v2959 = vmul.f32 %v2951, %v177
  %v2960 = vmul.f32 %v2954, %v177
  %v2961 = vmul.f32 %v2957, %v177
  %v2962 = vsub.f32 %v2938, %v2958
  %v2963 = vsub.f32 %v2939, %v2959
  %v2964 = vsub.f32 %v2940, %v2960
  %v2965 = vsub.f32 %v2941, %v2961
  %v2966 = vmul.f32 %v2962, %v2962
  %v2967 = vmul.f32 %v2963, %v2963
  %v2968 = vmul.f32 %v2964, %v2964
  %v2969 = vmul.f32 %v2965, %v2965
  %v2970 = vsel %vm167, %v2966, 0.0
  %2971 = vadd.xlane.f32.xlu0 %v2970
  %v2972 = vpop.xlane.xlu0 %2971
  %v2973 = vsel %vm167, %v2967, 0.0
  %2974 = vadd.xlane.f32.xlu0 %v2973
  %v2975 = vpop.xlane.xlu0 %2974
  %v2976 = vsel %vm167, %v2968, 0.0
  %2977 = vadd.xlane.f32.xlu0 %v2976
  %v2978 = vpop.xlane.xlu0 %2977
  %v2979 = vsel %vm287, %v2969, 0.0
  %2980 = vadd.xlane.f32.xlu0 %v2979
  %v2981 = vpop.xlane.xlu0 %2980
  %v2982 = vmul.f32 %v2972, %v177
  %v2983 = vmul.f32 %v2975, %v177
  %v2984 = vmul.f32 %v2978, %v177
  %v2985 = vmul.f32 %v2981, %v177
  %v2986 = vadd.f32 %v2982, 1e-05
  %v2987 = vadd.f32 %v2983, 1e-05
  %v2988 = vadd.f32 %v2984, 1e-05
  %v2989 = vadd.f32 %v2985, 1e-05
  %v2990 = vrsqrt.pop %v2986
  %v2991 = vrsqrt.pop %v2987
  %v2992 = vrsqrt.pop %v2988
  %v2993 = vrsqrt.pop %v2989
  %v2994 = vmul.f32 %v2962, %v2990
  %v2995 = vmul.f32 %v2963, %v2991
  %v2996 = vmul.f32 %v2964, %v2992
  %v2997 = vmul.f32 %v2965, %v2993
  %v2999 = vlaneseq
  %v3000 = vshrl.u32 %v2999, 7
  %v3001 = vsub.s32 0, %v3000
  %v3002 = vrot.slane %v2943, %v3001
  %v3004 = vmul.f32 %v2994, %v3002
  %v3005 = vmul.f32 %v2995, %v3002
  %v3006 = vmul.f32 %v2996, %v3002
  %v3007 = vmul.f32 %v2997, %v3002
  %v3009 = vlaneseq
  %v3010 = vshrl.u32 %v3009, 7
  %v3011 = vsub.s32 0, %v3010
  %v3012 = vrot.slane %v2945, %v3011
  %v3014 = vadd.f32 %v3004, %v3012
  %v3015 = vadd.f32 %v3005, %v3012
  %v3016 = vadd.f32 %v3006, %v3012
  %v3017 = vadd.f32 %v3007, %v3012
  %s3018 = scalar_lea.vmem %s14, 32
  %v3019 = vld [vmem:[%s3018] sm:$0xff]
  %v3020 = vld [vmem:[%s3018 + $0x8] sm:$0xff]
  %v3021 = vld [vmem:[%s3018 + $0x10] sm:$0xff]
  %v3022 = vld [vmem:[%s3018 + $0x18] sm:$0xff]
  %s3023 = scalar_lea.vmem %s15, 1
  %v3024 = vld [vmem:[%s3023] sm:$0x1]
  %v3026 = vlaneseq
  %v3027 = vshrl.u32 %v3026, 7
  %v3028 = vsub.s32 0, %v3027
  %v3029 = vrot.slane %v3024, %v3028
  %v3032 = vsel %vm167, %v3014, 0
  %v3035 = vsel %vm167, %v3015, 0
  %v3038 = vsel %vm167, %v3016, 0
  %v3041 = vsel %vm167, %v3017, 0
  %3043 = vmatprep.subr.mxu0 0.0
  %3044 = vmatpush1.msra.mxu0 %v3019
  %3045 = vmatprep.subr.mxu0 0.0
  %3046 = vmatpush1.msra.mxu0 %v3020
  %3047 = vmatprep.subr.mxu0 0.0
  %3048 = vmatpush1.msra.mxu0 %v3021
  %3049 = vmatprep.subr.mxu0 0.0
  %3050 = vmatpush1.msra.mxu0 %v3022
  %3051 = vmatprep.subr.mxu0 0.0
  %3052 = vmatpush1.msra.mxu0 0.0
  %3053 = vmatprep.subr.mxu0 0.0
  %3054 = vmatpush1.msra.mxu0 0.0
  %3055 = vmatprep.subr.mxu0 0.0
  %3056 = vmatpush1.msra.mxu0 0.0
  %3057 = vmatprep.subr.mxu0 0.0
  %3058 = vmatpush1.msra.mxu0 0.0
  %3059 = vmatprep.subr.mxu0 0.0
  %3060 = vmatpush1.msra.mxu0 0.0
  %3061 = vmatprep.subr.mxu0 0.0
  %3062 = vmatpush1.msra.mxu0 0.0
  %3063 = vmatprep.subr.mxu0 0.0
  %3064 = vmatpush1.msra.mxu0 0.0
  %3065 = vmatprep.subr.mxu0 0.0
  %3066 = vmatpush1.msra.mxu0 0.0
  %3067 = vmatprep.subr.mxu0 0.0
  %3068 = vmatpush1.msra.mxu0 0.0
  %3069 = vmatprep.subr.mxu0 0.0
  %3070 = vmatpush1.msra.mxu0 0.0
  %3071 = vmatprep.subr.mxu0 0.0
  %3072 = vmatpush1.msra.mxu0 0.0
  %3073 = vmatprep.subr.mxu0 0.0
  %3074 = vmatpush1.msra.mxu0 0.0
  %3075 = vmatprep.subr.mxu0 0.0
  %3076 = vmatpush1.msra.mxu0 0.0
  %3077 = vmatprep.subr.mxu0 0.0
  %3078 = vmatpush1.msra.mxu0 0.0
  %3079 = vmatprep.subr.mxu0 0.0
  %3080 = vmatpush1.msra.mxu0 0.0
  %3081 = vmatprep.subr.mxu0 0.0
  %3082 = vmatpush1.msra.mxu0 0.0
  %3083 = vmatprep.subr.mxu0 0.0
  %3084 = vmatpush1.msra.mxu0 0.0
  %3085 = vmatprep.subr.mxu0 0.0
  %3086 = vmatpush1.msra.mxu0 0.0
  %3087 = vmatprep.subr.mxu0 0.0
  %3088 = vmatpush1.msra.mxu0 0.0
  %3089 = vmatprep.subr.mxu0 0.0
  %3090 = vmatpush1.msra.mxu0 0.0
  %3091 = vmatprep.subr.mxu0 0.0
  %3092 = vmatpush1.msra.mxu0 0.0
  %3093 = vmatprep.subr.mxu0 0.0
  %3094 = vmatpush1.msra.mxu0 0.0
  %3095 = vmatprep.subr.mxu0 0.0
  %3096 = vmatpush1.msra.mxu0 0.0
  %3097 = vmatprep.subr.mxu0 0.0
  %3098 = vmatpush1.msra.mxu0 0.0
  %3099 = vmatprep.subr.mxu0 0.0
  %3100 = vmatpush1.msra.mxu0 0.0
  %3101 = vmatprep.subr.mxu0 0.0
  %3102 = vmatpush1.msra.mxu0 0.0
  %3103 = vmatprep.subr.mxu0 0.0
  %3104 = vmatpush1.msra.mxu0 0.0
  %3105 = vmatprep.subr.mxu0 0.0
  %3106 = vmatpush1.msra.mxu0 0.0
  %3107 = vmatprep.mubr.f32.mxu0 0.0
  %3108 = vmatmul.mubr.f32.gmra.mrb[0].mxu0 %v3032
  %v3109 = vpop.f32.mrb[0].mxu0
  %v3110 = vadd.f32 %v3029, %v3109
  %v3111 = vpop.f32.mrb[0].mxu0
  %3112 = vmatprep.mubr.f32.mxu0 0.0
  %3113 = vmatmul.mubr.f32.gmra.mrb[0].mxu0 %v3035
  %v3114 = vpop.f32.mrb[0].mxu0
  %v3115 = vadd.f32 %v3029, %v3114
  %v3116 = vpop.f32.mrb[0].mxu0
  %3117 = vmatprep.mubr.f32.mxu0 0.0
  %3118 = vmatmul.mubr.f32.gmra.mrb[0].mxu0 %v3038
  %v3119 = vpop.f32.mrb[0].mxu0
  %v3120 = vadd.f32 %v3029, %v3119
  %v3121 = vpop.f32.mrb[0].mxu0
  %3122 = vmatprep.mubr.f32.mxu0 0.0
  %3123 = vmatmul.mubr.f32.gmra.mrb[0].mxu0 %v3041
  %v3124 = vpop.f32.mrb[0].mxu0
  %v3125 = vadd.f32 %v3029, %v3124
  %v3126 = vpop.f32.mrb[0].mxu0
  %3127 = vdwg.mxu0
  %v3128 = vmul.f32 %v3110, 0.5
  %v3129 = vmul.f32 %v3115, 0.5
  %v3130 = vmul.f32 %v3120, 0.5
  %v3131 = vmul.f32 %v3125, 0.5
  %v3132 = vmul.f32 %v3110, 0.70710677
  %v3133 = vmul.f32 %v3115, 0.70710677
  %v3134 = vmul.f32 %v3120, 0.70710677
  %v3135 = vmul.f32 %v3125, 0.70710677
  %v3136 = vand.u32 2147483647, %v3132
  %v3137 = vand.u32 2147483647, %v3133
  %v3138 = vand.u32 2147483647, %v3134
  %v3139 = vand.u32 2147483647, %v3135
  %v3140 = vmul.f32 %v3136, 0.3275911
  %v3141 = vmul.f32 %v3137, 0.3275911
  %v3142 = vmul.f32 %v3138, 0.3275911
  %v3143 = vmul.f32 %v3139, 0.3275911
  %v3144 = vadd.f32 %v3140, 1.0
  %v3145 = vadd.f32 %v3141, 1.0
  %v3146 = vadd.f32 %v3142, 1.0
  %v3147 = vadd.f32 %v3143, 1.0
  %v3148 = vrcp.pop %v3144
  %v3149 = vmul.f32 1.0, %v3148
  %v3150 = vrcp.pop %v3145
  %v3151 = vmul.f32 1.0, %v3150
  %v3152 = vrcp.pop %v3146
  %v3153 = vmul.f32 1.0, %v3152
  %v3154 = vrcp.pop %v3147
  %v3155 = vmul.f32 1.0, %v3154
  %v3156 = vmul.f32 %v3149, 1.0614054
  %v3157 = vmul.f32 %v3151, 1.0614054
  %v3158 = vmul.f32 %v3153, 1.0614054
  %v3159 = vmul.f32 %v3155, 1.0614054
  %v3160 = vadd.f32 %v3156, -1.4531521
  %v3161 = vadd.f32 %v3157, -1.4531521
  %v3162 = vadd.f32 %v3158, -1.4531521
  %v3163 = vadd.f32 %v3159, -1.4531521
  %v3164 = vmul.f32 %v3160, %v3149
  %v3165 = vmul.f32 %v3161, %v3151
  %v3166 = vmul.f32 %v3162, %v3153
  %v3167 = vmul.f32 %v3163, %v3155
  %v3168 = vadd.f32 %v3164, 1.4214138
  %v3169 = vadd.f32 %v3165, 1.4214138
  %v3170 = vadd.f32 %v3166, 1.4214138
  %v3171 = vadd.f32 %v3167, 1.4214138
  %v3172 = vmul.f32 %v3168, %v3149
  %v3173 = vmul.f32 %v3169, %v3151
  %v3174 = vmul.f32 %v3170, %v3153
  %v3175 = vmul.f32 %v3171, %v3155
  %v3176 = vadd.f32 %v3172, -0.28449672
  %v3177 = vadd.f32 %v3173, -0.28449672
  %v3178 = vadd.f32 %v3174, -0.28449672
  %v3179 = vadd.f32 %v3175, -0.28449672
  %v3180 = vmul.f32 %v3176, %v3149
  %v3181 = vmul.f32 %v3177, %v3151
  %v3182 = vmul.f32 %v3178, %v3153
  %v3183 = vmul.f32 %v3179, %v3155
  %v3184 = vadd.f32 %v3180, 0.2548296
  %v3185 = vadd.f32 %v3181, 0.2548296
  %v3186 = vadd.f32 %v3182, 0.2548296
  %v3187 = vadd.f32 %v3183, 0.2548296
  %v3188 = vmul.f32 %v3184, %v3149
  %v3189 = vmul.f32 %v3185, %v3151
  %v3190 = vmul.f32 %v3186, %v3153
  %v3191 = vmul.f32 %v3187, %v3155
  %v3192 = vsub.f32 0.0, %v3136
  %v3193 = vsub.f32 0.0, %v3137
  %v3194 = vsub.f32 0.0, %v3138
  %v3195 = vsub.f32 0.0, %v3139
  %v3196 = vmul.f32 %v3192, %v3136
  %v3197 = vmul.f32 %v3193, %v3137
  %v3198 = vmul.f32 %v3194, %v3138
  %v3199 = vmul.f32 %v3195, %v3139
  %v3200 = vmul.f32 %v3196, 1.442695
  %v3201 = vpow.pop %v3200
  %v3202 = vmul.f32 %v3197, 1.442695
  %v3203 = vpow.pop %v3202
  %v3204 = vmul.f32 %v3198, 1.442695
  %v3205 = vpow.pop %v3204
  %v3206 = vmul.f32 %v3199, 1.442695
  %v3207 = vpow.pop %v3206
  %v3208 = vmul.f32 %v3188, %v3201
  %v3209 = vmul.f32 %v3189, %v3203
  %v3210 = vmul.f32 %v3190, %v3205
  %v3211 = vmul.f32 %v3191, %v3207
  %v3212 = vsub.f32 1.0, %v3208
  %v3213 = vsub.f32 1.0, %v3209
  %v3214 = vsub.f32 1.0, %v3210
  %v3215 = vsub.f32 1.0, %v3211
  %vm3216 = vcmp.lt.f32.partialorder %v3132, 0.0
  %vm3217 = vcmp.lt.f32.partialorder %v3133, 0.0
  %vm3218 = vcmp.lt.f32.partialorder %v3134, 0.0
  %vm3219 = vcmp.lt.f32.partialorder %v3135, 0.0
  %v3220 = vsub.f32 0.0, %v3212
  %v3221 = vsub.f32 0.0, %v3213
  %v3222 = vsub.f32 0.0, %v3214
  %v3223 = vsub.f32 0.0, %v3215
  %v3224 = vsel %vm3216, %v3220, %v3212
  %v3225 = vsel %vm3217, %v3221, %v3213
  %v3226 = vsel %vm3218, %v3222, %v3214
  %v3227 = vsel %vm3219, %v3223, %v3215
  %v3228 = vadd.f32 %v3224, 1.0
  %v3229 = vadd.f32 %v3225, 1.0
  %v3230 = vadd.f32 %v3226, 1.0
  %v3231 = vadd.f32 %v3227, 1.0
  %v3232 = vmul.f32 %v3128, %v3228
  %v3233 = vmul.f32 %v3129, %v3229
  %v3234 = vmul.f32 %v3130, %v3230
  %v3235 = vmul.f32 %v3131, %v3231
  %s3236 = scalar_lea.vmem %s16, 64
  %v3237 = vld [vmem:[%s3236] sm:$0xff]
  %v3238 = vld [vmem:[%s3236 + $0x8] sm:$0xff]
  %v3239 = vld [vmem:[%s3236 + $0x10] sm:$0xff]
  %v3240 = vld [vmem:[%s3236 + $0x18] sm:$0xff]
  %v3241 = vld [vmem:[%s3236 + $0x20] sm:$0xff]
  %v3242 = vld [vmem:[%s3236 + $0x28] sm:$0xff]
  %v3243 = vld [vmem:[%s3236 + $0x30] sm:$0xff]
  %v3244 = vld [vmem:[%s3236 + $0x38] sm:$0xff]
  %s3245 = scalar_lea.vmem %s17, 1
  %v3246 = vld [vmem:[%s3245] sm:$0x1]
  %v3248 = vlaneseq
  %v3249 = vshrl.u32 %v3248, 7
  %v3250 = vsub.s32 0, %v3249
  %v3251 = vrot.slane %v3246, %v3250
  %v3254 = vsel %vm1710, %v3232, 0
  %v3257 = vsel %vm1710, %v3233, 0
  %v3260 = vsel %vm1710, %v3234, 0
  %v3263 = vsel %vm1710, %v3235, 0
  %3265 = vmatprep.subr.mxu0 0.0
  %3266 = vmatpush1.msra.mxu0 %v3237
  %3267 = vmatprep.subr.mxu0 0.0
  %3268 = vmatpush1.msra.mxu0 %v3238
  %3269 = vmatprep.subr.mxu0 0.0
  %3270 = vmatpush1.msra.mxu0 %v3239
  %3271 = vmatprep.subr.mxu0 0.0
  %3272 = vmatpush1.msra.mxu0 %v3240
  %3273 = vmatprep.subr.mxu0 0.0
  %3274 = vmatpush1.msra.mxu0 %v3241
  %3275 = vmatprep.subr.mxu0 0.0
  %3276 = vmatpush1.msra.mxu0 %v3242
  %3277 = vmatprep.subr.mxu0 0.0
  %3278 = vmatpush1.msra.mxu0 %v3243
  %3279 = vmatprep.subr.mxu0 0.0
  %3280 = vmatpush1.msra.mxu0 %v3244
  %3281 = vmatprep.subr.mxu0 0.0
  %3282 = vmatpush1.msra.mxu0 0.0
  %3283 = vmatprep.subr.mxu0 0.0
  %3284 = vmatpush1.msra.mxu0 0.0
  %3285 = vmatprep.subr.mxu0 0.0
  %3286 = vmatpush1.msra.mxu0 0.0
  %3287 = vmatprep.subr.mxu0 0.0
  %3288 = vmatpush1.msra.mxu0 0.0
  %3289 = vmatprep.subr.mxu0 0.0
  %3290 = vmatpush1.msra.mxu0 0.0
  %3291 = vmatprep.subr.mxu0 0.0
  %3292 = vmatpush1.msra.mxu0 0.0
  %3293 = vmatprep.subr.mxu0 0.0
  %3294 = vmatpush1.msra.mxu0 0.0
  %3295 = vmatprep.subr.mxu0 0.0
  %3296 = vmatpush1.msra.mxu0 0.0
  %3297 = vmatprep.subr.mxu0 0.0
  %3298 = vmatpush1.msra.mxu0 0.0
  %3299 = vmatprep.subr.mxu0 0.0
  %3300 = vmatpush1.msra.mxu0 0.0
  %3301 = vmatprep.subr.mxu0 0.0
  %3302 = vmatpush1.msra.mxu0 0.0
  %3303 = vmatprep.subr.mxu0 0.0
  %3304 = vmatpush1.msra.mxu0 0.0
  %3305 = vmatprep.subr.mxu0 0.0
  %3306 = vmatpush1.msra.mxu0 0.0
  %3307 = vmatprep.subr.mxu0 0.0
  %3308 = vmatpush1.msra.mxu0 0.0
  %3309 = vmatprep.subr.mxu0 0.0
  %3310 = vmatpush1.msra.mxu0 0.0
  %3311 = vmatprep.subr.mxu0 0.0
  %3312 = vmatpush1.msra.mxu0 0.0
  %3313 = vmatprep.subr.mxu0 0.0
  %3314 = vmatpush1.msra.mxu0 0.0
  %3315 = vmatprep.subr.mxu0 0.0
  %3316 = vmatpush1.msra.mxu0 0.0
  %3317 = vmatprep.subr.mxu0 0.0
  %3318 = vmatpush1.msra.mxu0 0.0
  %3319 = vmatprep.subr.mxu0 0.0
  %3320 = vmatpush1.msra.mxu0 0.0
  %3321 = vmatprep.subr.mxu0 0.0
  %3322 = vmatpush1.msra.mxu0 0.0
  %3323 = vmatprep.subr.mxu0 0.0
  %3324 = vmatpush1.msra.mxu0 0.0
  %3325 = vmatprep.subr.mxu0 0.0
  %3326 = vmatpush1.msra.mxu0 0.0
  %3327 = vmatprep.subr.mxu0 0.0
  %3328 = vmatpush1.msra.mxu0 0.0
  %3329 = vmatprep.mubr.f32.mxu0 0.0
  %3330 = vmatmul.mubr.f32.gmra.mrb[0].mxu0 %v3254
  %v3331 = vpop.f32.mrb[0].mxu0
  %v3332 = vadd.f32 %v3251, %v3331
  %v3333 = vpop.f32.mrb[0].mxu0
  %3334 = vmatprep.mubr.f32.mxu0 0.0
  %3335 = vmatmul.mubr.f32.gmra.mrb[0].mxu0 %v3257
  %v3336 = vpop.f32.mrb[0].mxu0
  %v3337 = vadd.f32 %v3251, %v3336
  %v3338 = vpop.f32.mrb[0].mxu0
  %3339 = vmatprep.mubr.f32.mxu0 0.0
  %3340 = vmatmul.mubr.f32.gmra.mrb[0].mxu0 %v3260
  %v3341 = vpop.f32.mrb[0].mxu0
  %v3342 = vpop.f32.mrb[0].mxu0
  %3343 = vmatprep.mubr.f32.mxu0 0.0
  %3344 = vmatmul.mubr.f32.gmra.mrb[0].mxu0 %v3263
  %v3345 = vpop.f32.mrb[0].mxu0
  %v3346 = vpop.f32.mrb[0].mxu0
  %3347 = vdwg.mxu0
  %v3348 = vadd.f32 %v2938, %v3332
  %v3349 = vadd.f32 %v2939, %v3337
  %v3351 = vrot.slane %v3349, 4
  %v3353 = vsel %vm250, %v3348, %v3351
  %3354 = vst.msk [vmem:[%s18] sm:$0x3] %vm287, %v3353
  // Predicated region
  $region74: #{fnirs_pret_forward.6} parent=0 // pred_check
    _
  $region75: #{fnirs_pret_forward.6} parent=0 // pred_check_branch
    %3356 = sbr.rel (0) target = $region77
  $region76: #{fnirs_pret_forward.6} parent=0 // pred_region
    _
  $region77: #{fnirs_pret_forward.6} parent=0 // pred_fallthru
    _
  // Predicated region
  $region78: #{fnirs_pret_forward.6} parent=0 // pred_check
    _
  $region79: #{fnirs_pret_forward.6} parent=0 // pred_check_branch
    %3358 = sbr.rel (0) target = $region81
  $region80: #{fnirs_pret_forward.6} parent=0 // pred_region
    _
  $region81: #{fnirs_pret_forward.6} parent=0 // pred_fallthru
    _

// kernel: fnirs_pret_forward.5
$region0: #{fnirs_pret_forward.5}
  #allocation0 [shape = 'u32[]', space=smem, size = 0x4, offset = 0x4, fixed_abs, tag = 'smem constant byte address 0x4 - core index']
  #allocation1 [shape = 'u32[144,128]{1,0:T(1,128)}', space=vmem, size = 0x12000, scoped, tag = 'internal scratch']
  %s0 = inlined_call_operand.vmem [shape: f32[16,640], index: 0, kind: input, shape index: {}]
  %s1 = inlined_call_operand.vmem [shape: f32[640,32], index: 1, kind: input, shape index: {}]
  %s2 = inlined_call_operand.vmem [shape: f32[1,32], index: 2, kind: input, shape index: {}]
  %s3 = inlined_call_operand.vmem [shape: f32[1,32], index: 3, kind: input, shape index: {}]
  %s4 = inlined_call_operand.vmem [shape: f32[1,32], index: 4, kind: input, shape index: {}]
  %s5 = inlined_call_operand.vmem [shape: f32[1,32], index: 5, kind: input, shape index: {}]
  %s6 = inlined_call_operand.vmem [shape: f32[9,32], index: 6, kind: input, shape index: {}]
  %s7 = inlined_call_operand.vmem [shape: f32[2,1,32], index: 7, kind: input, shape index: {}]
  %s8 = inlined_call_operand.vmem [shape: f32[2,1,32], index: 8, kind: input, shape index: {}]
  %s9 = inlined_call_operand.vmem [shape: f32[2,32,96], index: 9, kind: input, shape index: {}]
  %s10 = inlined_call_operand.vmem [shape: f32[2,32,32], index: 10, kind: input, shape index: {}]
  %s11 = inlined_call_operand.vmem [shape: f32[2,1,32], index: 11, kind: input, shape index: {}]
  %s12 = inlined_call_operand.vmem [shape: f32[2,1,32], index: 12, kind: input, shape index: {}]
  %s13 = inlined_call_operand.vmem [shape: f32[2,1,32], index: 13, kind: input, shape index: {}]
  %s14 = inlined_call_operand.vmem [shape: f32[2,32,64], index: 14, kind: input, shape index: {}]
  %s15 = inlined_call_operand.vmem [shape: f32[2,1,64], index: 15, kind: input, shape index: {}]
  %s16 = inlined_call_operand.vmem [shape: f32[2,64,32], index: 16, kind: input, shape index: {}]
  %s17 = inlined_call_operand.vmem [shape: f32[2,1,32], index: 17, kind: input, shape index: {}]
  %s18 = inlined_call_operand.vmem [shape: f32[2,32], index: 18, kind: output, shape index: {}]
  %s19 = sld [smem:[#allocation0]]
  $region82: #{fnirs_pret_forward.5} parent=0
    _
  %s21 = ssub.s32 1, %s19
  %s22 = scalar_select 0, %s21, %s19
  // Predicated region
  $region2: #{fnirs_pret_forward.5} parent=0 // pred_check
    _
  $region3: #{fnirs_pret_forward.5} parent=0 // pred_check_branch
    %24 = sbr.rel (0) target = $region5
  $region4: #{fnirs_pret_forward.5} parent=0 // pred_region
    _
  $region5: #{fnirs_pret_forward.5} parent=0 // pred_fallthru
    _
  // Predicated region
  $region6: #{fnirs_pret_forward.5} parent=0 // pred_check
    _
  $region7: #{fnirs_pret_forward.5} parent=0 // pred_check_branch
    %26 = sbr.rel (0) target = $region9
  $region8: #{fnirs_pret_forward.5} parent=0 // pred_region
    _
  $region9: #{fnirs_pret_forward.5} parent=0 // pred_fallthru
    _
  // Predicated region
  $region10: #{fnirs_pret_forward.5} parent=0 // pred_check
    _
  $region11: #{fnirs_pret_forward.5} parent=0 // pred_check_branch
    %28 = sbr.rel (0) target = $region13
  $region12: #{fnirs_pret_forward.5} parent=0 // pred_region
    _
  $region13: #{fnirs_pret_forward.5} parent=0 // pred_fallthru
    _
  // Predicated region
  $region14: #{fnirs_pret_forward.5} parent=0 // pred_check
    _
  $region15: #{fnirs_pret_forward.5} parent=0 // pred_check_branch
    %30 = sbr.rel (0) target = $region17
  $region16: #{fnirs_pret_forward.5} parent=0 // pred_region
    _
  $region17: #{fnirs_pret_forward.5} parent=0 // pred_fallthru
    _
  // Predicated region
  $region18: #{fnirs_pret_forward.5} parent=0 // pred_check
    _
  $region19: #{fnirs_pret_forward.5} parent=0 // pred_check_branch
    %32 = sbr.rel (0) target = $region21
  $region20: #{fnirs_pret_forward.5} parent=0 // pred_region
    _
  $region21: #{fnirs_pret_forward.5} parent=0 // pred_fallthru
    _
  // Predicated region
  $region22: #{fnirs_pret_forward.5} parent=0 // pred_check
    _
  $region23: #{fnirs_pret_forward.5} parent=0 // pred_check_branch
    %34 = sbr.rel (0) target = $region25
  $region24: #{fnirs_pret_forward.5} parent=0 // pred_region
    _
  $region25: #{fnirs_pret_forward.5} parent=0 // pred_fallthru
    _
  // Predicated region
  $region26: #{fnirs_pret_forward.5} parent=0 // pred_check
    _
  $region27: #{fnirs_pret_forward.5} parent=0 // pred_check_branch
    %36 = sbr.rel (0) target = $region29
  $region28: #{fnirs_pret_forward.5} parent=0 // pred_region
    _
  $region29: #{fnirs_pret_forward.5} parent=0 // pred_fallthru
    _
  // Predicated region
  $region30: #{fnirs_pret_forward.5} parent=0 // pred_check
    _
  $region31: #{fnirs_pret_forward.5} parent=0 // pred_check_branch
    %38 = sbr.rel (0) target = $region33
  $region32: #{fnirs_pret_forward.5} parent=0 // pred_region
    _
  $region33: #{fnirs_pret_forward.5} parent=0 // pred_fallthru
    _
  // Predicated region
  $region34: #{fnirs_pret_forward.5} parent=0 // pred_check
    _
  $region35: #{fnirs_pret_forward.5} parent=0 // pred_check_branch
    %40 = sbr.rel (0) target = $region37
  $region36: #{fnirs_pret_forward.5} parent=0 // pred_region
    _
  $region37: #{fnirs_pret_forward.5} parent=0 // pred_fallthru
    _
  // Predicated region
  $region38: #{fnirs_pret_forward.5} parent=0 // pred_check
    _
  $region39: #{fnirs_pret_forward.5} parent=0 // pred_check_branch
    %42 = sbr.rel (0) target = $region41
  $region40: #{fnirs_pret_forward.5} parent=0 // pred_region
    _
  $region41: #{fnirs_pret_forward.5} parent=0 // pred_fallthru
    _
  // Predicated region
  $region42: #{fnirs_pret_forward.5} parent=0 // pred_check
    _
  $region43: #{fnirs_pret_forward.5} parent=0 // pred_check_branch
    %44 = sbr.rel (0) target = $region45
  $region44: #{fnirs_pret_forward.5} parent=0 // pred_region
    _
  $region45: #{fnirs_pret_forward.5} parent=0 // pred_fallthru
    _
  // Predicated region
  $region46: #{fnirs_pret_forward.5} parent=0 // pred_check
    _
  $region47: #{fnirs_pret_forward.5} parent=0 // pred_check_branch
    %46 = sbr.rel (0) target = $region49
  $region48: #{fnirs_pret_forward.5} parent=0 // pred_region
    _
  $region49: #{fnirs_pret_forward.5} parent=0 // pred_fallthru
    _
  // Predicated region
  $region50: #{fnirs_pret_forward.5} parent=0 // pred_check
    _
  $region51: #{fnirs_pret_forward.5} parent=0 // pred_check_branch
    %48 = sbr.rel (0) target = $region53
  $region52: #{fnirs_pret_forward.5} parent=0 // pred_region
    _
  $region53: #{fnirs_pret_forward.5} parent=0 // pred_fallthru
    _
  // Predicated region
  $region54: #{fnirs_pret_forward.5} parent=0 // pred_check
    _
  $region55: #{fnirs_pret_forward.5} parent=0 // pred_check_branch
    %50 = sbr.rel (0) target = $region57
  $region56: #{fnirs_pret_forward.5} parent=0 // pred_region
    _
  $region57: #{fnirs_pret_forward.5} parent=0 // pred_fallthru
    _
  // Predicated region
  $region58: #{fnirs_pret_forward.5} parent=0 // pred_check
    _
  $region59: #{fnirs_pret_forward.5} parent=0 // pred_check_branch
    %52 = sbr.rel (0) target = $region61
  $region60: #{fnirs_pret_forward.5} parent=0 // pred_region
    _
  $region61: #{fnirs_pret_forward.5} parent=0 // pred_fallthru
    _
  // Predicated region
  $region62: #{fnirs_pret_forward.5} parent=0 // pred_check
    _
  $region63: #{fnirs_pret_forward.5} parent=0 // pred_check_branch
    %54 = sbr.rel (0) target = $region65
  $region64: #{fnirs_pret_forward.5} parent=0 // pred_region
    _
  $region65: #{fnirs_pret_forward.5} parent=0 // pred_fallthru
    _
  // Predicated region
  $region66: #{fnirs_pret_forward.5} parent=0 // pred_check
    _
  $region67: #{fnirs_pret_forward.5} parent=0 // pred_check_branch
    %56 = sbr.rel (0) target = $region69
  $region68: #{fnirs_pret_forward.5} parent=0 // pred_region
    _
  $region69: #{fnirs_pret_forward.5} parent=0 // pred_fallthru
    _
  // Predicated region
  $region70: #{fnirs_pret_forward.5} parent=0 // pred_check
    _
  $region71: #{fnirs_pret_forward.5} parent=0 // pred_check_branch
    %58 = sbr.rel (0) target = $region73
  $region72: #{fnirs_pret_forward.5} parent=0 // pred_region
    _
  $region73: #{fnirs_pret_forward.5} parent=0 // pred_fallthru
    _
  %v59 = vld [vmem:[%s0] sm:$0xff]
  %v60 = vld [vmem:[%s0 + $0x8] sm:$0xff]
  %v61 = vld [vmem:[%s0 + $0x10] sm:$0xff]
  %v62 = vld [vmem:[%s0 + $0x18] sm:$0xff]
  %v63 = vld [vmem:[%s0 + $0x20] sm:$0xff]
  %v64 = vld [vmem:[%s0 + $0x28] sm:$0xff]
  %v65 = vld [vmem:[%s0 + $0x30] sm:$0xff]
  %v66 = vld [vmem:[%s0 + $0x38] sm:$0xff]
  %v67 = vld [vmem:[%s0 + $0x40] sm:$0xff]
  %v68 = vld [vmem:[%s0 + $0x48] sm:$0xff]
  %v69 = vld [vmem:[%s1] sm:$0xff]
  %v70 = vld [vmem:[%s1 + $0x8] sm:$0xff]
  %v71 = vld [vmem:[%s1 + $0x10] sm:$0xff]
  %v72 = vld [vmem:[%s1 + $0x18] sm:$0xff]
  %v73 = vld [vmem:[%s1 + $0x20] sm:$0xff]
  %v74 = vld [vmem:[%s1 + $0x28] sm:$0xff]
  %v75 = vld [vmem:[%s1 + $0x30] sm:$0xff]
  %v76 = vld [vmem:[%s1 + $0x38] sm:$0xff]
  %v77 = vld [vmem:[%s1 + $0x40] sm:$0xff]
  %v78 = vld [vmem:[%s1 + $0x48] sm:$0xff]
  %v79 = vld [vmem:[%s1 + $0x50] sm:$0xff]
  %v80 = vld [vmem:[%s1 + $0x58] sm:$0xff]
  %v81 = vld [vmem:[%s1 + $0x60] sm:$0xff]
  %v82 = vld [vmem:[%s1 + $0x68] sm:$0xff]
  %v83 = vld [vmem:[%s1 + $0x70] sm:$0xff]
  %v84 = vld [vmem:[%s1 + $0x78] sm:$0xff]
  %v85 = vld [vmem:[%s1 + $0x80] sm:$0xff]
  %v86 = vld [vmem:[%s1 + $0x88] sm:$0xff]
  %v87 = vld [vmem:[%s1 + $0x90] sm:$0xff]
  %v88 = vld [vmem:[%s1 + $0x98] sm:$0xff]
  %v89 = vld [vmem:[%s1 + $0xa0] sm:$0xff]
  %v90 = vld [vmem:[%s1 + $0xa8] sm:$0xff]
  %v91 = vld [vmem:[%s1 + $0xb0] sm:$0xff]
  %v92 = vld [vmem:[%s1 + $0xb8] sm:$0xff]
  %v93 = vld [vmem:[%s1 + $0xc0] sm:$0xff]
  %v94 = vld [vmem:[%s1 + $0xc8] sm:$0xff]
  %v95 = vld [vmem:[%s1 + $0xd0] sm:$0xff]
  %v96 = vld [vmem:[%s1 + $0xd8] sm:$0xff]
  %v97 = vld [vmem:[%s1 + $0xe0] sm:$0xff]
  %v98 = vld [vmem:[%s1 + $0xe8] sm:$0xff]
  %v99 = vld [vmem:[%s1 + $0xf0] sm:$0xff]
  %v100 = vld [vmem:[%s1 + $0xf8] sm:$0xff]
  %v101 = vld [vmem:[%s1 + $0x100] sm:$0xff]
  %v102 = vld [vmem:[%s1 + $0x108] sm:$0xff]
  %v103 = vld [vmem:[%s1 + $0x110] sm:$0xff]
  %v104 = vld [vmem:[%s1 + $0x118] sm:$0xff]
  %v105 = vld [vmem:[%s1 + $0x120] sm:$0xff]
  %v106 = vld [vmem:[%s1 + $0x128] sm:$0xff]
  %v107 = vld [vmem:[%s1 + $0x130] sm:$0xff]
  %v108 = vld [vmem:[%s1 + $0x138] sm:$0xff]
  %v109 = vld [vmem:[%s1 + $0x140] sm:$0xff]
  %v110 = vld [vmem:[%s1 + $0x148] sm:$0xff]
  %v111 = vld [vmem:[%s1 + $0x150] sm:$0xff]
  %v112 = vld [vmem:[%s1 + $0x158] sm:$0xff]
  %v113 = vld [vmem:[%s1 + $0x160] sm:$0xff]
  %v114 = vld [vmem:[%s1 + $0x168] sm:$0xff]
  %v115 = vld [vmem:[%s1 + $0x170] sm:$0xff]
  %v116 = vld [vmem:[%s1 + $0x178] sm:$0xff]
  %v117 = vld [vmem:[%s1 + $0x180] sm:$0xff]
  %v118 = vld [vmem:[%s1 + $0x188] sm:$0xff]
  %v119 = vld [vmem:[%s1 + $0x190] sm:$0xff]
  %v120 = vld [vmem:[%s1 + $0x198] sm:$0xff]
  %v121 = vld [vmem:[%s1 + $0x1a0] sm:$0xff]
  %v122 = vld [vmem:[%s1 + $0x1a8] sm:$0xff]
  %v123 = vld [vmem:[%s1 + $0x1b0] sm:$0xff]
  %v124 = vld [vmem:[%s1 + $0x1b8] sm:$0xff]
  %v125 = vld [vmem:[%s1 + $0x1c0] sm:$0xff]
  %v126 = vld [vmem:[%s1 + $0x1c8] sm:$0xff]
  %v127 = vld [vmem:[%s1 + $0x1d0] sm:$0xff]
  %v128 = vld [vmem:[%s1 + $0x1d8] sm:$0xff]
  %v129 = vld [vmem:[%s1 + $0x1e0] sm:$0xff]
  %v130 = vld [vmem:[%s1 + $0x1e8] sm:$0xff]
  %v131 = vld [vmem:[%s1 + $0x1f0] sm:$0xff]
  %v132 = vld [vmem:[%s1 + $0x1f8] sm:$0xff]
  %v133 = vld [vmem:[%s1 + $0x200] sm:$0xff]
  %v134 = vld [vmem:[%s1 + $0x208] sm:$0xff]
  %v135 = vld [vmem:[%s1 + $0x210] sm:$0xff]
  %v136 = vld [vmem:[%s1 + $0x218] sm:$0xff]
  %v137 = vld [vmem:[%s1 + $0x220] sm:$0xff]
  %v138 = vld [vmem:[%s1 + $0x228] sm:$0xff]
  %v139 = vld [vmem:[%s1 + $0x230] sm:$0xff]
  %v140 = vld [vmem:[%s1 + $0x238] sm:$0xff]
  %v141 = vld [vmem:[%s1 + $0x240] sm:$0xff]
  %v142 = vld [vmem:[%s1 + $0x248] sm:$0xff]
  %v143 = vld [vmem:[%s1 + $0x250] sm:$0xff]
  %v144 = vld [vmem:[%s1 + $0x258] sm:$0xff]
  %v145 = vld [vmem:[%s1 + $0x260] sm:$0xff]
  %v146 = vld [vmem:[%s1 + $0x268] sm:$0xff]
  %v147 = vld [vmem:[%s1 + $0x270] sm:$0xff]
  %v148 = vld [vmem:[%s1 + $0x278] sm:$0xff]
  %v149 = vld [vmem:[%s2] sm:$0x1]
  %v151 = vlaneseq
  %v152 = vshrl.u32 %v151, 7
  %v153 = vsub.s32 0, %v152
  %v154 = vrot.slane %v149, %v153
  %156 = vmatprep.subr.mxu0 0.0
  %157 = vmatpush1.msra.mxu0 %v69
  %158 = vmatprep.subr.mxu0 0.0
  %159 = vmatpush1.msra.mxu0 %v70
  %160 = vmatprep.subr.mxu0 0.0
  %161 = vmatpush1.msra.mxu0 %v71
  %162 = vmatprep.subr.mxu0 0.0
  %163 = vmatpush1.msra.mxu0 %v72
  %164 = vmatprep.subr.mxu0 0.0
  %165 = vmatpush1.msra.mxu0 %v73
  %166 = vmatprep.subr.mxu0 0.0
  %167 = vmatpush1.msra.mxu0 %v74
  %168 = vmatprep.subr.mxu0 0.0
  %169 = vmatpush1.msra.mxu0 %v75
  %170 = vmatprep.subr.mxu0 0.0
  %171 = vmatpush1.msra.mxu0 %v76
  %172 = vmatprep.subr.mxu0 0.0
  %173 = vmatpush1.msra.mxu0 %v77
  %174 = vmatprep.subr.mxu0 0.0
  %175 = vmatpush1.msra.mxu0 %v78
  %176 = vmatprep.subr.mxu0 0.0
  %177 = vmatpush1.msra.mxu0 %v79
  %178 = vmatprep.subr.mxu0 0.0
  %179 = vmatpush1.msra.mxu0 %v80
  %180 = vmatprep.subr.mxu0 0.0
  %181 = vmatpush1.msra.mxu0 %v81
  %182 = vmatprep.subr.mxu0 0.0
  %183 = vmatpush1.msra.mxu0 %v82
  %184 = vmatprep.subr.mxu0 0.0
  %185 = vmatpush1.msra.mxu0 %v83
  %186 = vmatprep.subr.mxu0 0.0
  %187 = vmatpush1.msra.mxu0 %v84
  %188 = vmatprep.subr.mxu0 0.0
  %189 = vmatpush1.msra.mxu0 %v85
  %190 = vmatprep.subr.mxu0 0.0
  %191 = vmatpush1.msra.mxu0 %v86
  %192 = vmatprep.subr.mxu0 0.0
  %193 = vmatpush1.msra.mxu0 %v87
  %194 = vmatprep.subr.mxu0 0.0
  %195 = vmatpush1.msra.mxu0 %v88
  %196 = vmatprep.subr.mxu0 0.0
  %197 = vmatpush1.msra.mxu0 %v89
  %198 = vmatprep.subr.mxu0 0.0
  %199 = vmatpush1.msra.mxu0 %v90
  %200 = vmatprep.subr.mxu0 0.0
  %201 = vmatpush1.msra.mxu0 %v91
  %202 = vmatprep.subr.mxu0 0.0
  %203 = vmatpush1.msra.mxu0 %v92
  %204 = vmatprep.subr.mxu0 0.0
  %205 = vmatpush1.msra.mxu0 %v93
  %206 = vmatprep.subr.mxu0 0.0
  %207 = vmatpush1.msra.mxu0 %v94
  %208 = vmatprep.subr.mxu0 0.0
  %209 = vmatpush1.msra.mxu0 %v95
  %210 = vmatprep.subr.mxu0 0.0
  %211 = vmatpush1.msra.mxu0 %v96
  %212 = vmatprep.subr.mxu0 0.0
  %213 = vmatpush1.msra.mxu0 %v97
  %214 = vmatprep.subr.mxu0 0.0
  %215 = vmatpush1.msra.mxu0 %v98
  %216 = vmatprep.subr.mxu0 0.0
  %217 = vmatpush1.msra.mxu0 %v99
  %218 = vmatprep.subr.mxu0 0.0
  %219 = vmatpush1.msra.mxu0 %v100
  %220 = vmatprep.mubr.f32.mxu0 %v60
  %221 = vmatmul.mubr.f32.gmra.mrb[0].mxu0 %v59
  %v222 = vpop.f32.mrb[0].mxu0
  %v223 = vadd.f32 %v154, %v222
  %v224 = vpop.f32.mrb[0].mxu0
  %225 = vmatprep.mubr.f32.mxu0 %v65
  %226 = vmatmul.mubr.f32.gmra.mrb[0].mxu0 %v64
  %v227 = vpop.f32.mrb[0].mxu0
  %v228 = vadd.f32 %v154, %v227
  %v229 = vpop.f32.mrb[0].mxu0
  %230 = vdwg.mxu0
  %231 = vmatprep.subr.mxu0 0.0
  %232 = vmatpush1.msra.mxu0 %v101
  %233 = vmatprep.subr.mxu0 0.0
  %234 = vmatpush1.msra.mxu0 %v102
  %235 = vmatprep.subr.mxu0 0.0
  %236 = vmatpush1.msra.mxu0 %v103
  %237 = vmatprep.subr.mxu0 0.0
  %238 = vmatpush1.msra.mxu0 %v104
  %239 = vmatprep.subr.mxu0 0.0
  %240 = vmatpush1.msra.mxu0 %v105
  %241 = vmatprep.subr.mxu0 0.0
  %242 = vmatpush1.msra.mxu0 %v106
  %243 = vmatprep.subr.mxu0 0.0
  %244 = vmatpush1.msra.mxu0 %v107
  %245 = vmatprep.subr.mxu0 0.0
  %246 = vmatpush1.msra.mxu0 %v108
  %247 = vmatprep.subr.mxu0 0.0
  %248 = vmatpush1.msra.mxu0 %v109
  %249 = vmatprep.subr.mxu0 0.0
  %250 = vmatpush1.msra.mxu0 %v110
  %251 = vmatprep.subr.mxu0 0.0
  %252 = vmatpush1.msra.mxu0 %v111
  %253 = vmatprep.subr.mxu0 0.0
  %254 = vmatpush1.msra.mxu0 %v112
  %255 = vmatprep.subr.mxu0 0.0
  %256 = vmatpush1.msra.mxu0 %v113
  %257 = vmatprep.subr.mxu0 0.0
  %258 = vmatpush1.msra.mxu0 %v114
  %259 = vmatprep.subr.mxu0 0.0
  %260 = vmatpush1.msra.mxu0 %v115
  %261 = vmatprep.subr.mxu0 0.0
  %262 = vmatpush1.msra.mxu0 %v116
  %263 = vmatprep.subr.mxu0 0.0
  %264 = vmatpush1.msra.mxu0 %v117
  %265 = vmatprep.subr.mxu0 0.0
  %266 = vmatpush1.msra.mxu0 %v118
  %267 = vmatprep.subr.mxu0 0.0
  %268 = vmatpush1.msra.mxu0 %v119
  %269 = vmatprep.subr.mxu0 0.0
  %270 = vmatpush1.msra.mxu0 %v120
  %271 = vmatprep.subr.mxu0 0.0
  %272 = vmatpush1.msra.mxu0 %v121
  %273 = vmatprep.subr.mxu0 0.0
  %274 = vmatpush1.msra.mxu0 %v122
  %275 = vmatprep.subr.mxu0 0.0
  %276 = vmatpush1.msra.mxu0 %v123
  %277 = vmatprep.subr.mxu0 0.0
  %278 = vmatpush1.msra.mxu0 %v124
  %279 = vmatprep.subr.mxu0 0.0
  %280 = vmatpush1.msra.mxu0 %v125
  %281 = vmatprep.subr.mxu0 0.0
  %282 = vmatpush1.msra.mxu0 %v126
  %283 = vmatprep.subr.mxu0 0.0
  %284 = vmatpush1.msra.mxu0 %v127
  %285 = vmatprep.subr.mxu0 0.0
  %286 = vmatpush1.msra.mxu0 %v128
  %287 = vmatprep.subr.mxu0 0.0
  %288 = vmatpush1.msra.mxu0 %v129
  %289 = vmatprep.subr.mxu0 0.0
  %290 = vmatpush1.msra.mxu0 %v130
  %291 = vmatprep.subr.mxu0 0.0
  %292 = vmatpush1.msra.mxu0 %v131
  %293 = vmatprep.subr.mxu0 0.0
  %294 = vmatpush1.msra.mxu0 %v132
  %295 = vmatprep.mubr.f32.mxu0 %v62
  %296 = vmatmul.mubr.f32.gmra.mrb[0].mxu0 %v61
  %v297 = vpop.f32.mrb[0].mxu0
  %v298 = vadd.f32 %v223, %v297
  %v299 = vpop.f32.mrb[0].mxu0
  %300 = vmatprep.mubr.f32.mxu0 %v67
  %301 = vmatmul.mubr.f32.gmra.mrb[0].mxu0 %v66
  %v302 = vpop.f32.mrb[0].mxu0
  %v303 = vadd.f32 %v228, %v302
  %v304 = vpop.f32.mrb[0].mxu0
  %305 = vdwg.mxu0
  %306 = vmatprep.subr.mxu0 0.0
  %307 = vmatpush1.msra.mxu0 %v133
  %308 = vmatprep.subr.mxu0 0.0
  %309 = vmatpush1.msra.mxu0 %v134
  %310 = vmatprep.subr.mxu0 0.0
  %311 = vmatpush1.msra.mxu0 %v135
  %312 = vmatprep.subr.mxu0 0.0
  %313 = vmatpush1.msra.mxu0 %v136
  %314 = vmatprep.subr.mxu0 0.0
  %315 = vmatpush1.msra.mxu0 %v137
  %316 = vmatprep.subr.mxu0 0.0
  %317 = vmatpush1.msra.mxu0 %v138
  %318 = vmatprep.subr.mxu0 0.0
  %319 = vmatpush1.msra.mxu0 %v139
  %320 = vmatprep.subr.mxu0 0.0
  %321 = vmatpush1.msra.mxu0 %v140
  %322 = vmatprep.subr.mxu0 0.0
  %323 = vmatpush1.msra.mxu0 %v141
  %324 = vmatprep.subr.mxu0 0.0
  %325 = vmatpush1.msra.mxu0 %v142
  %326 = vmatprep.subr.mxu0 0.0
  %327 = vmatpush1.msra.mxu0 %v143
  %328 = vmatprep.subr.mxu0 0.0
  %329 = vmatpush1.msra.mxu0 %v144
  %330 = vmatprep.subr.mxu0 0.0
  %331 = vmatpush1.msra.mxu0 %v145
  %332 = vmatprep.subr.mxu0 0.0
  %333 = vmatpush1.msra.mxu0 %v146
  %334 = vmatprep.subr.mxu0 0.0
  %335 = vmatpush1.msra.mxu0 %v147
  %336 = vmatprep.subr.mxu0 0.0
  %337 = vmatpush1.msra.mxu0 %v148
  %338 = vmatprep.subr.mxu0 0.0
  %339 = vmatpush1.msra.mxu0 0.0
  %340 = vmatprep.subr.mxu0 0.0
  %341 = vmatpush1.msra.mxu0 0.0
  %342 = vmatprep.subr.mxu0 0.0
  %343 = vmatpush1.msra.mxu0 0.0
  %344 = vmatprep.subr.mxu0 0.0
  %345 = vmatpush1.msra.mxu0 0.0
  %346 = vmatprep.subr.mxu0 0.0
  %347 = vmatpush1.msra.mxu0 0.0
  %348 = vmatprep.subr.mxu0 0.0
  %349 = vmatpush1.msra.mxu0 0.0
  %350 = vmatprep.subr.mxu0 0.0
  %351 = vmatpush1.msra.mxu0 0.0
  %352 = vmatprep.subr.mxu0 0.0
  %353 = vmatpush1.msra.mxu0 0.0
  %354 = vmatprep.subr.mxu0 0.0
  %355 = vmatpush1.msra.mxu0 0.0
  %356 = vmatprep.subr.mxu0 0.0
  %357 = vmatpush1.msra.mxu0 0.0
  %358 = vmatprep.subr.mxu0 0.0
  %359 = vmatpush1.msra.mxu0 0.0
  %360 = vmatprep.subr.mxu0 0.0
  %361 = vmatpush1.msra.mxu0 0.0
  %362 = vmatprep.subr.mxu0 0.0
  %363 = vmatpush1.msra.mxu0 0.0
  %364 = vmatprep.subr.mxu0 0.0
  %365 = vmatpush1.msra.mxu0 0.0
  %366 = vmatprep.subr.mxu0 0.0
  %367 = vmatpush1.msra.mxu0 0.0
  %368 = vmatprep.subr.mxu0 0.0
  %369 = vmatpush1.msra.mxu0 0.0
  %370 = vmatprep.mubr.f32.mxu0 0.0
  %371 = vmatmul.mubr.f32.gmra.mrb[0].mxu0 %v63
  %v372 = vpop.f32.mrb[0].mxu0
  %v373 = vadd.f32 %v298, %v372
  %v374 = vpop.f32.mrb[0].mxu0
  %375 = vmatprep.mubr.f32.mxu0 0.0
  %376 = vmatmul.mubr.f32.gmra.mrb[0].mxu0 %v68
  %v377 = vpop.f32.mrb[0].mxu0
  %v378 = vadd.f32 %v303, %v377
  %v379 = vpop.f32.mrb[0].mxu0
  %380 = vdwg.mxu0
  %v381 = vld [vmem:[%s3] sm:$0x1]
  %v382 = vld [vmem:[%s4] sm:$0x1]
  %vm383 = vcmask 261120
  %v384 = vsel %vm383, %v373, 0.0
  %385 = vadd.xlane.f32.xlu0 %v384
  %v386 = vpop.xlane.xlu0 %385
  %v387 = vsel %vm383, %v378, 0.0
  %388 = vadd.xlane.f32.xlu0 %v387
  %v389 = vpop.xlane.xlu0 %388
  %v390 = vrcp.pop 32.0
  %v391 = vmul.f32 %v386, %v390
  %v392 = vmul.f32 %v389, %v390
  %v393 = vsub.f32 %v373, %v391
  %v394 = vsub.f32 %v378, %v392
  %v395 = vmul.f32 %v393, %v393
  %v396 = vmul.f32 %v394, %v394
  %v397 = vsel %vm383, %v395, 0.0
  %398 = vadd.xlane.f32.xlu0 %v397
  %v399 = vpop.xlane.xlu0 %398
  %v400 = vsel %vm383, %v396, 0.0
  %401 = vadd.xlane.f32.xlu0 %v400
  %v402 = vpop.xlane.xlu0 %401
  %v403 = vmul.f32 %v399, %v390
  %v404 = vmul.f32 %v402, %v390
  %v405 = vadd.f32 %v403, 1e-05
  %v406 = vadd.f32 %v404, 1e-05
  %v407 = vrsqrt.pop %v405
  %v408 = vrsqrt.pop %v406
  %v409 = vmul.f32 %v393, %v407
  %v410 = vmul.f32 %v394, %v408
  %v412 = vlaneseq
  %v413 = vshrl.u32 %v412, 7
  %v414 = vsub.s32 0, %v413
  %v415 = vrot.slane %v381, %v414
  %v417 = vmul.f32 %v409, %v415
  %v418 = vmul.f32 %v410, %v415
  %v420 = vlaneseq
  %v421 = vshrl.u32 %v420, 7
  %v422 = vsub.s32 0, %v421
  %v423 = vrot.slane %v382, %v422
  %v425 = vadd.f32 %v417, %v423
  %v426 = vadd.f32 %v418, %v423
  %v427 = vld [vmem:[%s6] sm:$0xff]
  %v428 = vld [vmem:[%s6 + $0x8] sm:$0x1]
  %v429 = vld [vmem:[%s5] sm:$0x1]
  %v430 = vadd.f32 %v429, %v427
  %vm433 = vcmask 1046528
  %v434 = vrot.slane %v427, 1
  %v435 = vrot.slane %v428, 1
  %v436 = vsel %vm433, %v434, %v435
  %v438 = vadd.f32 %v425, %v436
  %v439 = vadd.f32 %v426, %v436
  %v441 = vrot.slane %v438, 7
  %v444 = vlaneseq
  %v445 = vshrl.u32 %v444, 7
  %v446 = vsub.s32 0, %v445
  %v447 = vrot.slane %v430, %v446
  %v450 = vrot.slane %v439, 6
  %vm452 = vcmask 1040384
  %v453 = vsel %vm452, %v430, %v441
  %v454 = vsel %vm452, %v441, %v447
  %vm455 = vcmask 1041408
  %v456 = vsel %vm455, %v454, %v450
  %v457 = vld [vmem:[%s7] sm:$0x1]
  %v458 = vld [vmem:[%s8] sm:$0x1]
  %v459 = vsel %vm383, %v453, 0.0
  %460 = vadd.xlane.f32.xlu0 %v459
  %v461 = vpop.xlane.xlu0 %460
  %v462 = vsel %vm383, %v456, 0.0
  %463 = vadd.xlane.f32.xlu0 %v462
  %v464 = vpop.xlane.xlu0 %463
  %vm465 = vcmask 254976
  %v466 = vsel %vm465, %v450, 0.0
  %467 = vadd.xlane.f32.xlu0 %v466
  %v468 = vpop.xlane.xlu0 %467
  %v469 = vmul.f32 %v461, %v390
  %v470 = vmul.f32 %v464, %v390
  %v471 = vmul.f32 %v468, %v390
  %v472 = vsub.f32 %v453, %v469
  %v473 = vsub.f32 %v456, %v470
  %v474 = vsub.f32 %v450, %v471
  %v475 = vmul.f32 %v472, %v472
  %v476 = vmul.f32 %v473, %v473
  %v477 = vmul.f32 %v474, %v474
  %v478 = vsel %vm383, %v475, 0.0
  %479 = vadd.xlane.f32.xlu0 %v478
  %v480 = vpop.xlane.xlu0 %479
  %v481 = vsel %vm383, %v476, 0.0
  %482 = vadd.xlane.f32.xlu0 %v481
  %v483 = vpop.xlane.xlu0 %482
  %v484 = vsel %vm465, %v477, 0.0
  %485 = vadd.xlane.f32.xlu0 %v484
  %v486 = vpop.xlane.xlu0 %485
  %v487 = vmul.f32 %v480, %v390
  %v488 = vmul.f32 %v483, %v390
  %v489 = vmul.f32 %v486, %v390
  %v490 = vadd.f32 %v487, 1e-05
  %v491 = vadd.f32 %v488, 1e-05
  %v492 = vadd.f32 %v489, 1e-05
  %v493 = vrsqrt.pop %v490
  %v494 = vrsqrt.pop %v491
  %v495 = vrsqrt.pop %v492
  %v496 = vmul.f32 %v472, %v493
  %v497 = vmul.f32 %v473, %v494
  %v498 = vmul.f32 %v474, %v495
  %v500 = vlaneseq
  %v501 = vshrl.u32 %v500, 7
  %v502 = vsub.s32 0, %v501
  %v503 = vrot.slane %v457, %v502
  %v505 = vmul.f32 %v496, %v503
  %v506 = vmul.f32 %v497, %v503
  %v507 = vmul.f32 %v498, %v503
  %v509 = vlaneseq
  %v510 = vshrl.u32 %v509, 7
  %v511 = vsub.s32 0, %v510
  %v512 = vrot.slane %v458, %v511
  %v514 = vadd.f32 %v505, %v512
  %v515 = vadd.f32 %v506, %v512
  %v516 = vadd.f32 %v507, %v512
  %v517 = vld [vmem:[%s9] sm:$0xff]
  %v518 = vld [vmem:[%s9 + $0x8] sm:$0xff]
  %v519 = vld [vmem:[%s9 + $0x10] sm:$0xff]
  %v520 = vld [vmem:[%s9 + $0x18] sm:$0xff]
  %v522 = vsel %vm383, %v514, 0
  %v525 = vsel %vm383, %v515, 0
  %v528 = vsel %vm383, %v516, 0
  %530 = vmatprep.subr.mxu0 0.0
  %531 = vmatpush1.msra.mxu0 %v517
  %532 = vmatprep.subr.mxu0 0.0
  %533 = vmatpush1.msra.mxu0 %v518
  %534 = vmatprep.subr.mxu0 0.0
  %535 = vmatpush1.msra.mxu0 %v519
  %536 = vmatprep.subr.mxu0 0.0
  %537 = vmatpush1.msra.mxu0 %v520
  %538 = vmatprep.subr.mxu0 0.0
  %539 = vmatpush1.msra.mxu0 0.0
  %540 = vmatprep.subr.mxu0 0.0
  %541 = vmatpush1.msra.mxu0 0.0
  %542 = vmatprep.subr.mxu0 0.0
  %543 = vmatpush1.msra.mxu0 0.0
  %544 = vmatprep.subr.mxu0 0.0
  %545 = vmatpush1.msra.mxu0 0.0
  %546 = vmatprep.subr.mxu0 0.0
  %547 = vmatpush1.msra.mxu0 0.0
  %548 = vmatprep.subr.mxu0 0.0
  %549 = vmatpush1.msra.mxu0 0.0
  %550 = vmatprep.subr.mxu0 0.0
  %551 = vmatpush1.msra.mxu0 0.0
  %552 = vmatprep.subr.mxu0 0.0
  %553 = vmatpush1.msra.mxu0 0.0
  %554 = vmatprep.subr.mxu0 0.0
  %555 = vmatpush1.msra.mxu0 0.0
  %556 = vmatprep.subr.mxu0 0.0
  %557 = vmatpush1.msra.mxu0 0.0
  %558 = vmatprep.subr.mxu0 0.0
  %559 = vmatpush1.msra.mxu0 0.0
  %560 = vmatprep.subr.mxu0 0.0
  %561 = vmatpush1.msra.mxu0 0.0
  %562 = vmatprep.subr.mxu0 0.0
  %563 = vmatpush1.msra.mxu0 0.0
  %564 = vmatprep.subr.mxu0 0.0
  %565 = vmatpush1.msra.mxu0 0.0
  %566 = vmatprep.subr.mxu0 0.0
  %567 = vmatpush1.msra.mxu0 0.0
  %568 = vmatprep.subr.mxu0 0.0
  %569 = vmatpush1.msra.mxu0 0.0
  %570 = vmatprep.subr.mxu0 0.0
  %571 = vmatpush1.msra.mxu0 0.0
  %572 = vmatprep.subr.mxu0 0.0
  %573 = vmatpush1.msra.mxu0 0.0
  %574 = vmatprep.subr.mxu0 0.0
  %575 = vmatpush1.msra.mxu0 0.0
  %576 = vmatprep.subr.mxu0 0.0
  %577 = vmatpush1.msra.mxu0 0.0
  %578 = vmatprep.subr.mxu0 0.0
  %579 = vmatpush1.msra.mxu0 0.0
  %580 = vmatprep.subr.mxu0 0.0
  %581 = vmatpush1.msra.mxu0 0.0
  %582 = vmatprep.subr.mxu0 0.0
  %583 = vmatpush1.msra.mxu0 0.0
  %584 = vmatprep.subr.mxu0 0.0
  %585 = vmatpush1.msra.mxu0 0.0
  %586 = vmatprep.subr.mxu0 0.0
  %587 = vmatpush1.msra.mxu0 0.0
  %588 = vmatprep.subr.mxu0 0.0
  %589 = vmatpush1.msra.mxu0 0.0
  %590 = vmatprep.subr.mxu0 0.0
  %591 = vmatpush1.msra.mxu0 0.0
  %592 = vmatprep.subr.mxu0 0.0
  %593 = vmatpush1.msra.mxu0 0.0
  %594 = vmatprep.mubr.f32.mxu0 0.0
  %595 = vmatmul.mubr.f32.gmra.mrb[0].mxu0 %v522
  %v596 = vpop.f32.mrb[0].mxu0
  %v597 = vadd.f32 0.0, %v596
  %v598 = vpop.f32.mrb[0].mxu0
  %599 = vmatprep.mubr.f32.mxu0 0.0
  %600 = vmatmul.mubr.f32.gmra.mrb[0].mxu0 %v525
  %v601 = vpop.f32.mrb[0].mxu0
  %v602 = vadd.f32 0.0, %v601
  %v603 = vpop.f32.mrb[0].mxu0
  %604 = vmatprep.mubr.f32.mxu0 0.0
  %605 = vmatmul.mubr.f32.gmra.mrb[0].mxu0 %v528
  %v606 = vpop.f32.mrb[0].mxu0
  %v607 = vadd.f32 0.0, %v606
  %v608 = vpop.f32.mrb[0].mxu0
  %609 = vdwg.mxu0
  %612 = vrot.lane.b32.xlu0 %v597, 96
  %v613 = vpop.permute.xlu0 %612
  %614 = vrot.lane.b32.xlu0 %v602, 96
  %v615 = vpop.permute.xlu0 %614
  %vm616 = vcmask 130048
  %v617 = vsel %vm616, %v597, 0
  %v619 = vsel %vm616, %v602, 0
  %v621 = vsel %vm616, %v613, 0
  %v623 = vsel %vm616, %v615, 0
  %625 = vmatprep.subr.mxu0 0.0
  %626 = vmatpush1.xpose.msra.mxu0 %v621
  %627 = vmatprep.subr.mxu0 0.0
  %628 = vmatpush1.xpose.msra.mxu0 %v623
  %629 = vmatprep.subr.mxu0 0.0
  %630 = vmatpush1.xpose.msra.mxu0 0.0
  %631 = vmatprep.subr.mxu0 0.0
  %632 = vmatpush1.xpose.msra.mxu0 0.0
  %633 = vmatprep.subr.mxu0 0.0
  %634 = vmatpush1.xpose.msra.mxu0 0.0
  %635 = vmatprep.subr.mxu0 0.0
  %636 = vmatpush1.xpose.msra.mxu0 0.0
  %637 = vmatprep.subr.mxu0 0.0
  %638 = vmatpush1.xpose.msra.mxu0 0.0
  %639 = vmatprep.subr.mxu0 0.0
  %640 = vmatpush1.xpose.msra.mxu0 0.0
  %641 = vmatprep.subr.mxu0 0.0
  %642 = vmatpush1.xpose.msra.mxu0 0.0
  %643 = vmatprep.subr.mxu0 0.0
  %644 = vmatpush1.xpose.msra.mxu0 0.0
  %645 = vmatprep.subr.mxu0 0.0
  %646 = vmatpush1.xpose.msra.mxu0 0.0
  %647 = vmatprep.subr.mxu0 0.0
  %648 = vmatpush1.xpose.msra.mxu0 0.0
  %649 = vmatprep.subr.mxu0 0.0
  %650 = vmatpush1.xpose.msra.mxu0 0.0
  %651 = vmatprep.subr.mxu0 0.0
  %652 = vmatpush1.xpose.msra.mxu0 0.0
  %653 = vmatprep.subr.mxu0 0.0
  %654 = vmatpush1.xpose.msra.mxu0 0.0
  %655 = vmatprep.subr.mxu0 0.0
  %656 = vmatpush1.xpose.msra.mxu0 0.0
  %657 = vmatprep.subr.mxu0 0.0
  %658 = vmatpush1.xpose.msra.mxu0 0.0
  %659 = vmatprep.subr.mxu0 0.0
  %660 = vmatpush1.xpose.msra.mxu0 0.0
  %661 = vmatprep.subr.mxu0 0.0
  %662 = vmatpush1.xpose.msra.mxu0 0.0
  %663 = vmatprep.subr.mxu0 0.0
  %664 = vmatpush1.xpose.msra.mxu0 0.0
  %665 = vmatprep.subr.mxu0 0.0
  %666 = vmatpush1.xpose.msra.mxu0 0.0
  %667 = vmatprep.subr.mxu0 0.0
  %668 = vmatpush1.xpose.msra.mxu0 0.0
  %669 = vmatprep.subr.mxu0 0.0
  %670 = vmatpush1.xpose.msra.mxu0 0.0
  %671 = vmatprep.subr.mxu0 0.0
  %672 = vmatpush1.xpose.msra.mxu0 0.0
  %673 = vmatprep.subr.mxu0 0.0
  %674 = vmatpush1.xpose.msra.mxu0 0.0
  %675 = vmatprep.subr.mxu0 0.0
  %676 = vmatpush1.xpose.msra.mxu0 0.0
  %677 = vmatprep.subr.mxu0 0.0
  %678 = vmatpush1.xpose.msra.mxu0 0.0
  %679 = vmatprep.subr.mxu0 0.0
  %680 = vmatpush1.xpose.msra.mxu0 0.0
  %681 = vmatprep.subr.mxu0 0.0
  %682 = vmatpush1.xpose.msra.mxu0 0.0
  %683 = vmatprep.subr.mxu0 0.0
  %684 = vmatpush1.xpose.msra.mxu0 0.0
  %685 = vmatprep.subr.mxu0 0.0
  %686 = vmatpush1.xpose.msra.mxu0 0.0
  %687 = vmatprep.subr.mxu0 0.0
  %688 = vmatpush1.xpose.msra.mxu0 0.0
  %689 = vmatprep.mubr.f32.mxu0 0.0
  %690 = vmatmul.mubr.f32.gmra.mrb[0].mxu0 %v617
  %v691 = vpop.f32.mrb[0].mxu0
  %v692 = vadd.f32 0.0, %v691
  %v693 = vpop.f32.mrb[0].mxu0
  %694 = vmatprep.mubr.f32.mxu0 0.0
  %695 = vmatmul.mubr.f32.gmra.mrb[0].mxu0 %v619
  %v696 = vpop.f32.mrb[0].mxu0
  %v697 = vadd.f32 0.0, %v696
  %v698 = vpop.f32.mrb[0].mxu0
  %699 = vdwg.mxu0
  %v700 = vmul.f32 %v692, 0.25
  %v701 = vmul.f32 %v697, 0.25
  %vm702 = vcmask 72704
  %v703 = vsel %vm702, %v700, -inf
  %704 = vmax.xlane.f32.xlu0 %v703
  %v705 = vpop.xlane.xlu0 %704
  %vm706 = vcmask 65536
  %v707 = vsel %vm706, %v701, -inf
  %708 = vmax.xlane.f32.xlu0 %v707
  %v709 = vpop.xlane.xlu0 %708
  %v710 = vsub.f32 %v700, %v705
  %v711 = vsub.f32 %v701, %v709
  %v712 = vmul.f32 %v710, 1.442695
  %v713 = vpow.pop %v712
  %v714 = vmul.f32 %v711, 1.442695
  %v715 = vpow.pop %v714
  %v716 = vsel %vm702, %v713, 0.0
  %717 = vadd.xlane.f32.xlu0 %v716
  %v718 = vpop.xlane.xlu0 %717
  %v719 = vsel %vm706, %v715, 0.0
  %720 = vadd.xlane.f32.xlu0 %v719
  %v721 = vpop.xlane.xlu0 %720
  %v722 = vrcp.pop %v718
  %v723 = vrcp.pop %v721
  %v724 = vmul.f32 %v713, %v722
  %v725 = vmul.f32 %v715, %v723
  %726 = vrot.lane.b32.xlu0 %v597, 64
  %v727 = vpop.permute.xlu0 %726
  %728 = vrot.lane.b32.xlu0 %v602, 64
  %v729 = vpop.permute.xlu0 %728
  %v732 = vsel %vm702, %v724, 0
  %v735 = vsel %vm702, %v725, 0
  %v737 = vsel %vm452, %v729, 0
  %739 = vmatprep.subr.mxu0 0.0
  %740 = vmatpush1.msra.mxu0 %v727
  %741 = vmatprep.subr.mxu0 0.0
  %742 = vmatpush1.msra.mxu0 %v737
  %743 = vmatprep.subr.mxu0 0.0
  %744 = vmatpush1.msra.mxu0 0.0
  %745 = vmatprep.subr.mxu0 0.0
  %746 = vmatpush1.msra.mxu0 0.0
  %747 = vmatprep.subr.mxu0 0.0
  %748 = vmatpush1.msra.mxu0 0.0
  %749 = vmatprep.subr.mxu0 0.0
  %750 = vmatpush1.msra.mxu0 0.0
  %751 = vmatprep.subr.mxu0 0.0
  %752 = vmatpush1.msra.mxu0 0.0
  %753 = vmatprep.subr.mxu0 0.0
  %754 = vmatpush1.msra.mxu0 0.0
  %755 = vmatprep.subr.mxu0 0.0
  %756 = vmatpush1.msra.mxu0 0.0
  %757 = vmatprep.subr.mxu0 0.0
  %758 = vmatpush1.msra.mxu0 0.0
  %759 = vmatprep.subr.mxu0 0.0
  %760 = vmatpush1.msra.mxu0 0.0
  %761 = vmatprep.subr.mxu0 0.0
  %762 = vmatpush1.msra.mxu0 0.0
  %763 = vmatprep.subr.mxu0 0.0
  %764 = vmatpush1.msra.mxu0 0.0
  %765 = vmatprep.subr.mxu0 0.0
  %766 = vmatpush1.msra.mxu0 0.0
  %767 = vmatprep.subr.mxu0 0.0
  %768 = vmatpush1.msra.mxu0 0.0
  %769 = vmatprep.subr.mxu0 0.0
  %770 = vmatpush1.msra.mxu0 0.0
  %771 = vmatprep.subr.mxu0 0.0
  %772 = vmatpush1.msra.mxu0 0.0
  %773 = vmatprep.subr.mxu0 0.0
  %774 = vmatpush1.msra.mxu0 0.0
  %775 = vmatprep.subr.mxu0 0.0
  %776 = vmatpush1.msra.mxu0 0.0
  %777 = vmatprep.subr.mxu0 0.0
  %778 = vmatpush1.msra.mxu0 0.0
  %779 = vmatprep.subr.mxu0 0.0
  %780 = vmatpush1.msra.mxu0 0.0
  %781 = vmatprep.subr.mxu0 0.0
  %782 = vmatpush1.msra.mxu0 0.0
  %783 = vmatprep.subr.mxu0 0.0
  %784 = vmatpush1.msra.mxu0 0.0
  %785 = vmatprep.subr.mxu0 0.0
  %786 = vmatpush1.msra.mxu0 0.0
  %787 = vmatprep.subr.mxu0 0.0
  %788 = vmatpush1.msra.mxu0 0.0
  %789 = vmatprep.subr.mxu0 0.0
  %790 = vmatpush1.msra.mxu0 0.0
  %791 = vmatprep.subr.mxu0 0.0
  %792 = vmatpush1.msra.mxu0 0.0
  %793 = vmatprep.subr.mxu0 0.0
  %794 = vmatpush1.msra.mxu0 0.0
  %795 = vmatprep.subr.mxu0 0.0
  %796 = vmatpush1.msra.mxu0 0.0
  %797 = vmatprep.subr.mxu0 0.0
  %798 = vmatpush1.msra.mxu0 0.0
  %799 = vmatprep.subr.mxu0 0.0
  %800 = vmatpush1.msra.mxu0 0.0
  %801 = vmatprep.subr.mxu0 0.0
  %802 = vmatpush1.msra.mxu0 0.0
  %803 = vmatprep.mubr.f32.mxu0 0.0
  %804 = vmatmul.mubr.f32.gmra.mrb[0].mxu0 %v732
  %v805 = vpop.f32.mrb[0].mxu0
  %v806 = vadd.f32 0.0, %v805
  %v807 = vpop.f32.mrb[0].mxu0
  %808 = vmatprep.mubr.f32.mxu0 0.0
  %809 = vmatmul.mubr.f32.gmra.mrb[0].mxu0 %v735
  %v810 = vpop.f32.mrb[0].mxu0
  %v811 = vadd.f32 0.0, %v810
  %v812 = vpop.f32.mrb[0].mxu0
  %813 = vdwg.mxu0
  %814 = vrot.lane.b32.xlu0 %v597, 112
  %v815 = vpop.permute.xlu0 %814
  %816 = vrot.lane.b32.xlu0 %v602, 112
  %v817 = vpop.permute.xlu0 %816
  %818 = vrot.lane.b32.xlu0 %v597, 80
  %v819 = vpop.permute.xlu0 %818
  %820 = vrot.lane.b32.xlu0 %v602, 80
  %v821 = vpop.permute.xlu0 %820
  %v822 = vsel %vm616, %v815, 0
  %v824 = vsel %vm616, %v817, 0
  %v826 = vsel %vm616, %v819, 0
  %v828 = vsel %vm616, %v821, 0
  %830 = vmatprep.subr.mxu0 0.0
  %831 = vmatpush1.xpose.msra.mxu0 %v826
  %832 = vmatprep.subr.mxu0 0.0
  %833 = vmatpush1.xpose.msra.mxu0 %v828
  %834 = vmatprep.subr.mxu0 0.0
  %835 = vmatpush1.xpose.msra.mxu0 0.0
  %836 = vmatprep.subr.mxu0 0.0
  %837 = vmatpush1.xpose.msra.mxu0 0.0
  %838 = vmatprep.subr.mxu0 0.0
  %839 = vmatpush1.xpose.msra.mxu0 0.0
  %840 = vmatprep.subr.mxu0 0.0
  %841 = vmatpush1.xpose.msra.mxu0 0.0
  %842 = vmatprep.subr.mxu0 0.0
  %843 = vmatpush1.xpose.msra.mxu0 0.0
  %844 = vmatprep.subr.mxu0 0.0
  %845 = vmatpush1.xpose.msra.mxu0 0.0
  %846 = vmatprep.subr.mxu0 0.0
  %847 = vmatpush1.xpose.msra.mxu0 0.0
  %848 = vmatprep.subr.mxu0 0.0
  %849 = vmatpush1.xpose.msra.mxu0 0.0
  %850 = vmatprep.subr.mxu0 0.0
  %851 = vmatpush1.xpose.msra.mxu0 0.0
  %852 = vmatprep.subr.mxu0 0.0
  %853 = vmatpush1.xpose.msra.mxu0 0.0
  %854 = vmatprep.subr.mxu0 0.0
  %855 = vmatpush1.xpose.msra.mxu0 0.0
  %856 = vmatprep.subr.mxu0 0.0
  %857 = vmatpush1.xpose.msra.mxu0 0.0
  %858 = vmatprep.subr.mxu0 0.0
  %859 = vmatpush1.xpose.msra.mxu0 0.0
  %860 = vmatprep.subr.mxu0 0.0
  %861 = vmatpush1.xpose.msra.mxu0 0.0
  %862 = vmatprep.subr.mxu0 0.0
  %863 = vmatpush1.xpose.msra.mxu0 0.0
  %864 = vmatprep.subr.mxu0 0.0
  %865 = vmatpush1.xpose.msra.mxu0 0.0
  %866 = vmatprep.subr.mxu0 0.0
  %867 = vmatpush1.xpose.msra.mxu0 0.0
  %868 = vmatprep.subr.mxu0 0.0
  %869 = vmatpush1.xpose.msra.mxu0 0.0
  %870 = vmatprep.subr.mxu0 0.0
  %871 = vmatpush1.xpose.msra.mxu0 0.0
  %872 = vmatprep.subr.mxu0 0.0
  %873 = vmatpush1.xpose.msra.mxu0 0.0
  %874 = vmatprep.subr.mxu0 0.0
  %875 = vmatpush1.xpose.msra.mxu0 0.0
  %876 = vmatprep.subr.mxu0 0.0
  %877 = vmatpush1.xpose.msra.mxu0 0.0
  %878 = vmatprep.subr.mxu0 0.0
  %879 = vmatpush1.xpose.msra.mxu0 0.0
  %880 = vmatprep.subr.mxu0 0.0
  %881 = vmatpush1.xpose.msra.mxu0 0.0
  %882 = vmatprep.subr.mxu0 0.0
  %883 = vmatpush1.xpose.msra.mxu0 0.0
  %884 = vmatprep.subr.mxu0 0.0
  %885 = vmatpush1.xpose.msra.mxu0 0.0
  %886 = vmatprep.subr.mxu0 0.0
  %887 = vmatpush1.xpose.msra.mxu0 0.0
  %888 = vmatprep.subr.mxu0 0.0
  %889 = vmatpush1.xpose.msra.mxu0 0.0
  %890 = vmatprep.subr.mxu0 0.0
  %891 = vmatpush1.xpose.msra.mxu0 0.0
  %892 = vmatprep.subr.mxu0 0.0
  %893 = vmatpush1.xpose.msra.mxu0 0.0
  %894 = vmatprep.mubr.f32.mxu0 0.0
  %895 = vmatmul.mubr.f32.gmra.mrb[0].mxu0 %v822
  %v896 = vpop.f32.mrb[0].mxu0
  %v897 = vadd.f32 0.0, %v896
  %v898 = vpop.f32.mrb[0].mxu0
  %899 = vmatprep.mubr.f32.mxu0 0.0
  %900 = vmatmul.mubr.f32.gmra.mrb[0].mxu0 %v824
  %v901 = vpop.f32.mrb[0].mxu0
  %v902 = vadd.f32 0.0, %v901
  %v903 = vpop.f32.mrb[0].mxu0
  %904 = vdwg.mxu0
  %v905 = vmul.f32 %v897, 0.25
  %v906 = vmul.f32 %v902, 0.25
  %v907 = vsel %vm702, %v905, -inf
  %908 = vmax.xlane.f32.xlu0 %v907
  %v909 = vpop.xlane.xlu0 %908
  %v910 = vsel %vm706, %v906, -inf
  %911 = vmax.xlane.f32.xlu0 %v910
  %v912 = vpop.xlane.xlu0 %911
  %v913 = vsub.f32 %v905, %v909
  %v914 = vsub.f32 %v906, %v912
  %v915 = vmul.f32 %v913, 1.442695
  %v916 = vpow.pop %v915
  %v917 = vmul.f32 %v914, 1.442695
  %v918 = vpow.pop %v917
  %v919 = vsel %vm702, %v916, 0.0
  %920 = vadd.xlane.f32.xlu0 %v919
  %v921 = vpop.xlane.xlu0 %920
  %v922 = vsel %vm706, %v918, 0.0
  %923 = vadd.xlane.f32.xlu0 %v922
  %v924 = vpop.xlane.xlu0 %923
  %v925 = vrcp.pop %v921
  %v926 = vrcp.pop %v924
  %v927 = vmul.f32 %v916, %v925
  %v928 = vmul.f32 %v918, %v926
  %929 = vrot.lane.b32.xlu0 %v597, 48
  %v930 = vpop.permute.xlu0 %929
  %931 = vrot.lane.b32.xlu0 %v602, 48
  %v932 = vpop.permute.xlu0 %931
  %v935 = vsel %vm702, %v927, 0
  %v938 = vsel %vm702, %v928, 0
  %v940 = vsel %vm452, %v932, 0
  %942 = vmatprep.subr.mxu0 0.0
  %943 = vmatpush1.msra.mxu0 %v930
  %944 = vmatprep.subr.mxu0 0.0
  %945 = vmatpush1.msra.mxu0 %v940
  %946 = vmatprep.subr.mxu0 0.0
  %947 = vmatpush1.msra.mxu0 0.0
  %948 = vmatprep.subr.mxu0 0.0
  %949 = vmatpush1.msra.mxu0 0.0
  %950 = vmatprep.subr.mxu0 0.0
  %951 = vmatpush1.msra.mxu0 0.0
  %952 = vmatprep.subr.mxu0 0.0
  %953 = vmatpush1.msra.mxu0 0.0
  %954 = vmatprep.subr.mxu0 0.0
  %955 = vmatpush1.msra.mxu0 0.0
  %956 = vmatprep.subr.mxu0 0.0
  %957 = vmatpush1.msra.mxu0 0.0
  %958 = vmatprep.subr.mxu0 0.0
  %959 = vmatpush1.msra.mxu0 0.0
  %960 = vmatprep.subr.mxu0 0.0
  %961 = vmatpush1.msra.mxu0 0.0
  %962 = vmatprep.subr.mxu0 0.0
  %963 = vmatpush1.msra.mxu0 0.0
  %964 = vmatprep.subr.mxu0 0.0
  %965 = vmatpush1.msra.mxu0 0.0
  %966 = vmatprep.subr.mxu0 0.0
  %967 = vmatpush1.msra.mxu0 0.0
  %968 = vmatprep.subr.mxu0 0.0
  %969 = vmatpush1.msra.mxu0 0.0
  %970 = vmatprep.subr.mxu0 0.0
  %971 = vmatpush1.msra.mxu0 0.0
  %972 = vmatprep.subr.mxu0 0.0
  %973 = vmatpush1.msra.mxu0 0.0
  %974 = vmatprep.subr.mxu0 0.0
  %975 = vmatpush1.msra.mxu0 0.0
  %976 = vmatprep.subr.mxu0 0.0
  %977 = vmatpush1.msra.mxu0 0.0
  %978 = vmatprep.subr.mxu0 0.0
  %979 = vmatpush1.msra.mxu0 0.0
  %980 = vmatprep.subr.mxu0 0.0
  %981 = vmatpush1.msra.mxu0 0.0
  %982 = vmatprep.subr.mxu0 0.0
  %983 = vmatpush1.msra.mxu0 0.0
  %984 = vmatprep.subr.mxu0 0.0
  %985 = vmatpush1.msra.mxu0 0.0
  %986 = vmatprep.subr.mxu0 0.0
  %987 = vmatpush1.msra.mxu0 0.0
  %988 = vmatprep.subr.mxu0 0.0
  %989 = vmatpush1.msra.mxu0 0.0
  %990 = vmatprep.subr.mxu0 0.0
  %991 = vmatpush1.msra.mxu0 0.0
  %992 = vmatprep.subr.mxu0 0.0
  %993 = vmatpush1.msra.mxu0 0.0
  %994 = vmatprep.subr.mxu0 0.0
  %995 = vmatpush1.msra.mxu0 0.0
  %996 = vmatprep.subr.mxu0 0.0
  %997 = vmatpush1.msra.mxu0 0.0
  %998 = vmatprep.subr.mxu0 0.0
  %999 = vmatpush1.msra.mxu0 0.0
  %1000 = vmatprep.subr.mxu0 0.0
  %1001 = vmatpush1.msra.mxu0 0.0
  %1002 = vmatprep.subr.mxu0 0.0
  %1003 = vmatpush1.msra.mxu0 0.0
  %1004 = vmatprep.subr.mxu0 0.0
  %1005 = vmatpush1.msra.mxu0 0.0
  %1006 = vmatprep.mubr.f32.mxu0 0.0
  %1007 = vmatmul.mubr.f32.gmra.mrb[0].mxu0 %v935
  %v1008 = vpop.f32.mrb[0].mxu0
  %v1009 = vadd.f32 0.0, %v1008
  %v1010 = vpop.f32.mrb[0].mxu0
  %1011 = vmatprep.mubr.f32.mxu0 0.0
  %1012 = vmatmul.mubr.f32.gmra.mrb[0].mxu0 %v938
  %v1013 = vpop.f32.mrb[0].mxu0
  %v1014 = vadd.f32 0.0, %v1013
  %v1015 = vpop.f32.mrb[0].mxu0
  %1016 = vdwg.mxu0
  %1019 = vrot.lane.b32.xlu0 %v1009, 16
  %v1020 = vpop.permute.xlu0 %1019
  %1021 = vrot.lane.b32.xlu0 %v1014, 16
  %v1022 = vpop.permute.xlu0 %1021
  %v1025 = vsel %vm616, %v806, %v1020
  %v1026 = vsel %vm616, %v811, %v1022
  %v1028 = vrot.slane %v602, 1
  %v1029 = vrot.slane %v607, 1
  %v1030 = vsel %vm433, %v1028, %v1029
  %1031 = vrot.lane.b32.xlu0 %v1030, 96
  %v1032 = vpop.permute.xlu0 %1031
  %1033 = vrot.lane.b32.xlu0 %v1029, 96
  %v1034 = vpop.permute.xlu0 %1033
  %v1035 = vsel %vm616, %v1030, 0
  %v1037 = vsel %vm616, %v1029, 0
  %v1039 = vsel %vm616, %v1032, 0
  %v1041 = vsel %vm616, %v1034, 0
  %1043 = vmatprep.subr.mxu0 0.0
  %1044 = vmatpush1.xpose.msra.mxu0 %v1039
  %1045 = vmatprep.subr.mxu0 0.0
  %1046 = vmatpush1.xpose.msra.mxu0 %v1041
  %1047 = vmatprep.subr.mxu0 0.0
  %1048 = vmatpush1.xpose.msra.mxu0 0.0
  %1049 = vmatprep.subr.mxu0 0.0
  %1050 = vmatpush1.xpose.msra.mxu0 0.0
  %1051 = vmatprep.subr.mxu0 0.0
  %1052 = vmatpush1.xpose.msra.mxu0 0.0
  %1053 = vmatprep.subr.mxu0 0.0
  %1054 = vmatpush1.xpose.msra.mxu0 0.0
  %1055 = vmatprep.subr.mxu0 0.0
  %1056 = vmatpush1.xpose.msra.mxu0 0.0
  %1057 = vmatprep.subr.mxu0 0.0
  %1058 = vmatpush1.xpose.msra.mxu0 0.0
  %1059 = vmatprep.subr.mxu0 0.0
  %1060 = vmatpush1.xpose.msra.mxu0 0.0
  %1061 = vmatprep.subr.mxu0 0.0
  %1062 = vmatpush1.xpose.msra.mxu0 0.0
  %1063 = vmatprep.subr.mxu0 0.0
  %1064 = vmatpush1.xpose.msra.mxu0 0.0
  %1065 = vmatprep.subr.mxu0 0.0
  %1066 = vmatpush1.xpose.msra.mxu0 0.0
  %1067 = vmatprep.subr.mxu0 0.0
  %1068 = vmatpush1.xpose.msra.mxu0 0.0
  %1069 = vmatprep.subr.mxu0 0.0
  %1070 = vmatpush1.xpose.msra.mxu0 0.0
  %1071 = vmatprep.subr.mxu0 0.0
  %1072 = vmatpush1.xpose.msra.mxu0 0.0
  %1073 = vmatprep.subr.mxu0 0.0
  %1074 = vmatpush1.xpose.msra.mxu0 0.0
  %1075 = vmatprep.subr.mxu0 0.0
  %1076 = vmatpush1.xpose.msra.mxu0 0.0
  %1077 = vmatprep.subr.mxu0 0.0
  %1078 = vmatpush1.xpose.msra.mxu0 0.0
  %1079 = vmatprep.subr.mxu0 0.0
  %1080 = vmatpush1.xpose.msra.mxu0 0.0
  %1081 = vmatprep.subr.mxu0 0.0
  %1082 = vmatpush1.xpose.msra.mxu0 0.0
  %1083 = vmatprep.subr.mxu0 0.0
  %1084 = vmatpush1.xpose.msra.mxu0 0.0
  %1085 = vmatprep.subr.mxu0 0.0
  %1086 = vmatpush1.xpose.msra.mxu0 0.0
  %1087 = vmatprep.subr.mxu0 0.0
  %1088 = vmatpush1.xpose.msra.mxu0 0.0
  %1089 = vmatprep.subr.mxu0 0.0
  %1090 = vmatpush1.xpose.msra.mxu0 0.0
  %1091 = vmatprep.subr.mxu0 0.0
  %1092 = vmatpush1.xpose.msra.mxu0 0.0
  %1093 = vmatprep.subr.mxu0 0.0
  %1094 = vmatpush1.xpose.msra.mxu0 0.0
  %1095 = vmatprep.subr.mxu0 0.0
  %1096 = vmatpush1.xpose.msra.mxu0 0.0
  %1097 = vmatprep.subr.mxu0 0.0
  %1098 = vmatpush1.xpose.msra.mxu0 0.0
  %1099 = vmatprep.subr.mxu0 0.0
  %1100 = vmatpush1.xpose.msra.mxu0 0.0
  %1101 = vmatprep.subr.mxu0 0.0
  %1102 = vmatpush1.xpose.msra.mxu0 0.0
  %1103 = vmatprep.subr.mxu0 0.0
  %1104 = vmatpush1.xpose.msra.mxu0 0.0
  %1105 = vmatprep.subr.mxu0 0.0
  %1106 = vmatpush1.xpose.msra.mxu0 0.0
  %1107 = vmatprep.mubr.f32.mxu0 0.0
  %1108 = vmatmul.mubr.f32.gmra.mrb[0].mxu0 %v1035
  %v1109 = vpop.f32.mrb[0].mxu0
  %v1110 = vadd.f32 0.0, %v1109
  %v1111 = vpop.f32.mrb[0].mxu0
  %1112 = vmatprep.mubr.f32.mxu0 0.0
  %1113 = vmatmul.mubr.f32.gmra.mrb[0].mxu0 %v1037
  %v1114 = vpop.f32.mrb[0].mxu0
  %v1115 = vadd.f32 0.0, %v1114
  %v1116 = vpop.f32.mrb[0].mxu0
  %1117 = vdwg.mxu0
  %v1118 = vmul.f32 %v1110, 0.25
  %v1119 = vmul.f32 %v1115, 0.25
  %v1120 = vsel %vm702, %v1118, -inf
  %1121 = vmax.xlane.f32.xlu0 %v1120
  %v1122 = vpop.xlane.xlu0 %1121
  %v1123 = vsel %vm706, %v1119, -inf
  %1124 = vmax.xlane.f32.xlu0 %v1123
  %v1125 = vpop.xlane.xlu0 %1124
  %v1126 = vsub.f32 %v1118, %v1122
  %v1127 = vsub.f32 %v1119, %v1125
  %v1128 = vmul.f32 %v1126, 1.442695
  %v1129 = vpow.pop %v1128
  %v1130 = vmul.f32 %v1127, 1.442695
  %v1131 = vpow.pop %v1130
  %v1132 = vsel %vm702, %v1129, 0.0
  %1133 = vadd.xlane.f32.xlu0 %v1132
  %v1134 = vpop.xlane.xlu0 %1133
  %v1135 = vsel %vm706, %v1131, 0.0
  %1136 = vadd.xlane.f32.xlu0 %v1135
  %v1137 = vpop.xlane.xlu0 %1136
  %v1138 = vrcp.pop %v1134
  %v1139 = vrcp.pop %v1137
  %v1140 = vmul.f32 %v1129, %v1138
  %v1141 = vmul.f32 %v1131, %v1139
  %1142 = vrot.lane.b32.xlu0 %v1030, 64
  %v1143 = vpop.permute.xlu0 %1142
  %1144 = vrot.lane.b32.xlu0 %v1029, 64
  %v1145 = vpop.permute.xlu0 %1144
  %v1148 = vsel %vm702, %v1140, 0
  %v1151 = vsel %vm702, %v1141, 0
  %v1153 = vsel %vm452, %v1145, 0
  %1155 = vmatprep.subr.mxu0 0.0
  %1156 = vmatpush1.msra.mxu0 %v1143
  %1157 = vmatprep.subr.mxu0 0.0
  %1158 = vmatpush1.msra.mxu0 %v1153
  %1159 = vmatprep.subr.mxu0 0.0
  %1160 = vmatpush1.msra.mxu0 0.0
  %1161 = vmatprep.subr.mxu0 0.0
  %1162 = vmatpush1.msra.mxu0 0.0
  %1163 = vmatprep.subr.mxu0 0.0
  %1164 = vmatpush1.msra.mxu0 0.0
  %1165 = vmatprep.subr.mxu0 0.0
  %1166 = vmatpush1.msra.mxu0 0.0
  %1167 = vmatprep.subr.mxu0 0.0
  %1168 = vmatpush1.msra.mxu0 0.0
  %1169 = vmatprep.subr.mxu0 0.0
  %1170 = vmatpush1.msra.mxu0 0.0
  %1171 = vmatprep.subr.mxu0 0.0
  %1172 = vmatpush1.msra.mxu0 0.0
  %1173 = vmatprep.subr.mxu0 0.0
  %1174 = vmatpush1.msra.mxu0 0.0
  %1175 = vmatprep.subr.mxu0 0.0
  %1176 = vmatpush1.msra.mxu0 0.0
  %1177 = vmatprep.subr.mxu0 0.0
  %1178 = vmatpush1.msra.mxu0 0.0
  %1179 = vmatprep.subr.mxu0 0.0
  %1180 = vmatpush1.msra.mxu0 0.0
  %1181 = vmatprep.subr.mxu0 0.0
  %1182 = vmatpush1.msra.mxu0 0.0
  %1183 = vmatprep.subr.mxu0 0.0
  %1184 = vmatpush1.msra.mxu0 0.0
  %1185 = vmatprep.subr.mxu0 0.0
  %1186 = vmatpush1.msra.mxu0 0.0
  %1187 = vmatprep.subr.mxu0 0.0
  %1188 = vmatpush1.msra.mxu0 0.0
  %1189 = vmatprep.subr.mxu0 0.0
  %1190 = vmatpush1.msra.mxu0 0.0
  %1191 = vmatprep.subr.mxu0 0.0
  %1192 = vmatpush1.msra.mxu0 0.0
  %1193 = vmatprep.subr.mxu0 0.0
  %1194 = vmatpush1.msra.mxu0 0.0
  %1195 = vmatprep.subr.mxu0 0.0
  %1196 = vmatpush1.msra.mxu0 0.0
  %1197 = vmatprep.subr.mxu0 0.0
  %1198 = vmatpush1.msra.mxu0 0.0
  %1199 = vmatprep.subr.mxu0 0.0
  %1200 = vmatpush1.msra.mxu0 0.0
  %1201 = vmatprep.subr.mxu0 0.0
  %1202 = vmatpush1.msra.mxu0 0.0
  %1203 = vmatprep.subr.mxu0 0.0
  %1204 = vmatpush1.msra.mxu0 0.0
  %1205 = vmatprep.subr.mxu0 0.0
  %1206 = vmatpush1.msra.mxu0 0.0
  %1207 = vmatprep.subr.mxu0 0.0
  %1208 = vmatpush1.msra.mxu0 0.0
  %1209 = vmatprep.subr.mxu0 0.0
  %1210 = vmatpush1.msra.mxu0 0.0
  %1211 = vmatprep.subr.mxu0 0.0
  %1212 = vmatpush1.msra.mxu0 0.0
  %1213 = vmatprep.subr.mxu0 0.0
  %1214 = vmatpush1.msra.mxu0 0.0
  %1215 = vmatprep.subr.mxu0 0.0
  %1216 = vmatpush1.msra.mxu0 0.0
  %1217 = vmatprep.subr.mxu0 0.0
  %1218 = vmatpush1.msra.mxu0 0.0
  %1219 = vmatprep.mubr.f32.mxu0 0.0
  %1220 = vmatmul.mubr.f32.gmra.mrb[0].mxu0 %v1148
  %v1221 = vpop.f32.mrb[0].mxu0
  %v1222 = vadd.f32 0.0, %v1221
  %v1223 = vpop.f32.mrb[0].mxu0
  %1224 = vmatprep.mubr.f32.mxu0 0.0
  %1225 = vmatmul.mubr.f32.gmra.mrb[0].mxu0 %v1151
  %v1226 = vpop.f32.mrb[0].mxu0
  %v1227 = vadd.f32 0.0, %v1226
  %v1228 = vpop.f32.mrb[0].mxu0
  %1229 = vdwg.mxu0
  %1230 = vrot.lane.b32.xlu0 %v1030, 112
  %v1231 = vpop.permute.xlu0 %1230
  %1232 = vrot.lane.b32.xlu0 %v1029, 112
  %v1233 = vpop.permute.xlu0 %1232
  %1234 = vrot.lane.b32.xlu0 %v1030, 80
  %v1235 = vpop.permute.xlu0 %1234
  %1236 = vrot.lane.b32.xlu0 %v1029, 80
  %v1237 = vpop.permute.xlu0 %1236
  %v1238 = vsel %vm616, %v1231, 0
  %v1240 = vsel %vm616, %v1233, 0
  %v1242 = vsel %vm616, %v1235, 0
  %v1244 = vsel %vm616, %v1237, 0
  %1246 = vmatprep.subr.mxu0 0.0
  %1247 = vmatpush1.xpose.msra.mxu0 %v1242
  %1248 = vmatprep.subr.mxu0 0.0
  %1249 = vmatpush1.xpose.msra.mxu0 %v1244
  %1250 = vmatprep.subr.mxu0 0.0
  %1251 = vmatpush1.xpose.msra.mxu0 0.0
  %1252 = vmatprep.subr.mxu0 0.0
  %1253 = vmatpush1.xpose.msra.mxu0 0.0
  %1254 = vmatprep.subr.mxu0 0.0
  %1255 = vmatpush1.xpose.msra.mxu0 0.0
  %1256 = vmatprep.subr.mxu0 0.0
  %1257 = vmatpush1.xpose.msra.mxu0 0.0
  %1258 = vmatprep.subr.mxu0 0.0
  %1259 = vmatpush1.xpose.msra.mxu0 0.0
  %1260 = vmatprep.subr.mxu0 0.0
  %1261 = vmatpush1.xpose.msra.mxu0 0.0
  %1262 = vmatprep.subr.mxu0 0.0
  %1263 = vmatpush1.xpose.msra.mxu0 0.0
  %1264 = vmatprep.subr.mxu0 0.0
  %1265 = vmatpush1.xpose.msra.mxu0 0.0
  %1266 = vmatprep.subr.mxu0 0.0
  %1267 = vmatpush1.xpose.msra.mxu0 0.0
  %1268 = vmatprep.subr.mxu0 0.0
  %1269 = vmatpush1.xpose.msra.mxu0 0.0
  %1270 = vmatprep.subr.mxu0 0.0
  %1271 = vmatpush1.xpose.msra.mxu0 0.0
  %1272 = vmatprep.subr.mxu0 0.0
  %1273 = vmatpush1.xpose.msra.mxu0 0.0
  %1274 = vmatprep.subr.mxu0 0.0
  %1275 = vmatpush1.xpose.msra.mxu0 0.0
  %1276 = vmatprep.subr.mxu0 0.0
  %1277 = vmatpush1.xpose.msra.mxu0 0.0
  %1278 = vmatprep.subr.mxu0 0.0
  %1279 = vmatpush1.xpose.msra.mxu0 0.0
  %1280 = vmatprep.subr.mxu0 0.0
  %1281 = vmatpush1.xpose.msra.mxu0 0.0
  %1282 = vmatprep.subr.mxu0 0.0
  %1283 = vmatpush1.xpose.msra.mxu0 0.0
  %1284 = vmatprep.subr.mxu0 0.0
  %1285 = vmatpush1.xpose.msra.mxu0 0.0
  %1286 = vmatprep.subr.mxu0 0.0
  %1287 = vmatpush1.xpose.msra.mxu0 0.0
  %1288 = vmatprep.subr.mxu0 0.0
  %1289 = vmatpush1.xpose.msra.mxu0 0.0
  %1290 = vmatprep.subr.mxu0 0.0
  %1291 = vmatpush1.xpose.msra.mxu0 0.0
  %1292 = vmatprep.subr.mxu0 0.0
  %1293 = vmatpush1.xpose.msra.mxu0 0.0
  %1294 = vmatprep.subr.mxu0 0.0
  %1295 = vmatpush1.xpose.msra.mxu0 0.0
  %1296 = vmatprep.subr.mxu0 0.0
  %1297 = vmatpush1.xpose.msra.mxu0 0.0
  %1298 = vmatprep.subr.mxu0 0.0
  %1299 = vmatpush1.xpose.msra.mxu0 0.0
  %1300 = vmatprep.subr.mxu0 0.0
  %1301 = vmatpush1.xpose.msra.mxu0 0.0
  %1302 = vmatprep.subr.mxu0 0.0
  %1303 = vmatpush1.xpose.msra.mxu0 0.0
  %1304 = vmatprep.subr.mxu0 0.0
  %1305 = vmatpush1.xpose.msra.mxu0 0.0
  %1306 = vmatprep.subr.mxu0 0.0
  %1307 = vmatpush1.xpose.msra.mxu0 0.0
  %1308 = vmatprep.subr.mxu0 0.0
  %1309 = vmatpush1.xpose.msra.mxu0 0.0
  %1310 = vmatprep.mubr.f32.mxu0 0.0
  %1311 = vmatmul.mubr.f32.gmra.mrb[0].mxu0 %v1238
  %v1312 = vpop.f32.mrb[0].mxu0
  %v1313 = vadd.f32 0.0, %v1312
  %v1314 = vpop.f32.mrb[0].mxu0
  %1315 = vmatprep.mubr.f32.mxu0 0.0
  %1316 = vmatmul.mubr.f32.gmra.mrb[0].mxu0 %v1240
  %v1317 = vpop.f32.mrb[0].mxu0
  %v1318 = vadd.f32 0.0, %v1317
  %v1319 = vpop.f32.mrb[0].mxu0
  %1320 = vdwg.mxu0
  %v1321 = vmul.f32 %v1313, 0.25
  %v1322 = vmul.f32 %v1318, 0.25
  %v1323 = vsel %vm702, %v1321, -inf
  %1324 = vmax.xlane.f32.xlu0 %v1323
  %v1325 = vpop.xlane.xlu0 %1324
  %v1326 = vsel %vm706, %v1322, -inf
  %1327 = vmax.xlane.f32.xlu0 %v1326
  %v1328 = vpop.xlane.xlu0 %1327
  %v1329 = vsub.f32 %v1321, %v1325
  %v1330 = vsub.f32 %v1322, %v1328
  %v1331 = vmul.f32 %v1329, 1.442695
  %v1332 = vpow.pop %v1331
  %v1333 = vmul.f32 %v1330, 1.442695
  %v1334 = vpow.pop %v1333
  %v1335 = vsel %vm702, %v1332, 0.0
  %1336 = vadd.xlane.f32.xlu0 %v1335
  %v1337 = vpop.xlane.xlu0 %1336
  %v1338 = vsel %vm706, %v1334, 0.0
  %1339 = vadd.xlane.f32.xlu0 %v1338
  %v1340 = vpop.xlane.xlu0 %1339
  %v1341 = vrcp.pop %v1337
  %v1342 = vrcp.pop %v1340
  %v1343 = vmul.f32 %v1332, %v1341
  %v1344 = vmul.f32 %v1334, %v1342
  %1345 = vrot.lane.b32.xlu0 %v1030, 48
  %v1346 = vpop.permute.xlu0 %1345
  %1347 = vrot.lane.b32.xlu0 %v1029, 48
  %v1348 = vpop.permute.xlu0 %1347
  %v1351 = vsel %vm702, %v1343, 0
  %v1354 = vsel %vm702, %v1344, 0
  %v1356 = vsel %vm452, %v1348, 0
  %1358 = vmatprep.subr.mxu0 0.0
  %1359 = vmatpush1.msra.mxu0 %v1346
  %1360 = vmatprep.subr.mxu0 0.0
  %1361 = vmatpush1.msra.mxu0 %v1356
  %1362 = vmatprep.subr.mxu0 0.0
  %1363 = vmatpush1.msra.mxu0 0.0
  %1364 = vmatprep.subr.mxu0 0.0
  %1365 = vmatpush1.msra.mxu0 0.0
  %1366 = vmatprep.subr.mxu0 0.0
  %1367 = vmatpush1.msra.mxu0 0.0
  %1368 = vmatprep.subr.mxu0 0.0
  %1369 = vmatpush1.msra.mxu0 0.0
  %1370 = vmatprep.subr.mxu0 0.0
  %1371 = vmatpush1.msra.mxu0 0.0
  %1372 = vmatprep.subr.mxu0 0.0
  %1373 = vmatpush1.msra.mxu0 0.0
  %1374 = vmatprep.subr.mxu0 0.0
  %1375 = vmatpush1.msra.mxu0 0.0
  %1376 = vmatprep.subr.mxu0 0.0
  %1377 = vmatpush1.msra.mxu0 0.0
  %1378 = vmatprep.subr.mxu0 0.0
  %1379 = vmatpush1.msra.mxu0 0.0
  %1380 = vmatprep.subr.mxu0 0.0
  %1381 = vmatpush1.msra.mxu0 0.0
  %1382 = vmatprep.subr.mxu0 0.0
  %1383 = vmatpush1.msra.mxu0 0.0
  %1384 = vmatprep.subr.mxu0 0.0
  %1385 = vmatpush1.msra.mxu0 0.0
  %1386 = vmatprep.subr.mxu0 0.0
  %1387 = vmatpush1.msra.mxu0 0.0
  %1388 = vmatprep.subr.mxu0 0.0
  %1389 = vmatpush1.msra.mxu0 0.0
  %1390 = vmatprep.subr.mxu0 0.0
  %1391 = vmatpush1.msra.mxu0 0.0
  %1392 = vmatprep.subr.mxu0 0.0
  %1393 = vmatpush1.msra.mxu0 0.0
  %1394 = vmatprep.subr.mxu0 0.0
  %1395 = vmatpush1.msra.mxu0 0.0
  %1396 = vmatprep.subr.mxu0 0.0
  %1397 = vmatpush1.msra.mxu0 0.0
  %1398 = vmatprep.subr.mxu0 0.0
  %1399 = vmatpush1.msra.mxu0 0.0
  %1400 = vmatprep.subr.mxu0 0.0
  %1401 = vmatpush1.msra.mxu0 0.0
  %1402 = vmatprep.subr.mxu0 0.0
  %1403 = vmatpush1.msra.mxu0 0.0
  %1404 = vmatprep.subr.mxu0 0.0
  %1405 = vmatpush1.msra.mxu0 0.0
  %1406 = vmatprep.subr.mxu0 0.0
  %1407 = vmatpush1.msra.mxu0 0.0
  %1408 = vmatprep.subr.mxu0 0.0
  %1409 = vmatpush1.msra.mxu0 0.0
  %1410 = vmatprep.subr.mxu0 0.0
  %1411 = vmatpush1.msra.mxu0 0.0
  %1412 = vmatprep.subr.mxu0 0.0
  %1413 = vmatpush1.msra.mxu0 0.0
  %1414 = vmatprep.subr.mxu0 0.0
  %1415 = vmatpush1.msra.mxu0 0.0
  %1416 = vmatprep.subr.mxu0 0.0
  %1417 = vmatpush1.msra.mxu0 0.0
  %1418 = vmatprep.subr.mxu0 0.0
  %1419 = vmatpush1.msra.mxu0 0.0
  %1420 = vmatprep.subr.mxu0 0.0
  %1421 = vmatpush1.msra.mxu0 0.0
  %1422 = vmatprep.mubr.f32.mxu0 0.0
  %1423 = vmatmul.mubr.f32.gmra.mrb[0].mxu0 %v1351
  %v1424 = vpop.f32.mrb[0].mxu0
  %v1425 = vadd.f32 0.0, %v1424
  %v1426 = vpop.f32.mrb[0].mxu0
  %1427 = vmatprep.mubr.f32.mxu0 0.0
  %1428 = vmatmul.mubr.f32.gmra.mrb[0].mxu0 %v1354
  %v1429 = vpop.f32.mrb[0].mxu0
  %v1430 = vadd.f32 0.0, %v1429
  %v1431 = vpop.f32.mrb[0].mxu0
  %1432 = vdwg.mxu0
  %1435 = vrot.lane.b32.xlu0 %v1425, 16
  %v1436 = vpop.permute.xlu0 %1435
  %1437 = vrot.lane.b32.xlu0 %v1430, 16
  %v1438 = vpop.permute.xlu0 %1437
  %v1441 = vsel %vm616, %v1222, %v1436
  %v1442 = vsel %vm616, %v1227, %v1438
  %v1445 = vrot.slane %v1441, 7
  %v1446 = vrot.slane %v1442, 7
  %v1447 = vsel %vm452, %v1445, %v1446
  %v1449 = vsel %vm452, %v1026, %v1445
  %v1450 = vld [vmem:[%s10] sm:$0xff]
  %v1451 = vld [vmem:[%s10 + $0x8] sm:$0xff]
  %v1452 = vld [vmem:[%s10 + $0x10] sm:$0xff]
  %v1453 = vld [vmem:[%s10 + $0x18] sm:$0xff]
  %v1454 = vld [vmem:[%s11] sm:$0x1]
  %v1456 = vlaneseq
  %v1457 = vshrl.u32 %v1456, 7
  %v1458 = vsub.s32 0, %v1457
  %v1459 = vrot.slane %v1454, %v1458
  %v1462 = vsel %vm383, %v1025, 0
  %v1465 = vsel %vm383, %v1449, 0
  %v1467 = vsel %vm383, %v1447, 0
  %1469 = vmatprep.subr.mxu0 0.0
  %1470 = vmatpush1.msra.mxu0 %v1450
  %1471 = vmatprep.subr.mxu0 0.0
  %1472 = vmatpush1.msra.mxu0 %v1451
  %1473 = vmatprep.subr.mxu0 0.0
  %1474 = vmatpush1.msra.mxu0 %v1452
  %1475 = vmatprep.subr.mxu0 0.0
  %1476 = vmatpush1.msra.mxu0 %v1453
  %1477 = vmatprep.subr.mxu0 0.0
  %1478 = vmatpush1.msra.mxu0 0.0
  %1479 = vmatprep.subr.mxu0 0.0
  %1480 = vmatpush1.msra.mxu0 0.0
  %1481 = vmatprep.subr.mxu0 0.0
  %1482 = vmatpush1.msra.mxu0 0.0
  %1483 = vmatprep.subr.mxu0 0.0
  %1484 = vmatpush1.msra.mxu0 0.0
  %1485 = vmatprep.subr.mxu0 0.0
  %1486 = vmatpush1.msra.mxu0 0.0
  %1487 = vmatprep.subr.mxu0 0.0
  %1488 = vmatpush1.msra.mxu0 0.0
  %1489 = vmatprep.subr.mxu0 0.0
  %1490 = vmatpush1.msra.mxu0 0.0
  %1491 = vmatprep.subr.mxu0 0.0
  %1492 = vmatpush1.msra.mxu0 0.0
  %1493 = vmatprep.subr.mxu0 0.0
  %1494 = vmatpush1.msra.mxu0 0.0
  %1495 = vmatprep.subr.mxu0 0.0
  %1496 = vmatpush1.msra.mxu0 0.0
  %1497 = vmatprep.subr.mxu0 0.0
  %1498 = vmatpush1.msra.mxu0 0.0
  %1499 = vmatprep.subr.mxu0 0.0
  %1500 = vmatpush1.msra.mxu0 0.0
  %1501 = vmatprep.subr.mxu0 0.0
  %1502 = vmatpush1.msra.mxu0 0.0
  %1503 = vmatprep.subr.mxu0 0.0
  %1504 = vmatpush1.msra.mxu0 0.0
  %1505 = vmatprep.subr.mxu0 0.0
  %1506 = vmatpush1.msra.mxu0 0.0
  %1507 = vmatprep.subr.mxu0 0.0
  %1508 = vmatpush1.msra.mxu0 0.0
  %1509 = vmatprep.subr.mxu0 0.0
  %1510 = vmatpush1.msra.mxu0 0.0
  %1511 = vmatprep.subr.mxu0 0.0
  %1512 = vmatpush1.msra.mxu0 0.0
  %1513 = vmatprep.subr.mxu0 0.0
  %1514 = vmatpush1.msra.mxu0 0.0
  %1515 = vmatprep.subr.mxu0 0.0
  %1516 = vmatpush1.msra.mxu0 0.0
  %1517 = vmatprep.subr.mxu0 0.0
  %1518 = vmatpush1.msra.mxu0 0.0
  %1519 = vmatprep.subr.mxu0 0.0
  %1520 = vmatpush1.msra.mxu0 0.0
  %1521 = vmatprep.subr.mxu0 0.0
  %1522 = vmatpush1.msra.mxu0 0.0
  %1523 = vmatprep.subr.mxu0 0.0
  %1524 = vmatpush1.msra.mxu0 0.0
  %1525 = vmatprep.subr.mxu0 0.0
  %1526 = vmatpush1.msra.mxu0 0.0
  %1527 = vmatprep.subr.mxu0 0.0
  %1528 = vmatpush1.msra.mxu0 0.0
  %1529 = vmatprep.subr.mxu0 0.0
  %1530 = vmatpush1.msra.mxu0 0.0
  %1531 = vmatprep.subr.mxu0 0.0
  %1532 = vmatpush1.msra.mxu0 0.0
  %1533 = vmatprep.mubr.f32.mxu0 0.0
  %1534 = vmatmul.mubr.f32.gmra.mrb[0].mxu0 %v1462
  %v1535 = vpop.f32.mrb[0].mxu0
  %v1536 = vadd.f32 %v1459, %v1535
  %v1537 = vpop.f32.mrb[0].mxu0
  %1538 = vmatprep.mubr.f32.mxu0 0.0
  %1539 = vmatmul.mubr.f32.gmra.mrb[0].mxu0 %v1465
  %v1540 = vpop.f32.mrb[0].mxu0
  %v1541 = vadd.f32 %v1459, %v1540
  %v1542 = vpop.f32.mrb[0].mxu0
  %1543 = vmatprep.mubr.f32.mxu0 0.0
  %1544 = vmatmul.mubr.f32.gmra.mrb[0].mxu0 %v1467
  %v1545 = vpop.f32.mrb[0].mxu0
  %v1546 = vadd.f32 %v1459, %v1545
  %v1547 = vpop.f32.mrb[0].mxu0
  %1548 = vdwg.mxu0
  %v1549 = vadd.f32 %v453, %v1536
  %v1550 = vadd.f32 %v456, %v1541
  %v1551 = vadd.f32 %v450, %v1546
  %v1552 = vld [vmem:[%s12] sm:$0x1]
  %v1553 = vld [vmem:[%s13] sm:$0x1]
  %v1554 = vsel %vm383, %v1549, 0.0
  %1555 = vadd.xlane.f32.xlu0 %v1554
  %v1556 = vpop.xlane.xlu0 %1555
  %v1557 = vsel %vm383, %v1550, 0.0
  %1558 = vadd.xlane.f32.xlu0 %v1557
  %v1559 = vpop.xlane.xlu0 %1558
  %v1560 = vsel %vm465, %v1551, 0.0
  %1561 = vadd.xlane.f32.xlu0 %v1560
  %v1562 = vpop.xlane.xlu0 %1561
  %v1563 = vmul.f32 %v1556, %v390
  %v1564 = vmul.f32 %v1559, %v390
  %v1565 = vmul.f32 %v1562, %v390
  %v1566 = vsub.f32 %v1549, %v1563
  %v1567 = vsub.f32 %v1550, %v1564
  %v1568 = vsub.f32 %v1551, %v1565
  %v1569 = vmul.f32 %v1566, %v1566
  %v1570 = vmul.f32 %v1567, %v1567
  %v1571 = vmul.f32 %v1568, %v1568
  %v1572 = vsel %vm383, %v1569, 0.0
  %1573 = vadd.xlane.f32.xlu0 %v1572
  %v1574 = vpop.xlane.xlu0 %1573
  %v1575 = vsel %vm383, %v1570, 0.0
  %1576 = vadd.xlane.f32.xlu0 %v1575
  %v1577 = vpop.xlane.xlu0 %1576
  %v1578 = vsel %vm465, %v1571, 0.0
  %1579 = vadd.xlane.f32.xlu0 %v1578
  %v1580 = vpop.xlane.xlu0 %1579
  %v1581 = vmul.f32 %v1574, %v390
  %v1582 = vmul.f32 %v1577, %v390
  %v1583 = vmul.f32 %v1580, %v390
  %v1584 = vadd.f32 %v1581, 1e-05
  %v1585 = vadd.f32 %v1582, 1e-05
  %v1586 = vadd.f32 %v1583, 1e-05
  %v1587 = vrsqrt.pop %v1584
  %v1588 = vrsqrt.pop %v1585
  %v1589 = vrsqrt.pop %v1586
  %v1590 = vmul.f32 %v1566, %v1587
  %v1591 = vmul.f32 %v1567, %v1588
  %v1592 = vmul.f32 %v1568, %v1589
  %v1594 = vlaneseq
  %v1595 = vshrl.u32 %v1594, 7
  %v1596 = vsub.s32 0, %v1595
  %v1597 = vrot.slane %v1552, %v1596
  %v1599 = vmul.f32 %v1590, %v1597
  %v1600 = vmul.f32 %v1591, %v1597
  %v1601 = vmul.f32 %v1592, %v1597
  %v1603 = vlaneseq
  %v1604 = vshrl.u32 %v1603, 7
  %v1605 = vsub.s32 0, %v1604
  %v1606 = vrot.slane %v1553, %v1605
  %v1608 = vadd.f32 %v1599, %v1606
  %v1609 = vadd.f32 %v1600, %v1606
  %v1610 = vadd.f32 %v1601, %v1606
  %v1611 = vld [vmem:[%s14] sm:$0xff]
  %v1612 = vld [vmem:[%s14 + $0x8] sm:$0xff]
  %v1613 = vld [vmem:[%s14 + $0x10] sm:$0xff]
  %v1614 = vld [vmem:[%s14 + $0x18] sm:$0xff]
  %v1615 = vld [vmem:[%s15] sm:$0x1]
  %v1617 = vlaneseq
  %v1618 = vshrl.u32 %v1617, 7
  %v1619 = vsub.s32 0, %v1618
  %v1620 = vrot.slane %v1615, %v1619
  %v1623 = vsel %vm383, %v1608, 0
  %v1626 = vsel %vm383, %v1609, 0
  %v1629 = vsel %vm383, %v1610, 0
  %1631 = vmatprep.subr.mxu0 0.0
  %1632 = vmatpush1.msra.mxu0 %v1611
  %1633 = vmatprep.subr.mxu0 0.0
  %1634 = vmatpush1.msra.mxu0 %v1612
  %1635 = vmatprep.subr.mxu0 0.0
  %1636 = vmatpush1.msra.mxu0 %v1613
  %1637 = vmatprep.subr.mxu0 0.0
  %1638 = vmatpush1.msra.mxu0 %v1614
  %1639 = vmatprep.subr.mxu0 0.0
  %1640 = vmatpush1.msra.mxu0 0.0
  %1641 = vmatprep.subr.mxu0 0.0
  %1642 = vmatpush1.msra.mxu0 0.0
  %1643 = vmatprep.subr.mxu0 0.0
  %1644 = vmatpush1.msra.mxu0 0.0
  %1645 = vmatprep.subr.mxu0 0.0
  %1646 = vmatpush1.msra.mxu0 0.0
  %1647 = vmatprep.subr.mxu0 0.0
  %1648 = vmatpush1.msra.mxu0 0.0
  %1649 = vmatprep.subr.mxu0 0.0
  %1650 = vmatpush1.msra.mxu0 0.0
  %1651 = vmatprep.subr.mxu0 0.0
  %1652 = vmatpush1.msra.mxu0 0.0
  %1653 = vmatprep.subr.mxu0 0.0
  %1654 = vmatpush1.msra.mxu0 0.0
  %1655 = vmatprep.subr.mxu0 0.0
  %1656 = vmatpush1.msra.mxu0 0.0
  %1657 = vmatprep.subr.mxu0 0.0
  %1658 = vmatpush1.msra.mxu0 0.0
  %1659 = vmatprep.subr.mxu0 0.0
  %1660 = vmatpush1.msra.mxu0 0.0
  %1661 = vmatprep.subr.mxu0 0.0
  %1662 = vmatpush1.msra.mxu0 0.0
  %1663 = vmatprep.subr.mxu0 0.0
  %1664 = vmatpush1.msra.mxu0 0.0
  %1665 = vmatprep.subr.mxu0 0.0
  %1666 = vmatpush1.msra.mxu0 0.0
  %1667 = vmatprep.subr.mxu0 0.0
  %1668 = vmatpush1.msra.mxu0 0.0
  %1669 = vmatprep.subr.mxu0 0.0
  %1670 = vmatpush1.msra.mxu0 0.0
  %1671 = vmatprep.subr.mxu0 0.0
  %1672 = vmatpush1.msra.mxu0 0.0
  %1673 = vmatprep.subr.mxu0 0.0
  %1674 = vmatpush1.msra.mxu0 0.0
  %1675 = vmatprep.subr.mxu0 0.0
  %1676 = vmatpush1.msra.mxu0 0.0
  %1677 = vmatprep.subr.mxu0 0.0
  %1678 = vmatpush1.msra.mxu0 0.0
  %1679 = vmatprep.subr.mxu0 0.0
  %1680 = vmatpush1.msra.mxu0 0.0
  %1681 = vmatprep.subr.mxu0 0.0
  %1682 = vmatpush1.msra.mxu0 0.0
  %1683 = vmatprep.subr.mxu0 0.0
  %1684 = vmatpush1.msra.mxu0 0.0
  %1685 = vmatprep.subr.mxu0 0.0
  %1686 = vmatpush1.msra.mxu0 0.0
  %1687 = vmatprep.subr.mxu0 0.0
  %1688 = vmatpush1.msra.mxu0 0.0
  %1689 = vmatprep.subr.mxu0 0.0
  %1690 = vmatpush1.msra.mxu0 0.0
  %1691 = vmatprep.subr.mxu0 0.0
  %1692 = vmatpush1.msra.mxu0 0.0
  %1693 = vmatprep.subr.mxu0 0.0
  %1694 = vmatpush1.msra.mxu0 0.0
  %1695 = vmatprep.mubr.f32.mxu0 0.0
  %1696 = vmatmul.mubr.f32.gmra.mrb[0].mxu0 %v1623
  %v1697 = vpop.f32.mrb[0].mxu0
  %v1698 = vadd.f32 %v1620, %v1697
  %v1699 = vpop.f32.mrb[0].mxu0
  %1700 = vmatprep.mubr.f32.mxu0 0.0
  %1701 = vmatmul.mubr.f32.gmra.mrb[0].mxu0 %v1626
  %v1702 = vpop.f32.mrb[0].mxu0
  %v1703 = vadd.f32 %v1620, %v1702
  %v1704 = vpop.f32.mrb[0].mxu0
  %1705 = vmatprep.mubr.f32.mxu0 0.0
  %1706 = vmatmul.mubr.f32.gmra.mrb[0].mxu0 %v1629
  %v1707 = vpop.f32.mrb[0].mxu0
  %v1708 = vadd.f32 %v1620, %v1707
  %v1709 = vpop.f32.mrb[0].mxu0
  %1710 = vdwg.mxu0
  %v1711 = vmul.f32 %v1698, 0.5
  %v1712 = vmul.f32 %v1703, 0.5
  %v1713 = vmul.f32 %v1708, 0.5
  %v1714 = vmul.f32 %v1698, 0.70710677
  %v1715 = vmul.f32 %v1703, 0.70710677
  %v1716 = vmul.f32 %v1708, 0.70710677
  %v1717 = vand.u32 2147483647, %v1714
  %v1718 = vand.u32 2147483647, %v1715
  %v1719 = vand.u32 2147483647, %v1716
  %v1720 = vmul.f32 %v1717, 0.3275911
  %v1721 = vmul.f32 %v1718, 0.3275911
  %v1722 = vmul.f32 %v1719, 0.3275911
  %v1723 = vadd.f32 %v1720, 1.0
  %v1724 = vadd.f32 %v1721, 1.0
  %v1725 = vadd.f32 %v1722, 1.0
  %v1726 = vrcp.pop %v1723
  %v1727 = vmul.f32 1.0, %v1726
  %v1728 = vrcp.pop %v1724
  %v1729 = vmul.f32 1.0, %v1728
  %v1730 = vrcp.pop %v1725
  %v1731 = vmul.f32 1.0, %v1730
  %v1732 = vmul.f32 %v1727, 1.0614054
  %v1733 = vmul.f32 %v1729, 1.0614054
  %v1734 = vmul.f32 %v1731, 1.0614054
  %v1735 = vadd.f32 %v1732, -1.4531521
  %v1736 = vadd.f32 %v1733, -1.4531521
  %v1737 = vadd.f32 %v1734, -1.4531521
  %v1738 = vmul.f32 %v1735, %v1727
  %v1739 = vmul.f32 %v1736, %v1729
  %v1740 = vmul.f32 %v1737, %v1731
  %v1741 = vadd.f32 %v1738, 1.4214138
  %v1742 = vadd.f32 %v1739, 1.4214138
  %v1743 = vadd.f32 %v1740, 1.4214138
  %v1744 = vmul.f32 %v1741, %v1727
  %v1745 = vmul.f32 %v1742, %v1729
  %v1746 = vmul.f32 %v1743, %v1731
  %v1747 = vadd.f32 %v1744, -0.28449672
  %v1748 = vadd.f32 %v1745, -0.28449672
  %v1749 = vadd.f32 %v1746, -0.28449672
  %v1750 = vmul.f32 %v1747, %v1727
  %v1751 = vmul.f32 %v1748, %v1729
  %v1752 = vmul.f32 %v1749, %v1731
  %v1753 = vadd.f32 %v1750, 0.2548296
  %v1754 = vadd.f32 %v1751, 0.2548296
  %v1755 = vadd.f32 %v1752, 0.2548296
  %v1756 = vmul.f32 %v1753, %v1727
  %v1757 = vmul.f32 %v1754, %v1729
  %v1758 = vmul.f32 %v1755, %v1731
  %v1759 = vsub.f32 0.0, %v1717
  %v1760 = vsub.f32 0.0, %v1718
  %v1761 = vsub.f32 0.0, %v1719
  %v1762 = vmul.f32 %v1759, %v1717
  %v1763 = vmul.f32 %v1760, %v1718
  %v1764 = vmul.f32 %v1761, %v1719
  %v1765 = vmul.f32 %v1762, 1.442695
  %v1766 = vpow.pop %v1765
  %v1767 = vmul.f32 %v1763, 1.442695
  %v1768 = vpow.pop %v1767
  %v1769 = vmul.f32 %v1764, 1.442695
  %v1770 = vpow.pop %v1769
  %v1771 = vmul.f32 %v1756, %v1766
  %v1772 = vmul.f32 %v1757, %v1768
  %v1773 = vmul.f32 %v1758, %v1770
  %v1774 = vsub.f32 1.0, %v1771
  %v1775 = vsub.f32 1.0, %v1772
  %v1776 = vsub.f32 1.0, %v1773
  %vm1777 = vcmp.lt.f32.partialorder %v1714, 0.0
  %vm1778 = vcmp.lt.f32.partialorder %v1715, 0.0
  %vm1779 = vcmp.lt.f32.partialorder %v1716, 0.0
  %v1780 = vsub.f32 0.0, %v1774
  %v1781 = vsub.f32 0.0, %v1775
  %v1782 = vsub.f32 0.0, %v1776
  %v1783 = vsel %vm1777, %v1780, %v1774
  %v1784 = vsel %vm1778, %v1781, %v1775
  %v1785 = vsel %vm1779, %v1782, %v1776
  %v1786 = vadd.f32 %v1783, 1.0
  %v1787 = vadd.f32 %v1784, 1.0
  %v1788 = vadd.f32 %v1785, 1.0
  %v1789 = vmul.f32 %v1711, %v1786
  %v1790 = vmul.f32 %v1712, %v1787
  %v1791 = vmul.f32 %v1713, %v1788
  %v1792 = vld [vmem:[%s16] sm:$0xff]
  %v1793 = vld [vmem:[%s16 + $0x8] sm:$0xff]
  %v1794 = vld [vmem:[%s16 + $0x10] sm:$0xff]
  %v1795 = vld [vmem:[%s16 + $0x18] sm:$0xff]
  %v1796 = vld [vmem:[%s16 + $0x20] sm:$0xff]
  %v1797 = vld [vmem:[%s16 + $0x28] sm:$0xff]
  %v1798 = vld [vmem:[%s16 + $0x30] sm:$0xff]
  %v1799 = vld [vmem:[%s16 + $0x38] sm:$0xff]
  %v1800 = vld [vmem:[%s17] sm:$0x1]
  %v1802 = vlaneseq
  %v1803 = vshrl.u32 %v1802, 7
  %v1804 = vsub.s32 0, %v1803
  %v1805 = vrot.slane %v1800, %v1804
  %vm1807 = vcmask 523264
  %v1809 = vsel %vm1807, %v1789, 0
  %v1812 = vsel %vm1807, %v1790, 0
  %v1815 = vsel %vm1807, %v1791, 0
  %1817 = vmatprep.subr.mxu0 0.0
  %1818 = vmatpush1.msra.mxu0 %v1792
  %1819 = vmatprep.subr.mxu0 0.0
  %1820 = vmatpush1.msra.mxu0 %v1793
  %1821 = vmatprep.subr.mxu0 0.0
  %1822 = vmatpush1.msra.mxu0 %v1794
  %1823 = vmatprep.subr.mxu0 0.0
  %1824 = vmatpush1.msra.mxu0 %v1795
  %1825 = vmatprep.subr.mxu0 0.0
  %1826 = vmatpush1.msra.mxu0 %v1796
  %1827 = vmatprep.subr.mxu0 0.0
  %1828 = vmatpush1.msra.mxu0 %v1797
  %1829 = vmatprep.subr.mxu0 0.0
  %1830 = vmatpush1.msra.mxu0 %v1798
  %1831 = vmatprep.subr.mxu0 0.0
  %1832 = vmatpush1.msra.mxu0 %v1799
  %1833 = vmatprep.subr.mxu0 0.0
  %1834 = vmatpush1.msra.mxu0 0.0
  %1835 = vmatprep.subr.mxu0 0.0
  %1836 = vmatpush1.msra.mxu0 0.0
  %1837 = vmatprep.subr.mxu0 0.0
  %1838 = vmatpush1.msra.mxu0 0.0
  %1839 = vmatprep.subr.mxu0 0.0
  %1840 = vmatpush1.msra.mxu0 0.0
  %1841 = vmatprep.subr.mxu0 0.0
  %1842 = vmatpush1.msra.mxu0 0.0
  %1843 = vmatprep.subr.mxu0 0.0
  %1844 = vmatpush1.msra.mxu0 0.0
  %1845 = vmatprep.subr.mxu0 0.0
  %1846 = vmatpush1.msra.mxu0 0.0
  %1847 = vmatprep.subr.mxu0 0.0
  %1848 = vmatpush1.msra.mxu0 0.0
  %1849 = vmatprep.subr.mxu0 0.0
  %1850 = vmatpush1.msra.mxu0 0.0
  %1851 = vmatprep.subr.mxu0 0.0
  %1852 = vmatpush1.msra.mxu0 0.0
  %1853 = vmatprep.subr.mxu0 0.0
  %1854 = vmatpush1.msra.mxu0 0.0
  %1855 = vmatprep.subr.mxu0 0.0
  %1856 = vmatpush1.msra.mxu0 0.0
  %1857 = vmatprep.subr.mxu0 0.0
  %1858 = vmatpush1.msra.mxu0 0.0
  %1859 = vmatprep.subr.mxu0 0.0
  %1860 = vmatpush1.msra.mxu0 0.0
  %1861 = vmatprep.subr.mxu0 0.0
  %1862 = vmatpush1.msra.mxu0 0.0
  %1863 = vmatprep.subr.mxu0 0.0
  %1864 = vmatpush1.msra.mxu0 0.0
  %1865 = vmatprep.subr.mxu0 0.0
  %1866 = vmatpush1.msra.mxu0 0.0
  %1867 = vmatprep.subr.mxu0 0.0
  %1868 = vmatpush1.msra.mxu0 0.0
  %1869 = vmatprep.subr.mxu0 0.0
  %1870 = vmatpush1.msra.mxu0 0.0
  %1871 = vmatprep.subr.mxu0 0.0
  %1872 = vmatpush1.msra.mxu0 0.0
  %1873 = vmatprep.subr.mxu0 0.0
  %1874 = vmatpush1.msra.mxu0 0.0
  %1875 = vmatprep.subr.mxu0 0.0
  %1876 = vmatpush1.msra.mxu0 0.0
  %1877 = vmatprep.subr.mxu0 0.0
  %1878 = vmatpush1.msra.mxu0 0.0
  %1879 = vmatprep.subr.mxu0 0.0
  %1880 = vmatpush1.msra.mxu0 0.0
  %1881 = vmatprep.mubr.f32.mxu0 0.0
  %1882 = vmatmul.mubr.f32.gmra.mrb[0].mxu0 %v1809
  %v1883 = vpop.f32.mrb[0].mxu0
  %v1884 = vadd.f32 %v1805, %v1883
  %v1885 = vpop.f32.mrb[0].mxu0
  %1886 = vmatprep.mubr.f32.mxu0 0.0
  %1887 = vmatmul.mubr.f32.gmra.mrb[0].mxu0 %v1812
  %v1888 = vpop.f32.mrb[0].mxu0
  %v1889 = vadd.f32 %v1805, %v1888
  %v1890 = vpop.f32.mrb[0].mxu0
  %1891 = vmatprep.mubr.f32.mxu0 0.0
  %1892 = vmatmul.mubr.f32.gmra.mrb[0].mxu0 %v1815
  %v1893 = vpop.f32.mrb[0].mxu0
  %v1894 = vadd.f32 %v1805, %v1893
  %v1895 = vpop.f32.mrb[0].mxu0
  %1896 = vdwg.mxu0
  %v1897 = vadd.f32 %v1549, %v1884
  %v1898 = vadd.f32 %v1550, %v1889
  %v1899 = vadd.f32 %v1551, %v1894
  %s1900 = scalar_lea.vmem %s7, 1
  %v1901 = vld [vmem:[%s1900] sm:$0x1]
  %s1902 = scalar_lea.vmem %s8, 1
  %v1903 = vld [vmem:[%s1902] sm:$0x1]
  %v1904 = vsel %vm383, %v1897, 0.0
  %1905 = vadd.xlane.f32.xlu0 %v1904
  %v1906 = vpop.xlane.xlu0 %1905
  %v1907 = vsel %vm383, %v1898, 0.0
  %1908 = vadd.xlane.f32.xlu0 %v1907
  %v1909 = vpop.xlane.xlu0 %1908
  %v1910 = vsel %vm465, %v1899, 0.0
  %1911 = vadd.xlane.f32.xlu0 %v1910
  %v1912 = vpop.xlane.xlu0 %1911
  %v1913 = vmul.f32 %v1906, %v390
  %v1914 = vmul.f32 %v1909, %v390
  %v1915 = vmul.f32 %v1912, %v390
  %v1916 = vsub.f32 %v1897, %v1913
  %v1917 = vsub.f32 %v1898, %v1914
  %v1918 = vsub.f32 %v1899, %v1915
  %v1919 = vmul.f32 %v1916, %v1916
  %v1920 = vmul.f32 %v1917, %v1917
  %v1921 = vmul.f32 %v1918, %v1918
  %v1922 = vsel %vm383, %v1919, 0.0
  %1923 = vadd.xlane.f32.xlu0 %v1922
  %v1924 = vpop.xlane.xlu0 %1923
  %v1925 = vsel %vm383, %v1920, 0.0
  %1926 = vadd.xlane.f32.xlu0 %v1925
  %v1927 = vpop.xlane.xlu0 %1926
  %v1928 = vsel %vm465, %v1921, 0.0
  %1929 = vadd.xlane.f32.xlu0 %v1928
  %v1930 = vpop.xlane.xlu0 %1929
  %v1931 = vmul.f32 %v1924, %v390
  %v1932 = vmul.f32 %v1927, %v390
  %v1933 = vmul.f32 %v1930, %v390
  %v1934 = vadd.f32 %v1931, 1e-05
  %v1935 = vadd.f32 %v1932, 1e-05
  %v1936 = vadd.f32 %v1933, 1e-05
  %v1937 = vrsqrt.pop %v1934
  %v1938 = vrsqrt.pop %v1935
  %v1939 = vrsqrt.pop %v1936
  %v1940 = vmul.f32 %v1916, %v1937
  %v1941 = vmul.f32 %v1917, %v1938
  %v1942 = vmul.f32 %v1918, %v1939
  %v1944 = vlaneseq
  %v1945 = vshrl.u32 %v1944, 7
  %v1946 = vsub.s32 0, %v1945
  %v1947 = vrot.slane %v1901, %v1946
  %v1949 = vmul.f32 %v1940, %v1947
  %v1950 = vmul.f32 %v1941, %v1947
  %v1951 = vmul.f32 %v1942, %v1947
  %v1953 = vlaneseq
  %v1954 = vshrl.u32 %v1953, 7
  %v1955 = vsub.s32 0, %v1954
  %v1956 = vrot.slane %v1903, %v1955
  %v1958 = vadd.f32 %v1949, %v1956
  %v1959 = vadd.f32 %v1950, %v1956
  %v1960 = vadd.f32 %v1951, %v1956
  %s1961 = scalar_lea.vmem %s9, 32
  %v1962 = vld [vmem:[%s1961] sm:$0xff]
  %v1963 = vld [vmem:[%s1961 + $0x8] sm:$0xff]
  %v1964 = vld [vmem:[%s1961 + $0x10] sm:$0xff]
  %v1965 = vld [vmem:[%s1961 + $0x18] sm:$0xff]
  %v1967 = vsel %vm383, %v1958, 0
  %v1970 = vsel %vm383, %v1959, 0
  %v1973 = vsel %vm383, %v1960, 0
  %1975 = vmatprep.subr.mxu0 0.0
  %1976 = vmatpush1.msra.mxu0 %v1962
  %1977 = vmatprep.subr.mxu0 0.0
  %1978 = vmatpush1.msra.mxu0 %v1963
  %1979 = vmatprep.subr.mxu0 0.0
  %1980 = vmatpush1.msra.mxu0 %v1964
  %1981 = vmatprep.subr.mxu0 0.0
  %1982 = vmatpush1.msra.mxu0 %v1965
  %1983 = vmatprep.subr.mxu0 0.0
  %1984 = vmatpush1.msra.mxu0 0.0
  %1985 = vmatprep.subr.mxu0 0.0
  %1986 = vmatpush1.msra.mxu0 0.0
  %1987 = vmatprep.subr.mxu0 0.0
  %1988 = vmatpush1.msra.mxu0 0.0
  %1989 = vmatprep.subr.mxu0 0.0
  %1990 = vmatpush1.msra.mxu0 0.0
  %1991 = vmatprep.subr.mxu0 0.0
  %1992 = vmatpush1.msra.mxu0 0.0
  %1993 = vmatprep.subr.mxu0 0.0
  %1994 = vmatpush1.msra.mxu0 0.0
  %1995 = vmatprep.subr.mxu0 0.0
  %1996 = vmatpush1.msra.mxu0 0.0
  %1997 = vmatprep.subr.mxu0 0.0
  %1998 = vmatpush1.msra.mxu0 0.0
  %1999 = vmatprep.subr.mxu0 0.0
  %2000 = vmatpush1.msra.mxu0 0.0
  %2001 = vmatprep.subr.mxu0 0.0
  %2002 = vmatpush1.msra.mxu0 0.0
  %2003 = vmatprep.subr.mxu0 0.0
  %2004 = vmatpush1.msra.mxu0 0.0
  %2005 = vmatprep.subr.mxu0 0.0
  %2006 = vmatpush1.msra.mxu0 0.0
  %2007 = vmatprep.subr.mxu0 0.0
  %2008 = vmatpush1.msra.mxu0 0.0
  %2009 = vmatprep.subr.mxu0 0.0
  %2010 = vmatpush1.msra.mxu0 0.0
  %2011 = vmatprep.subr.mxu0 0.0
  %2012 = vmatpush1.msra.mxu0 0.0
  %2013 = vmatprep.subr.mxu0 0.0
  %2014 = vmatpush1.msra.mxu0 0.0
  %2015 = vmatprep.subr.mxu0 0.0
  %2016 = vmatpush1.msra.mxu0 0.0
  %2017 = vmatprep.subr.mxu0 0.0
  %2018 = vmatpush1.msra.mxu0 0.0
  %2019 = vmatprep.subr.mxu0 0.0
  %2020 = vmatpush1.msra.mxu0 0.0
  %2021 = vmatprep.subr.mxu0 0.0
  %2022 = vmatpush1.msra.mxu0 0.0
  %2023 = vmatprep.subr.mxu0 0.0
  %2024 = vmatpush1.msra.mxu0 0.0
  %2025 = vmatprep.subr.mxu0 0.0
  %2026 = vmatpush1.msra.mxu0 0.0
  %2027 = vmatprep.subr.mxu0 0.0
  %2028 = vmatpush1.msra.mxu0 0.0
  %2029 = vmatprep.subr.mxu0 0.0
  %2030 = vmatpush1.msra.mxu0 0.0
  %2031 = vmatprep.subr.mxu0 0.0
  %2032 = vmatpush1.msra.mxu0 0.0
  %2033 = vmatprep.subr.mxu0 0.0
  %2034 = vmatpush1.msra.mxu0 0.0
  %2035 = vmatprep.subr.mxu0 0.0
  %2036 = vmatpush1.msra.mxu0 0.0
  %2037 = vmatprep.subr.mxu0 0.0
  %2038 = vmatpush1.msra.mxu0 0.0
  %2039 = vmatprep.mubr.f32.mxu0 0.0
  %2040 = vmatmul.mubr.f32.gmra.mrb[0].mxu0 %v1967
  %v2041 = vpop.f32.mrb[0].mxu0
  %v2042 = vadd.f32 0.0, %v2041
  %v2043 = vpop.f32.mrb[0].mxu0
  %2044 = vmatprep.mubr.f32.mxu0 0.0
  %2045 = vmatmul.mubr.f32.gmra.mrb[0].mxu0 %v1970
  %v2046 = vpop.f32.mrb[0].mxu0
  %v2047 = vadd.f32 0.0, %v2046
  %v2048 = vpop.f32.mrb[0].mxu0
  %2049 = vmatprep.mubr.f32.mxu0 0.0
  %2050 = vmatmul.mubr.f32.gmra.mrb[0].mxu0 %v1973
  %v2051 = vpop.f32.mrb[0].mxu0
  %v2052 = vadd.f32 0.0, %v2051
  %v2053 = vpop.f32.mrb[0].mxu0
  %2054 = vdwg.mxu0
  %2057 = vrot.lane.b32.xlu0 %v2042, 96
  %v2058 = vpop.permute.xlu0 %2057
  %2059 = vrot.lane.b32.xlu0 %v2047, 96
  %v2060 = vpop.permute.xlu0 %2059
  %v2061 = vsel %vm616, %v2042, 0
  %v2063 = vsel %vm616, %v2047, 0
  %v2065 = vsel %vm616, %v2058, 0
  %v2067 = vsel %vm616, %v2060, 0
  %2069 = vmatprep.subr.mxu0 0.0
  %2070 = vmatpush1.xpose.msra.mxu0 %v2065
  %2071 = vmatprep.subr.mxu0 0.0
  %2072 = vmatpush1.xpose.msra.mxu0 %v2067
  %2073 = vmatprep.subr.mxu0 0.0
  %2074 = vmatpush1.xpose.msra.mxu0 0.0
  %2075 = vmatprep.subr.mxu0 0.0
  %2076 = vmatpush1.xpose.msra.mxu0 0.0
  %2077 = vmatprep.subr.mxu0 0.0
  %2078 = vmatpush1.xpose.msra.mxu0 0.0
  %2079 = vmatprep.subr.mxu0 0.0
  %2080 = vmatpush1.xpose.msra.mxu0 0.0
  %2081 = vmatprep.subr.mxu0 0.0
  %2082 = vmatpush1.xpose.msra.mxu0 0.0
  %2083 = vmatprep.subr.mxu0 0.0
  %2084 = vmatpush1.xpose.msra.mxu0 0.0
  %2085 = vmatprep.subr.mxu0 0.0
  %2086 = vmatpush1.xpose.msra.mxu0 0.0
  %2087 = vmatprep.subr.mxu0 0.0
  %2088 = vmatpush1.xpose.msra.mxu0 0.0
  %2089 = vmatprep.subr.mxu0 0.0
  %2090 = vmatpush1.xpose.msra.mxu0 0.0
  %2091 = vmatprep.subr.mxu0 0.0
  %2092 = vmatpush1.xpose.msra.mxu0 0.0
  %2093 = vmatprep.subr.mxu0 0.0
  %2094 = vmatpush1.xpose.msra.mxu0 0.0
  %2095 = vmatprep.subr.mxu0 0.0
  %2096 = vmatpush1.xpose.msra.mxu0 0.0
  %2097 = vmatprep.subr.mxu0 0.0
  %2098 = vmatpush1.xpose.msra.mxu0 0.0
  %2099 = vmatprep.subr.mxu0 0.0
  %2100 = vmatpush1.xpose.msra.mxu0 0.0
  %2101 = vmatprep.subr.mxu0 0.0
  %2102 = vmatpush1.xpose.msra.mxu0 0.0
  %2103 = vmatprep.subr.mxu0 0.0
  %2104 = vmatpush1.xpose.msra.mxu0 0.0
  %2105 = vmatprep.subr.mxu0 0.0
  %2106 = vmatpush1.xpose.msra.mxu0 0.0
  %2107 = vmatprep.subr.mxu0 0.0
  %2108 = vmatpush1.xpose.msra.mxu0 0.0
  %2109 = vmatprep.subr.mxu0 0.0
  %2110 = vmatpush1.xpose.msra.mxu0 0.0
  %2111 = vmatprep.subr.mxu0 0.0
  %2112 = vmatpush1.xpose.msra.mxu0 0.0
  %2113 = vmatprep.subr.mxu0 0.0
  %2114 = vmatpush1.xpose.msra.mxu0 0.0
  %2115 = vmatprep.subr.mxu0 0.0
  %2116 = vmatpush1.xpose.msra.mxu0 0.0
  %2117 = vmatprep.subr.mxu0 0.0
  %2118 = vmatpush1.xpose.msra.mxu0 0.0
  %2119 = vmatprep.subr.mxu0 0.0
  %2120 = vmatpush1.xpose.msra.mxu0 0.0
  %2121 = vmatprep.subr.mxu0 0.0
  %2122 = vmatpush1.xpose.msra.mxu0 0.0
  %2123 = vmatprep.subr.mxu0 0.0
  %2124 = vmatpush1.xpose.msra.mxu0 0.0
  %2125 = vmatprep.subr.mxu0 0.0
  %2126 = vmatpush1.xpose.msra.mxu0 0.0
  %2127 = vmatprep.subr.mxu0 0.0
  %2128 = vmatpush1.xpose.msra.mxu0 0.0
  %2129 = vmatprep.subr.mxu0 0.0
  %2130 = vmatpush1.xpose.msra.mxu0 0.0
  %2131 = vmatprep.subr.mxu0 0.0
  %2132 = vmatpush1.xpose.msra.mxu0 0.0
  %2133 = vmatprep.mubr.f32.mxu0 0.0
  %2134 = vmatmul.mubr.f32.gmra.mrb[0].mxu0 %v2061
  %v2135 = vpop.f32.mrb[0].mxu0
  %v2136 = vadd.f32 0.0, %v2135
  %v2137 = vpop.f32.mrb[0].mxu0
  %2138 = vmatprep.mubr.f32.mxu0 0.0
  %2139 = vmatmul.mubr.f32.gmra.mrb[0].mxu0 %v2063
  %v2140 = vpop.f32.mrb[0].mxu0
  %v2141 = vadd.f32 0.0, %v2140
  %v2142 = vpop.f32.mrb[0].mxu0
  %2143 = vdwg.mxu0
  %v2144 = vmul.f32 %v2136, 0.25
  %v2145 = vmul.f32 %v2141, 0.25
  %v2146 = vsel %vm702, %v2144, -inf
  %2147 = vmax.xlane.f32.xlu0 %v2146
  %v2148 = vpop.xlane.xlu0 %2147
  %v2149 = vsel %vm706, %v2145, -inf
  %2150 = vmax.xlane.f32.xlu0 %v2149
  %v2151 = vpop.xlane.xlu0 %2150
  %v2152 = vsub.f32 %v2144, %v2148
  %v2153 = vsub.f32 %v2145, %v2151
  %v2154 = vmul.f32 %v2152, 1.442695
  %v2155 = vpow.pop %v2154
  %v2156 = vmul.f32 %v2153, 1.442695
  %v2157 = vpow.pop %v2156
  %v2158 = vsel %vm702, %v2155, 0.0
  %2159 = vadd.xlane.f32.xlu0 %v2158
  %v2160 = vpop.xlane.xlu0 %2159
  %v2161 = vsel %vm706, %v2157, 0.0
  %2162 = vadd.xlane.f32.xlu0 %v2161
  %v2163 = vpop.xlane.xlu0 %2162
  %v2164 = vrcp.pop %v2160
  %v2165 = vrcp.pop %v2163
  %v2166 = vmul.f32 %v2155, %v2164
  %v2167 = vmul.f32 %v2157, %v2165
  %2168 = vrot.lane.b32.xlu0 %v2042, 64
  %v2169 = vpop.permute.xlu0 %2168
  %2170 = vrot.lane.b32.xlu0 %v2047, 64
  %v2171 = vpop.permute.xlu0 %2170
  %v2174 = vsel %vm702, %v2166, 0
  %v2177 = vsel %vm702, %v2167, 0
  %v2179 = vsel %vm452, %v2171, 0
  %2181 = vmatprep.subr.mxu0 0.0
  %2182 = vmatpush1.msra.mxu0 %v2169
  %2183 = vmatprep.subr.mxu0 0.0
  %2184 = vmatpush1.msra.mxu0 %v2179
  %2185 = vmatprep.subr.mxu0 0.0
  %2186 = vmatpush1.msra.mxu0 0.0
  %2187 = vmatprep.subr.mxu0 0.0
  %2188 = vmatpush1.msra.mxu0 0.0
  %2189 = vmatprep.subr.mxu0 0.0
  %2190 = vmatpush1.msra.mxu0 0.0
  %2191 = vmatprep.subr.mxu0 0.0
  %2192 = vmatpush1.msra.mxu0 0.0
  %2193 = vmatprep.subr.mxu0 0.0
  %2194 = vmatpush1.msra.mxu0 0.0
  %2195 = vmatprep.subr.mxu0 0.0
  %2196 = vmatpush1.msra.mxu0 0.0
  %2197 = vmatprep.subr.mxu0 0.0
  %2198 = vmatpush1.msra.mxu0 0.0
  %2199 = vmatprep.subr.mxu0 0.0
  %2200 = vmatpush1.msra.mxu0 0.0
  %2201 = vmatprep.subr.mxu0 0.0
  %2202 = vmatpush1.msra.mxu0 0.0
  %2203 = vmatprep.subr.mxu0 0.0
  %2204 = vmatpush1.msra.mxu0 0.0
  %2205 = vmatprep.subr.mxu0 0.0
  %2206 = vmatpush1.msra.mxu0 0.0
  %2207 = vmatprep.subr.mxu0 0.0
  %2208 = vmatpush1.msra.mxu0 0.0
  %2209 = vmatprep.subr.mxu0 0.0
  %2210 = vmatpush1.msra.mxu0 0.0
  %2211 = vmatprep.subr.mxu0 0.0
  %2212 = vmatpush1.msra.mxu0 0.0
  %2213 = vmatprep.subr.mxu0 0.0
  %2214 = vmatpush1.msra.mxu0 0.0
  %2215 = vmatprep.subr.mxu0 0.0
  %2216 = vmatpush1.msra.mxu0 0.0
  %2217 = vmatprep.subr.mxu0 0.0
  %2218 = vmatpush1.msra.mxu0 0.0
  %2219 = vmatprep.subr.mxu0 0.0
  %2220 = vmatpush1.msra.mxu0 0.0
  %2221 = vmatprep.subr.mxu0 0.0
  %2222 = vmatpush1.msra.mxu0 0.0
  %2223 = vmatprep.subr.mxu0 0.0
  %2224 = vmatpush1.msra.mxu0 0.0
  %2225 = vmatprep.subr.mxu0 0.0
  %2226 = vmatpush1.msra.mxu0 0.0
  %2227 = vmatprep.subr.mxu0 0.0
  %2228 = vmatpush1.msra.mxu0 0.0
  %2229 = vmatprep.subr.mxu0 0.0
  %2230 = vmatpush1.msra.mxu0 0.0
  %2231 = vmatprep.subr.mxu0 0.0
  %2232 = vmatpush1.msra.mxu0 0.0
  %2233 = vmatprep.subr.mxu0 0.0
  %2234 = vmatpush1.msra.mxu0 0.0
  %2235 = vmatprep.subr.mxu0 0.0
  %2236 = vmatpush1.msra.mxu0 0.0
  %2237 = vmatprep.subr.mxu0 0.0
  %2238 = vmatpush1.msra.mxu0 0.0
  %2239 = vmatprep.subr.mxu0 0.0
  %2240 = vmatpush1.msra.mxu0 0.0
  %2241 = vmatprep.subr.mxu0 0.0
  %2242 = vmatpush1.msra.mxu0 0.0
  %2243 = vmatprep.subr.mxu0 0.0
  %2244 = vmatpush1.msra.mxu0 0.0
  %2245 = vmatprep.mubr.f32.mxu0 0.0
  %2246 = vmatmul.mubr.f32.gmra.mrb[0].mxu0 %v2174
  %v2247 = vpop.f32.mrb[0].mxu0
  %v2248 = vadd.f32 0.0, %v2247
  %v2249 = vpop.f32.mrb[0].mxu0
  %2250 = vmatprep.mubr.f32.mxu0 0.0
  %2251 = vmatmul.mubr.f32.gmra.mrb[0].mxu0 %v2177
  %v2252 = vpop.f32.mrb[0].mxu0
  %v2253 = vadd.f32 0.0, %v2252
  %v2254 = vpop.f32.mrb[0].mxu0
  %2255 = vdwg.mxu0
  %2256 = vrot.lane.b32.xlu0 %v2042, 112
  %v2257 = vpop.permute.xlu0 %2256
  %2258 = vrot.lane.b32.xlu0 %v2047, 112
  %v2259 = vpop.permute.xlu0 %2258
  %2260 = vrot.lane.b32.xlu0 %v2042, 80
  %v2261 = vpop.permute.xlu0 %2260
  %2262 = vrot.lane.b32.xlu0 %v2047, 80
  %v2263 = vpop.permute.xlu0 %2262
  %v2264 = vsel %vm616, %v2257, 0
  %v2266 = vsel %vm616, %v2259, 0
  %v2268 = vsel %vm616, %v2261, 0
  %v2270 = vsel %vm616, %v2263, 0
  %2272 = vmatprep.subr.mxu0 0.0
  %2273 = vmatpush1.xpose.msra.mxu0 %v2268
  %2274 = vmatprep.subr.mxu0 0.0
  %2275 = vmatpush1.xpose.msra.mxu0 %v2270
  %2276 = vmatprep.subr.mxu0 0.0
  %2277 = vmatpush1.xpose.msra.mxu0 0.0
  %2278 = vmatprep.subr.mxu0 0.0
  %2279 = vmatpush1.xpose.msra.mxu0 0.0
  %2280 = vmatprep.subr.mxu0 0.0
  %2281 = vmatpush1.xpose.msra.mxu0 0.0
  %2282 = vmatprep.subr.mxu0 0.0
  %2283 = vmatpush1.xpose.msra.mxu0 0.0
  %2284 = vmatprep.subr.mxu0 0.0
  %2285 = vmatpush1.xpose.msra.mxu0 0.0
  %2286 = vmatprep.subr.mxu0 0.0
  %2287 = vmatpush1.xpose.msra.mxu0 0.0
  %2288 = vmatprep.subr.mxu0 0.0
  %2289 = vmatpush1.xpose.msra.mxu0 0.0
  %2290 = vmatprep.subr.mxu0 0.0
  %2291 = vmatpush1.xpose.msra.mxu0 0.0
  %2292 = vmatprep.subr.mxu0 0.0
  %2293 = vmatpush1.xpose.msra.mxu0 0.0
  %2294 = vmatprep.subr.mxu0 0.0
  %2295 = vmatpush1.xpose.msra.mxu0 0.0
  %2296 = vmatprep.subr.mxu0 0.0
  %2297 = vmatpush1.xpose.msra.mxu0 0.0
  %2298 = vmatprep.subr.mxu0 0.0
  %2299 = vmatpush1.xpose.msra.mxu0 0.0
  %2300 = vmatprep.subr.mxu0 0.0
  %2301 = vmatpush1.xpose.msra.mxu0 0.0
  %2302 = vmatprep.subr.mxu0 0.0
  %2303 = vmatpush1.xpose.msra.mxu0 0.0
  %2304 = vmatprep.subr.mxu0 0.0
  %2305 = vmatpush1.xpose.msra.mxu0 0.0
  %2306 = vmatprep.subr.mxu0 0.0
  %2307 = vmatpush1.xpose.msra.mxu0 0.0
  %2308 = vmatprep.subr.mxu0 0.0
  %2309 = vmatpush1.xpose.msra.mxu0 0.0
  %2310 = vmatprep.subr.mxu0 0.0
  %2311 = vmatpush1.xpose.msra.mxu0 0.0
  %2312 = vmatprep.subr.mxu0 0.0
  %2313 = vmatpush1.xpose.msra.mxu0 0.0
  %2314 = vmatprep.subr.mxu0 0.0
  %2315 = vmatpush1.xpose.msra.mxu0 0.0
  %2316 = vmatprep.subr.mxu0 0.0
  %2317 = vmatpush1.xpose.msra.mxu0 0.0
  %2318 = vmatprep.subr.mxu0 0.0
  %2319 = vmatpush1.xpose.msra.mxu0 0.0
  %2320 = vmatprep.subr.mxu0 0.0
  %2321 = vmatpush1.xpose.msra.mxu0 0.0
  %2322 = vmatprep.subr.mxu0 0.0
  %2323 = vmatpush1.xpose.msra.mxu0 0.0
  %2324 = vmatprep.subr.mxu0 0.0
  %2325 = vmatpush1.xpose.msra.mxu0 0.0
  %2326 = vmatprep.subr.mxu0 0.0
  %2327 = vmatpush1.xpose.msra.mxu0 0.0
  %2328 = vmatprep.subr.mxu0 0.0
  %2329 = vmatpush1.xpose.msra.mxu0 0.0
  %2330 = vmatprep.subr.mxu0 0.0
  %2331 = vmatpush1.xpose.msra.mxu0 0.0
  %2332 = vmatprep.subr.mxu0 0.0
  %2333 = vmatpush1.xpose.msra.mxu0 0.0
  %2334 = vmatprep.subr.mxu0 0.0
  %2335 = vmatpush1.xpose.msra.mxu0 0.0
  %2336 = vmatprep.mubr.f32.mxu0 0.0
  %2337 = vmatmul.mubr.f32.gmra.mrb[0].mxu0 %v2264
  %v2338 = vpop.f32.mrb[0].mxu0
  %v2339 = vadd.f32 0.0, %v2338
  %v2340 = vpop.f32.mrb[0].mxu0
  %2341 = vmatprep.mubr.f32.mxu0 0.0
  %2342 = vmatmul.mubr.f32.gmra.mrb[0].mxu0 %v2266
  %v2343 = vpop.f32.mrb[0].mxu0
  %v2344 = vadd.f32 0.0, %v2343
  %v2345 = vpop.f32.mrb[0].mxu0
  %2346 = vdwg.mxu0
  %v2347 = vmul.f32 %v2339, 0.25
  %v2348 = vmul.f32 %v2344, 0.25
  %v2349 = vsel %vm702, %v2347, -inf
  %2350 = vmax.xlane.f32.xlu0 %v2349
  %v2351 = vpop.xlane.xlu0 %2350
  %v2352 = vsel %vm706, %v2348, -inf
  %2353 = vmax.xlane.f32.xlu0 %v2352
  %v2354 = vpop.xlane.xlu0 %2353
  %v2355 = vsub.f32 %v2347, %v2351
  %v2356 = vsub.f32 %v2348, %v2354
  %v2357 = vmul.f32 %v2355, 1.442695
  %v2358 = vpow.pop %v2357
  %v2359 = vmul.f32 %v2356, 1.442695
  %v2360 = vpow.pop %v2359
  %v2361 = vsel %vm702, %v2358, 0.0
  %2362 = vadd.xlane.f32.xlu0 %v2361
  %v2363 = vpop.xlane.xlu0 %2362
  %v2364 = vsel %vm706, %v2360, 0.0
  %2365 = vadd.xlane.f32.xlu0 %v2364
  %v2366 = vpop.xlane.xlu0 %2365
  %v2367 = vrcp.pop %v2363
  %v2368 = vrcp.pop %v2366
  %v2369 = vmul.f32 %v2358, %v2367
  %v2370 = vmul.f32 %v2360, %v2368
  %2371 = vrot.lane.b32.xlu0 %v2042, 48
  %v2372 = vpop.permute.xlu0 %2371
  %2373 = vrot.lane.b32.xlu0 %v2047, 48
  %v2374 = vpop.permute.xlu0 %2373
  %v2377 = vsel %vm702, %v2369, 0
  %v2380 = vsel %vm702, %v2370, 0
  %v2382 = vsel %vm452, %v2374, 0
  %2384 = vmatprep.subr.mxu0 0.0
  %2385 = vmatpush1.msra.mxu0 %v2372
  %2386 = vmatprep.subr.mxu0 0.0
  %2387 = vmatpush1.msra.mxu0 %v2382
  %2388 = vmatprep.subr.mxu0 0.0
  %2389 = vmatpush1.msra.mxu0 0.0
  %2390 = vmatprep.subr.mxu0 0.0
  %2391 = vmatpush1.msra.mxu0 0.0
  %2392 = vmatprep.subr.mxu0 0.0
  %2393 = vmatpush1.msra.mxu0 0.0
  %2394 = vmatprep.subr.mxu0 0.0
  %2395 = vmatpush1.msra.mxu0 0.0
  %2396 = vmatprep.subr.mxu0 0.0
  %2397 = vmatpush1.msra.mxu0 0.0
  %2398 = vmatprep.subr.mxu0 0.0
  %2399 = vmatpush1.msra.mxu0 0.0
  %2400 = vmatprep.subr.mxu0 0.0
  %2401 = vmatpush1.msra.mxu0 0.0
  %2402 = vmatprep.subr.mxu0 0.0
  %2403 = vmatpush1.msra.mxu0 0.0
  %2404 = vmatprep.subr.mxu0 0.0
  %2405 = vmatpush1.msra.mxu0 0.0
  %2406 = vmatprep.subr.mxu0 0.0
  %2407 = vmatpush1.msra.mxu0 0.0
  %2408 = vmatprep.subr.mxu0 0.0
  %2409 = vmatpush1.msra.mxu0 0.0
  %2410 = vmatprep.subr.mxu0 0.0
  %2411 = vmatpush1.msra.mxu0 0.0
  %2412 = vmatprep.subr.mxu0 0.0
  %2413 = vmatpush1.msra.mxu0 0.0
  %2414 = vmatprep.subr.mxu0 0.0
  %2415 = vmatpush1.msra.mxu0 0.0
  %2416 = vmatprep.subr.mxu0 0.0
  %2417 = vmatpush1.msra.mxu0 0.0
  %2418 = vmatprep.subr.mxu0 0.0
  %2419 = vmatpush1.msra.mxu0 0.0
  %2420 = vmatprep.subr.mxu0 0.0
  %2421 = vmatpush1.msra.mxu0 0.0
  %2422 = vmatprep.subr.mxu0 0.0
  %2423 = vmatpush1.msra.mxu0 0.0
  %2424 = vmatprep.subr.mxu0 0.0
  %2425 = vmatpush1.msra.mxu0 0.0
  %2426 = vmatprep.subr.mxu0 0.0
  %2427 = vmatpush1.msra.mxu0 0.0
  %2428 = vmatprep.subr.mxu0 0.0
  %2429 = vmatpush1.msra.mxu0 0.0
  %2430 = vmatprep.subr.mxu0 0.0
  %2431 = vmatpush1.msra.mxu0 0.0
  %2432 = vmatprep.subr.mxu0 0.0
  %2433 = vmatpush1.msra.mxu0 0.0
  %2434 = vmatprep.subr.mxu0 0.0
  %2435 = vmatpush1.msra.mxu0 0.0
  %2436 = vmatprep.subr.mxu0 0.0
  %2437 = vmatpush1.msra.mxu0 0.0
  %2438 = vmatprep.subr.mxu0 0.0
  %2439 = vmatpush1.msra.mxu0 0.0
  %2440 = vmatprep.subr.mxu0 0.0
  %2441 = vmatpush1.msra.mxu0 0.0
  %2442 = vmatprep.subr.mxu0 0.0
  %2443 = vmatpush1.msra.mxu0 0.0
  %2444 = vmatprep.subr.mxu0 0.0
  %2445 = vmatpush1.msra.mxu0 0.0
  %2446 = vmatprep.subr.mxu0 0.0
  %2447 = vmatpush1.msra.mxu0 0.0
  %2448 = vmatprep.mubr.f32.mxu0 0.0
  %2449 = vmatmul.mubr.f32.gmra.mrb[0].mxu0 %v2377
  %v2450 = vpop.f32.mrb[0].mxu0
  %v2451 = vadd.f32 0.0, %v2450
  %v2452 = vpop.f32.mrb[0].mxu0
  %2453 = vmatprep.mubr.f32.mxu0 0.0
  %2454 = vmatmul.mubr.f32.gmra.mrb[0].mxu0 %v2380
  %v2455 = vpop.f32.mrb[0].mxu0
  %v2456 = vadd.f32 0.0, %v2455
  %v2457 = vpop.f32.mrb[0].mxu0
  %2458 = vdwg.mxu0
  %2461 = vrot.lane.b32.xlu0 %v2451, 16
  %v2462 = vpop.permute.xlu0 %2461
  %2463 = vrot.lane.b32.xlu0 %v2456, 16
  %v2464 = vpop.permute.xlu0 %2463
  %v2467 = vsel %vm616, %v2248, %v2462
  %v2468 = vsel %vm616, %v2253, %v2464
  %v2470 = vrot.slane %v2047, 1
  %v2471 = vrot.slane %v2052, 1
  %v2472 = vsel %vm433, %v2470, %v2471
  %2473 = vrot.lane.b32.xlu0 %v2472, 96
  %v2474 = vpop.permute.xlu0 %2473
  %2475 = vrot.lane.b32.xlu0 %v2471, 96
  %v2476 = vpop.permute.xlu0 %2475
  %v2477 = vsel %vm616, %v2472, 0
  %v2479 = vsel %vm616, %v2471, 0
  %v2481 = vsel %vm616, %v2474, 0
  %v2483 = vsel %vm616, %v2476, 0
  %2485 = vmatprep.subr.mxu0 0.0
  %2486 = vmatpush1.xpose.msra.mxu0 %v2481
  %2487 = vmatprep.subr.mxu0 0.0
  %2488 = vmatpush1.xpose.msra.mxu0 %v2483
  %2489 = vmatprep.subr.mxu0 0.0
  %2490 = vmatpush1.xpose.msra.mxu0 0.0
  %2491 = vmatprep.subr.mxu0 0.0
  %2492 = vmatpush1.xpose.msra.mxu0 0.0
  %2493 = vmatprep.subr.mxu0 0.0
  %2494 = vmatpush1.xpose.msra.mxu0 0.0
  %2495 = vmatprep.subr.mxu0 0.0
  %2496 = vmatpush1.xpose.msra.mxu0 0.0
  %2497 = vmatprep.subr.mxu0 0.0
  %2498 = vmatpush1.xpose.msra.mxu0 0.0
  %2499 = vmatprep.subr.mxu0 0.0
  %2500 = vmatpush1.xpose.msra.mxu0 0.0
  %2501 = vmatprep.subr.mxu0 0.0
  %2502 = vmatpush1.xpose.msra.mxu0 0.0
  %2503 = vmatprep.subr.mxu0 0.0
  %2504 = vmatpush1.xpose.msra.mxu0 0.0
  %2505 = vmatprep.subr.mxu0 0.0
  %2506 = vmatpush1.xpose.msra.mxu0 0.0
  %2507 = vmatprep.subr.mxu0 0.0
  %2508 = vmatpush1.xpose.msra.mxu0 0.0
  %2509 = vmatprep.subr.mxu0 0.0
  %2510 = vmatpush1.xpose.msra.mxu0 0.0
  %2511 = vmatprep.subr.mxu0 0.0
  %2512 = vmatpush1.xpose.msra.mxu0 0.0
  %2513 = vmatprep.subr.mxu0 0.0
  %2514 = vmatpush1.xpose.msra.mxu0 0.0
  %2515 = vmatprep.subr.mxu0 0.0
  %2516 = vmatpush1.xpose.msra.mxu0 0.0
  %2517 = vmatprep.subr.mxu0 0.0
  %2518 = vmatpush1.xpose.msra.mxu0 0.0
  %2519 = vmatprep.subr.mxu0 0.0
  %2520 = vmatpush1.xpose.msra.mxu0 0.0
  %2521 = vmatprep.subr.mxu0 0.0
  %2522 = vmatpush1.xpose.msra.mxu0 0.0
  %2523 = vmatprep.subr.mxu0 0.0
  %2524 = vmatpush1.xpose.msra.mxu0 0.0
  %2525 = vmatprep.subr.mxu0 0.0
  %2526 = vmatpush1.xpose.msra.mxu0 0.0
  %2527 = vmatprep.subr.mxu0 0.0
  %2528 = vmatpush1.xpose.msra.mxu0 0.0
  %2529 = vmatprep.subr.mxu0 0.0
  %2530 = vmatpush1.xpose.msra.mxu0 0.0
  %2531 = vmatprep.subr.mxu0 0.0
  %2532 = vmatpush1.xpose.msra.mxu0 0.0
  %2533 = vmatprep.subr.mxu0 0.0
  %2534 = vmatpush1.xpose.msra.mxu0 0.0
  %2535 = vmatprep.subr.mxu0 0.0
  %2536 = vmatpush1.xpose.msra.mxu0 0.0
  %2537 = vmatprep.subr.mxu0 0.0
  %2538 = vmatpush1.xpose.msra.mxu0 0.0
  %2539 = vmatprep.subr.mxu0 0.0
  %2540 = vmatpush1.xpose.msra.mxu0 0.0
  %2541 = vmatprep.subr.mxu0 0.0
  %2542 = vmatpush1.xpose.msra.mxu0 0.0
  %2543 = vmatprep.subr.mxu0 0.0
  %2544 = vmatpush1.xpose.msra.mxu0 0.0
  %2545 = vmatprep.subr.mxu0 0.0
  %2546 = vmatpush1.xpose.msra.mxu0 0.0
  %2547 = vmatprep.subr.mxu0 0.0
  %2548 = vmatpush1.xpose.msra.mxu0 0.0
  %2549 = vmatprep.mubr.f32.mxu0 0.0
  %2550 = vmatmul.mubr.f32.gmra.mrb[0].mxu0 %v2477
  %v2551 = vpop.f32.mrb[0].mxu0
  %v2552 = vadd.f32 0.0, %v2551
  %v2553 = vpop.f32.mrb[0].mxu0
  %2554 = vmatprep.mubr.f32.mxu0 0.0
  %2555 = vmatmul.mubr.f32.gmra.mrb[0].mxu0 %v2479
  %v2556 = vpop.f32.mrb[0].mxu0
  %v2557 = vadd.f32 0.0, %v2556
  %v2558 = vpop.f32.mrb[0].mxu0
  %2559 = vdwg.mxu0
  %v2560 = vmul.f32 %v2552, 0.25
  %v2561 = vmul.f32 %v2557, 0.25
  %v2562 = vsel %vm702, %v2560, -inf
  %2563 = vmax.xlane.f32.xlu0 %v2562
  %v2564 = vpop.xlane.xlu0 %2563
  %v2565 = vsel %vm706, %v2561, -inf
  %2566 = vmax.xlane.f32.xlu0 %v2565
  %v2567 = vpop.xlane.xlu0 %2566
  %v2568 = vsub.f32 %v2560, %v2564
  %v2569 = vsub.f32 %v2561, %v2567
  %v2570 = vmul.f32 %v2568, 1.442695
  %v2571 = vpow.pop %v2570
  %v2572 = vmul.f32 %v2569, 1.442695
  %v2573 = vpow.pop %v2572
  %v2574 = vsel %vm702, %v2571, 0.0
  %2575 = vadd.xlane.f32.xlu0 %v2574
  %v2576 = vpop.xlane.xlu0 %2575
  %v2577 = vsel %vm706, %v2573, 0.0
  %2578 = vadd.xlane.f32.xlu0 %v2577
  %v2579 = vpop.xlane.xlu0 %2578
  %v2580 = vrcp.pop %v2576
  %v2581 = vrcp.pop %v2579
  %v2582 = vmul.f32 %v2571, %v2580
  %v2583 = vmul.f32 %v2573, %v2581
  %2584 = vrot.lane.b32.xlu0 %v2472, 64
  %v2585 = vpop.permute.xlu0 %2584
  %2586 = vrot.lane.b32.xlu0 %v2471, 64
  %v2587 = vpop.permute.xlu0 %2586
  %v2590 = vsel %vm702, %v2582, 0
  %v2593 = vsel %vm702, %v2583, 0
  %v2595 = vsel %vm452, %v2587, 0
  %2597 = vmatprep.subr.mxu0 0.0
  %2598 = vmatpush1.msra.mxu0 %v2585
  %2599 = vmatprep.subr.mxu0 0.0
  %2600 = vmatpush1.msra.mxu0 %v2595
  %2601 = vmatprep.subr.mxu0 0.0
  %2602 = vmatpush1.msra.mxu0 0.0
  %2603 = vmatprep.subr.mxu0 0.0
  %2604 = vmatpush1.msra.mxu0 0.0
  %2605 = vmatprep.subr.mxu0 0.0
  %2606 = vmatpush1.msra.mxu0 0.0
  %2607 = vmatprep.subr.mxu0 0.0
  %2608 = vmatpush1.msra.mxu0 0.0
  %2609 = vmatprep.subr.mxu0 0.0
  %2610 = vmatpush1.msra.mxu0 0.0
  %2611 = vmatprep.subr.mxu0 0.0
  %2612 = vmatpush1.msra.mxu0 0.0
  %2613 = vmatprep.subr.mxu0 0.0
  %2614 = vmatpush1.msra.mxu0 0.0
  %2615 = vmatprep.subr.mxu0 0.0
  %2616 = vmatpush1.msra.mxu0 0.0
  %2617 = vmatprep.subr.mxu0 0.0
  %2618 = vmatpush1.msra.mxu0 0.0
  %2619 = vmatprep.subr.mxu0 0.0
  %2620 = vmatpush1.msra.mxu0 0.0
  %2621 = vmatprep.subr.mxu0 0.0
  %2622 = vmatpush1.msra.mxu0 0.0
  %2623 = vmatprep.subr.mxu0 0.0
  %2624 = vmatpush1.msra.mxu0 0.0
  %2625 = vmatprep.subr.mxu0 0.0
  %2626 = vmatpush1.msra.mxu0 0.0
  %2627 = vmatprep.subr.mxu0 0.0
  %2628 = vmatpush1.msra.mxu0 0.0
  %2629 = vmatprep.subr.mxu0 0.0
  %2630 = vmatpush1.msra.mxu0 0.0
  %2631 = vmatprep.subr.mxu0 0.0
  %2632 = vmatpush1.msra.mxu0 0.0
  %2633 = vmatprep.subr.mxu0 0.0
  %2634 = vmatpush1.msra.mxu0 0.0
  %2635 = vmatprep.subr.mxu0 0.0
  %2636 = vmatpush1.msra.mxu0 0.0
  %2637 = vmatprep.subr.mxu0 0.0
  %2638 = vmatpush1.msra.mxu0 0.0
  %2639 = vmatprep.subr.mxu0 0.0
  %2640 = vmatpush1.msra.mxu0 0.0
  %2641 = vmatprep.subr.mxu0 0.0
  %2642 = vmatpush1.msra.mxu0 0.0
  %2643 = vmatprep.subr.mxu0 0.0
  %2644 = vmatpush1.msra.mxu0 0.0
  %2645 = vmatprep.subr.mxu0 0.0
  %2646 = vmatpush1.msra.mxu0 0.0
  %2647 = vmatprep.subr.mxu0 0.0
  %2648 = vmatpush1.msra.mxu0 0.0
  %2649 = vmatprep.subr.mxu0 0.0
  %2650 = vmatpush1.msra.mxu0 0.0
  %2651 = vmatprep.subr.mxu0 0.0
  %2652 = vmatpush1.msra.mxu0 0.0
  %2653 = vmatprep.subr.mxu0 0.0
  %2654 = vmatpush1.msra.mxu0 0.0
  %2655 = vmatprep.subr.mxu0 0.0
  %2656 = vmatpush1.msra.mxu0 0.0
  %2657 = vmatprep.subr.mxu0 0.0
  %2658 = vmatpush1.msra.mxu0 0.0
  %2659 = vmatprep.subr.mxu0 0.0
  %2660 = vmatpush1.msra.mxu0 0.0
  %2661 = vmatprep.mubr.f32.mxu0 0.0
  %2662 = vmatmul.mubr.f32.gmra.mrb[0].mxu0 %v2590
  %v2663 = vpop.f32.mrb[0].mxu0
  %v2664 = vadd.f32 0.0, %v2663
  %v2665 = vpop.f32.mrb[0].mxu0
  %2666 = vmatprep.mubr.f32.mxu0 0.0
  %2667 = vmatmul.mubr.f32.gmra.mrb[0].mxu0 %v2593
  %v2668 = vpop.f32.mrb[0].mxu0
  %v2669 = vadd.f32 0.0, %v2668
  %v2670 = vpop.f32.mrb[0].mxu0
  %2671 = vdwg.mxu0
  %2672 = vrot.lane.b32.xlu0 %v2472, 112
  %v2673 = vpop.permute.xlu0 %2672
  %2674 = vrot.lane.b32.xlu0 %v2471, 112
  %v2675 = vpop.permute.xlu0 %2674
  %2676 = vrot.lane.b32.xlu0 %v2472, 80
  %v2677 = vpop.permute.xlu0 %2676
  %2678 = vrot.lane.b32.xlu0 %v2471, 80
  %v2679 = vpop.permute.xlu0 %2678
  %v2680 = vsel %vm616, %v2673, 0
  %v2682 = vsel %vm616, %v2675, 0
  %v2684 = vsel %vm616, %v2677, 0
  %v2686 = vsel %vm616, %v2679, 0
  %2688 = vmatprep.subr.mxu0 0.0
  %2689 = vmatpush1.xpose.msra.mxu0 %v2684
  %2690 = vmatprep.subr.mxu0 0.0
  %2691 = vmatpush1.xpose.msra.mxu0 %v2686
  %2692 = vmatprep.subr.mxu0 0.0
  %2693 = vmatpush1.xpose.msra.mxu0 0.0
  %2694 = vmatprep.subr.mxu0 0.0
  %2695 = vmatpush1.xpose.msra.mxu0 0.0
  %2696 = vmatprep.subr.mxu0 0.0
  %2697 = vmatpush1.xpose.msra.mxu0 0.0
  %2698 = vmatprep.subr.mxu0 0.0
  %2699 = vmatpush1.xpose.msra.mxu0 0.0
  %2700 = vmatprep.subr.mxu0 0.0
  %2701 = vmatpush1.xpose.msra.mxu0 0.0
  %2702 = vmatprep.subr.mxu0 0.0
  %2703 = vmatpush1.xpose.msra.mxu0 0.0
  %2704 = vmatprep.subr.mxu0 0.0
  %2705 = vmatpush1.xpose.msra.mxu0 0.0
  %2706 = vmatprep.subr.mxu0 0.0
  %2707 = vmatpush1.xpose.msra.mxu0 0.0
  %2708 = vmatprep.subr.mxu0 0.0
  %2709 = vmatpush1.xpose.msra.mxu0 0.0
  %2710 = vmatprep.subr.mxu0 0.0
  %2711 = vmatpush1.xpose.msra.mxu0 0.0
  %2712 = vmatprep.subr.mxu0 0.0
  %2713 = vmatpush1.xpose.msra.mxu0 0.0
  %2714 = vmatprep.subr.mxu0 0.0
  %2715 = vmatpush1.xpose.msra.mxu0 0.0
  %2716 = vmatprep.subr.mxu0 0.0
  %2717 = vmatpush1.xpose.msra.mxu0 0.0
  %2718 = vmatprep.subr.mxu0 0.0
  %2719 = vmatpush1.xpose.msra.mxu0 0.0
  %2720 = vmatprep.subr.mxu0 0.0
  %2721 = vmatpush1.xpose.msra.mxu0 0.0
  %2722 = vmatprep.subr.mxu0 0.0
  %2723 = vmatpush1.xpose.msra.mxu0 0.0
  %2724 = vmatprep.subr.mxu0 0.0
  %2725 = vmatpush1.xpose.msra.mxu0 0.0
  %2726 = vmatprep.subr.mxu0 0.0
  %2727 = vmatpush1.xpose.msra.mxu0 0.0
  %2728 = vmatprep.subr.mxu0 0.0
  %2729 = vmatpush1.xpose.msra.mxu0 0.0
  %2730 = vmatprep.subr.mxu0 0.0
  %2731 = vmatpush1.xpose.msra.mxu0 0.0
  %2732 = vmatprep.subr.mxu0 0.0
  %2733 = vmatpush1.xpose.msra.mxu0 0.0
  %2734 = vmatprep.subr.mxu0 0.0
  %2735 = vmatpush1.xpose.msra.mxu0 0.0
  %2736 = vmatprep.subr.mxu0 0.0
  %2737 = vmatpush1.xpose.msra.mxu0 0.0
  %2738 = vmatprep.subr.mxu0 0.0
  %2739 = vmatpush1.xpose.msra.mxu0 0.0
  %2740 = vmatprep.subr.mxu0 0.0
  %2741 = vmatpush1.xpose.msra.mxu0 0.0
  %2742 = vmatprep.subr.mxu0 0.0
  %2743 = vmatpush1.xpose.msra.mxu0 0.0
  %2744 = vmatprep.subr.mxu0 0.0
  %2745 = vmatpush1.xpose.msra.mxu0 0.0
  %2746 = vmatprep.subr.mxu0 0.0
  %2747 = vmatpush1.xpose.msra.mxu0 0.0
  %2748 = vmatprep.subr.mxu0 0.0
  %2749 = vmatpush1.xpose.msra.mxu0 0.0
  %2750 = vmatprep.subr.mxu0 0.0
  %2751 = vmatpush1.xpose.msra.mxu0 0.0
  %2752 = vmatprep.mubr.f32.mxu0 0.0
  %2753 = vmatmul.mubr.f32.gmra.mrb[0].mxu0 %v2680
  %v2754 = vpop.f32.mrb[0].mxu0
  %v2755 = vadd.f32 0.0, %v2754
  %v2756 = vpop.f32.mrb[0].mxu0
  %2757 = vmatprep.mubr.f32.mxu0 0.0
  %2758 = vmatmul.mubr.f32.gmra.mrb[0].mxu0 %v2682
  %v2759 = vpop.f32.mrb[0].mxu0
  %v2760 = vadd.f32 0.0, %v2759
  %v2761 = vpop.f32.mrb[0].mxu0
  %2762 = vdwg.mxu0
  %v2763 = vmul.f32 %v2755, 0.25
  %v2764 = vmul.f32 %v2760, 0.25
  %v2765 = vsel %vm702, %v2763, -inf
  %2766 = vmax.xlane.f32.xlu0 %v2765
  %v2767 = vpop.xlane.xlu0 %2766
  %v2768 = vsel %vm706, %v2764, -inf
  %2769 = vmax.xlane.f32.xlu0 %v2768
  %v2770 = vpop.xlane.xlu0 %2769
  %v2771 = vsub.f32 %v2763, %v2767
  %v2772 = vsub.f32 %v2764, %v2770
  %v2773 = vmul.f32 %v2771, 1.442695
  %v2774 = vpow.pop %v2773
  %v2775 = vmul.f32 %v2772, 1.442695
  %v2776 = vpow.pop %v2775
  %v2777 = vsel %vm702, %v2774, 0.0
  %2778 = vadd.xlane.f32.xlu0 %v2777
  %v2779 = vpop.xlane.xlu0 %2778
  %v2780 = vsel %vm706, %v2776, 0.0
  %2781 = vadd.xlane.f32.xlu0 %v2780
  %v2782 = vpop.xlane.xlu0 %2781
  %v2783 = vrcp.pop %v2779
  %v2784 = vrcp.pop %v2782
  %v2785 = vmul.f32 %v2774, %v2783
  %v2786 = vmul.f32 %v2776, %v2784
  %2787 = vrot.lane.b32.xlu0 %v2472, 48
  %v2788 = vpop.permute.xlu0 %2787
  %2789 = vrot.lane.b32.xlu0 %v2471, 48
  %v2790 = vpop.permute.xlu0 %2789
  %v2793 = vsel %vm702, %v2785, 0
  %v2796 = vsel %vm702, %v2786, 0
  %v2798 = vsel %vm452, %v2790, 0
  %2800 = vmatprep.subr.mxu0 0.0
  %2801 = vmatpush1.msra.mxu0 %v2788
  %2802 = vmatprep.subr.mxu0 0.0
  %2803 = vmatpush1.msra.mxu0 %v2798
  %2804 = vmatprep.subr.mxu0 0.0
  %2805 = vmatpush1.msra.mxu0 0.0
  %2806 = vmatprep.subr.mxu0 0.0
  %2807 = vmatpush1.msra.mxu0 0.0
  %2808 = vmatprep.subr.mxu0 0.0
  %2809 = vmatpush1.msra.mxu0 0.0
  %2810 = vmatprep.subr.mxu0 0.0
  %2811 = vmatpush1.msra.mxu0 0.0
  %2812 = vmatprep.subr.mxu0 0.0
  %2813 = vmatpush1.msra.mxu0 0.0
  %2814 = vmatprep.subr.mxu0 0.0
  %2815 = vmatpush1.msra.mxu0 0.0
  %2816 = vmatprep.subr.mxu0 0.0
  %2817 = vmatpush1.msra.mxu0 0.0
  %2818 = vmatprep.subr.mxu0 0.0
  %2819 = vmatpush1.msra.mxu0 0.0
  %2820 = vmatprep.subr.mxu0 0.0
  %2821 = vmatpush1.msra.mxu0 0.0
  %2822 = vmatprep.subr.mxu0 0.0
  %2823 = vmatpush1.msra.mxu0 0.0
  %2824 = vmatprep.subr.mxu0 0.0
  %2825 = vmatpush1.msra.mxu0 0.0
  %2826 = vmatprep.subr.mxu0 0.0
  %2827 = vmatpush1.msra.mxu0 0.0
  %2828 = vmatprep.subr.mxu0 0.0
  %2829 = vmatpush1.msra.mxu0 0.0
  %2830 = vmatprep.subr.mxu0 0.0
  %2831 = vmatpush1.msra.mxu0 0.0
  %2832 = vmatprep.subr.mxu0 0.0
  %2833 = vmatpush1.msra.mxu0 0.0
  %2834 = vmatprep.subr.mxu0 0.0
  %2835 = vmatpush1.msra.mxu0 0.0
  %2836 = vmatprep.subr.mxu0 0.0
  %2837 = vmatpush1.msra.mxu0 0.0
  %2838 = vmatprep.subr.mxu0 0.0
  %2839 = vmatpush1.msra.mxu0 0.0
  %2840 = vmatprep.subr.mxu0 0.0
  %2841 = vmatpush1.msra.mxu0 0.0
  %2842 = vmatprep.subr.mxu0 0.0
  %2843 = vmatpush1.msra.mxu0 0.0
  %2844 = vmatprep.subr.mxu0 0.0
  %2845 = vmatpush1.msra.mxu0 0.0
  %2846 = vmatprep.subr.mxu0 0.0
  %2847 = vmatpush1.msra.mxu0 0.0
  %2848 = vmatprep.subr.mxu0 0.0
  %2849 = vmatpush1.msra.mxu0 0.0
  %2850 = vmatprep.subr.mxu0 0.0
  %2851 = vmatpush1.msra.mxu0 0.0
  %2852 = vmatprep.subr.mxu0 0.0
  %2853 = vmatpush1.msra.mxu0 0.0
  %2854 = vmatprep.subr.mxu0 0.0
  %2855 = vmatpush1.msra.mxu0 0.0
  %2856 = vmatprep.subr.mxu0 0.0
  %2857 = vmatpush1.msra.mxu0 0.0
  %2858 = vmatprep.subr.mxu0 0.0
  %2859 = vmatpush1.msra.mxu0 0.0
  %2860 = vmatprep.subr.mxu0 0.0
  %2861 = vmatpush1.msra.mxu0 0.0
  %2862 = vmatprep.subr.mxu0 0.0
  %2863 = vmatpush1.msra.mxu0 0.0
  %2864 = vmatprep.mubr.f32.mxu0 0.0
  %2865 = vmatmul.mubr.f32.gmra.mrb[0].mxu0 %v2793
  %v2866 = vpop.f32.mrb[0].mxu0
  %v2867 = vadd.f32 0.0, %v2866
  %v2868 = vpop.f32.mrb[0].mxu0
  %2869 = vmatprep.mubr.f32.mxu0 0.0
  %2870 = vmatmul.mubr.f32.gmra.mrb[0].mxu0 %v2796
  %v2871 = vpop.f32.mrb[0].mxu0
  %v2872 = vadd.f32 0.0, %v2871
  %v2873 = vpop.f32.mrb[0].mxu0
  %2874 = vdwg.mxu0
  %2877 = vrot.lane.b32.xlu0 %v2867, 16
  %v2878 = vpop.permute.xlu0 %2877
  %2879 = vrot.lane.b32.xlu0 %v2872, 16
  %v2880 = vpop.permute.xlu0 %2879
  %v2883 = vsel %vm616, %v2664, %v2878
  %v2884 = vsel %vm616, %v2669, %v2880
  %v2887 = vrot.slane %v2883, 7
  %v2888 = vrot.slane %v2884, 7
  %v2889 = vsel %vm452, %v2887, %v2888
  %v2891 = vsel %vm452, %v2468, %v2887
  %s2892 = scalar_lea.vmem %s10, 32
  %v2893 = vld [vmem:[%s2892] sm:$0xff]
  %v2894 = vld [vmem:[%s2892 + $0x8] sm:$0xff]
  %v2895 = vld [vmem:[%s2892 + $0x10] sm:$0xff]
  %v2896 = vld [vmem:[%s2892 + $0x18] sm:$0xff]
  %s2897 = scalar_lea.vmem %s11, 1
  %v2898 = vld [vmem:[%s2897] sm:$0x1]
  %v2900 = vlaneseq
  %v2901 = vshrl.u32 %v2900, 7
  %v2902 = vsub.s32 0, %v2901
  %v2903 = vrot.slane %v2898, %v2902
  %v2906 = vsel %vm383, %v2467, 0
  %v2909 = vsel %vm383, %v2891, 0
  %v2911 = vsel %vm383, %v2889, 0
  %2913 = vmatprep.subr.mxu0 0.0
  %2914 = vmatpush1.msra.mxu0 %v2893
  %2915 = vmatprep.subr.mxu0 0.0
  %2916 = vmatpush1.msra.mxu0 %v2894
  %2917 = vmatprep.subr.mxu0 0.0
  %2918 = vmatpush1.msra.mxu0 %v2895
  %2919 = vmatprep.subr.mxu0 0.0
  %2920 = vmatpush1.msra.mxu0 %v2896
  %2921 = vmatprep.subr.mxu0 0.0
  %2922 = vmatpush1.msra.mxu0 0.0
  %2923 = vmatprep.subr.mxu0 0.0
  %2924 = vmatpush1.msra.mxu0 0.0
  %2925 = vmatprep.subr.mxu0 0.0
  %2926 = vmatpush1.msra.mxu0 0.0
  %2927 = vmatprep.subr.mxu0 0.0
  %2928 = vmatpush1.msra.mxu0 0.0
  %2929 = vmatprep.subr.mxu0 0.0
  %2930 = vmatpush1.msra.mxu0 0.0
  %2931 = vmatprep.subr.mxu0 0.0
  %2932 = vmatpush1.msra.mxu0 0.0
  %2933 = vmatprep.subr.mxu0 0.0
  %2934 = vmatpush1.msra.mxu0 0.0
  %2935 = vmatprep.subr.mxu0 0.0
  %2936 = vmatpush1.msra.mxu0 0.0
  %2937 = vmatprep.subr.mxu0 0.0
  %2938 = vmatpush1.msra.mxu0 0.0
  %2939 = vmatprep.subr.mxu0 0.0
  %2940 = vmatpush1.msra.mxu0 0.0
  %2941 = vmatprep.subr.mxu0 0.0
  %2942 = vmatpush1.msra.mxu0 0.0
  %2943 = vmatprep.subr.mxu0 0.0
  %2944 = vmatpush1.msra.mxu0 0.0
  %2945 = vmatprep.subr.mxu0 0.0
  %2946 = vmatpush1.msra.mxu0 0.0
  %2947 = vmatprep.subr.mxu0 0.0
  %2948 = vmatpush1.msra.mxu0 0.0
  %2949 = vmatprep.subr.mxu0 0.0
  %2950 = vmatpush1.msra.mxu0 0.0
  %2951 = vmatprep.subr.mxu0 0.0
  %2952 = vmatpush1.msra.mxu0 0.0
  %2953 = vmatprep.subr.mxu0 0.0
  %2954 = vmatpush1.msra.mxu0 0.0
  %2955 = vmatprep.subr.mxu0 0.0
  %2956 = vmatpush1.msra.mxu0 0.0
  %2957 = vmatprep.subr.mxu0 0.0
  %2958 = vmatpush1.msra.mxu0 0.0
  %2959 = vmatprep.subr.mxu0 0.0
  %2960 = vmatpush1.msra.mxu0 0.0
  %2961 = vmatprep.subr.mxu0 0.0
  %2962 = vmatpush1.msra.mxu0 0.0
  %2963 = vmatprep.subr.mxu0 0.0
  %2964 = vmatpush1.msra.mxu0 0.0
  %2965 = vmatprep.subr.mxu0 0.0
  %2966 = vmatpush1.msra.mxu0 0.0
  %2967 = vmatprep.subr.mxu0 0.0
  %2968 = vmatpush1.msra.mxu0 0.0
  %2969 = vmatprep.subr.mxu0 0.0
  %2970 = vmatpush1.msra.mxu0 0.0
  %2971 = vmatprep.subr.mxu0 0.0
  %2972 = vmatpush1.msra.mxu0 0.0
  %2973 = vmatprep.subr.mxu0 0.0
  %2974 = vmatpush1.msra.mxu0 0.0
  %2975 = vmatprep.subr.mxu0 0.0
  %2976 = vmatpush1.msra.mxu0 0.0
  %2977 = vmatprep.mubr.f32.mxu0 0.0
  %2978 = vmatmul.mubr.f32.gmra.mrb[0].mxu0 %v2906
  %v2979 = vpop.f32.mrb[0].mxu0
  %v2980 = vadd.f32 %v2903, %v2979
  %v2981 = vpop.f32.mrb[0].mxu0
  %2982 = vmatprep.mubr.f32.mxu0 0.0
  %2983 = vmatmul.mubr.f32.gmra.mrb[0].mxu0 %v2909
  %v2984 = vpop.f32.mrb[0].mxu0
  %v2985 = vadd.f32 %v2903, %v2984
  %v2986 = vpop.f32.mrb[0].mxu0
  %2987 = vmatprep.mubr.f32.mxu0 0.0
  %2988 = vmatmul.mubr.f32.gmra.mrb[0].mxu0 %v2911
  %v2989 = vpop.f32.mrb[0].mxu0
  %v2990 = vadd.f32 %v2903, %v2989
  %v2991 = vpop.f32.mrb[0].mxu0
  %2992 = vdwg.mxu0
  %v2993 = vadd.f32 %v1897, %v2980
  %v2994 = vadd.f32 %v1898, %v2985
  %v2995 = vadd.f32 %v1899, %v2990
  %s2996 = scalar_lea.vmem %s12, 1
  %v2997 = vld [vmem:[%s2996] sm:$0x1]
  %s2998 = scalar_lea.vmem %s13, 1
  %v2999 = vld [vmem:[%s2998] sm:$0x1]
  %v3000 = vsel %vm383, %v2993, 0.0
  %3001 = vadd.xlane.f32.xlu0 %v3000
  %v3002 = vpop.xlane.xlu0 %3001
  %v3003 = vsel %vm383, %v2994, 0.0
  %3004 = vadd.xlane.f32.xlu0 %v3003
  %v3005 = vpop.xlane.xlu0 %3004
  %v3006 = vsel %vm465, %v2995, 0.0
  %3007 = vadd.xlane.f32.xlu0 %v3006
  %v3008 = vpop.xlane.xlu0 %3007
  %v3009 = vmul.f32 %v3002, %v390
  %v3010 = vmul.f32 %v3005, %v390
  %v3011 = vmul.f32 %v3008, %v390
  %v3012 = vsub.f32 %v2993, %v3009
  %v3013 = vsub.f32 %v2994, %v3010
  %v3014 = vsub.f32 %v2995, %v3011
  %v3015 = vmul.f32 %v3012, %v3012
  %v3016 = vmul.f32 %v3013, %v3013
  %v3017 = vmul.f32 %v3014, %v3014
  %v3018 = vsel %vm383, %v3015, 0.0
  %3019 = vadd.xlane.f32.xlu0 %v3018
  %v3020 = vpop.xlane.xlu0 %3019
  %v3021 = vsel %vm383, %v3016, 0.0
  %3022 = vadd.xlane.f32.xlu0 %v3021
  %v3023 = vpop.xlane.xlu0 %3022
  %v3024 = vsel %vm465, %v3017, 0.0
  %3025 = vadd.xlane.f32.xlu0 %v3024
  %v3026 = vpop.xlane.xlu0 %3025
  %v3027 = vmul.f32 %v3020, %v390
  %v3028 = vmul.f32 %v3023, %v390
  %v3029 = vmul.f32 %v3026, %v390
  %v3030 = vadd.f32 %v3027, 1e-05
  %v3031 = vadd.f32 %v3028, 1e-05
  %v3032 = vadd.f32 %v3029, 1e-05
  %v3033 = vrsqrt.pop %v3030
  %v3034 = vrsqrt.pop %v3031
  %v3035 = vrsqrt.pop %v3032
  %v3036 = vmul.f32 %v3012, %v3033
  %v3037 = vmul.f32 %v3013, %v3034
  %v3038 = vmul.f32 %v3014, %v3035
  %v3040 = vlaneseq
  %v3041 = vshrl.u32 %v3040, 7
  %v3042 = vsub.s32 0, %v3041
  %v3043 = vrot.slane %v2997, %v3042
  %v3045 = vmul.f32 %v3036, %v3043
  %v3046 = vmul.f32 %v3037, %v3043
  %v3047 = vmul.f32 %v3038, %v3043
  %v3049 = vlaneseq
  %v3050 = vshrl.u32 %v3049, 7
  %v3051 = vsub.s32 0, %v3050
  %v3052 = vrot.slane %v2999, %v3051
  %v3054 = vadd.f32 %v3045, %v3052
  %v3055 = vadd.f32 %v3046, %v3052
  %v3056 = vadd.f32 %v3047, %v3052
  %s3057 = scalar_lea.vmem %s14, 32
  %v3058 = vld [vmem:[%s3057] sm:$0xff]
  %v3059 = vld [vmem:[%s3057 + $0x8] sm:$0xff]
  %v3060 = vld [vmem:[%s3057 + $0x10] sm:$0xff]
  %v3061 = vld [vmem:[%s3057 + $0x18] sm:$0xff]
  %s3062 = scalar_lea.vmem %s15, 1
  %v3063 = vld [vmem:[%s3062] sm:$0x1]
  %v3065 = vlaneseq
  %v3066 = vshrl.u32 %v3065, 7
  %v3067 = vsub.s32 0, %v3066
  %v3068 = vrot.slane %v3063, %v3067
  %v3071 = vsel %vm383, %v3054, 0
  %v3074 = vsel %vm383, %v3055, 0
  %v3077 = vsel %vm383, %v3056, 0
  %3079 = vmatprep.subr.mxu0 0.0
  %3080 = vmatpush1.msra.mxu0 %v3058
  %3081 = vmatprep.subr.mxu0 0.0
  %3082 = vmatpush1.msra.mxu0 %v3059
  %3083 = vmatprep.subr.mxu0 0.0
  %3084 = vmatpush1.msra.mxu0 %v3060
  %3085 = vmatprep.subr.mxu0 0.0
  %3086 = vmatpush1.msra.mxu0 %v3061
  %3087 = vmatprep.subr.mxu0 0.0
  %3088 = vmatpush1.msra.mxu0 0.0
  %3089 = vmatprep.subr.mxu0 0.0
  %3090 = vmatpush1.msra.mxu0 0.0
  %3091 = vmatprep.subr.mxu0 0.0
  %3092 = vmatpush1.msra.mxu0 0.0
  %3093 = vmatprep.subr.mxu0 0.0
  %3094 = vmatpush1.msra.mxu0 0.0
  %3095 = vmatprep.subr.mxu0 0.0
  %3096 = vmatpush1.msra.mxu0 0.0
  %3097 = vmatprep.subr.mxu0 0.0
  %3098 = vmatpush1.msra.mxu0 0.0
  %3099 = vmatprep.subr.mxu0 0.0
  %3100 = vmatpush1.msra.mxu0 0.0
  %3101 = vmatprep.subr.mxu0 0.0
  %3102 = vmatpush1.msra.mxu0 0.0
  %3103 = vmatprep.subr.mxu0 0.0
  %3104 = vmatpush1.msra.mxu0 0.0
  %3105 = vmatprep.subr.mxu0 0.0
  %3106 = vmatpush1.msra.mxu0 0.0
  %3107 = vmatprep.subr.mxu0 0.0
  %3108 = vmatpush1.msra.mxu0 0.0
  %3109 = vmatprep.subr.mxu0 0.0
  %3110 = vmatpush1.msra.mxu0 0.0
  %3111 = vmatprep.subr.mxu0 0.0
  %3112 = vmatpush1.msra.mxu0 0.0
  %3113 = vmatprep.subr.mxu0 0.0
  %3114 = vmatpush1.msra.mxu0 0.0
  %3115 = vmatprep.subr.mxu0 0.0
  %3116 = vmatpush1.msra.mxu0 0.0
  %3117 = vmatprep.subr.mxu0 0.0
  %3118 = vmatpush1.msra.mxu0 0.0
  %3119 = vmatprep.subr.mxu0 0.0
  %3120 = vmatpush1.msra.mxu0 0.0
  %3121 = vmatprep.subr.mxu0 0.0
  %3122 = vmatpush1.msra.mxu0 0.0
  %3123 = vmatprep.subr.mxu0 0.0
  %3124 = vmatpush1.msra.mxu0 0.0
  %3125 = vmatprep.subr.mxu0 0.0
  %3126 = vmatpush1.msra.mxu0 0.0
  %3127 = vmatprep.subr.mxu0 0.0
  %3128 = vmatpush1.msra.mxu0 0.0
  %3129 = vmatprep.subr.mxu0 0.0
  %3130 = vmatpush1.msra.mxu0 0.0
  %3131 = vmatprep.subr.mxu0 0.0
  %3132 = vmatpush1.msra.mxu0 0.0
  %3133 = vmatprep.subr.mxu0 0.0
  %3134 = vmatpush1.msra.mxu0 0.0
  %3135 = vmatprep.subr.mxu0 0.0
  %3136 = vmatpush1.msra.mxu0 0.0
  %3137 = vmatprep.subr.mxu0 0.0
  %3138 = vmatpush1.msra.mxu0 0.0
  %3139 = vmatprep.subr.mxu0 0.0
  %3140 = vmatpush1.msra.mxu0 0.0
  %3141 = vmatprep.subr.mxu0 0.0
  %3142 = vmatpush1.msra.mxu0 0.0
  %3143 = vmatprep.mubr.f32.mxu0 0.0
  %3144 = vmatmul.mubr.f32.gmra.mrb[0].mxu0 %v3071
  %v3145 = vpop.f32.mrb[0].mxu0
  %v3146 = vadd.f32 %v3068, %v3145
  %v3147 = vpop.f32.mrb[0].mxu0
  %3148 = vmatprep.mubr.f32.mxu0 0.0
  %3149 = vmatmul.mubr.f32.gmra.mrb[0].mxu0 %v3074
  %v3150 = vpop.f32.mrb[0].mxu0
  %v3151 = vadd.f32 %v3068, %v3150
  %v3152 = vpop.f32.mrb[0].mxu0
  %3153 = vmatprep.mubr.f32.mxu0 0.0
  %3154 = vmatmul.mubr.f32.gmra.mrb[0].mxu0 %v3077
  %v3155 = vpop.f32.mrb[0].mxu0
  %v3156 = vadd.f32 %v3068, %v3155
  %v3157 = vpop.f32.mrb[0].mxu0
  %3158 = vdwg.mxu0
  %v3159 = vmul.f32 %v3146, 0.5
  %v3160 = vmul.f32 %v3151, 0.5
  %v3161 = vmul.f32 %v3156, 0.5
  %v3162 = vmul.f32 %v3146, 0.70710677
  %v3163 = vmul.f32 %v3151, 0.70710677
  %v3164 = vmul.f32 %v3156, 0.70710677
  %v3165 = vand.u32 2147483647, %v3162
  %v3166 = vand.u32 2147483647, %v3163
  %v3167 = vand.u32 2147483647, %v3164
  %v3168 = vmul.f32 %v3165, 0.3275911
  %v3169 = vmul.f32 %v3166, 0.3275911
  %v3170 = vmul.f32 %v3167, 0.3275911
  %v3171 = vadd.f32 %v3168, 1.0
  %v3172 = vadd.f32 %v3169, 1.0
  %v3173 = vadd.f32 %v3170, 1.0
  %v3174 = vrcp.pop %v3171
  %v3175 = vmul.f32 1.0, %v3174
  %v3176 = vrcp.pop %v3172
  %v3177 = vmul.f32 1.0, %v3176
  %v3178 = vrcp.pop %v3173
  %v3179 = vmul.f32 1.0, %v3178
  %v3180 = vmul.f32 %v3175, 1.0614054
  %v3181 = vmul.f32 %v3177, 1.0614054
  %v3182 = vmul.f32 %v3179, 1.0614054
  %v3183 = vadd.f32 %v3180, -1.4531521
  %v3184 = vadd.f32 %v3181, -1.4531521
  %v3185 = vadd.f32 %v3182, -1.4531521
  %v3186 = vmul.f32 %v3183, %v3175
  %v3187 = vmul.f32 %v3184, %v3177
  %v3188 = vmul.f32 %v3185, %v3179
  %v3189 = vadd.f32 %v3186, 1.4214138
  %v3190 = vadd.f32 %v3187, 1.4214138
  %v3191 = vadd.f32 %v3188, 1.4214138
  %v3192 = vmul.f32 %v3189, %v3175
  %v3193 = vmul.f32 %v3190, %v3177
  %v3194 = vmul.f32 %v3191, %v3179
  %v3195 = vadd.f32 %v3192, -0.28449672
  %v3196 = vadd.f32 %v3193, -0.28449672
  %v3197 = vadd.f32 %v3194, -0.28449672
  %v3198 = vmul.f32 %v3195, %v3175
  %v3199 = vmul.f32 %v3196, %v3177
  %v3200 = vmul.f32 %v3197, %v3179
  %v3201 = vadd.f32 %v3198, 0.2548296
  %v3202 = vadd.f32 %v3199, 0.2548296
  %v3203 = vadd.f32 %v3200, 0.2548296
  %v3204 = vmul.f32 %v3201, %v3175
  %v3205 = vmul.f32 %v3202, %v3177
  %v3206 = vmul.f32 %v3203, %v3179
  %v3207 = vsub.f32 0.0, %v3165
  %v3208 = vsub.f32 0.0, %v3166
  %v3209 = vsub.f32 0.0, %v3167
  %v3210 = vmul.f32 %v3207, %v3165
  %v3211 = vmul.f32 %v3208, %v3166
  %v3212 = vmul.f32 %v3209, %v3167
  %v3213 = vmul.f32 %v3210, 1.442695
  %v3214 = vpow.pop %v3213
  %v3215 = vmul.f32 %v3211, 1.442695
  %v3216 = vpow.pop %v3215
  %v3217 = vmul.f32 %v3212, 1.442695
  %v3218 = vpow.pop %v3217
  %v3219 = vmul.f32 %v3204, %v3214
  %v3220 = vmul.f32 %v3205, %v3216
  %v3221 = vmul.f32 %v3206, %v3218
  %v3222 = vsub.f32 1.0, %v3219
  %v3223 = vsub.f32 1.0, %v3220
  %v3224 = vsub.f32 1.0, %v3221
  %vm3225 = vcmp.lt.f32.partialorder %v3162, 0.0
  %vm3226 = vcmp.lt.f32.partialorder %v3163, 0.0
  %vm3227 = vcmp.lt.f32.partialorder %v3164, 0.0
  %v3228 = vsub.f32 0.0, %v3222
  %v3229 = vsub.f32 0.0, %v3223
  %v3230 = vsub.f32 0.0, %v3224
  %v3231 = vsel %vm3225, %v3228, %v3222
  %v3232 = vsel %vm3226, %v3229, %v3223
  %v3233 = vsel %vm3227, %v3230, %v3224
  %v3234 = vadd.f32 %v3231, 1.0
  %v3235 = vadd.f32 %v3232, 1.0
  %v3236 = vadd.f32 %v3233, 1.0
  %v3237 = vmul.f32 %v3159, %v3234
  %v3238 = vmul.f32 %v3160, %v3235
  %v3239 = vmul.f32 %v3161, %v3236
  %s3240 = scalar_lea.vmem %s16, 64
  %v3241 = vld [vmem:[%s3240] sm:$0xff]
  %v3242 = vld [vmem:[%s3240 + $0x8] sm:$0xff]
  %v3243 = vld [vmem:[%s3240 + $0x10] sm:$0xff]
  %v3244 = vld [vmem:[%s3240 + $0x18] sm:$0xff]
  %v3245 = vld [vmem:[%s3240 + $0x20] sm:$0xff]
  %v3246 = vld [vmem:[%s3240 + $0x28] sm:$0xff]
  %v3247 = vld [vmem:[%s3240 + $0x30] sm:$0xff]
  %v3248 = vld [vmem:[%s3240 + $0x38] sm:$0xff]
  %s3249 = scalar_lea.vmem %s17, 1
  %v3250 = vld [vmem:[%s3249] sm:$0x1]
  %v3252 = vlaneseq
  %v3253 = vshrl.u32 %v3252, 7
  %v3254 = vsub.s32 0, %v3253
  %v3255 = vrot.slane %v3250, %v3254
  %v3258 = vsel %vm1807, %v3237, 0
  %v3261 = vsel %vm1807, %v3238, 0
  %v3264 = vsel %vm1807, %v3239, 0
  %3266 = vmatprep.subr.mxu0 0.0
  %3267 = vmatpush1.msra.mxu0 %v3241
  %3268 = vmatprep.subr.mxu0 0.0
  %3269 = vmatpush1.msra.mxu0 %v3242
  %3270 = vmatprep.subr.mxu0 0.0
  %3271 = vmatpush1.msra.mxu0 %v3243
  %3272 = vmatprep.subr.mxu0 0.0
  %3273 = vmatpush1.msra.mxu0 %v3244
  %3274 = vmatprep.subr.mxu0 0.0
  %3275 = vmatpush1.msra.mxu0 %v3245
  %3276 = vmatprep.subr.mxu0 0.0
  %3277 = vmatpush1.msra.mxu0 %v3246
  %3278 = vmatprep.subr.mxu0 0.0
  %3279 = vmatpush1.msra.mxu0 %v3247
  %3280 = vmatprep.subr.mxu0 0.0
  %3281 = vmatpush1.msra.mxu0 %v3248
  %3282 = vmatprep.subr.mxu0 0.0
  %3283 = vmatpush1.msra.mxu0 0.0
  %3284 = vmatprep.subr.mxu0 0.0
  %3285 = vmatpush1.msra.mxu0 0.0
  %3286 = vmatprep.subr.mxu0 0.0
  %3287 = vmatpush1.msra.mxu0 0.0
  %3288 = vmatprep.subr.mxu0 0.0
  %3289 = vmatpush1.msra.mxu0 0.0
  %3290 = vmatprep.subr.mxu0 0.0
  %3291 = vmatpush1.msra.mxu0 0.0
  %3292 = vmatprep.subr.mxu0 0.0
  %3293 = vmatpush1.msra.mxu0 0.0
  %3294 = vmatprep.subr.mxu0 0.0
  %3295 = vmatpush1.msra.mxu0 0.0
  %3296 = vmatprep.subr.mxu0 0.0
  %3297 = vmatpush1.msra.mxu0 0.0
  %3298 = vmatprep.subr.mxu0 0.0
  %3299 = vmatpush1.msra.mxu0 0.0
  %3300 = vmatprep.subr.mxu0 0.0
  %3301 = vmatpush1.msra.mxu0 0.0
  %3302 = vmatprep.subr.mxu0 0.0
  %3303 = vmatpush1.msra.mxu0 0.0
  %3304 = vmatprep.subr.mxu0 0.0
  %3305 = vmatpush1.msra.mxu0 0.0
  %3306 = vmatprep.subr.mxu0 0.0
  %3307 = vmatpush1.msra.mxu0 0.0
  %3308 = vmatprep.subr.mxu0 0.0
  %3309 = vmatpush1.msra.mxu0 0.0
  %3310 = vmatprep.subr.mxu0 0.0
  %3311 = vmatpush1.msra.mxu0 0.0
  %3312 = vmatprep.subr.mxu0 0.0
  %3313 = vmatpush1.msra.mxu0 0.0
  %3314 = vmatprep.subr.mxu0 0.0
  %3315 = vmatpush1.msra.mxu0 0.0
  %3316 = vmatprep.subr.mxu0 0.0
  %3317 = vmatpush1.msra.mxu0 0.0
  %3318 = vmatprep.subr.mxu0 0.0
  %3319 = vmatpush1.msra.mxu0 0.0
  %3320 = vmatprep.subr.mxu0 0.0
  %3321 = vmatpush1.msra.mxu0 0.0
  %3322 = vmatprep.subr.mxu0 0.0
  %3323 = vmatpush1.msra.mxu0 0.0
  %3324 = vmatprep.subr.mxu0 0.0
  %3325 = vmatpush1.msra.mxu0 0.0
  %3326 = vmatprep.subr.mxu0 0.0
  %3327 = vmatpush1.msra.mxu0 0.0
  %3328 = vmatprep.subr.mxu0 0.0
  %3329 = vmatpush1.msra.mxu0 0.0
  %3330 = vmatprep.mubr.f32.mxu0 0.0
  %3331 = vmatmul.mubr.f32.gmra.mrb[0].mxu0 %v3258
  %v3332 = vpop.f32.mrb[0].mxu0
  %v3333 = vadd.f32 %v3255, %v3332
  %v3334 = vpop.f32.mrb[0].mxu0
  %3335 = vmatprep.mubr.f32.mxu0 0.0
  %3336 = vmatmul.mubr.f32.gmra.mrb[0].mxu0 %v3261
  %v3337 = vpop.f32.mrb[0].mxu0
  %v3338 = vadd.f32 %v3255, %v3337
  %v3339 = vpop.f32.mrb[0].mxu0
  %3340 = vmatprep.mubr.f32.mxu0 0.0
  %3341 = vmatmul.mubr.f32.gmra.mrb[0].mxu0 %v3264
  %v3342 = vpop.f32.mrb[0].mxu0
  %v3343 = vpop.f32.mrb[0].mxu0
  %3344 = vdwg.mxu0
  %v3345 = vadd.f32 %v2993, %v3333
  %v3346 = vadd.f32 %v2994, %v3338
  %v3347 = vsel %vm452, %v3345, %v3346
  %3348 = vst.msk [vmem:[%s18] sm:$0x3] %vm465, %v3347
  // Predicated region
  $region74: #{fnirs_pret_forward.5} parent=0 // pred_check
    _
  $region75: #{fnirs_pret_forward.5} parent=0 // pred_check_branch
    %3350 = sbr.rel (0) target = $region77
  $region76: #{fnirs_pret_forward.5} parent=0 // pred_region
    _
  $region77: #{fnirs_pret_forward.5} parent=0 // pred_fallthru
    _
  // Predicated region
  $region78: #{fnirs_pret_forward.5} parent=0 // pred_check
    _
  $region79: #{fnirs_pret_forward.5} parent=0 // pred_check_branch
    %3352 = sbr.rel (0) target = $region81
  $region80: #{fnirs_pret_forward.5} parent=0 // pred_region
    _
  $region81: #{fnirs_pret_forward.5} parent=0 // pred_fallthru
    _

</llo_original>
